<compile_context>
chip_gen: v6e
topology: v6e:2x2x1
jax: 0.10.0
libtpu: 0.0.40
codegen_flags: <defaults>
</compile_context>

<pallas_src>
import functools

import jax
import jax.numpy as jnp
from jax import lax
from jax.experimental import pallas as pl
from jax.experimental.pallas import tpu as pltpu

NHEAD = 6
LN_EPS = 1e-5
NUM_LAYERS = 6
DIM_FF = 2048

# Rows of the packed per-layer small-vector block [L, 8, d] (f32).
_ROW_BO, _ROW_G1, _ROW_BE1, _ROW_B2, _ROW_G2, _ROW_BE2 = range(6)
_NUM_VEC_ROWS = 8


def _fused_postfinder_kernel(nhead, s_start, s_end, n_valid,
                             ctx_ref, wih_ref, whh_ref, lb_ref,
                             wq_ref, wk_ref, wv_ref, wo_ref, qb_ref,
                             w1_ref, b1_ref, w2_ref, vec_ref,
                             cw_ref, cb_ref,
                             out_ref, x_sc):
    l = pl.program_id(0)
    B, Np, d = x_sc.shape
    hd = d // nhead
    T = s_end - s_start
    H = whh_ref.shape[-1]
    S = ctx_ref.shape[1]
    N = n_valid                         # = S + 1 valid token rows per batch

    # ---------------- prologue (grid step 0): LSTM + build resident activation ----
    @pl.when(l == 0)
    def _prologue():
        ctx = ctx_ref[...]                                         # [B, S, D] f32
        x_sub = ctx[:, s_start:s_end, :].astype(jnp.bfloat16)      # [B, T, D]
        # Hoisted, gate-major input projection: 4 aligned matmuls (not T per-step
        # pushes), gate extraction is a leading-axis index -> no lane relayouts.
        gx = [jnp.einsum('btd,dh->bth', x_sub, wih_ref[g],
                         preferred_element_type=jnp.float32) + lb_ref[g]
              for g in range(4)]                                    # each [B, T, H]
        whh = [whh_ref[g] for g in range(4)]                        # each [H, H] bf16
        h = jnp.zeros((B, H), jnp.float32)
        c = jnp.zeros((B, H), jnp.float32)
        # TODO(synk): static unrolled recurrence (T is a small compile-time span);
        # switch to lax.fori_loop(..., unroll=True) + masking if spans become
        # dynamic / large to avoid per-shape recompiles.
        for t in range(T):
            hb = h.astype(jnp.bfloat16)
            zi = gx[0][:, t, :] + jnp.dot(hb, whh[0], preferred_element_type=jnp.float32)
            zf = gx[1][:, t, :] + jnp.dot(hb, whh[1], preferred_element_type=jnp.float32)
            zg = gx[2][:, t, :] + jnp.dot(hb, whh[2], preferred_element_type=jnp.float32)
            zo = gx[3][:, t, :] + jnp.dot(hb, whh[3], preferred_element_type=jnp.float32)
            i_g = jax.nn.sigmoid(zi)
            f_g = jax.nn.sigmoid(zf)
            g_g = jnp.tanh(zg)
            o_g = jax.nn.sigmoid(zo)
            c = f_g * c + i_g * g_g
            h = o_g * jnp.tanh(c)
        # Resident activation per batch: [h_last | context rows | zero pad rows].
        x_sc[...] = jnp.zeros_like(x_sc)
        for b in range(B):
            x_sc[b, 0:1, :] = h[b:b + 1, :]
            x_sc[b, 1:1 + S, :] = ctx[b, :, :]

    # ---------------- one transformer-encoder layer (post-norm, relu FFN) --------
    x3 = x_sc[...]                           # [B, Np, d] f32 (resident across grid)
    x2d = x3.reshape(B * Np, d)              # free leading-dim merge (Np % 8 == 0)
    xb = x2d.astype(jnp.bfloat16)

    vec = vec_ref[...]                       # [8, d] packed per-layer vectors (f32)
    bo = vec[_ROW_BO:_ROW_BO + 1, :]
    g1 = vec[_ROW_G1:_ROW_G1 + 1, :]
    be1 = vec[_ROW_BE1:_ROW_BE1 + 1, :]
    b2 = vec[_ROW_B2:_ROW_B2 + 1, :]
    g2 = vec[_ROW_G2:_ROW_G2 + 1, :]
    be2 = vec[_ROW_BE2:_ROW_BE2 + 1, :]
    qb = qb_ref[...]                          # [3*nhead, hd] q/k/v biases (f32)

    scale = 1.0 / float(hd) ** 0.5
    # Key-padding mask: pad key rows (>= N) must receive zero attention weight.
    col = lax.broadcasted_iota(jnp.int32, (1, Np, Np), 2)
    neg = jnp.where(col >= N, jnp.float32(-1e30), jnp.float32(0.0))

    # ---- self attention: per-head weight blocks, no lane slicing / lane concat ----
    attn2d = jnp.zeros((B * Np, d), jnp.float32)
    for hi in range(nhead):
        qh = jnp.dot(xb, wq_ref[hi], preferred_element_type=jnp.float32) \
            + qb[hi:hi + 1, :]
        kh = jnp.dot(xb, wk_ref[hi], preferred_element_type=jnp.float32) \
            + qb[nhead + hi:nhead + hi + 1, :]
        vh = jnp.dot(xb, wv_ref[hi], preferred_element_type=jnp.float32) \
            + qb[2 * nhead + hi:2 * nhead + hi + 1, :]
        q3 = qh.reshape(B, Np, hd)
        k3 = kh.reshape(B, Np, hd)
        v3 = vh.reshape(B, Np, hd)
        s = jnp.einsum('bne,bme->bnm', q3, k3,
                       preferred_element_type=jnp.float32) * scale + neg
        s = s - jnp.max(s, axis=-1, keepdims=True)
        p = jnp.exp(s)
        p = p * pl.reciprocal(jnp.sum(p, axis=-1, keepdims=True), approx=True)
        oh = jnp.einsum('bnm,bme->bne', p, v3,
                        preferred_element_type=jnp.float32)          # [B, Np, hd]
        # Fold this head's output through its slice of Wo; accumulate on the VPU.
        attn2d = attn2d + jnp.dot(oh.reshape(B * Np, hd).astype(jnp.bfloat16),
                                  wo_ref[hi],
                                  preferred_element_type=jnp.float32)
    attn2d = attn2d + bo

    # ---- residual + LayerNorm 1 (f32) ----
    x1 = x2d + attn2d
    mu = jnp.mean(x1, axis=-1, keepdims=True)
    var = jnp.mean((x1 - mu) ** 2, axis=-1, keepdims=True)
    x1 = (x1 - mu) * lax.rsqrt(var + LN_EPS) * g1 + be1

    # ---- feed-forward (relu, bf16 weights, single 2-D matmuls) ----
    hdn = jnp.dot(x1.astype(jnp.bfloat16), w1_ref[...],
                  preferred_element_type=jnp.float32) + b1_ref[...]
    hdn = jnp.maximum(hdn, 0.0)
    ffn = jnp.dot(hdn.astype(jnp.bfloat16), w2_ref[...],
                  preferred_element_type=jnp.float32) + b2

    # ---- residual + LayerNorm 2 (f32) ----
    x2 = x1 + ffn
    mu2 = jnp.mean(x2, axis=-1, keepdims=True)
    var2 = jnp.mean((x2 - mu2) ** 2, axis=-1, keepdims=True)
    x2 = (x2 - mu2) * lax.rsqrt(var2 + LN_EPS) * g2 + be2

    x_sc[...] = x2.reshape(B, Np, d)          # carry to next layer (stays in VMEM)

    # ---------------- epilogue (last grid step): fused 1x1 conv head --------------
    @pl.when(l == pl.num_programs(0) - 1)
    def _epilogue():
        y = jnp.dot(x2.astype(jnp.bfloat16), cw_ref[...],
                    preferred_element_type=jnp.float32) + cb_ref[...]   # [B*Np, C]
        for b in range(B):
            out_ref[b, :, :] = y[b * Np:b * Np + N, :]


def _fused_forward(context, params, s_start, s_end):
    B, S, D = context.shape
    N = S + 1
    Np = ((N + 7) // 8) * 8                      # pad rows to a sublane multiple
    lstm = params['lstm']
    enc = params['encoder']
    L, nh, d, hd = enc['wq'].shape
    F = enc['w1'].shape[-1]
    C = enc['conv_w'].shape[-1]

    kernel = functools.partial(_fused_postfinder_kernel, nh, s_start, s_end, N)

    const3 = lambda l: (0, 0, 0)
    layer3 = lambda l: (l, 0, 0)
    layer4 = lambda l: (l, 0, 0, 0)

    return pl.pallas_call(
        kernel,
        out_shape=jax.ShapeDtypeStruct((B, N, C), jnp.float32),
        grid=(L,),
        in_specs=[
            pl.BlockSpec((B, S, D), const3),                   # context (fetched once)
            pl.BlockSpec(lstm['w_ih'].shape, const3),          # LSTM W_ih, gate-major
            pl.BlockSpec(lstm['w_hh'].shape, const3),          # LSTM W_hh, gate-major
            pl.BlockSpec(lstm['b'].shape, const3),             # LSTM bias (b_ih + b_hh)
            pl.BlockSpec((None, nh, d, hd), layer4),           # per-head W_q, streamed
            pl.BlockSpec((None, nh, d, hd), layer4),           # per-head W_k
            pl.BlockSpec((None, nh, d, hd), layer4),           # per-head W_v
            pl.BlockSpec((None, nh, hd, d), layer4),           # per-head W_o rows
            pl.BlockSpec((None, 3 * nh, hd), layer3),          # q/k/v biases per head
            pl.BlockSpec((None, d, F), layer3),                # FFN W1 (bf16)
            pl.BlockSpec((None, 1, F), layer3),                # FFN b1
            pl.BlockSpec((None, F, d), layer3),                # FFN W2 (bf16)
            pl.BlockSpec((None, _NUM_VEC_ROWS, d), layer3),    # packed LN / bias vecs
            pl.BlockSpec((D, C), lambda l: (0, 0)),            # conv weight (bf16)
            pl.BlockSpec((1, C), lambda l: (0, 0)),            # conv bias
        ],
        out_specs=pl.BlockSpec((B, N, C), const3),
        scratch_shapes=[pltpu.VMEM((B, Np, d), jnp.float32)],
        compiler_params=pltpu.CompilerParams(
            dimension_semantics=("arbitrary",)),               # serial layer recurrence
    )(context, lstm['w_ih'], lstm['w_hh'], lstm['b'],
      enc['wq'], enc['wk'], enc['wv'], enc['wo'], enc['qkv_b'],
      enc['w1'], enc['b1'], enc['w2'], enc['vec'],
      enc['conv_w'], enc['conv_b'])


# --------------------------------------------------------------------------- #
# Parameter init (deterministic, synthetic) + full forward.
# --------------------------------------------------------------------------- #
def init_params(key, input_size, max_len, tag_num, dim_ff=DIM_FF,
                num_layers=NUM_LAYERS, nhead=NHEAD):
    assert max_len % nhead == 0
    assert input_size == max_len, "reference module implicitly requires input_size == max_len"
    d = max_len
    H = max_len
    hd = d // nhead

    def nrm(k, shape, scale=0.05):
        return (scale * jax.random.normal(k, shape)).astype(jnp.float32)

    keys = jax.random.split(key, 10)

    lstm = dict(
        w_ih=nrm(keys[0], (4, input_size, H)).astype(jnp.bfloat16),   # gate-major
        w_hh=nrm(keys[1], (4, H, H)).astype(jnp.bfloat16),            # gate-major
        b=nrm(keys[2], (4, 1, H)),                                    # b_ih + b_hh (f32)
    )

    wq = nrm(keys[3], (num_layers, nhead, d, hd)).astype(jnp.bfloat16)
    wk = nrm(keys[4], (num_layers, nhead, d, hd)).astype(jnp.bfloat16)
    wv = nrm(keys[5], (num_layers, nhead, d, hd)).astype(jnp.bfloat16)
    wo = nrm(keys[6], (num_layers, nhead, hd, d)).astype(jnp.bfloat16)
    qkv_b = jnp.zeros((num_layers, 3 * nhead, hd), jnp.float32)       # q|k|v per head

    w1 = nrm(keys[7], (num_layers, d, dim_ff)).astype(jnp.bfloat16)
    b1 = jnp.zeros((num_layers, 1, dim_ff), jnp.float32)
    w2 = nrm(keys[8], (num_layers, dim_ff, d)).astype(jnp.bfloat16)

    # Packed per-layer small vectors [L, 8, d]:
    # rows: bo | ln1 gain | ln1 bias | ffn b2 | ln2 gain | ln2 bias | pad | pad
    zero = jnp.zeros((d,), jnp.float32)
    one = jnp.ones((d,), jnp.float32)
    vec_one = jnp.stack([zero, one, zero, zero, one, zero, zero, zero], axis=0)
    vec = jnp.tile(vec_one[None], (num_layers, 1, 1))

    conv_w = nrm(keys[9], (d, tag_num)).astype(jnp.bfloat16)
    conv_b = jnp.zeros((1, tag_num), jnp.float32)

    encoder = dict(wq=wq, wk=wk, wv=wv, wo=wo, qkv_b=qkv_b,
                   w1=w1, b1=b1, w2=w2, vec=vec,
                   conv_w=conv_w, conv_b=conv_b)
    return dict(lstm=lstm, encoder=encoder)


def postfinder_forward(params, s_idx, context):
    s_start, s_end = s_idx                                     # static Python ints
    y = _fused_forward(context, params, s_start, s_end)        # [B, S+1, tag_num]
    # Conv1d NCL output layout; the reference's trailing .permute(0, 1, 2) is identity.
    return jnp.transpose(y, (0, 2, 1))                         # [B, tag_num, S+1]


if __name__ == "__main__":
    B, S = 2, 8
    INPUT_SIZE = 48      # == max_len (d_model), divisible by nhead=6
    MAX_LEN = 48
    TAG_NUM = 4
    s_idx = (2, 6)

    root = jax.random.PRNGKey(0)
    k_ctx, k_par = jax.random.split(root)
    context = jax.random.normal(k_ctx, (B, S, INPUT_SIZE), dtype=jnp.float32)
    params = init_params(k_par, INPUT_SIZE, MAX_LEN, TAG_NUM)

    fwd = jax.jit(functools.partial(postfinder_forward, params, s_idx))
    out = jax.block_until_ready(fwd(context))
    assert out.shape == (B, TAG_NUM, S + 1), out.shape
    assert bool(jnp.all(jnp.isfinite(out)))
    print("KERNEL_OK")
</pallas_src>

<mosaic_0001>
module attributes {stable_mosaic.version = 11 : i64} {
  func.func @_fused_postfinder_kernel(%arg0: i32, %arg1: memref<2x8x48xf32, #tpu.memory_space<vmem>>, %arg2: memref<4x48x48xbf16, #tpu.memory_space<vmem>>, %arg3: memref<4x48x48xbf16, #tpu.memory_space<vmem>>, %arg4: memref<4x1x48xf32, #tpu.memory_space<vmem>>, %arg5: memref<1x6x48x8xbf16, #tpu.memory_space<vmem>>, %arg6: memref<1x6x48x8xbf16, #tpu.memory_space<vmem>>, %arg7: memref<1x6x48x8xbf16, #tpu.memory_space<vmem>>, %arg8: memref<1x6x8x48xbf16, #tpu.memory_space<vmem>>, %arg9: memref<1x18x8xf32, #tpu.memory_space<vmem>>, %arg10: memref<1x48x2048xbf16, #tpu.memory_space<vmem>>, %arg11: memref<1x1x2048xf32, #tpu.memory_space<vmem>>, %arg12: memref<1x2048x48xbf16, #tpu.memory_space<vmem>>, %arg13: memref<1x8x48xf32, #tpu.memory_space<vmem>>, %arg14: memref<48x4xbf16, #tpu.memory_space<vmem>>, %arg15: memref<1x4xf32, #tpu.memory_space<vmem>>, %arg16: memref<2x9x4xf32, #tpu.memory_space<vmem>>, %arg17: memref<2x16x48xf32, #tpu.memory_space<vmem>>) attributes {dimension_semantics = [#tpu.dimension_semantics<arbitrary>], iteration_bounds = array<i64: 6>, scalar_prefetch = 0 : i64, scratch_operands = 1 : i64, tpu.core_type = #tpu.core_type<tc>, window_params = [{pipeline_mode = #tpu.pipeline_mode<synchronous>, transform_indices = @transform_0, window_bounds = array<i64: 2, 8, 48>}, {pipeline_mode = #tpu.pipeline_mode<synchronous>, transform_indices = @transform_1, window_bounds = array<i64: 4, 48, 48>}, {pipeline_mode = #tpu.pipeline_mode<synchronous>, transform_indices = @transform_2, window_bounds = array<i64: 4, 48, 48>}, {pipeline_mode = #tpu.pipeline_mode<synchronous>, transform_indices = @transform_3, window_bounds = array<i64: 4, 1, 48>}, {transform_indices = @transform_4, window_bounds = array<i64: 1, 6, 48, 8>}, {transform_indices = @transform_5, window_bounds = array<i64: 1, 6, 48, 8>}, {transform_indices = @transform_6, window_bounds = array<i64: 1, 6, 48, 8>}, {transform_indices = @transform_7, window_bounds = array<i64: 1, 6, 8, 48>}, {transform_indices = @transform_8, window_bounds = array<i64: 1, 18, 8>}, {transform_indices = @transform_9, window_bounds = array<i64: 1, 48, 2048>}, {transform_indices = @transform_10, window_bounds = array<i64: 1, 1, 2048>}, {transform_indices = @transform_11, window_bounds = array<i64: 1, 2048, 48>}, {transform_indices = @transform_12, window_bounds = array<i64: 1, 8, 48>}, {pipeline_mode = #tpu.pipeline_mode<synchronous>, transform_indices = @transform_13, window_bounds = array<i64: 48, 4>}, {pipeline_mode = #tpu.pipeline_mode<synchronous>, transform_indices = @transform_14, window_bounds = array<i64: 1, 4>}, {pipeline_mode = #tpu.pipeline_mode<synchronous>, transform_indices = @transform_15, window_bounds = array<i64: 2, 9, 4>}]} {
    %c0_i32 = arith.constant 0 : i32
    %0 = arith.cmpi eq, %arg0, %c0_i32 : i32
    %1 = arith.extui %0 : i1 to i32
    %c0_i32_0 = arith.constant 0 : i32
    %2 = arith.cmpi ne, %1, %c0_i32_0 : i32
    scf.if %2 {
      %c0_182 = arith.constant 0 : index
      %c0_183 = arith.constant 0 : index
      %c0_184 = arith.constant 0 : index
      %350 = vector.load %arg1[%c0_182, %c0_183, %c0_184] : memref<2x8x48xf32, #tpu.memory_space<vmem>>, vector<2x8x48xf32>
      %351 = vector.extract_strided_slice %350 {offsets = [0, 2, 0], sizes = [2, 4, 48], strides = [1, 1, 1]} : vector<2x8x48xf32> to vector<2x4x48xf32>
      %352 = arith.truncf %351 : vector<2x4x48xf32> to vector<2x4x48xbf16>
      %c0_185 = arith.constant 0 : index
      %c0_186 = arith.constant 0 : index
      %c0_187 = arith.constant 0 : index
      %353 = vector.load %arg2[%c0_185, %c0_186, %c0_187] : memref<4x48x48xbf16, #tpu.memory_space<vmem>>, vector<1x48x48xbf16>
      %354 = vector.shape_cast %353 : vector<1x48x48xbf16> to vector<48x48xbf16>
      "tpu.trace_start"() <{level = 10 : i32, message = "btd,dh->bth"}> : () -> ()
      %cst_188 = arith.constant dense<0.000000e+00> : vector<2x4x48xf32>
      %355 = tpu.matmul %352, %354, %cst_188 {dimension_numbers = #tpu.dot_dimension_numbers<[2], [0], [0, 1], [1], [0, 0, 0, 1, 1, 1], [], []>} : vector<2x4x48xbf16>, vector<48x48xbf16>, vector<2x4x48xf32> -> vector<2x4x48xf32>
      "tpu.trace_stop"() : () -> ()
      %c0_189 = arith.constant 0 : index
      %c0_190 = arith.constant 0 : index
      %c0_191 = arith.constant 0 : index
      %356 = vector.load %arg4[%c0_189, %c0_190, %c0_191] : memref<4x1x48xf32, #tpu.memory_space<vmem>>, vector<1x1x48xf32>
      %357 = vector.shape_cast %356 : vector<1x1x48xf32> to vector<1x48xf32>
      %358 = vector.shape_cast %357 : vector<1x48xf32> to vector<1x1x48xf32>
      %359 = vector.broadcast %358 : vector<1x1x48xf32> to vector<2x4x48xf32>
      %360 = arith.addf %355, %359 : vector<2x4x48xf32>
      %c1_192 = arith.constant 1 : index
      %c0_193 = arith.constant 0 : index
      %c0_194 = arith.constant 0 : index
      %361 = vector.load %arg2[%c1_192, %c0_193, %c0_194] : memref<4x48x48xbf16, #tpu.memory_space<vmem>>, vector<1x48x48xbf16>
      %362 = vector.shape_cast %361 : vector<1x48x48xbf16> to vector<48x48xbf16>
      "tpu.trace_start"() <{level = 10 : i32, message = "btd,dh->bth"}> : () -> ()
      %cst_195 = arith.constant dense<0.000000e+00> : vector<2x4x48xf32>
      %363 = tpu.matmul %352, %362, %cst_195 {dimension_numbers = #tpu.dot_dimension_numbers<[2], [0], [0, 1], [1], [0, 0, 0, 1, 1, 1], [], []>} : vector<2x4x48xbf16>, vector<48x48xbf16>, vector<2x4x48xf32> -> vector<2x4x48xf32>
      "tpu.trace_stop"() : () -> ()
      %c1_196 = arith.constant 1 : index
      %c0_197 = arith.constant 0 : index
      %c0_198 = arith.constant 0 : index
      %364 = vector.load %arg4[%c1_196, %c0_197, %c0_198] : memref<4x1x48xf32, #tpu.memory_space<vmem>>, vector<1x1x48xf32>
      %365 = vector.shape_cast %364 : vector<1x1x48xf32> to vector<1x48xf32>
      %366 = vector.shape_cast %365 : vector<1x48xf32> to vector<1x1x48xf32>
      %367 = vector.broadcast %366 : vector<1x1x48xf32> to vector<2x4x48xf32>
      %368 = arith.addf %363, %367 : vector<2x4x48xf32>
      %c2_199 = arith.constant 2 : index
      %c0_200 = arith.constant 0 : index
      %c0_201 = arith.constant 0 : index
      %369 = vector.load %arg2[%c2_199, %c0_200, %c0_201] : memref<4x48x48xbf16, #tpu.memory_space<vmem>>, vector<1x48x48xbf16>
      %370 = vector.shape_cast %369 : vector<1x48x48xbf16> to vector<48x48xbf16>
      "tpu.trace_start"() <{level = 10 : i32, message = "btd,dh->bth"}> : () -> ()
      %cst_202 = arith.constant dense<0.000000e+00> : vector<2x4x48xf32>
      %371 = tpu.matmul %352, %370, %cst_202 {dimension_numbers = #tpu.dot_dimension_numbers<[2], [0], [0, 1], [1], [0, 0, 0, 1, 1, 1], [], []>} : vector<2x4x48xbf16>, vector<48x48xbf16>, vector<2x4x48xf32> -> vector<2x4x48xf32>
      "tpu.trace_stop"() : () -> ()
      %c2_203 = arith.constant 2 : index
      %c0_204 = arith.constant 0 : index
      %c0_205 = arith.constant 0 : index
      %372 = vector.load %arg4[%c2_203, %c0_204, %c0_205] : memref<4x1x48xf32, #tpu.memory_space<vmem>>, vector<1x1x48xf32>
      %373 = vector.shape_cast %372 : vector<1x1x48xf32> to vector<1x48xf32>
      %374 = vector.shape_cast %373 : vector<1x48xf32> to vector<1x1x48xf32>
      %375 = vector.broadcast %374 : vector<1x1x48xf32> to vector<2x4x48xf32>
      %376 = arith.addf %371, %375 : vector<2x4x48xf32>
      %c3_206 = arith.constant 3 : index
      %c0_207 = arith.constant 0 : index
      %c0_208 = arith.constant 0 : index
      %377 = vector.load %arg2[%c3_206, %c0_207, %c0_208] : memref<4x48x48xbf16, #tpu.memory_space<vmem>>, vector<1x48x48xbf16>
      %378 = vector.shape_cast %377 : vector<1x48x48xbf16> to vector<48x48xbf16>
      "tpu.trace_start"() <{level = 10 : i32, message = "btd,dh->bth"}> : () -> ()
      %cst_209 = arith.constant dense<0.000000e+00> : vector<2x4x48xf32>
      %379 = tpu.matmul %352, %378, %cst_209 {dimension_numbers = #tpu.dot_dimension_numbers<[2], [0], [0, 1], [1], [0, 0, 0, 1, 1, 1], [], []>} : vector<2x4x48xbf16>, vector<48x48xbf16>, vector<2x4x48xf32> -> vector<2x4x48xf32>
      "tpu.trace_stop"() : () -> ()
      %c3_210 = arith.constant 3 : index
      %c0_211 = arith.constant 0 : index
      %c0_212 = arith.constant 0 : index
      %380 = vector.load %arg4[%c3_210, %c0_211, %c0_212] : memref<4x1x48xf32, #tpu.memory_space<vmem>>, vector<1x1x48xf32>
      %381 = vector.shape_cast %380 : vector<1x1x48xf32> to vector<1x48xf32>
      %382 = vector.shape_cast %381 : vector<1x48xf32> to vector<1x1x48xf32>
      %383 = vector.broadcast %382 : vector<1x1x48xf32> to vector<2x4x48xf32>
      %384 = arith.addf %379, %383 : vector<2x4x48xf32>
      %c0_213 = arith.constant 0 : index
      %c0_214 = arith.constant 0 : index
      %c0_215 = arith.constant 0 : index
      %385 = vector.load %arg3[%c0_213, %c0_214, %c0_215] : memref<4x48x48xbf16, #tpu.memory_space<vmem>>, vector<1x48x48xbf16>
      %386 = vector.shape_cast %385 : vector<1x48x48xbf16> to vector<48x48xbf16>
      %c1_216 = arith.constant 1 : index
      %c0_217 = arith.constant 0 : index
      %c0_218 = arith.constant 0 : index
      %387 = vector.load %arg3[%c1_216, %c0_217, %c0_218] : memref<4x48x48xbf16, #tpu.memory_space<vmem>>, vector<1x48x48xbf16>
      %388 = vector.shape_cast %387 : vector<1x48x48xbf16> to vector<48x48xbf16>
      %c2_219 = arith.constant 2 : index
      %c0_220 = arith.constant 0 : index
      %c0_221 = arith.constant 0 : index
      %389 = vector.load %arg3[%c2_219, %c0_220, %c0_221] : memref<4x48x48xbf16, #tpu.memory_space<vmem>>, vector<1x48x48xbf16>
      %390 = vector.shape_cast %389 : vector<1x48x48xbf16> to vector<48x48xbf16>
      %c3_222 = arith.constant 3 : index
      %c0_223 = arith.constant 0 : index
      %c0_224 = arith.constant 0 : index
      %391 = vector.load %arg3[%c3_222, %c0_223, %c0_224] : memref<4x48x48xbf16, #tpu.memory_space<vmem>>, vector<1x48x48xbf16>
      %392 = vector.shape_cast %391 : vector<1x48x48xbf16> to vector<48x48xbf16>
      %cst_225 = arith.constant 0.000000e+00 : f32
      %393 = vector.broadcast %cst_225 : f32 to vector<2x48xf32>
      %cst_226 = arith.constant 0.000000e+00 : f32
      %394 = vector.broadcast %cst_226 : f32 to vector<2x48xf32>
      %395 = arith.truncf %393 : vector<2x48xf32> to vector<2x48xbf16>
      %396 = vector.extract_strided_slice %360 {offsets = [0, 0, 0], sizes = [2, 1, 48], strides = [1, 1, 1]} : vector<2x4x48xf32> to vector<2x1x48xf32>
      %397 = vector.shape_cast %396 : vector<2x1x48xf32> to vector<2x48xf32>
      %cst_227 = arith.constant dense<0.000000e+00> : vector<2x48xf32>
      %398 = tpu.matmul %395, %386, %cst_227 {dimension_numbers = #tpu.dot_dimension_numbers<[1], [0], [0], [1], [0, 0, 1, 1], [], []>} : vector<2x48xbf16>, vector<48x48xbf16>, vector<2x48xf32> -> vector<2x48xf32>
      %399 = arith.addf %397, %398 : vector<2x48xf32>
      %400 = vector.extract_strided_slice %368 {offsets = [0, 0, 0], sizes = [2, 1, 48], strides = [1, 1, 1]} : vector<2x4x48xf32> to vector<2x1x48xf32>
      %401 = vector.shape_cast %400 : vector<2x1x48xf32> to vector<2x48xf32>
      %cst_228 = arith.constant dense<0.000000e+00> : vector<2x48xf32>
      %402 = tpu.matmul %395, %388, %cst_228 {dimension_numbers = #tpu.dot_dimension_numbers<[1], [0], [0], [1], [0, 0, 1, 1], [], []>} : vector<2x48xbf16>, vector<48x48xbf16>, vector<2x48xf32> -> vector<2x48xf32>
      %403 = arith.addf %401, %402 : vector<2x48xf32>
      %404 = vector.extract_strided_slice %376 {offsets = [0, 0, 0], sizes = [2, 1, 48], strides = [1, 1, 1]} : vector<2x4x48xf32> to vector<2x1x48xf32>
      %405 = vector.shape_cast %404 : vector<2x1x48xf32> to vector<2x48xf32>
      %cst_229 = arith.constant dense<0.000000e+00> : vector<2x48xf32>
      %406 = tpu.matmul %395, %390, %cst_229 {dimension_numbers = #tpu.dot_dimension_numbers<[1], [0], [0], [1], [0, 0, 1, 1], [], []>} : vector<2x48xbf16>, vector<48x48xbf16>, vector<2x48xf32> -> vector<2x48xf32>
      %407 = arith.addf %405, %406 : vector<2x48xf32>
      %408 = vector.extract_strided_slice %384 {offsets = [0, 0, 0], sizes = [2, 1, 48], strides = [1, 1, 1]} : vector<2x4x48xf32> to vector<2x1x48xf32>
      %409 = vector.shape_cast %408 : vector<2x1x48xf32> to vector<2x48xf32>
      %cst_230 = arith.constant dense<0.000000e+00> : vector<2x48xf32>
      %410 = tpu.matmul %395, %392, %cst_230 {dimension_numbers = #tpu.dot_dimension_numbers<[1], [0], [0], [1], [0, 0, 1, 1], [], []>} : vector<2x48xbf16>, vector<48x48xbf16>, vector<2x48xf32> -> vector<2x48xf32>
      %411 = arith.addf %409, %410 : vector<2x48xf32>
      %412 = arith.negf %399 : vector<2x48xf32>
      %413 = math.exp %412 : vector<2x48xf32>
      %cst_231 = arith.constant 1.000000e+00 : f32
      %414 = vector.broadcast %cst_231 : f32 to vector<2x48xf32>
      %415 = arith.addf %414, %413 : vector<2x48xf32>
      %416 = arith.divf %414, %415 : vector<2x48xf32>
      %417 = arith.negf %403 : vector<2x48xf32>
      %418 = math.exp %417 : vector<2x48xf32>
      %cst_232 = arith.constant 1.000000e+00 : f32
      %419 = vector.broadcast %cst_232 : f32 to vector<2x48xf32>
      %420 = arith.addf %419, %418 : vector<2x48xf32>
      %421 = arith.divf %419, %420 : vector<2x48xf32>
      %422 = math.tanh %407 : vector<2x48xf32>
      %423 = arith.negf %411 : vector<2x48xf32>
      %424 = math.exp %423 : vector<2x48xf32>
      %cst_233 = arith.constant 1.000000e+00 : f32
      %425 = vector.broadcast %cst_233 : f32 to vector<2x48xf32>
      %426 = arith.addf %425, %424 : vector<2x48xf32>
      %427 = arith.divf %425, %426 : vector<2x48xf32>
      %428 = arith.mulf %421, %394 : vector<2x48xf32>
      %429 = arith.mulf %416, %422 : vector<2x48xf32>
      %430 = arith.addf %428, %429 : vector<2x48xf32>
      %431 = math.tanh %430 : vector<2x48xf32>
      %432 = arith.mulf %427, %431 : vector<2x48xf32>
      %433 = arith.truncf %432 : vector<2x48xf32> to vector<2x48xbf16>
      %434 = vector.extract_strided_slice %360 {offsets = [0, 1, 0], sizes = [2, 1, 48], strides = [1, 1, 1]} : vector<2x4x48xf32> to vector<2x1x48xf32>
      %435 = vector.shape_cast %434 : vector<2x1x48xf32> to vector<2x48xf32>
      %cst_234 = arith.constant dense<0.000000e+00> : vector<2x48xf32>
      %436 = tpu.matmul %433, %386, %cst_234 {dimension_numbers = #tpu.dot_dimension_numbers<[1], [0], [0], [1], [0, 0, 1, 1], [], []>} : vector<2x48xbf16>, vector<48x48xbf16>, vector<2x48xf32> -> vector<2x48xf32>
      %437 = arith.addf %435, %436 : vector<2x48xf32>
      %438 = vector.extract_strided_slice %368 {offsets = [0, 1, 0], sizes = [2, 1, 48], strides = [1, 1, 1]} : vector<2x4x48xf32> to vector<2x1x48xf32>
      %439 = vector.shape_cast %438 : vector<2x1x48xf32> to vector<2x48xf32>
      %cst_235 = arith.constant dense<0.000000e+00> : vector<2x48xf32>
      %440 = tpu.matmul %433, %388, %cst_235 {dimension_numbers = #tpu.dot_dimension_numbers<[1], [0], [0], [1], [0, 0, 1, 1], [], []>} : vector<2x48xbf16>, vector<48x48xbf16>, vector<2x48xf32> -> vector<2x48xf32>
      %441 = arith.addf %439, %440 : vector<2x48xf32>
      %442 = vector.extract_strided_slice %376 {offsets = [0, 1, 0], sizes = [2, 1, 48], strides = [1, 1, 1]} : vector<2x4x48xf32> to vector<2x1x48xf32>
      %443 = vector.shape_cast %442 : vector<2x1x48xf32> to vector<2x48xf32>
      %cst_236 = arith.constant dense<0.000000e+00> : vector<2x48xf32>
      %444 = tpu.matmul %433, %390, %cst_236 {dimension_numbers = #tpu.dot_dimension_numbers<[1], [0], [0], [1], [0, 0, 1, 1], [], []>} : vector<2x48xbf16>, vector<48x48xbf16>, vector<2x48xf32> -> vector<2x48xf32>
      %445 = arith.addf %443, %444 : vector<2x48xf32>
      %446 = vector.extract_strided_slice %384 {offsets = [0, 1, 0], sizes = [2, 1, 48], strides = [1, 1, 1]} : vector<2x4x48xf32> to vector<2x1x48xf32>
      %447 = vector.shape_cast %446 : vector<2x1x48xf32> to vector<2x48xf32>
      %cst_237 = arith.constant dense<0.000000e+00> : vector<2x48xf32>
      %448 = tpu.matmul %433, %392, %cst_237 {dimension_numbers = #tpu.dot_dimension_numbers<[1], [0], [0], [1], [0, 0, 1, 1], [], []>} : vector<2x48xbf16>, vector<48x48xbf16>, vector<2x48xf32> -> vector<2x48xf32>
      %449 = arith.addf %447, %448 : vector<2x48xf32>
      %450 = arith.negf %437 : vector<2x48xf32>
      %451 = math.exp %450 : vector<2x48xf32>
      %cst_238 = arith.constant 1.000000e+00 : f32
      %452 = vector.broadcast %cst_238 : f32 to vector<2x48xf32>
      %453 = arith.addf %452, %451 : vector<2x48xf32>
      %454 = arith.divf %452, %453 : vector<2x48xf32>
      %455 = arith.negf %441 : vector<2x48xf32>
      %456 = math.exp %455 : vector<2x48xf32>
      %cst_239 = arith.constant 1.000000e+00 : f32
      %457 = vector.broadcast %cst_239 : f32 to vector<2x48xf32>
      %458 = arith.addf %457, %456 : vector<2x48xf32>
      %459 = arith.divf %457, %458 : vector<2x48xf32>
      %460 = math.tanh %445 : vector<2x48xf32>
      %461 = arith.negf %449 : vector<2x48xf32>
      %462 = math.exp %461 : vector<2x48xf32>
      %cst_240 = arith.constant 1.000000e+00 : f32
      %463 = vector.broadcast %cst_240 : f32 to vector<2x48xf32>
      %464 = arith.addf %463, %462 : vector<2x48xf32>
      %465 = arith.divf %463, %464 : vector<2x48xf32>
      %466 = arith.mulf %459, %430 : vector<2x48xf32>
      %467 = arith.mulf %454, %460 : vector<2x48xf32>
      %468 = arith.addf %466, %467 : vector<2x48xf32>
      %469 = math.tanh %468 : vector<2x48xf32>
      %470 = arith.mulf %465, %469 : vector<2x48xf32>
      %471 = arith.truncf %470 : vector<2x48xf32> to vector<2x48xbf16>
      %472 = vector.extract_strided_slice %360 {offsets = [0, 2, 0], sizes = [2, 1, 48], strides = [1, 1, 1]} : vector<2x4x48xf32> to vector<2x1x48xf32>
      %473 = vector.shape_cast %472 : vector<2x1x48xf32> to vector<2x48xf32>
      %cst_241 = arith.constant dense<0.000000e+00> : vector<2x48xf32>
      %474 = tpu.matmul %471, %386, %cst_241 {dimension_numbers = #tpu.dot_dimension_numbers<[1], [0], [0], [1], [0, 0, 1, 1], [], []>} : vector<2x48xbf16>, vector<48x48xbf16>, vector<2x48xf32> -> vector<2x48xf32>
      %475 = arith.addf %473, %474 : vector<2x48xf32>
      %476 = vector.extract_strided_slice %368 {offsets = [0, 2, 0], sizes = [2, 1, 48], strides = [1, 1, 1]} : vector<2x4x48xf32> to vector<2x1x48xf32>
      %477 = vector.shape_cast %476 : vector<2x1x48xf32> to vector<2x48xf32>
      %cst_242 = arith.constant dense<0.000000e+00> : vector<2x48xf32>
      %478 = tpu.matmul %471, %388, %cst_242 {dimension_numbers = #tpu.dot_dimension_numbers<[1], [0], [0], [1], [0, 0, 1, 1], [], []>} : vector<2x48xbf16>, vector<48x48xbf16>, vector<2x48xf32> -> vector<2x48xf32>
      %479 = arith.addf %477, %478 : vector<2x48xf32>
      %480 = vector.extract_strided_slice %376 {offsets = [0, 2, 0], sizes = [2, 1, 48], strides = [1, 1, 1]} : vector<2x4x48xf32> to vector<2x1x48xf32>
      %481 = vector.shape_cast %480 : vector<2x1x48xf32> to vector<2x48xf32>
      %cst_243 = arith.constant dense<0.000000e+00> : vector<2x48xf32>
      %482 = tpu.matmul %471, %390, %cst_243 {dimension_numbers = #tpu.dot_dimension_numbers<[1], [0], [0], [1], [0, 0, 1, 1], [], []>} : vector<2x48xbf16>, vector<48x48xbf16>, vector<2x48xf32> -> vector<2x48xf32>
      %483 = arith.addf %481, %482 : vector<2x48xf32>
      %484 = vector.extract_strided_slice %384 {offsets = [0, 2, 0], sizes = [2, 1, 48], strides = [1, 1, 1]} : vector<2x4x48xf32> to vector<2x1x48xf32>
      %485 = vector.shape_cast %484 : vector<2x1x48xf32> to vector<2x48xf32>
      %cst_244 = arith.constant dense<0.000000e+00> : vector<2x48xf32>
      %486 = tpu.matmul %471, %392, %cst_244 {dimension_numbers = #tpu.dot_dimension_numbers<[1], [0], [0], [1], [0, 0, 1, 1], [], []>} : vector<2x48xbf16>, vector<48x48xbf16>, vector<2x48xf32> -> vector<2x48xf32>
      %487 = arith.addf %485, %486 : vector<2x48xf32>
      %488 = arith.negf %475 : vector<2x48xf32>
      %489 = math.exp %488 : vector<2x48xf32>
      %cst_245 = arith.constant 1.000000e+00 : f32
      %490 = vector.broadcast %cst_245 : f32 to vector<2x48xf32>
      %491 = arith.addf %490, %489 : vector<2x48xf32>
      %492 = arith.divf %490, %491 : vector<2x48xf32>
      %493 = arith.negf %479 : vector<2x48xf32>
      %494 = math.exp %493 : vector<2x48xf32>
      %cst_246 = arith.constant 1.000000e+00 : f32
      %495 = vector.broadcast %cst_246 : f32 to vector<2x48xf32>
      %496 = arith.addf %495, %494 : vector<2x48xf32>
      %497 = arith.divf %495, %496 : vector<2x48xf32>
      %498 = math.tanh %483 : vector<2x48xf32>
      %499 = arith.negf %487 : vector<2x48xf32>
      %500 = math.exp %499 : vector<2x48xf32>
      %cst_247 = arith.constant 1.000000e+00 : f32
      %501 = vector.broadcast %cst_247 : f32 to vector<2x48xf32>
      %502 = arith.addf %501, %500 : vector<2x48xf32>
      %503 = arith.divf %501, %502 : vector<2x48xf32>
      %504 = arith.mulf %497, %468 : vector<2x48xf32>
      %505 = arith.mulf %492, %498 : vector<2x48xf32>
      %506 = arith.addf %504, %505 : vector<2x48xf32>
      %507 = math.tanh %506 : vector<2x48xf32>
      %508 = arith.mulf %503, %507 : vector<2x48xf32>
      %509 = arith.truncf %508 : vector<2x48xf32> to vector<2x48xbf16>
      %510 = vector.extract_strided_slice %360 {offsets = [0, 3, 0], sizes = [2, 1, 48], strides = [1, 1, 1]} : vector<2x4x48xf32> to vector<2x1x48xf32>
      %511 = vector.shape_cast %510 : vector<2x1x48xf32> to vector<2x48xf32>
      %cst_248 = arith.constant dense<0.000000e+00> : vector<2x48xf32>
      %512 = tpu.matmul %509, %386, %cst_248 {dimension_numbers = #tpu.dot_dimension_numbers<[1], [0], [0], [1], [0, 0, 1, 1], [], []>} : vector<2x48xbf16>, vector<48x48xbf16>, vector<2x48xf32> -> vector<2x48xf32>
      %513 = arith.addf %511, %512 : vector<2x48xf32>
      %514 = vector.extract_strided_slice %368 {offsets = [0, 3, 0], sizes = [2, 1, 48], strides = [1, 1, 1]} : vector<2x4x48xf32> to vector<2x1x48xf32>
      %515 = vector.shape_cast %514 : vector<2x1x48xf32> to vector<2x48xf32>
      %cst_249 = arith.constant dense<0.000000e+00> : vector<2x48xf32>
      %516 = tpu.matmul %509, %388, %cst_249 {dimension_numbers = #tpu.dot_dimension_numbers<[1], [0], [0], [1], [0, 0, 1, 1], [], []>} : vector<2x48xbf16>, vector<48x48xbf16>, vector<2x48xf32> -> vector<2x48xf32>
      %517 = arith.addf %515, %516 : vector<2x48xf32>
      %518 = vector.extract_strided_slice %376 {offsets = [0, 3, 0], sizes = [2, 1, 48], strides = [1, 1, 1]} : vector<2x4x48xf32> to vector<2x1x48xf32>
      %519 = vector.shape_cast %518 : vector<2x1x48xf32> to vector<2x48xf32>
      %cst_250 = arith.constant dense<0.000000e+00> : vector<2x48xf32>
      %520 = tpu.matmul %509, %390, %cst_250 {dimension_numbers = #tpu.dot_dimension_numbers<[1], [0], [0], [1], [0, 0, 1, 1], [], []>} : vector<2x48xbf16>, vector<48x48xbf16>, vector<2x48xf32> -> vector<2x48xf32>
      %521 = arith.addf %519, %520 : vector<2x48xf32>
      %522 = vector.extract_strided_slice %384 {offsets = [0, 3, 0], sizes = [2, 1, 48], strides = [1, 1, 1]} : vector<2x4x48xf32> to vector<2x1x48xf32>
      %523 = vector.shape_cast %522 : vector<2x1x48xf32> to vector<2x48xf32>
      %cst_251 = arith.constant dense<0.000000e+00> : vector<2x48xf32>
      %524 = tpu.matmul %509, %392, %cst_251 {dimension_numbers = #tpu.dot_dimension_numbers<[1], [0], [0], [1], [0, 0, 1, 1], [], []>} : vector<2x48xbf16>, vector<48x48xbf16>, vector<2x48xf32> -> vector<2x48xf32>
      %525 = arith.addf %523, %524 : vector<2x48xf32>
      %526 = arith.negf %513 : vector<2x48xf32>
      %527 = math.exp %526 : vector<2x48xf32>
      %cst_252 = arith.constant 1.000000e+00 : f32
      %528 = vector.broadcast %cst_252 : f32 to vector<2x48xf32>
      %529 = arith.addf %528, %527 : vector<2x48xf32>
      %530 = arith.divf %528, %529 : vector<2x48xf32>
      %531 = arith.negf %517 : vector<2x48xf32>
      %532 = math.exp %531 : vector<2x48xf32>
      %cst_253 = arith.constant 1.000000e+00 : f32
      %533 = vector.broadcast %cst_253 : f32 to vector<2x48xf32>
      %534 = arith.addf %533, %532 : vector<2x48xf32>
      %535 = arith.divf %533, %534 : vector<2x48xf32>
      %536 = math.tanh %521 : vector<2x48xf32>
      %537 = arith.negf %525 : vector<2x48xf32>
      %538 = math.exp %537 : vector<2x48xf32>
      %cst_254 = arith.constant 1.000000e+00 : f32
      %539 = vector.broadcast %cst_254 : f32 to vector<2x48xf32>
      %540 = arith.addf %539, %538 : vector<2x48xf32>
      %541 = arith.divf %539, %540 : vector<2x48xf32>
      %542 = arith.mulf %535, %506 : vector<2x48xf32>
      %543 = arith.mulf %530, %536 : vector<2x48xf32>
      %544 = arith.addf %542, %543 : vector<2x48xf32>
      %545 = math.tanh %544 : vector<2x48xf32>
      %546 = arith.mulf %541, %545 : vector<2x48xf32>
      %cst_255 = arith.constant 0.000000e+00 : f32
      %547 = vector.broadcast %cst_255 : f32 to vector<2x16x48xf32>
      %c0_256 = arith.constant 0 : index
      %c0_257 = arith.constant 0 : index
      %c0_258 = arith.constant 0 : index
      %548 = vector.load %arg17[%c0_256, %c0_257, %c0_258] : memref<2x16x48xf32, #tpu.memory_space<vmem>>, vector<2x16x48xf32>
      tpu.vector_store %arg17[%c0_256, %c0_257, %c0_258], %547 {strides = array<i32>} : memref<2x16x48xf32, #tpu.memory_space<vmem>>, vector<2x16x48xf32>,
      %549 = vector.extract_strided_slice %546 {offsets = [0, 0], sizes = [1, 48], strides = [1, 1]} : vector<2x48xf32> to vector<1x48xf32>
      %c0_259 = arith.constant 0 : index
      %c0_260 = arith.constant 0 : index
      %c0_261 = arith.constant 0 : index
      %550 = vector.load %arg17[%c0_259, %c0_260, %c0_261] : memref<2x16x48xf32, #tpu.memory_space<vmem>>, vector<1x1x48xf32>
      %551 = vector.shape_cast %550 : vector<1x1x48xf32> to vector<1x48xf32>
      %552 = vector.shape_cast %549 : vector<1x48xf32> to vector<1x1x48xf32>
      tpu.vector_store %arg17[%c0_259, %c0_260, %c0_261], %552 {strides = array<i32>} : memref<2x16x48xf32, #tpu.memory_space<vmem>>, vector<1x1x48xf32>,
      %553 = vector.extract_strided_slice %350 {offsets = [0, 0, 0], sizes = [1, 8, 48], strides = [1, 1, 1]} : vector<2x8x48xf32> to vector<1x8x48xf32>
      %554 = vector.shape_cast %553 : vector<1x8x48xf32> to vector<8x48xf32>
      %c0_262 = arith.constant 0 : index
      %c1_263 = arith.constant 1 : index
      %c0_264 = arith.constant 0 : index
      %555 = vector.load %arg17[%c0_262, %c1_263, %c0_264] : memref<2x16x48xf32, #tpu.memory_space<vmem>>, vector<1x8x48xf32>
      %556 = vector.shape_cast %555 : vector<1x8x48xf32> to vector<8x48xf32>
      %557 = vector.shape_cast %554 : vector<8x48xf32> to vector<1x8x48xf32>
      tpu.vector_store %arg17[%c0_262, %c1_263, %c0_264], %557 {strides = array<i32>} : memref<2x16x48xf32, #tpu.memory_space<vmem>>, vector<1x8x48xf32>,
      %558 = vector.extract_strided_slice %546 {offsets = [1, 0], sizes = [1, 48], strides = [1, 1]} : vector<2x48xf32> to vector<1x48xf32>
      %c1_265 = arith.constant 1 : index
      %c0_266 = arith.constant 0 : index
      %c0_267 = arith.constant 0 : index
      %559 = vector.load %arg17[%c1_265, %c0_266, %c0_267] : memref<2x16x48xf32, #tpu.memory_space<vmem>>, vector<1x1x48xf32>
      %560 = vector.shape_cast %559 : vector<1x1x48xf32> to vector<1x48xf32>
      %561 = vector.shape_cast %558 : vector<1x48xf32> to vector<1x1x48xf32>
      tpu.vector_store %arg17[%c1_265, %c0_266, %c0_267], %561 {strides = array<i32>} : memref<2x16x48xf32, #tpu.memory_space<vmem>>, vector<1x1x48xf32>,
      %562 = vector.extract_strided_slice %350 {offsets = [1, 0, 0], sizes = [1, 8, 48], strides = [1, 1, 1]} : vector<2x8x48xf32> to vector<1x8x48xf32>
      %563 = vector.shape_cast %562 : vector<1x8x48xf32> to vector<8x48xf32>
      %c1_268 = arith.constant 1 : index
      %c1_269 = arith.constant 1 : index
      %c0_270 = arith.constant 0 : index
      %564 = vector.load %arg17[%c1_268, %c1_269, %c0_270] : memref<2x16x48xf32, #tpu.memory_space<vmem>>, vector<1x8x48xf32>
      %565 = vector.shape_cast %564 : vector<1x8x48xf32> to vector<8x48xf32>
      %566 = vector.shape_cast %563 : vector<8x48xf32> to vector<1x8x48xf32>
      tpu.vector_store %arg17[%c1_268, %c1_269, %c0_270], %566 {strides = array<i32>} : memref<2x16x48xf32, #tpu.memory_space<vmem>>, vector<1x8x48xf32>,
    } else {
    }
    %c0 = arith.constant 0 : index
    %c0_1 = arith.constant 0 : index
    %c0_2 = arith.constant 0 : index
    %3 = vector.load %arg17[%c0, %c0_1, %c0_2] : memref<2x16x48xf32, #tpu.memory_space<vmem>>, vector<2x16x48xf32>
    %4 = vector.shape_cast %3 : vector<2x16x48xf32> to vector<32x48xf32>
    %5 = arith.truncf %4 : vector<32x48xf32> to vector<32x48xbf16>
    %c0_3 = arith.constant 0 : index
    %c0_4 = arith.constant 0 : index
    %c0_5 = arith.constant 0 : index
    %6 = vector.load %arg13[%c0_3, %c0_4, %c0_5] : memref<1x8x48xf32, #tpu.memory_space<vmem>>, vector<1x8x48xf32>
    %7 = vector.shape_cast %6 : vector<1x8x48xf32> to vector<8x48xf32>
    %8 = vector.extract_strided_slice %7 {offsets = [0, 0], sizes = [1, 48], strides = [1, 1]} : vector<8x48xf32> to vector<1x48xf32>
    %9 = vector.extract_strided_slice %7 {offsets = [1, 0], sizes = [1, 48], strides = [1, 1]} : vector<8x48xf32> to vector<1x48xf32>
    %10 = vector.extract_strided_slice %7 {offsets = [2, 0], sizes = [1, 48], strides = [1, 1]} : vector<8x48xf32> to vector<1x48xf32>
    %11 = vector.extract_strided_slice %7 {offsets = [3, 0], sizes = [1, 48], strides = [1, 1]} : vector<8x48xf32> to vector<1x48xf32>
    %12 = vector.extract_strided_slice %7 {offsets = [4, 0], sizes = [1, 48], strides = [1, 1]} : vector<8x48xf32> to vector<1x48xf32>
    %13 = vector.extract_strided_slice %7 {offsets = [5, 0], sizes = [1, 48], strides = [1, 1]} : vector<8x48xf32> to vector<1x48xf32>
    %c0_6 = arith.constant 0 : index
    %c0_7 = arith.constant 0 : index
    %c0_8 = arith.constant 0 : index
    %14 = vector.load %arg9[%c0_6, %c0_7, %c0_8] : memref<1x18x8xf32, #tpu.memory_space<vmem>>, vector<1x18x8xf32>
    %15 = vector.shape_cast %14 : vector<1x18x8xf32> to vector<18x8xf32>
    %16 = tpu.iota {dimensions = array<i32: 2>} : vector<1x16x16xi32>
    %c9_i32 = arith.constant 9 : i32
    %17 = vector.broadcast %c9_i32 : i32 to vector<1x16x16xi32>
    %18 = arith.cmpi sge, %16, %17 : vector<1x16x16xi32>
    %cst = arith.constant -1.000000e+30 : f32
    %cst_9 = arith.constant 0.000000e+00 : f32
    %19 = vector.broadcast %cst : f32 to vector<1x16x16xf32>
    %20 = vector.broadcast %cst_9 : f32 to vector<1x16x16xf32>
    %21 = arith.select %18, %19, %20 : vector<1x16x16xi1>, vector<1x16x16xf32>
    %cst_10 = arith.constant 0.000000e+00 : f32
    %22 = vector.broadcast %cst_10 : f32 to vector<32x48xf32>
    %c0_11 = arith.constant 0 : index
    %c0_12 = arith.constant 0 : index
    %c0_13 = arith.constant 0 : index
    %c0_14 = arith.constant 0 : index
    %23 = vector.load %arg5[%c0_11, %c0_12, %c0_13, %c0_14] : memref<1x6x48x8xbf16, #tpu.memory_space<vmem>>, vector<1x1x48x8xbf16>
    %24 = vector.shape_cast %23 : vector<1x1x48x8xbf16> to vector<48x8xbf16>
    %cst_15 = arith.constant dense<0.000000e+00> : vector<32x8xf32>
    %25 = tpu.matmul %5, %24, %cst_15 {dimension_numbers = #tpu.dot_dimension_numbers<[1], [0], [0], [1], [0, 0, 1, 1], [], []>} : vector<32x48xbf16>, vector<48x8xbf16>, vector<32x8xf32> -> vector<32x8xf32>
    %26 = vector.extract_strided_slice %15 {offsets = [0, 0], sizes = [1, 8], strides = [1, 1]} : vector<18x8xf32> to vector<1x8xf32>
    %27 = vector.broadcast %26 : vector<1x8xf32> to vector<32x8xf32>
    %28 = arith.addf %25, %27 : vector<32x8xf32>
    %c0_16 = arith.constant 0 : index
    %c0_17 = arith.constant 0 : index
    %c0_18 = arith.constant 0 : index
    %c0_19 = arith.constant 0 : index
    %29 = vector.load %arg6[%c0_16, %c0_17, %c0_18, %c0_19] : memref<1x6x48x8xbf16, #tpu.memory_space<vmem>>, vector<1x1x48x8xbf16>
    %30 = vector.shape_cast %29 : vector<1x1x48x8xbf16> to vector<48x8xbf16>
    %cst_20 = arith.constant dense<0.000000e+00> : vector<32x8xf32>
    %31 = tpu.matmul %5, %30, %cst_20 {dimension_numbers = #tpu.dot_dimension_numbers<[1], [0], [0], [1], [0, 0, 1, 1], [], []>} : vector<32x48xbf16>, vector<48x8xbf16>, vector<32x8xf32> -> vector<32x8xf32>
    %32 = vector.extract_strided_slice %15 {offsets = [6, 0], sizes = [1, 8], strides = [1, 1]} : vector<18x8xf32> to vector<1x8xf32>
    %33 = vector.broadcast %32 : vector<1x8xf32> to vector<32x8xf32>
    %34 = arith.addf %31, %33 : vector<32x8xf32>
    %c0_21 = arith.constant 0 : index
    %c0_22 = arith.constant 0 : index
    %c0_23 = arith.constant 0 : index
    %c0_24 = arith.constant 0 : index
    %35 = vector.load %arg7[%c0_21, %c0_22, %c0_23, %c0_24] : memref<1x6x48x8xbf16, #tpu.memory_space<vmem>>, vector<1x1x48x8xbf16>
    %36 = vector.shape_cast %35 : vector<1x1x48x8xbf16> to vector<48x8xbf16>
    %cst_25 = arith.constant dense<0.000000e+00> : vector<32x8xf32>
    %37 = tpu.matmul %5, %36, %cst_25 {dimension_numbers = #tpu.dot_dimension_numbers<[1], [0], [0], [1], [0, 0, 1, 1], [], []>} : vector<32x48xbf16>, vector<48x8xbf16>, vector<32x8xf32> -> vector<32x8xf32>
    %38 = vector.extract_strided_slice %15 {offsets = [12, 0], sizes = [1, 8], strides = [1, 1]} : vector<18x8xf32> to vector<1x8xf32>
    %39 = vector.broadcast %38 : vector<1x8xf32> to vector<32x8xf32>
    %40 = arith.addf %37, %39 : vector<32x8xf32>
    %41 = vector.shape_cast %28 : vector<32x8xf32> to vector<2x16x8xf32>
    %42 = vector.shape_cast %34 : vector<32x8xf32> to vector<2x16x8xf32>
    %43 = vector.shape_cast %40 : vector<32x8xf32> to vector<2x16x8xf32>
    "tpu.trace_start"() <{level = 10 : i32, message = "bne,bme->bnm"}> : () -> ()
    %cst_26 = arith.constant dense<0.000000e+00> : vector<2x16x16xf32>
    %44 = tpu.matmul %41, %42, %cst_26 {dimension_numbers = #tpu.dot_dimension_numbers<[2], [2], [1], [1], [0, 0, 0, 1, 1, 1], [0], [0]>} : vector<2x16x8xf32>, vector<2x16x8xf32>, vector<2x16x16xf32> -> vector<2x16x16xf32>
    "tpu.trace_stop"() : () -> ()
    %cst_27 = arith.constant 0.353553385 : f32
    %45 = vector.broadcast %cst_27 : f32 to vector<2x16x16xf32>
    %46 = arith.mulf %44, %45 : vector<2x16x16xf32>
    %47 = vector.broadcast %21 : vector<1x16x16xf32> to vector<2x16x16xf32>
    %48 = arith.addf %46, %47 : vector<2x16x16xf32>
    %cst_28 = arith.constant dense<0xFF800000> : vector<2x16xf32>
    %49 = vector.multi_reduction <maximumf>, %48, %cst_28 [2] : vector<2x16x16xf32> to vector<2x16xf32>
    %50 = vector.shape_cast %49 : vector<2x16xf32> to vector<2x16x1xf32>
    %51 = vector.broadcast %50 : vector<2x16x1xf32> to vector<2x16x16xf32>
    %52 = arith.subf %48, %51 : vector<2x16x16xf32>
    %53 = math.exp %52 : vector<2x16x16xf32>
    %cst_29 = arith.constant dense<0.000000e+00> : vector<2x16xf32>
    %54 = vector.multi_reduction <add>, %53, %cst_29 [2] : vector<2x16x16xf32> to vector<2x16xf32>
    %55 = vector.shape_cast %54 : vector<2x16xf32> to vector<2x16x1xf32>
    %56 = tpu.reciprocal %55 {approx = true} : vector<2x16x1xf32> -> vector<2x16x1xf32>
    %57 = vector.broadcast %56 : vector<2x16x1xf32> to vector<2x16x16xf32>
    %58 = arith.mulf %53, %57 : vector<2x16x16xf32>
    "tpu.trace_start"() <{level = 10 : i32, message = "bnm,bme->bne"}> : () -> ()
    %cst_30 = arith.constant dense<0.000000e+00> : vector<2x16x8xf32>
    %59 = tpu.matmul %58, %43, %cst_30 {dimension_numbers = #tpu.dot_dimension_numbers<[2], [1], [1], [2], [0, 0, 0, 1, 1, 2], [0], [0]>} : vector<2x16x16xf32>, vector<2x16x8xf32>, vector<2x16x8xf32> -> vector<2x16x8xf32>
    "tpu.trace_stop"() : () -> ()
    %60 = vector.shape_cast %59 : vector<2x16x8xf32> to vector<32x8xf32>
    %61 = arith.truncf %60 : vector<32x8xf32> to vector<32x8xbf16>
    %c0_31 = arith.constant 0 : index
    %c0_32 = arith.constant 0 : index
    %c0_33 = arith.constant 0 : index
    %c0_34 = arith.constant 0 : index
    %62 = vector.load %arg8[%c0_31, %c0_32, %c0_33, %c0_34] : memref<1x6x8x48xbf16, #tpu.memory_space<vmem>>, vector<1x1x8x48xbf16>
    %63 = vector.shape_cast %62 : vector<1x1x8x48xbf16> to vector<8x48xbf16>
    %cst_35 = arith.constant dense<0.000000e+00> : vector<32x48xf32>
    %64 = tpu.matmul %61, %63, %cst_35 {dimension_numbers = #tpu.dot_dimension_numbers<[1], [0], [0], [1], [0, 0, 1, 1], [], []>} : vector<32x8xbf16>, vector<8x48xbf16>, vector<32x48xf32> -> vector<32x48xf32>
    %65 = arith.addf %22, %64 : vector<32x48xf32>
    %c0_36 = arith.constant 0 : index
    %c1 = arith.constant 1 : index
    %c0_37 = arith.constant 0 : index
    %c0_38 = arith.constant 0 : index
    %66 = vector.load %arg5[%c0_36, %c1, %c0_37, %c0_38] : memref<1x6x48x8xbf16, #tpu.memory_space<vmem>>, vector<1x1x48x8xbf16>
    %67 = vector.shape_cast %66 : vector<1x1x48x8xbf16> to vector<48x8xbf16>
    %cst_39 = arith.constant dense<0.000000e+00> : vector<32x8xf32>
    %68 = tpu.matmul %5, %67, %cst_39 {dimension_numbers = #tpu.dot_dimension_numbers<[1], [0], [0], [1], [0, 0, 1, 1], [], []>} : vector<32x48xbf16>, vector<48x8xbf16>, vector<32x8xf32> -> vector<32x8xf32>
    %69 = vector.extract_strided_slice %15 {offsets = [1, 0], sizes = [1, 8], strides = [1, 1]} : vector<18x8xf32> to vector<1x8xf32>
    %70 = vector.broadcast %69 : vector<1x8xf32> to vector<32x8xf32>
    %71 = arith.addf %68, %70 : vector<32x8xf32>
    %c0_40 = arith.constant 0 : index
    %c1_41 = arith.constant 1 : index
    %c0_42 = arith.constant 0 : index
    %c0_43 = arith.constant 0 : index
    %72 = vector.load %arg6[%c0_40, %c1_41, %c0_42, %c0_43] : memref<1x6x48x8xbf16, #tpu.memory_space<vmem>>, vector<1x1x48x8xbf16>
    %73 = vector.shape_cast %72 : vector<1x1x48x8xbf16> to vector<48x8xbf16>
    %cst_44 = arith.constant dense<0.000000e+00> : vector<32x8xf32>
    %74 = tpu.matmul %5, %73, %cst_44 {dimension_numbers = #tpu.dot_dimension_numbers<[1], [0], [0], [1], [0, 0, 1, 1], [], []>} : vector<32x48xbf16>, vector<48x8xbf16>, vector<32x8xf32> -> vector<32x8xf32>
    %75 = vector.extract_strided_slice %15 {offsets = [7, 0], sizes = [1, 8], strides = [1, 1]} : vector<18x8xf32> to vector<1x8xf32>
    %76 = vector.broadcast %75 : vector<1x8xf32> to vector<32x8xf32>
    %77 = arith.addf %74, %76 : vector<32x8xf32>
    %c0_45 = arith.constant 0 : index
    %c1_46 = arith.constant 1 : index
    %c0_47 = arith.constant 0 : index
    %c0_48 = arith.constant 0 : index
    %78 = vector.load %arg7[%c0_45, %c1_46, %c0_47, %c0_48] : memref<1x6x48x8xbf16, #tpu.memory_space<vmem>>, vector<1x1x48x8xbf16>
    %79 = vector.shape_cast %78 : vector<1x1x48x8xbf16> to vector<48x8xbf16>
    %cst_49 = arith.constant dense<0.000000e+00> : vector<32x8xf32>
    %80 = tpu.matmul %5, %79, %cst_49 {dimension_numbers = #tpu.dot_dimension_numbers<[1], [0], [0], [1], [0, 0, 1, 1], [], []>} : vector<32x48xbf16>, vector<48x8xbf16>, vector<32x8xf32> -> vector<32x8xf32>
    %81 = vector.extract_strided_slice %15 {offsets = [13, 0], sizes = [1, 8], strides = [1, 1]} : vector<18x8xf32> to vector<1x8xf32>
    %82 = vector.broadcast %81 : vector<1x8xf32> to vector<32x8xf32>
    %83 = arith.addf %80, %82 : vector<32x8xf32>
    %84 = vector.shape_cast %71 : vector<32x8xf32> to vector<2x16x8xf32>
    %85 = vector.shape_cast %77 : vector<32x8xf32> to vector<2x16x8xf32>
    %86 = vector.shape_cast %83 : vector<32x8xf32> to vector<2x16x8xf32>
    "tpu.trace_start"() <{level = 10 : i32, message = "bne,bme->bnm"}> : () -> ()
    %cst_50 = arith.constant dense<0.000000e+00> : vector<2x16x16xf32>
    %87 = tpu.matmul %84, %85, %cst_50 {dimension_numbers = #tpu.dot_dimension_numbers<[2], [2], [1], [1], [0, 0, 0, 1, 1, 1], [0], [0]>} : vector<2x16x8xf32>, vector<2x16x8xf32>, vector<2x16x16xf32> -> vector<2x16x16xf32>
    "tpu.trace_stop"() : () -> ()
    %cst_51 = arith.constant 0.353553385 : f32
    %88 = vector.broadcast %cst_51 : f32 to vector<2x16x16xf32>
    %89 = arith.mulf %87, %88 : vector<2x16x16xf32>
    %90 = vector.broadcast %21 : vector<1x16x16xf32> to vector<2x16x16xf32>
    %91 = arith.addf %89, %90 : vector<2x16x16xf32>
    %cst_52 = arith.constant dense<0xFF800000> : vector<2x16xf32>
    %92 = vector.multi_reduction <maximumf>, %91, %cst_52 [2] : vector<2x16x16xf32> to vector<2x16xf32>
    %93 = vector.shape_cast %92 : vector<2x16xf32> to vector<2x16x1xf32>
    %94 = vector.broadcast %93 : vector<2x16x1xf32> to vector<2x16x16xf32>
    %95 = arith.subf %91, %94 : vector<2x16x16xf32>
    %96 = math.exp %95 : vector<2x16x16xf32>
    %cst_53 = arith.constant dense<0.000000e+00> : vector<2x16xf32>
    %97 = vector.multi_reduction <add>, %96, %cst_53 [2] : vector<2x16x16xf32> to vector<2x16xf32>
    %98 = vector.shape_cast %97 : vector<2x16xf32> to vector<2x16x1xf32>
    %99 = tpu.reciprocal %98 {approx = true} : vector<2x16x1xf32> -> vector<2x16x1xf32>
    %100 = vector.broadcast %99 : vector<2x16x1xf32> to vector<2x16x16xf32>
    %101 = arith.mulf %96, %100 : vector<2x16x16xf32>
    "tpu.trace_start"() <{level = 10 : i32, message = "bnm,bme->bne"}> : () -> ()
    %cst_54 = arith.constant dense<0.000000e+00> : vector<2x16x8xf32>
    %102 = tpu.matmul %101, %86, %cst_54 {dimension_numbers = #tpu.dot_dimension_numbers<[2], [1], [1], [2], [0, 0, 0, 1, 1, 2], [0], [0]>} : vector<2x16x16xf32>, vector<2x16x8xf32>, vector<2x16x8xf32> -> vector<2x16x8xf32>
    "tpu.trace_stop"() : () -> ()
    %103 = vector.shape_cast %102 : vector<2x16x8xf32> to vector<32x8xf32>
    %104 = arith.truncf %103 : vector<32x8xf32> to vector<32x8xbf16>
    %c0_55 = arith.constant 0 : index
    %c1_56 = arith.constant 1 : index
    %c0_57 = arith.constant 0 : index
    %c0_58 = arith.constant 0 : index
    %105 = vector.load %arg8[%c0_55, %c1_56, %c0_57, %c0_58] : memref<1x6x8x48xbf16, #tpu.memory_space<vmem>>, vector<1x1x8x48xbf16>
    %106 = vector.shape_cast %105 : vector<1x1x8x48xbf16> to vector<8x48xbf16>
    %cst_59 = arith.constant dense<0.000000e+00> : vector<32x48xf32>
    %107 = tpu.matmul %104, %106, %cst_59 {dimension_numbers = #tpu.dot_dimension_numbers<[1], [0], [0], [1], [0, 0, 1, 1], [], []>} : vector<32x8xbf16>, vector<8x48xbf16>, vector<32x48xf32> -> vector<32x48xf32>
    %108 = arith.addf %65, %107 : vector<32x48xf32>
    %c0_60 = arith.constant 0 : index
    %c2 = arith.constant 2 : index
    %c0_61 = arith.constant 0 : index
    %c0_62 = arith.constant 0 : index
    %109 = vector.load %arg5[%c0_60, %c2, %c0_61, %c0_62] : memref<1x6x48x8xbf16, #tpu.memory_space<vmem>>, vector<1x1x48x8xbf16>
    %110 = vector.shape_cast %109 : vector<1x1x48x8xbf16> to vector<48x8xbf16>
    %cst_63 = arith.constant dense<0.000000e+00> : vector<32x8xf32>
    %111 = tpu.matmul %5, %110, %cst_63 {dimension_numbers = #tpu.dot_dimension_numbers<[1], [0], [0], [1], [0, 0, 1, 1], [], []>} : vector<32x48xbf16>, vector<48x8xbf16>, vector<32x8xf32> -> vector<32x8xf32>
    %112 = vector.extract_strided_slice %15 {offsets = [2, 0], sizes = [1, 8], strides = [1, 1]} : vector<18x8xf32> to vector<1x8xf32>
    %113 = vector.broadcast %112 : vector<1x8xf32> to vector<32x8xf32>
    %114 = arith.addf %111, %113 : vector<32x8xf32>
    %c0_64 = arith.constant 0 : index
    %c2_65 = arith.constant 2 : index
    %c0_66 = arith.constant 0 : index
    %c0_67 = arith.constant 0 : index
    %115 = vector.load %arg6[%c0_64, %c2_65, %c0_66, %c0_67] : memref<1x6x48x8xbf16, #tpu.memory_space<vmem>>, vector<1x1x48x8xbf16>
    %116 = vector.shape_cast %115 : vector<1x1x48x8xbf16> to vector<48x8xbf16>
    %cst_68 = arith.constant dense<0.000000e+00> : vector<32x8xf32>
    %117 = tpu.matmul %5, %116, %cst_68 {dimension_numbers = #tpu.dot_dimension_numbers<[1], [0], [0], [1], [0, 0, 1, 1], [], []>} : vector<32x48xbf16>, vector<48x8xbf16>, vector<32x8xf32> -> vector<32x8xf32>
    %118 = vector.extract_strided_slice %15 {offsets = [8, 0], sizes = [1, 8], strides = [1, 1]} : vector<18x8xf32> to vector<1x8xf32>
    %119 = vector.broadcast %118 : vector<1x8xf32> to vector<32x8xf32>
    %120 = arith.addf %117, %119 : vector<32x8xf32>
    %c0_69 = arith.constant 0 : index
    %c2_70 = arith.constant 2 : index
    %c0_71 = arith.constant 0 : index
    %c0_72 = arith.constant 0 : index
    %121 = vector.load %arg7[%c0_69, %c2_70, %c0_71, %c0_72] : memref<1x6x48x8xbf16, #tpu.memory_space<vmem>>, vector<1x1x48x8xbf16>
    %122 = vector.shape_cast %121 : vector<1x1x48x8xbf16> to vector<48x8xbf16>
    %cst_73 = arith.constant dense<0.000000e+00> : vector<32x8xf32>
    %123 = tpu.matmul %5, %122, %cst_73 {dimension_numbers = #tpu.dot_dimension_numbers<[1], [0], [0], [1], [0, 0, 1, 1], [], []>} : vector<32x48xbf16>, vector<48x8xbf16>, vector<32x8xf32> -> vector<32x8xf32>
    %124 = vector.extract_strided_slice %15 {offsets = [14, 0], sizes = [1, 8], strides = [1, 1]} : vector<18x8xf32> to vector<1x8xf32>
    %125 = vector.broadcast %124 : vector<1x8xf32> to vector<32x8xf32>
    %126 = arith.addf %123, %125 : vector<32x8xf32>
    %127 = vector.shape_cast %114 : vector<32x8xf32> to vector<2x16x8xf32>
    %128 = vector.shape_cast %120 : vector<32x8xf32> to vector<2x16x8xf32>
    %129 = vector.shape_cast %126 : vector<32x8xf32> to vector<2x16x8xf32>
    "tpu.trace_start"() <{level = 10 : i32, message = "bne,bme->bnm"}> : () -> ()
    %cst_74 = arith.constant dense<0.000000e+00> : vector<2x16x16xf32>
    %130 = tpu.matmul %127, %128, %cst_74 {dimension_numbers = #tpu.dot_dimension_numbers<[2], [2], [1], [1], [0, 0, 0, 1, 1, 1], [0], [0]>} : vector<2x16x8xf32>, vector<2x16x8xf32>, vector<2x16x16xf32> -> vector<2x16x16xf32>
    "tpu.trace_stop"() : () -> ()
    %cst_75 = arith.constant 0.353553385 : f32
    %131 = vector.broadcast %cst_75 : f32 to vector<2x16x16xf32>
    %132 = arith.mulf %130, %131 : vector<2x16x16xf32>
    %133 = vector.broadcast %21 : vector<1x16x16xf32> to vector<2x16x16xf32>
    %134 = arith.addf %132, %133 : vector<2x16x16xf32>
    %cst_76 = arith.constant dense<0xFF800000> : vector<2x16xf32>
    %135 = vector.multi_reduction <maximumf>, %134, %cst_76 [2] : vector<2x16x16xf32> to vector<2x16xf32>
    %136 = vector.shape_cast %135 : vector<2x16xf32> to vector<2x16x1xf32>
    %137 = vector.broadcast %136 : vector<2x16x1xf32> to vector<2x16x16xf32>
    %138 = arith.subf %134, %137 : vector<2x16x16xf32>
    %139 = math.exp %138 : vector<2x16x16xf32>
    %cst_77 = arith.constant dense<0.000000e+00> : vector<2x16xf32>
    %140 = vector.multi_reduction <add>, %139, %cst_77 [2] : vector<2x16x16xf32> to vector<2x16xf32>
    %141 = vector.shape_cast %140 : vector<2x16xf32> to vector<2x16x1xf32>
    %142 = tpu.reciprocal %141 {approx = true} : vector<2x16x1xf32> -> vector<2x16x1xf32>
    %143 = vector.broadcast %142 : vector<2x16x1xf32> to vector<2x16x16xf32>
    %144 = arith.mulf %139, %143 : vector<2x16x16xf32>
    "tpu.trace_start"() <{level = 10 : i32, message = "bnm,bme->bne"}> : () -> ()
    %cst_78 = arith.constant dense<0.000000e+00> : vector<2x16x8xf32>
    %145 = tpu.matmul %144, %129, %cst_78 {dimension_numbers = #tpu.dot_dimension_numbers<[2], [1], [1], [2], [0, 0, 0, 1, 1, 2], [0], [0]>} : vector<2x16x16xf32>, vector<2x16x8xf32>, vector<2x16x8xf32> -> vector<2x16x8xf32>
    "tpu.trace_stop"() : () -> ()
    %146 = vector.shape_cast %145 : vector<2x16x8xf32> to vector<32x8xf32>
    %147 = arith.truncf %146 : vector<32x8xf32> to vector<32x8xbf16>
    %c0_79 = arith.constant 0 : index
    %c2_80 = arith.constant 2 : index
    %c0_81 = arith.constant 0 : index
    %c0_82 = arith.constant 0 : index
    %148 = vector.load %arg8[%c0_79, %c2_80, %c0_81, %c0_82] : memref<1x6x8x48xbf16, #tpu.memory_space<vmem>>, vector<1x1x8x48xbf16>
    %149 = vector.shape_cast %148 : vector<1x1x8x48xbf16> to vector<8x48xbf16>
    %cst_83 = arith.constant dense<0.000000e+00> : vector<32x48xf32>
    %150 = tpu.matmul %147, %149, %cst_83 {dimension_numbers = #tpu.dot_dimension_numbers<[1], [0], [0], [1], [0, 0, 1, 1], [], []>} : vector<32x8xbf16>, vector<8x48xbf16>, vector<32x48xf32> -> vector<32x48xf32>
    %151 = arith.addf %108, %150 : vector<32x48xf32>
    %c0_84 = arith.constant 0 : index
    %c3 = arith.constant 3 : index
    %c0_85 = arith.constant 0 : index
    %c0_86 = arith.constant 0 : index
    %152 = vector.load %arg5[%c0_84, %c3, %c0_85, %c0_86] : memref<1x6x48x8xbf16, #tpu.memory_space<vmem>>, vector<1x1x48x8xbf16>
    %153 = vector.shape_cast %152 : vector<1x1x48x8xbf16> to vector<48x8xbf16>
    %cst_87 = arith.constant dense<0.000000e+00> : vector<32x8xf32>
    %154 = tpu.matmul %5, %153, %cst_87 {dimension_numbers = #tpu.dot_dimension_numbers<[1], [0], [0], [1], [0, 0, 1, 1], [], []>} : vector<32x48xbf16>, vector<48x8xbf16>, vector<32x8xf32> -> vector<32x8xf32>
    %155 = vector.extract_strided_slice %15 {offsets = [3, 0], sizes = [1, 8], strides = [1, 1]} : vector<18x8xf32> to vector<1x8xf32>
    %156 = vector.broadcast %155 : vector<1x8xf32> to vector<32x8xf32>
    %157 = arith.addf %154, %156 : vector<32x8xf32>
    %c0_88 = arith.constant 0 : index
    %c3_89 = arith.constant 3 : index
    %c0_90 = arith.constant 0 : index
    %c0_91 = arith.constant 0 : index
    %158 = vector.load %arg6[%c0_88, %c3_89, %c0_90, %c0_91] : memref<1x6x48x8xbf16, #tpu.memory_space<vmem>>, vector<1x1x48x8xbf16>
    %159 = vector.shape_cast %158 : vector<1x1x48x8xbf16> to vector<48x8xbf16>
    %cst_92 = arith.constant dense<0.000000e+00> : vector<32x8xf32>
    %160 = tpu.matmul %5, %159, %cst_92 {dimension_numbers = #tpu.dot_dimension_numbers<[1], [0], [0], [1], [0, 0, 1, 1], [], []>} : vector<32x48xbf16>, vector<48x8xbf16>, vector<32x8xf32> -> vector<32x8xf32>
    %161 = vector.extract_strided_slice %15 {offsets = [9, 0], sizes = [1, 8], strides = [1, 1]} : vector<18x8xf32> to vector<1x8xf32>
    %162 = vector.broadcast %161 : vector<1x8xf32> to vector<32x8xf32>
    %163 = arith.addf %160, %162 : vector<32x8xf32>
    %c0_93 = arith.constant 0 : index
    %c3_94 = arith.constant 3 : index
    %c0_95 = arith.constant 0 : index
    %c0_96 = arith.constant 0 : index
    %164 = vector.load %arg7[%c0_93, %c3_94, %c0_95, %c0_96] : memref<1x6x48x8xbf16, #tpu.memory_space<vmem>>, vector<1x1x48x8xbf16>
    %165 = vector.shape_cast %164 : vector<1x1x48x8xbf16> to vector<48x8xbf16>
    %cst_97 = arith.constant dense<0.000000e+00> : vector<32x8xf32>
    %166 = tpu.matmul %5, %165, %cst_97 {dimension_numbers = #tpu.dot_dimension_numbers<[1], [0], [0], [1], [0, 0, 1, 1], [], []>} : vector<32x48xbf16>, vector<48x8xbf16>, vector<32x8xf32> -> vector<32x8xf32>
    %167 = vector.extract_strided_slice %15 {offsets = [15, 0], sizes = [1, 8], strides = [1, 1]} : vector<18x8xf32> to vector<1x8xf32>
    %168 = vector.broadcast %167 : vector<1x8xf32> to vector<32x8xf32>
    %169 = arith.addf %166, %168 : vector<32x8xf32>
    %170 = vector.shape_cast %157 : vector<32x8xf32> to vector<2x16x8xf32>
    %171 = vector.shape_cast %163 : vector<32x8xf32> to vector<2x16x8xf32>
    %172 = vector.shape_cast %169 : vector<32x8xf32> to vector<2x16x8xf32>
    "tpu.trace_start"() <{level = 10 : i32, message = "bne,bme->bnm"}> : () -> ()
    %cst_98 = arith.constant dense<0.000000e+00> : vector<2x16x16xf32>
    %173 = tpu.matmul %170, %171, %cst_98 {dimension_numbers = #tpu.dot_dimension_numbers<[2], [2], [1], [1], [0, 0, 0, 1, 1, 1], [0], [0]>} : vector<2x16x8xf32>, vector<2x16x8xf32>, vector<2x16x16xf32> -> vector<2x16x16xf32>
    "tpu.trace_stop"() : () -> ()
    %cst_99 = arith.constant 0.353553385 : f32
    %174 = vector.broadcast %cst_99 : f32 to vector<2x16x16xf32>
    %175 = arith.mulf %173, %174 : vector<2x16x16xf32>
    %176 = vector.broadcast %21 : vector<1x16x16xf32> to vector<2x16x16xf32>
    %177 = arith.addf %175, %176 : vector<2x16x16xf32>
    %cst_100 = arith.constant dense<0xFF800000> : vector<2x16xf32>
    %178 = vector.multi_reduction <maximumf>, %177, %cst_100 [2] : vector<2x16x16xf32> to vector<2x16xf32>
    %179 = vector.shape_cast %178 : vector<2x16xf32> to vector<2x16x1xf32>
    %180 = vector.broadcast %179 : vector<2x16x1xf32> to vector<2x16x16xf32>
    %181 = arith.subf %177, %180 : vector<2x16x16xf32>
    %182 = math.exp %181 : vector<2x16x16xf32>
    %cst_101 = arith.constant dense<0.000000e+00> : vector<2x16xf32>
    %183 = vector.multi_reduction <add>, %182, %cst_101 [2] : vector<2x16x16xf32> to vector<2x16xf32>
    %184 = vector.shape_cast %183 : vector<2x16xf32> to vector<2x16x1xf32>
    %185 = tpu.reciprocal %184 {approx = true} : vector<2x16x1xf32> -> vector<2x16x1xf32>
    %186 = vector.broadcast %185 : vector<2x16x1xf32> to vector<2x16x16xf32>
    %187 = arith.mulf %182, %186 : vector<2x16x16xf32>
    "tpu.trace_start"() <{level = 10 : i32, message = "bnm,bme->bne"}> : () -> ()
    %cst_102 = arith.constant dense<0.000000e+00> : vector<2x16x8xf32>
    %188 = tpu.matmul %187, %172, %cst_102 {dimension_numbers = #tpu.dot_dimension_numbers<[2], [1], [1], [2], [0, 0, 0, 1, 1, 2], [0], [0]>} : vector<2x16x16xf32>, vector<2x16x8xf32>, vector<2x16x8xf32> -> vector<2x16x8xf32>
    "tpu.trace_stop"() : () -> ()
    %189 = vector.shape_cast %188 : vector<2x16x8xf32> to vector<32x8xf32>
    %190 = arith.truncf %189 : vector<32x8xf32> to vector<32x8xbf16>
    %c0_103 = arith.constant 0 : index
    %c3_104 = arith.constant 3 : index
    %c0_105 = arith.constant 0 : index
    %c0_106 = arith.constant 0 : index
    %191 = vector.load %arg8[%c0_103, %c3_104, %c0_105, %c0_106] : memref<1x6x8x48xbf16, #tpu.memory_space<vmem>>, vector<1x1x8x48xbf16>
    %192 = vector.shape_cast %191 : vector<1x1x8x48xbf16> to vector<8x48xbf16>
    %cst_107 = arith.constant dense<0.000000e+00> : vector<32x48xf32>
    %193 = tpu.matmul %190, %192, %cst_107 {dimension_numbers = #tpu.dot_dimension_numbers<[1], [0], [0], [1], [0, 0, 1, 1], [], []>} : vector<32x8xbf16>, vector<8x48xbf16>, vector<32x48xf32> -> vector<32x48xf32>
    %194 = arith.addf %151, %193 : vector<32x48xf32>
    %c0_108 = arith.constant 0 : index
    %c4 = arith.constant 4 : index
    %c0_109 = arith.constant 0 : index
    %c0_110 = arith.constant 0 : index
    %195 = vector.load %arg5[%c0_108, %c4, %c0_109, %c0_110] : memref<1x6x48x8xbf16, #tpu.memory_space<vmem>>, vector<1x1x48x8xbf16>
    %196 = vector.shape_cast %195 : vector<1x1x48x8xbf16> to vector<48x8xbf16>
    %cst_111 = arith.constant dense<0.000000e+00> : vector<32x8xf32>
    %197 = tpu.matmul %5, %196, %cst_111 {dimension_numbers = #tpu.dot_dimension_numbers<[1], [0], [0], [1], [0, 0, 1, 1], [], []>} : vector<32x48xbf16>, vector<48x8xbf16>, vector<32x8xf32> -> vector<32x8xf32>
    %198 = vector.extract_strided_slice %15 {offsets = [4, 0], sizes = [1, 8], strides = [1, 1]} : vector<18x8xf32> to vector<1x8xf32>
    %199 = vector.broadcast %198 : vector<1x8xf32> to vector<32x8xf32>
    %200 = arith.addf %197, %199 : vector<32x8xf32>
    %c0_112 = arith.constant 0 : index
    %c4_113 = arith.constant 4 : index
    %c0_114 = arith.constant 0 : index
    %c0_115 = arith.constant 0 : index
    %201 = vector.load %arg6[%c0_112, %c4_113, %c0_114, %c0_115] : memref<1x6x48x8xbf16, #tpu.memory_space<vmem>>, vector<1x1x48x8xbf16>
    %202 = vector.shape_cast %201 : vector<1x1x48x8xbf16> to vector<48x8xbf16>
    %cst_116 = arith.constant dense<0.000000e+00> : vector<32x8xf32>
    %203 = tpu.matmul %5, %202, %cst_116 {dimension_numbers = #tpu.dot_dimension_numbers<[1], [0], [0], [1], [0, 0, 1, 1], [], []>} : vector<32x48xbf16>, vector<48x8xbf16>, vector<32x8xf32> -> vector<32x8xf32>
    %204 = vector.extract_strided_slice %15 {offsets = [10, 0], sizes = [1, 8], strides = [1, 1]} : vector<18x8xf32> to vector<1x8xf32>
    %205 = vector.broadcast %204 : vector<1x8xf32> to vector<32x8xf32>
    %206 = arith.addf %203, %205 : vector<32x8xf32>
    %c0_117 = arith.constant 0 : index
    %c4_118 = arith.constant 4 : index
    %c0_119 = arith.constant 0 : index
    %c0_120 = arith.constant 0 : index
    %207 = vector.load %arg7[%c0_117, %c4_118, %c0_119, %c0_120] : memref<1x6x48x8xbf16, #tpu.memory_space<vmem>>, vector<1x1x48x8xbf16>
    %208 = vector.shape_cast %207 : vector<1x1x48x8xbf16> to vector<48x8xbf16>
    %cst_121 = arith.constant dense<0.000000e+00> : vector<32x8xf32>
    %209 = tpu.matmul %5, %208, %cst_121 {dimension_numbers = #tpu.dot_dimension_numbers<[1], [0], [0], [1], [0, 0, 1, 1], [], []>} : vector<32x48xbf16>, vector<48x8xbf16>, vector<32x8xf32> -> vector<32x8xf32>
    %210 = vector.extract_strided_slice %15 {offsets = [16, 0], sizes = [1, 8], strides = [1, 1]} : vector<18x8xf32> to vector<1x8xf32>
    %211 = vector.broadcast %210 : vector<1x8xf32> to vector<32x8xf32>
    %212 = arith.addf %209, %211 : vector<32x8xf32>
    %213 = vector.shape_cast %200 : vector<32x8xf32> to vector<2x16x8xf32>
    %214 = vector.shape_cast %206 : vector<32x8xf32> to vector<2x16x8xf32>
    %215 = vector.shape_cast %212 : vector<32x8xf32> to vector<2x16x8xf32>
    "tpu.trace_start"() <{level = 10 : i32, message = "bne,bme->bnm"}> : () -> ()
    %cst_122 = arith.constant dense<0.000000e+00> : vector<2x16x16xf32>
    %216 = tpu.matmul %213, %214, %cst_122 {dimension_numbers = #tpu.dot_dimension_numbers<[2], [2], [1], [1], [0, 0, 0, 1, 1, 1], [0], [0]>} : vector<2x16x8xf32>, vector<2x16x8xf32>, vector<2x16x16xf32> -> vector<2x16x16xf32>
    "tpu.trace_stop"() : () -> ()
    %cst_123 = arith.constant 0.353553385 : f32
    %217 = vector.broadcast %cst_123 : f32 to vector<2x16x16xf32>
    %218 = arith.mulf %216, %217 : vector<2x16x16xf32>
    %219 = vector.broadcast %21 : vector<1x16x16xf32> to vector<2x16x16xf32>
    %220 = arith.addf %218, %219 : vector<2x16x16xf32>
    %cst_124 = arith.constant dense<0xFF800000> : vector<2x16xf32>
    %221 = vector.multi_reduction <maximumf>, %220, %cst_124 [2] : vector<2x16x16xf32> to vector<2x16xf32>
    %222 = vector.shape_cast %221 : vector<2x16xf32> to vector<2x16x1xf32>
    %223 = vector.broadcast %222 : vector<2x16x1xf32> to vector<2x16x16xf32>
    %224 = arith.subf %220, %223 : vector<2x16x16xf32>
    %225 = math.exp %224 : vector<2x16x16xf32>
    %cst_125 = arith.constant dense<0.000000e+00> : vector<2x16xf32>
    %226 = vector.multi_reduction <add>, %225, %cst_125 [2] : vector<2x16x16xf32> to vector<2x16xf32>
    %227 = vector.shape_cast %226 : vector<2x16xf32> to vector<2x16x1xf32>
    %228 = tpu.reciprocal %227 {approx = true} : vector<2x16x1xf32> -> vector<2x16x1xf32>
    %229 = vector.broadcast %228 : vector<2x16x1xf32> to vector<2x16x16xf32>
    %230 = arith.mulf %225, %229 : vector<2x16x16xf32>
    "tpu.trace_start"() <{level = 10 : i32, message = "bnm,bme->bne"}> : () -> ()
    %cst_126 = arith.constant dense<0.000000e+00> : vector<2x16x8xf32>
    %231 = tpu.matmul %230, %215, %cst_126 {dimension_numbers = #tpu.dot_dimension_numbers<[2], [1], [1], [2], [0, 0, 0, 1, 1, 2], [0], [0]>} : vector<2x16x16xf32>, vector<2x16x8xf32>, vector<2x16x8xf32> -> vector<2x16x8xf32>
    "tpu.trace_stop"() : () -> ()
    %232 = vector.shape_cast %231 : vector<2x16x8xf32> to vector<32x8xf32>
    %233 = arith.truncf %232 : vector<32x8xf32> to vector<32x8xbf16>
    %c0_127 = arith.constant 0 : index
    %c4_128 = arith.constant 4 : index
    %c0_129 = arith.constant 0 : index
    %c0_130 = arith.constant 0 : index
    %234 = vector.load %arg8[%c0_127, %c4_128, %c0_129, %c0_130] : memref<1x6x8x48xbf16, #tpu.memory_space<vmem>>, vector<1x1x8x48xbf16>
    %235 = vector.shape_cast %234 : vector<1x1x8x48xbf16> to vector<8x48xbf16>
    %cst_131 = arith.constant dense<0.000000e+00> : vector<32x48xf32>
    %236 = tpu.matmul %233, %235, %cst_131 {dimension_numbers = #tpu.dot_dimension_numbers<[1], [0], [0], [1], [0, 0, 1, 1], [], []>} : vector<32x8xbf16>, vector<8x48xbf16>, vector<32x48xf32> -> vector<32x48xf32>
    %237 = arith.addf %194, %236 : vector<32x48xf32>
    %c0_132 = arith.constant 0 : index
    %c5 = arith.constant 5 : index
    %c0_133 = arith.constant 0 : index
    %c0_134 = arith.constant 0 : index
    %238 = vector.load %arg5[%c0_132, %c5, %c0_133, %c0_134] : memref<1x6x48x8xbf16, #tpu.memory_space<vmem>>, vector<1x1x48x8xbf16>
    %239 = vector.shape_cast %238 : vector<1x1x48x8xbf16> to vector<48x8xbf16>
    %cst_135 = arith.constant dense<0.000000e+00> : vector<32x8xf32>
    %240 = tpu.matmul %5, %239, %cst_135 {dimension_numbers = #tpu.dot_dimension_numbers<[1], [0], [0], [1], [0, 0, 1, 1], [], []>} : vector<32x48xbf16>, vector<48x8xbf16>, vector<32x8xf32> -> vector<32x8xf32>
    %241 = vector.extract_strided_slice %15 {offsets = [5, 0], sizes = [1, 8], strides = [1, 1]} : vector<18x8xf32> to vector<1x8xf32>
    %242 = vector.broadcast %241 : vector<1x8xf32> to vector<32x8xf32>
    %243 = arith.addf %240, %242 : vector<32x8xf32>
    %c0_136 = arith.constant 0 : index
    %c5_137 = arith.constant 5 : index
    %c0_138 = arith.constant 0 : index
    %c0_139 = arith.constant 0 : index
    %244 = vector.load %arg6[%c0_136, %c5_137, %c0_138, %c0_139] : memref<1x6x48x8xbf16, #tpu.memory_space<vmem>>, vector<1x1x48x8xbf16>
    %245 = vector.shape_cast %244 : vector<1x1x48x8xbf16> to vector<48x8xbf16>
    %cst_140 = arith.constant dense<0.000000e+00> : vector<32x8xf32>
    %246 = tpu.matmul %5, %245, %cst_140 {dimension_numbers = #tpu.dot_dimension_numbers<[1], [0], [0], [1], [0, 0, 1, 1], [], []>} : vector<32x48xbf16>, vector<48x8xbf16>, vector<32x8xf32> -> vector<32x8xf32>
    %247 = vector.extract_strided_slice %15 {offsets = [11, 0], sizes = [1, 8], strides = [1, 1]} : vector<18x8xf32> to vector<1x8xf32>
    %248 = vector.broadcast %247 : vector<1x8xf32> to vector<32x8xf32>
    %249 = arith.addf %246, %248 : vector<32x8xf32>
    %c0_141 = arith.constant 0 : index
    %c5_142 = arith.constant 5 : index
    %c0_143 = arith.constant 0 : index
    %c0_144 = arith.constant 0 : index
    %250 = vector.load %arg7[%c0_141, %c5_142, %c0_143, %c0_144] : memref<1x6x48x8xbf16, #tpu.memory_space<vmem>>, vector<1x1x48x8xbf16>
    %251 = vector.shape_cast %250 : vector<1x1x48x8xbf16> to vector<48x8xbf16>
    %cst_145 = arith.constant dense<0.000000e+00> : vector<32x8xf32>
    %252 = tpu.matmul %5, %251, %cst_145 {dimension_numbers = #tpu.dot_dimension_numbers<[1], [0], [0], [1], [0, 0, 1, 1], [], []>} : vector<32x48xbf16>, vector<48x8xbf16>, vector<32x8xf32> -> vector<32x8xf32>
    %253 = vector.extract_strided_slice %15 {offsets = [17, 0], sizes = [1, 8], strides = [1, 1]} : vector<18x8xf32> to vector<1x8xf32>
    %254 = vector.broadcast %253 : vector<1x8xf32> to vector<32x8xf32>
    %255 = arith.addf %252, %254 : vector<32x8xf32>
    %256 = vector.shape_cast %243 : vector<32x8xf32> to vector<2x16x8xf32>
    %257 = vector.shape_cast %249 : vector<32x8xf32> to vector<2x16x8xf32>
    %258 = vector.shape_cast %255 : vector<32x8xf32> to vector<2x16x8xf32>
    "tpu.trace_start"() <{level = 10 : i32, message = "bne,bme->bnm"}> : () -> ()
    %cst_146 = arith.constant dense<0.000000e+00> : vector<2x16x16xf32>
    %259 = tpu.matmul %256, %257, %cst_146 {dimension_numbers = #tpu.dot_dimension_numbers<[2], [2], [1], [1], [0, 0, 0, 1, 1, 1], [0], [0]>} : vector<2x16x8xf32>, vector<2x16x8xf32>, vector<2x16x16xf32> -> vector<2x16x16xf32>
    "tpu.trace_stop"() : () -> ()
    %cst_147 = arith.constant 0.353553385 : f32
    %260 = vector.broadcast %cst_147 : f32 to vector<2x16x16xf32>
    %261 = arith.mulf %259, %260 : vector<2x16x16xf32>
    %262 = vector.broadcast %21 : vector<1x16x16xf32> to vector<2x16x16xf32>
    %263 = arith.addf %261, %262 : vector<2x16x16xf32>
    %cst_148 = arith.constant dense<0xFF800000> : vector<2x16xf32>
    %264 = vector.multi_reduction <maximumf>, %263, %cst_148 [2] : vector<2x16x16xf32> to vector<2x16xf32>
    %265 = vector.shape_cast %264 : vector<2x16xf32> to vector<2x16x1xf32>
    %266 = vector.broadcast %265 : vector<2x16x1xf32> to vector<2x16x16xf32>
    %267 = arith.subf %263, %266 : vector<2x16x16xf32>
    %268 = math.exp %267 : vector<2x16x16xf32>
    %cst_149 = arith.constant dense<0.000000e+00> : vector<2x16xf32>
    %269 = vector.multi_reduction <add>, %268, %cst_149 [2] : vector<2x16x16xf32> to vector<2x16xf32>
    %270 = vector.shape_cast %269 : vector<2x16xf32> to vector<2x16x1xf32>
    %271 = tpu.reciprocal %270 {approx = true} : vector<2x16x1xf32> -> vector<2x16x1xf32>
    %272 = vector.broadcast %271 : vector<2x16x1xf32> to vector<2x16x16xf32>
    %273 = arith.mulf %268, %272 : vector<2x16x16xf32>
    "tpu.trace_start"() <{level = 10 : i32, message = "bnm,bme->bne"}> : () -> ()
    %cst_150 = arith.constant dense<0.000000e+00> : vector<2x16x8xf32>
    %274 = tpu.matmul %273, %258, %cst_150 {dimension_numbers = #tpu.dot_dimension_numbers<[2], [1], [1], [2], [0, 0, 0, 1, 1, 2], [0], [0]>} : vector<2x16x16xf32>, vector<2x16x8xf32>, vector<2x16x8xf32> -> vector<2x16x8xf32>
    "tpu.trace_stop"() : () -> ()
    %275 = vector.shape_cast %274 : vector<2x16x8xf32> to vector<32x8xf32>
    %276 = arith.truncf %275 : vector<32x8xf32> to vector<32x8xbf16>
    %c0_151 = arith.constant 0 : index
    %c5_152 = arith.constant 5 : index
    %c0_153 = arith.constant 0 : index
    %c0_154 = arith.constant 0 : index
    %277 = vector.load %arg8[%c0_151, %c5_152, %c0_153, %c0_154] : memref<1x6x8x48xbf16, #tpu.memory_space<vmem>>, vector<1x1x8x48xbf16>
    %278 = vector.shape_cast %277 : vector<1x1x8x48xbf16> to vector<8x48xbf16>
    %cst_155 = arith.constant dense<0.000000e+00> : vector<32x48xf32>
    %279 = tpu.matmul %276, %278, %cst_155 {dimension_numbers = #tpu.dot_dimension_numbers<[1], [0], [0], [1], [0, 0, 1, 1], [], []>} : vector<32x8xbf16>, vector<8x48xbf16>, vector<32x48xf32> -> vector<32x48xf32>
    %280 = arith.addf %237, %279 : vector<32x48xf32>
    %281 = vector.broadcast %8 : vector<1x48xf32> to vector<32x48xf32>
    %282 = arith.addf %280, %281 : vector<32x48xf32>
    %283 = arith.addf %4, %282 : vector<32x48xf32>
    %cst_156 = arith.constant dense<0.000000e+00> : vector<32xf32>
    %284 = vector.multi_reduction <add>, %283, %cst_156 [1] : vector<32x48xf32> to vector<32xf32>
    %285 = vector.shape_cast %284 : vector<32xf32> to vector<32x1xf32>
    %cst_157 = arith.constant 4.800000e+01 : f32
    %286 = vector.broadcast %cst_157 : f32 to vector<32x1xf32>
    %287 = arith.divf %285, %286 : vector<32x1xf32>
    %288 = vector.broadcast %287 : vector<32x1xf32> to vector<32x48xf32>
    %289 = arith.subf %283, %288 : vector<32x48xf32>
    %290 = arith.mulf %289, %289 : vector<32x48xf32>
    %cst_158 = arith.constant dense<0.000000e+00> : vector<32xf32>
    %291 = vector.multi_reduction <add>, %290, %cst_158 [1] : vector<32x48xf32> to vector<32xf32>
    %292 = vector.shape_cast %291 : vector<32xf32> to vector<32x1xf32>
    %cst_159 = arith.constant 4.800000e+01 : f32
    %293 = vector.broadcast %cst_159 : f32 to vector<32x1xf32>
    %294 = arith.divf %292, %293 : vector<32x1xf32>
    %295 = vector.broadcast %287 : vector<32x1xf32> to vector<32x48xf32>
    %296 = arith.subf %283, %295 : vector<32x48xf32>
    %cst_160 = arith.constant 9.99999974E-6 : f32
    %297 = vector.broadcast %cst_160 : f32 to vector<32x1xf32>
    %298 = arith.addf %294, %297 : vector<32x1xf32>
    %299 = math.rsqrt %298 : vector<32x1xf32>
    %300 = vector.broadcast %299 : vector<32x1xf32> to vector<32x48xf32>
    %301 = arith.mulf %296, %300 : vector<32x48xf32>
    %302 = vector.broadcast %9 : vector<1x48xf32> to vector<32x48xf32>
    %303 = arith.mulf %301, %302 : vector<32x48xf32>
    %304 = vector.broadcast %10 : vector<1x48xf32> to vector<32x48xf32>
    %305 = arith.addf %303, %304 : vector<32x48xf32>
    %306 = arith.truncf %305 : vector<32x48xf32> to vector<32x48xbf16>
    %c0_161 = arith.constant 0 : index
    %c0_162 = arith.constant 0 : index
    %c0_163 = arith.constant 0 : index
    %307 = vector.load %arg10[%c0_161, %c0_162, %c0_163] : memref<1x48x2048xbf16, #tpu.memory_space<vmem>>, vector<1x48x2048xbf16>
    %308 = vector.shape_cast %307 : vector<1x48x2048xbf16> to vector<48x2048xbf16>
    %cst_164 = arith.constant dense<0.000000e+00> : vector<32x2048xf32>
    %309 = tpu.matmul %306, %308, %cst_164 {dimension_numbers = #tpu.dot_dimension_numbers<[1], [0], [0], [1], [0, 0, 1, 1], [], []>} : vector<32x48xbf16>, vector<48x2048xbf16>, vector<32x2048xf32> -> vector<32x2048xf32>
    %c0_165 = arith.constant 0 : index
    %c0_166 = arith.constant 0 : index
    %c0_167 = arith.constant 0 : index
    %310 = vector.load %arg11[%c0_165, %c0_166, %c0_167] : memref<1x1x2048xf32, #tpu.memory_space<vmem>>, vector<1x1x2048xf32>
    %311 = vector.shape_cast %310 : vector<1x1x2048xf32> to vector<1x2048xf32>
    %312 = vector.broadcast %311 : vector<1x2048xf32> to vector<32x2048xf32>
    %313 = arith.addf %309, %312 : vector<32x2048xf32>
    %cst_168 = arith.constant 0.000000e+00 : f32
    %314 = vector.broadcast %cst_168 : f32 to vector<32x2048xf32>
    %315 = arith.maximumf %313, %314 : vector<32x2048xf32>
    %316 = arith.truncf %315 : vector<32x2048xf32> to vector<32x2048xbf16>
    %c0_169 = arith.constant 0 : index
    %c0_170 = arith.constant 0 : index
    %c0_171 = arith.constant 0 : index
    %317 = vector.load %arg12[%c0_169, %c0_170, %c0_171] : memref<1x2048x48xbf16, #tpu.memory_space<vmem>>, vector<1x2048x48xbf16>
    %318 = vector.shape_cast %317 : vector<1x2048x48xbf16> to vector<2048x48xbf16>
    %cst_172 = arith.constant dense<0.000000e+00> : vector<32x48xf32>
    %319 = tpu.matmul %316, %318, %cst_172 {dimension_numbers = #tpu.dot_dimension_numbers<[1], [0], [0], [1], [0, 0, 1, 1], [], []>} : vector<32x2048xbf16>, vector<2048x48xbf16>, vector<32x48xf32> -> vector<32x48xf32>
    %320 = vector.broadcast %11 : vector<1x48xf32> to vector<32x48xf32>
    %321 = arith.addf %319, %320 : vector<32x48xf32>
    %322 = arith.addf %305, %321 : vector<32x48xf32>
    %cst_173 = arith.constant dense<0.000000e+00> : vector<32xf32>
    %323 = vector.multi_reduction <add>, %322, %cst_173 [1] : vector<32x48xf32> to vector<32xf32>
    %324 = vector.shape_cast %323 : vector<32xf32> to vector<32x1xf32>
    %cst_174 = arith.constant 4.800000e+01 : f32
    %325 = vector.broadcast %cst_174 : f32 to vector<32x1xf32>
    %326 = arith.divf %324, %325 : vector<32x1xf32>
    %327 = vector.broadcast %326 : vector<32x1xf32> to vector<32x48xf32>
    %328 = arith.subf %322, %327 : vector<32x48xf32>
    %329 = arith.mulf %328, %328 : vector<32x48xf32>
    %cst_175 = arith.constant dense<0.000000e+00> : vector<32xf32>
    %330 = vector.multi_reduction <add>, %329, %cst_175 [1] : vector<32x48xf32> to vector<32xf32>
    %331 = vector.shape_cast %330 : vector<32xf32> to vector<32x1xf32>
    %cst_176 = arith.constant 4.800000e+01 : f32
    %332 = vector.broadcast %cst_176 : f32 to vector<32x1xf32>
    %333 = arith.divf %331, %332 : vector<32x1xf32>
    %334 = vector.broadcast %326 : vector<32x1xf32> to vector<32x48xf32>
    %335 = arith.subf %322, %334 : vector<32x48xf32>
    %cst_177 = arith.constant 9.99999974E-6 : f32
    %336 = vector.broadcast %cst_177 : f32 to vector<32x1xf32>
    %337 = arith.addf %333, %336 : vector<32x1xf32>
    %338 = math.rsqrt %337 : vector<32x1xf32>
    %339 = vector.broadcast %338 : vector<32x1xf32> to vector<32x48xf32>
    %340 = arith.mulf %335, %339 : vector<32x48xf32>
    %341 = vector.broadcast %12 : vector<1x48xf32> to vector<32x48xf32>
    %342 = arith.mulf %340, %341 : vector<32x48xf32>
    %343 = vector.broadcast %13 : vector<1x48xf32> to vector<32x48xf32>
    %344 = arith.addf %342, %343 : vector<32x48xf32>
    %345 = vector.shape_cast %344 : vector<32x48xf32> to vector<2x16x48xf32>
    %c0_178 = arith.constant 0 : index
    %c0_179 = arith.constant 0 : index
    %c0_180 = arith.constant 0 : index
    %346 = vector.load %arg17[%c0_178, %c0_179, %c0_180] : memref<2x16x48xf32, #tpu.memory_space<vmem>>, vector<2x16x48xf32>
    tpu.vector_store %arg17[%c0_178, %c0_179, %c0_180], %345 {strides = array<i32>} : memref<2x16x48xf32, #tpu.memory_space<vmem>>, vector<2x16x48xf32>,
    %c5_i32 = arith.constant 5 : i32
    %347 = arith.cmpi eq, %arg0, %c5_i32 : i32
    %348 = arith.extui %347 : i1 to i32
    %c0_i32_181 = arith.constant 0 : i32
    %349 = arith.cmpi ne, %348, %c0_i32_181 : i32
    scf.if %349 {
      %350 = arith.truncf %344 : vector<32x48xf32> to vector<32x48xbf16>
      %c0_182 = arith.constant 0 : index
      %c0_183 = arith.constant 0 : index
      %351 = vector.load %arg14[%c0_182, %c0_183] : memref<48x4xbf16, #tpu.memory_space<vmem>>, vector<48x4xbf16>
      %cst_184 = arith.constant dense<0.000000e+00> : vector<32x4xf32>
      %352 = tpu.matmul %350, %351, %cst_184 {dimension_numbers = #tpu.dot_dimension_numbers<[1], [0], [0], [1], [0, 0, 1, 1], [], []>} : vector<32x48xbf16>, vector<48x4xbf16>, vector<32x4xf32> -> vector<32x4xf32>
      %c0_185 = arith.constant 0 : index
      %c0_186 = arith.constant 0 : index
      %353 = vector.load %arg15[%c0_185, %c0_186] : memref<1x4xf32, #tpu.memory_space<vmem>>, vector<1x4xf32>
      %354 = vector.broadcast %353 : vector<1x4xf32> to vector<32x4xf32>
      %355 = arith.addf %352, %354 : vector<32x4xf32>
      %356 = vector.extract_strided_slice %355 {offsets = [0, 0], sizes = [9, 4], strides = [1, 1]} : vector<32x4xf32> to vector<9x4xf32>
      %c0_187 = arith.constant 0 : index
      %c0_188 = arith.constant 0 : index
      %c0_189 = arith.constant 0 : index
      %357 = vector.load %arg16[%c0_187, %c0_188, %c0_189] : memref<2x9x4xf32, #tpu.memory_space<vmem>>, vector<1x9x4xf32>
      %358 = vector.shape_cast %357 : vector<1x9x4xf32> to vector<9x4xf32>
      %359 = vector.shape_cast %356 : vector<9x4xf32> to vector<1x9x4xf32>
      tpu.vector_store %arg16[%c0_187, %c0_188, %c0_189], %359 {strides = array<i32>} : memref<2x9x4xf32, #tpu.memory_space<vmem>>, vector<1x9x4xf32>,
      %360 = vector.extract_strided_slice %355 {offsets = [16, 0], sizes = [9, 4], strides = [1, 1]} : vector<32x4xf32> to vector<9x4xf32>
      %c1_190 = arith.constant 1 : index
      %c0_191 = arith.constant 0 : index
      %c0_192 = arith.constant 0 : index
      %361 = vector.load %arg16[%c1_190, %c0_191, %c0_192] : memref<2x9x4xf32, #tpu.memory_space<vmem>>, vector<1x9x4xf32>
      %362 = vector.shape_cast %361 : vector<1x9x4xf32> to vector<9x4xf32>
      %363 = vector.shape_cast %360 : vector<9x4xf32> to vector<1x9x4xf32>
      tpu.vector_store %arg16[%c1_190, %c0_191, %c0_192], %363 {strides = array<i32>} : memref<2x9x4xf32, #tpu.memory_space<vmem>>, vector<1x9x4xf32>,
    } else {
    }
    return
  }
  func.func @transform_0(%arg0: i32) -> (i32, i32, i32) {
    %c0_i32 = arith.constant 0 : i32
    %c0_i32_0 = arith.constant 0 : i32
    %c0_i32_1 = arith.constant 0 : i32
    %c0_i32_2 = arith.constant 0 : i32
    return %c0_i32, %c0_i32_0, %c0_i32_1 : i32, i32, i32
  }
  func.func @transform_1(%arg0: i32) -> (i32, i32, i32) {
    %c0_i32 = arith.constant 0 : i32
    %c0_i32_0 = arith.constant 0 : i32
    %c0_i32_1 = arith.constant 0 : i32
    %c0_i32_2 = arith.constant 0 : i32
    return %c0_i32, %c0_i32_0, %c0_i32_1 : i32, i32, i32
  }
  func.func @transform_2(%arg0: i32) -> (i32, i32, i32) {
    %c0_i32 = arith.constant 0 : i32
    %c0_i32_0 = arith.constant 0 : i32
    %c0_i32_1 = arith.constant 0 : i32
    %c0_i32_2 = arith.constant 0 : i32
    return %c0_i32, %c0_i32_0, %c0_i32_1 : i32, i32, i32
  }
  func.func @transform_3(%arg0: i32) -> (i32, i32, i32) {
    %c0_i32 = arith.constant 0 : i32
    %c0_i32_0 = arith.constant 0 : i32
    %c0_i32_1 = arith.constant 0 : i32
    %c0_i32_2 = arith.constant 0 : i32
    return %c0_i32, %c0_i32_0, %c0_i32_1 : i32, i32, i32
  }
  func.func @transform_4(%arg0: i32) -> (i32, i32, i32, i32) {
    %c0_i32 = arith.constant 0 : i32
    %c0_i32_0 = arith.constant 0 : i32
    %c0_i32_1 = arith.constant 0 : i32
    %c0_i32_2 = arith.constant 0 : i32
    return %arg0, %c0_i32, %c0_i32_0, %c0_i32_1 : i32, i32, i32, i32
  }
  func.func @transform_5(%arg0: i32) -> (i32, i32, i32, i32) {
    %c0_i32 = arith.constant 0 : i32
    %c0_i32_0 = arith.constant 0 : i32
    %c0_i32_1 = arith.constant 0 : i32
    %c0_i32_2 = arith.constant 0 : i32
    return %arg0, %c0_i32, %c0_i32_0, %c0_i32_1 : i32, i32, i32, i32
  }
  func.func @transform_6(%arg0: i32) -> (i32, i32, i32, i32) {
    %c0_i32 = arith.constant 0 : i32
    %c0_i32_0 = arith.constant 0 : i32
    %c0_i32_1 = arith.constant 0 : i32
    %c0_i32_2 = arith.constant 0 : i32
    return %arg0, %c0_i32, %c0_i32_0, %c0_i32_1 : i32, i32, i32, i32
  }
  func.func @transform_7(%arg0: i32) -> (i32, i32, i32, i32) {
    %c0_i32 = arith.constant 0 : i32
    %c0_i32_0 = arith.constant 0 : i32
    %c0_i32_1 = arith.constant 0 : i32
    %c0_i32_2 = arith.constant 0 : i32
    return %arg0, %c0_i32, %c0_i32_0, %c0_i32_1 : i32, i32, i32, i32
  }
  func.func @transform_8(%arg0: i32) -> (i32, i32, i32) {
    %c0_i32 = arith.constant 0 : i32
    %c0_i32_0 = arith.constant 0 : i32
    %c0_i32_1 = arith.constant 0 : i32
    return %arg0, %c0_i32, %c0_i32_0 : i32, i32, i32
  }
  func.func @transform_9(%arg0: i32) -> (i32, i32, i32) {
    %c0_i32 = arith.constant 0 : i32
    %c0_i32_0 = arith.constant 0 : i32
    %c0_i32_1 = arith.constant 0 : i32
    return %arg0, %c0_i32, %c0_i32_0 : i32, i32, i32
  }
  func.func @transform_10(%arg0: i32) -> (i32, i32, i32) {
    %c0_i32 = arith.constant 0 : i32
    %c0_i32_0 = arith.constant 0 : i32
    %c0_i32_1 = arith.constant 0 : i32
    return %arg0, %c0_i32, %c0_i32_0 : i32, i32, i32
  }
  func.func @transform_11(%arg0: i32) -> (i32, i32, i32) {
    %c0_i32 = arith.constant 0 : i32
    %c0_i32_0 = arith.constant 0 : i32
    %c0_i32_1 = arith.constant 0 : i32
    return %arg0, %c0_i32, %c0_i32_0 : i32, i32, i32
  }
  func.func @transform_12(%arg0: i32) -> (i32, i32, i32) {
    %c0_i32 = arith.constant 0 : i32
    %c0_i32_0 = arith.constant 0 : i32
    %c0_i32_1 = arith.constant 0 : i32
    return %arg0, %c0_i32, %c0_i32_0 : i32, i32, i32
  }
  func.func @transform_13(%arg0: i32) -> (i32, i32) {
    %c0_i32 = arith.constant 0 : i32
    %c0_i32_0 = arith.constant 0 : i32
    %c0_i32_1 = arith.constant 0 : i32
    return %c0_i32, %c0_i32_0 : i32, i32
  }
  func.func @transform_14(%arg0: i32) -> (i32, i32) {
    %c0_i32 = arith.constant 0 : i32
    %c0_i32_0 = arith.constant 0 : i32
    %c0_i32_1 = arith.constant 0 : i32
    return %c0_i32, %c0_i32_0 : i32, i32
  }
  func.func @transform_15(%arg0: i32) -> (i32, i32, i32) {
    %c0_i32 = arith.constant 0 : i32
    %c0_i32_0 = arith.constant 0 : i32
    %c0_i32_1 = arith.constant 0 : i32
    %c0_i32_2 = arith.constant 0 : i32
    return %c0_i32, %c0_i32_0, %c0_i32_1 : i32, i32, i32
  }
}

</mosaic_0001>

<llo_original>
// kernel: postfinder_forward.1
$region0: #{postfinder_forward.1}
  #allocation0 [shape = 'u32[]', space=smem, size = 0x4, offset = 0x4, fixed_abs, tag = 'smem constant byte address 0x4 - core index']
  #allocation1 [shape = 'u32[144,128]{1,0:T(1,128)}', space=vmem, size = 0x12000, scoped, tag = 'internal scratch']
  #allocation2 [shape = 'f32[2,16,48]{2,1,0:T(8,128)}', space=vmem, size = 0x4000, scoped, tag = 'scratch operand']
  %s0 = inlined_call_operand.hbm [shape: f32[2,8,48], index: 0, kind: input, shape index: {}]
  %s1 = inlined_call_operand.hbm [shape: bf16[4,48,48], index: 1, kind: input, shape index: {}]
  %s2 = inlined_call_operand.hbm [shape: bf16[4,48,48], index: 2, kind: input, shape index: {}]
  %s3 = inlined_call_operand.hbm [shape: f32[4,1,48], index: 3, kind: input, shape index: {}]
  %s4 = inlined_call_operand.hbm [shape: bf16[6,6,48,8], index: 4, kind: input, shape index: {}]
  %s5 = inlined_call_operand.hbm [shape: bf16[6,6,48,8], index: 5, kind: input, shape index: {}]
  %s6 = inlined_call_operand.hbm [shape: bf16[6,6,48,8], index: 6, kind: input, shape index: {}]
  %s7 = inlined_call_operand.hbm [shape: bf16[6,6,8,48], index: 7, kind: input, shape index: {}]
  %s8 = inlined_call_operand.vmem [shape: f32[6,18,8], index: 8, kind: input, shape index: {}]
  %s9 = inlined_call_operand.hbm [shape: bf16[6,48,2048], index: 9, kind: input, shape index: {}]
  %s10 = inlined_call_operand.vmem [shape: f32[6,1,2048], index: 10, kind: input, shape index: {}]
  %s11 = inlined_call_operand.hbm [shape: bf16[6,2048,48], index: 11, kind: input, shape index: {}]
  %s12 = inlined_call_operand.hbm [shape: f32[6,8,48], index: 12, kind: input, shape index: {}]
  %s13 = inlined_call_operand.hbm [shape: bf16[48,4], index: 13, kind: input, shape index: {}]
  %s14 = inlined_call_operand.vmem [shape: f32[1,4], index: 14, kind: input, shape index: {}]
  %s15 = inlined_call_operand.vmem [shape: f32[2,9,4], index: 15, kind: output, shape index: {}]
  %s16 = sld [smem:[#allocation0]]
  $region149: #{postfinder_forward.1} parent=0
    _
  %s18 = ssub.s32 1, %s16
  %s19 = scalar_select 0, %s18, %s16
  $region1: #{postfinder_forward.1} parent=0
    #allocation3 [shape = 'u8[8192]{0}', space=vmem, size = 0x2000, scoped, tag = 'input window, operand 0, single buffered']
    #allocation4 [shape = 's32[2]{0}', space=sflag, size = 0x8, scoped, tag = 'scoped memory for postfinder_forward.1']
    #allocation5 [shape = 'u8[49152]{0}', space=vmem, size = 0xc000, scoped, tag = 'input window, operand 1, single buffered']
    #allocation6 [shape = 's32[1]{0}', space=sflag, size = 0x4, scoped, tag = 'scoped memory for postfinder_forward.1']
    #allocation7 [shape = 'u8[49152]{0}', space=vmem, size = 0xc000, scoped, tag = 'input window, operand 2, single buffered']
    #allocation8 [shape = 'u8[2048]{0}', space=vmem, size = 0x800, scoped, tag = 'input window, operand 3, single buffered']
    #allocation9 [shape = 's32[1]{0}', space=sflag, size = 0x4, scoped, tag = 'scoped memory for postfinder_forward.1']
    #allocation10 [shape = 'u8[147456]{0}', space=vmem, size = 0x24000, scoped, tag = 'input window, operand 4']
    #allocation11 [shape = 'u8[147456]{0}', space=vmem, size = 0x24000, scoped, tag = 'input window, operand 5']
    #allocation12 [shape = 'u8[147456]{0}', space=vmem, size = 0x24000, scoped, tag = 'input window, operand 6']
    #allocation13 [shape = 'u8[24576]{0}', space=vmem, size = 0x6000, scoped, tag = 'input window, operand 7']
    #allocation14 [shape = 'u8[393216]{0}', space=vmem, size = 0x60000, scoped, tag = 'input window, operand 9']
    #allocation15 [shape = 'u8[1048576]{0}', space=vmem, size = 0x100000, scoped, tag = 'input window, operand 11']
    #allocation16 [shape = 'u8[8192]{0}', space=vmem, size = 0x2000, scoped, tag = 'input window, operand 12']
    #allocation17 [shape = 'u8[12288]{0}', space=vmem, size = 0x3000, scoped, tag = 'input window, operand 13, single buffered']
    %20 = vsyncpa [#allocation4], 0
    %21 = vsyncpa [#allocation6], 0
    %22 = vsyncpa [#allocation9], 0
    loop: start=0, step=1, limit=8
    $region2: #{postfinder_forward.1} parent=1 // loop_pre_header
      _
    $region3: #{postfinder_forward.1} parent=1 // loop_header
      %s24 = sphi 0, %s28
      %p25 = scmp.ge.s32.totalorder %s24, 8
      %s32 = sphi 0, %s32
      %s34 = sphi 0, %s32
      %s35 = sphi 0, %s34
      %s49 = sphi 0, %s35
      %s53 = sphi 0, %s53
      %s55 = sphi 0, %s53
      %s56 = sphi 0, %s55
      %s70 = sphi 0, %s56
      %s74 = sphi 0, %s74
      %s76 = sphi 0, %s74
      %s77 = sphi 0, %s76
      %s91 = sphi 0, %s77
      %s95 = sphi 0, %s95
      %s97 = sphi 0, %s95
      %s98 = sphi 0, %s97
      %s112 = sphi 0, %s98
      %s118 = sphi 0, %s120
      %s121 = sphi 0, %s118
      %s122 = sphi 0, %s121
      %s138 = sphi 0, %s122
      %s144 = sphi 0, %s146
      %s147 = sphi 0, %s144
      %s148 = sphi 0, %s147
      %s164 = sphi 0, %s148
      %s170 = sphi 0, %s172
      %s173 = sphi 0, %s170
      %s174 = sphi 0, %s173
      %s190 = sphi 0, %s174
      %s196 = sphi 0, %s198
      %s199 = sphi 0, %s196
      %s200 = sphi 0, %s199
      %s216 = sphi 0, %s200
      %s222 = sphi 0, %s224
      %s225 = sphi 0, %s222
      %s226 = sphi 0, %s225
      %s242 = sphi 0, %s226
      %s248 = sphi 0, %s250
      %s251 = sphi 0, %s248
      %s252 = sphi 0, %s251
      %s268 = sphi 0, %s252
      %s274 = sphi 0, %s276
      %s277 = sphi 0, %s274
      %s278 = sphi 0, %s277
      %s294 = sphi 0, %s278
      %s300 = sphi 0, %s302
      %s303 = sphi 0, %s300
      %s304 = sphi 0, %s303
      %s320 = sphi 0, %s304
      %s326 = sphi 0, %s328
      %s329 = sphi 0, %s326
      %s330 = sphi 0, %s329
      %s346 = sphi 0, %s330
      %s350 = sphi 0, %s350
      %s352 = sphi 0, %s350
      %s353 = sphi 0, %s352
      %s367 = sphi 0, %s353
      %s371 = sphi 0, %s371
      %s373 = sphi 0, %s371
      %s374 = sphi 0, %s373
      %s388 = sphi 0, %s374
      %s392 = sphi 0, %s392
      %s394 = sphi 0, %s392
      %s395 = sphi 0, %s394
      %s409 = sphi 0, %s395
    $region4: #{postfinder_forward.1} parent=1 // loop_header_branch
      %27 = sbr.rel (%p25) target = $region8
    $region5: #{postfinder_forward.1} parent=1 // loop_body
      %s29 = ssub.s32 %s24, 1
      %s30 = ssub.s32 %s24, 2
      %s31 = sadd.s32 %s24, 1
      %s33 = sadd.s32 %s32, 1
      %p36 = scmp.eq.s32.totalorder %s24, 5
      %p37 = scmp.ne.s32.totalorder %s32, %s34
      %p38 = scmp.eq.s32.totalorder %s24, 0
      %p39 = por %p37, %p38
      %p40 = scmp.ne.s32.totalorder %s32, %s34
      %p41 = scmp.eq.s32.totalorder %s29, 5
      %p42 = por %p40, %p41
      %p43 = scmp.ne.s32.totalorder %s34, %s35
      %p44 = scmp.eq.s32.totalorder %s29, 0
      %p45 = por %p43, %p44
      %p46 = scmp.ne.s32.totalorder %s34, %s35
      %p47 = scmp.eq.s32.totalorder %s30, 5
      %p48 = por %p46, %p47
      %p50 = scmp.ne.s32.totalorder %s35, %s49
      %p51 = scmp.eq.s32.totalorder %s30, 0
      %p52 = por %p50, %p51
      %s54 = sadd.s32 %s53, 1
      %p57 = scmp.eq.s32.totalorder %s24, 5
      %p58 = scmp.ne.s32.totalorder %s53, %s55
      %p59 = scmp.eq.s32.totalorder %s24, 0
      %p60 = por %p58, %p59
      %p61 = scmp.ne.s32.totalorder %s53, %s55
      %p62 = scmp.eq.s32.totalorder %s29, 5
      %p63 = por %p61, %p62
      %p64 = scmp.ne.s32.totalorder %s55, %s56
      %p65 = scmp.eq.s32.totalorder %s29, 0
      %p66 = por %p64, %p65
      %p67 = scmp.ne.s32.totalorder %s55, %s56
      %p68 = scmp.eq.s32.totalorder %s30, 5
      %p69 = por %p67, %p68
      %p71 = scmp.ne.s32.totalorder %s56, %s70
      %p72 = scmp.eq.s32.totalorder %s30, 0
      %p73 = por %p71, %p72
      %s75 = sadd.s32 %s74, 1
      %p78 = scmp.eq.s32.totalorder %s24, 5
      %p79 = scmp.ne.s32.totalorder %s74, %s76
      %p80 = scmp.eq.s32.totalorder %s24, 0
      %p81 = por %p79, %p80
      %p82 = scmp.ne.s32.totalorder %s74, %s76
      %p83 = scmp.eq.s32.totalorder %s29, 5
      %p84 = por %p82, %p83
      %p85 = scmp.ne.s32.totalorder %s76, %s77
      %p86 = scmp.eq.s32.totalorder %s29, 0
      %p87 = por %p85, %p86
      %p88 = scmp.ne.s32.totalorder %s76, %s77
      %p89 = scmp.eq.s32.totalorder %s30, 5
      %p90 = por %p88, %p89
      %p92 = scmp.ne.s32.totalorder %s77, %s91
      %p93 = scmp.eq.s32.totalorder %s30, 0
      %p94 = por %p92, %p93
      %s96 = sadd.s32 %s95, 1
      %p99 = scmp.eq.s32.totalorder %s24, 5
      %p100 = scmp.ne.s32.totalorder %s95, %s97
      %p101 = scmp.eq.s32.totalorder %s24, 0
      %p102 = por %p100, %p101
      %p103 = scmp.ne.s32.totalorder %s95, %s97
      %p104 = scmp.eq.s32.totalorder %s29, 5
      %p105 = por %p103, %p104
      %p106 = scmp.ne.s32.totalorder %s97, %s98
      %p107 = scmp.eq.s32.totalorder %s29, 0
      %p108 = por %p106, %p107
      %p109 = scmp.ne.s32.totalorder %s97, %s98
      %p110 = scmp.eq.s32.totalorder %s30, 5
      %p111 = por %p109, %p110
      %p113 = scmp.ne.s32.totalorder %s98, %s112
      %p114 = scmp.eq.s32.totalorder %s30, 0
      %p115 = por %p113, %p114
      %s116 = ssub.s32 %s24, %s31
      %p117 = scmp.eq.s32.totalorder %s116, 0
      %s119 = sadd.s32 %s118, 1
      %s120 = scalar_select %p117, %s118, %s119
      %p123 = pneg %p117
      %p124 = scmp.eq.s32.totalorder %s24, 5
      %p125 = por %p123, %p124
      %p126 = scmp.ne.s32.totalorder %s118, %s121
      %p127 = scmp.eq.s32.totalorder %s24, 0
      %p128 = por %p126, %p127
      %p129 = scmp.ne.s32.totalorder %s118, %s121
      %p130 = scmp.eq.s32.totalorder %s29, 5
      %p131 = por %p129, %p130
      %p132 = scmp.ne.s32.totalorder %s121, %s122
      %p133 = scmp.eq.s32.totalorder %s29, 0
      %p134 = por %p132, %p133
      %p135 = scmp.ne.s32.totalorder %s121, %s122
      %p136 = scmp.eq.s32.totalorder %s30, 5
      %p137 = por %p135, %p136
      %p139 = scmp.ne.s32.totalorder %s122, %s138
      %p140 = scmp.eq.s32.totalorder %s30, 0
      %p141 = por %p139, %p140
      %s142 = ssub.s32 %s24, %s31
      %p143 = scmp.eq.s32.totalorder %s142, 0
      %s145 = sadd.s32 %s144, 1
      %s146 = scalar_select %p143, %s144, %s145
      %p149 = pneg %p143
      %p150 = scmp.eq.s32.totalorder %s24, 5
      %p151 = por %p149, %p150
      %p152 = scmp.ne.s32.totalorder %s144, %s147
      %p153 = scmp.eq.s32.totalorder %s24, 0
      %p154 = por %p152, %p153
      %p155 = scmp.ne.s32.totalorder %s144, %s147
      %p156 = scmp.eq.s32.totalorder %s29, 5
      %p157 = por %p155, %p156
      %p158 = scmp.ne.s32.totalorder %s147, %s148
      %p159 = scmp.eq.s32.totalorder %s29, 0
      %p160 = por %p158, %p159
      %p161 = scmp.ne.s32.totalorder %s147, %s148
      %p162 = scmp.eq.s32.totalorder %s30, 5
      %p163 = por %p161, %p162
      %p165 = scmp.ne.s32.totalorder %s148, %s164
      %p166 = scmp.eq.s32.totalorder %s30, 0
      %p167 = por %p165, %p166
      %s168 = ssub.s32 %s24, %s31
      %p169 = scmp.eq.s32.totalorder %s168, 0
      %s171 = sadd.s32 %s170, 1
      %s172 = scalar_select %p169, %s170, %s171
      %p175 = pneg %p169
      %p176 = scmp.eq.s32.totalorder %s24, 5
      %p177 = por %p175, %p176
      %p178 = scmp.ne.s32.totalorder %s170, %s173
      %p179 = scmp.eq.s32.totalorder %s24, 0
      %p180 = por %p178, %p179
      %p181 = scmp.ne.s32.totalorder %s170, %s173
      %p182 = scmp.eq.s32.totalorder %s29, 5
      %p183 = por %p181, %p182
      %p184 = scmp.ne.s32.totalorder %s173, %s174
      %p185 = scmp.eq.s32.totalorder %s29, 0
      %p186 = por %p184, %p185
      %p187 = scmp.ne.s32.totalorder %s173, %s174
      %p188 = scmp.eq.s32.totalorder %s30, 5
      %p189 = por %p187, %p188
      %p191 = scmp.ne.s32.totalorder %s174, %s190
      %p192 = scmp.eq.s32.totalorder %s30, 0
      %p193 = por %p191, %p192
      %s194 = ssub.s32 %s24, %s31
      %p195 = scmp.eq.s32.totalorder %s194, 0
      %s197 = sadd.s32 %s196, 1
      %s198 = scalar_select %p195, %s196, %s197
      %p201 = pneg %p195
      %p202 = scmp.eq.s32.totalorder %s24, 5
      %p203 = por %p201, %p202
      %p204 = scmp.ne.s32.totalorder %s196, %s199
      %p205 = scmp.eq.s32.totalorder %s24, 0
      %p206 = por %p204, %p205
      %p207 = scmp.ne.s32.totalorder %s196, %s199
      %p208 = scmp.eq.s32.totalorder %s29, 5
      %p209 = por %p207, %p208
      %p210 = scmp.ne.s32.totalorder %s199, %s200
      %p211 = scmp.eq.s32.totalorder %s29, 0
      %p212 = por %p210, %p211
      %p213 = scmp.ne.s32.totalorder %s199, %s200
      %p214 = scmp.eq.s32.totalorder %s30, 5
      %p215 = por %p213, %p214
      %p217 = scmp.ne.s32.totalorder %s200, %s216
      %p218 = scmp.eq.s32.totalorder %s30, 0
      %p219 = por %p217, %p218
      %s220 = ssub.s32 %s24, %s31
      %p221 = scmp.eq.s32.totalorder %s220, 0
      %s223 = sadd.s32 %s222, 1
      %s224 = scalar_select %p221, %s222, %s223
      %p227 = pneg %p221
      %p228 = scmp.eq.s32.totalorder %s24, 5
      %p229 = por %p227, %p228
      %p230 = scmp.ne.s32.totalorder %s222, %s225
      %p231 = scmp.eq.s32.totalorder %s24, 0
      %p232 = por %p230, %p231
      %p233 = scmp.ne.s32.totalorder %s222, %s225
      %p234 = scmp.eq.s32.totalorder %s29, 5
      %p235 = por %p233, %p234
      %p236 = scmp.ne.s32.totalorder %s225, %s226
      %p237 = scmp.eq.s32.totalorder %s29, 0
      %p238 = por %p236, %p237
      %p239 = scmp.ne.s32.totalorder %s225, %s226
      %p240 = scmp.eq.s32.totalorder %s30, 5
      %p241 = por %p239, %p240
      %p243 = scmp.ne.s32.totalorder %s226, %s242
      %p244 = scmp.eq.s32.totalorder %s30, 0
      %p245 = por %p243, %p244
      %s246 = ssub.s32 %s24, %s31
      %p247 = scmp.eq.s32.totalorder %s246, 0
      %s249 = sadd.s32 %s248, 1
      %s250 = scalar_select %p247, %s248, %s249
      %p253 = pneg %p247
      %p254 = scmp.eq.s32.totalorder %s24, 5
      %p255 = por %p253, %p254
      %p256 = scmp.ne.s32.totalorder %s248, %s251
      %p257 = scmp.eq.s32.totalorder %s24, 0
      %p258 = por %p256, %p257
      %p259 = scmp.ne.s32.totalorder %s248, %s251
      %p260 = scmp.eq.s32.totalorder %s29, 5
      %p261 = por %p259, %p260
      %p262 = scmp.ne.s32.totalorder %s251, %s252
      %p263 = scmp.eq.s32.totalorder %s29, 0
      %p264 = por %p262, %p263
      %p265 = scmp.ne.s32.totalorder %s251, %s252
      %p266 = scmp.eq.s32.totalorder %s30, 5
      %p267 = por %p265, %p266
      %p269 = scmp.ne.s32.totalorder %s252, %s268
      %p270 = scmp.eq.s32.totalorder %s30, 0
      %p271 = por %p269, %p270
      %s272 = ssub.s32 %s24, %s31
      %p273 = scmp.eq.s32.totalorder %s272, 0
      %s275 = sadd.s32 %s274, 1
      %s276 = scalar_select %p273, %s274, %s275
      %p279 = pneg %p273
      %p280 = scmp.eq.s32.totalorder %s24, 5
      %p281 = por %p279, %p280
      %p282 = scmp.ne.s32.totalorder %s274, %s277
      %p283 = scmp.eq.s32.totalorder %s24, 0
      %p284 = por %p282, %p283
      %p285 = scmp.ne.s32.totalorder %s274, %s277
      %p286 = scmp.eq.s32.totalorder %s29, 5
      %p287 = por %p285, %p286
      %p288 = scmp.ne.s32.totalorder %s277, %s278
      %p289 = scmp.eq.s32.totalorder %s29, 0
      %p290 = por %p288, %p289
      %p291 = scmp.ne.s32.totalorder %s277, %s278
      %p292 = scmp.eq.s32.totalorder %s30, 5
      %p293 = por %p291, %p292
      %p295 = scmp.ne.s32.totalorder %s278, %s294
      %p296 = scmp.eq.s32.totalorder %s30, 0
      %p297 = por %p295, %p296
      %s298 = ssub.s32 %s24, %s31
      %p299 = scmp.eq.s32.totalorder %s298, 0
      %s301 = sadd.s32 %s300, 1
      %s302 = scalar_select %p299, %s300, %s301
      %p305 = pneg %p299
      %p306 = scmp.eq.s32.totalorder %s24, 5
      %p307 = por %p305, %p306
      %p308 = scmp.ne.s32.totalorder %s300, %s303
      %p309 = scmp.eq.s32.totalorder %s24, 0
      %p310 = por %p308, %p309
      %p311 = scmp.ne.s32.totalorder %s300, %s303
      %p312 = scmp.eq.s32.totalorder %s29, 5
      %p313 = por %p311, %p312
      %p314 = scmp.ne.s32.totalorder %s303, %s304
      %p315 = scmp.eq.s32.totalorder %s29, 0
      %p316 = por %p314, %p315
      %p317 = scmp.ne.s32.totalorder %s303, %s304
      %p318 = scmp.eq.s32.totalorder %s30, 5
      %p319 = por %p317, %p318
      %p321 = scmp.ne.s32.totalorder %s304, %s320
      %p322 = scmp.eq.s32.totalorder %s30, 0
      %p323 = por %p321, %p322
      %s324 = ssub.s32 %s24, %s31
      %p325 = scmp.eq.s32.totalorder %s324, 0
      %s327 = sadd.s32 %s326, 1
      %s328 = scalar_select %p325, %s326, %s327
      %p331 = pneg %p325
      %p332 = scmp.eq.s32.totalorder %s24, 5
      %p333 = por %p331, %p332
      %p334 = scmp.ne.s32.totalorder %s326, %s329
      %p335 = scmp.eq.s32.totalorder %s24, 0
      %p336 = por %p334, %p335
      %p337 = scmp.ne.s32.totalorder %s326, %s329
      %p338 = scmp.eq.s32.totalorder %s29, 5
      %p339 = por %p337, %p338
      %p340 = scmp.ne.s32.totalorder %s329, %s330
      %p341 = scmp.eq.s32.totalorder %s29, 0
      %p342 = por %p340, %p341
      %p343 = scmp.ne.s32.totalorder %s329, %s330
      %p344 = scmp.eq.s32.totalorder %s30, 5
      %p345 = por %p343, %p344
      %p347 = scmp.ne.s32.totalorder %s330, %s346
      %p348 = scmp.eq.s32.totalorder %s30, 0
      %p349 = por %p347, %p348
      %s351 = sadd.s32 %s350, 1
      %p354 = scmp.eq.s32.totalorder %s24, 5
      %p355 = scmp.ne.s32.totalorder %s350, %s352
      %p356 = scmp.eq.s32.totalorder %s24, 0
      %p357 = por %p355, %p356
      %p358 = scmp.ne.s32.totalorder %s350, %s352
      %p359 = scmp.eq.s32.totalorder %s29, 5
      %p360 = por %p358, %p359
      %p361 = scmp.ne.s32.totalorder %s352, %s353
      %p362 = scmp.eq.s32.totalorder %s29, 0
      %p363 = por %p361, %p362
      %p364 = scmp.ne.s32.totalorder %s352, %s353
      %p365 = scmp.eq.s32.totalorder %s30, 5
      %p366 = por %p364, %p365
      %p368 = scmp.ne.s32.totalorder %s353, %s367
      %p369 = scmp.eq.s32.totalorder %s30, 0
      %p370 = por %p368, %p369
      %s372 = sadd.s32 %s371, 1
      %p375 = scmp.eq.s32.totalorder %s24, 5
      %p376 = scmp.ne.s32.totalorder %s371, %s373
      %p377 = scmp.eq.s32.totalorder %s24, 0
      %p378 = por %p376, %p377
      %p379 = scmp.ne.s32.totalorder %s371, %s373
      %p380 = scmp.eq.s32.totalorder %s29, 5
      %p381 = por %p379, %p380
      %p382 = scmp.ne.s32.totalorder %s373, %s374
      %p383 = scmp.eq.s32.totalorder %s29, 0
      %p384 = por %p382, %p383
      %p385 = scmp.ne.s32.totalorder %s373, %s374
      %p386 = scmp.eq.s32.totalorder %s30, 5
      %p387 = por %p385, %p386
      %p389 = scmp.ne.s32.totalorder %s374, %s388
      %p390 = scmp.eq.s32.totalorder %s30, 0
      %p391 = por %p389, %p390
      %s393 = sadd.s32 %s392, 1
      %p396 = scmp.eq.s32.totalorder %s24, 5
      %p397 = scmp.ne.s32.totalorder %s392, %s394
      %p398 = scmp.eq.s32.totalorder %s24, 0
      %p399 = por %p397, %p398
      %p400 = scmp.ne.s32.totalorder %s392, %s394
      %p401 = scmp.eq.s32.totalorder %s29, 5
      %p402 = por %p400, %p401
      %p403 = scmp.ne.s32.totalorder %s394, %s395
      %p404 = scmp.eq.s32.totalorder %s29, 0
      %p405 = por %p403, %p404
      %p406 = scmp.ne.s32.totalorder %s394, %s395
      %p407 = scmp.eq.s32.totalorder %s30, 5
      %p408 = por %p406, %p407
      %p410 = scmp.ne.s32.totalorder %s395, %s409
      %p411 = scmp.eq.s32.totalorder %s30, 0
      %p412 = por %p410, %p411
      %p413 = scmp.le.s32.totalorder 1, %s24
      %p414 = scmp.lt.s32.totalorder %s24, 7
      %p415 = pnand %p413, %p414
      %p416 = pneg %p415
      // Predicated region
      $region9: #{postfinder_forward.1} parent=5 // pred_check
        _
      $region10: #{postfinder_forward.1} parent=5 // pred_check_branch
        %418 = sbr.rel (%p415) target = $region12
      $region11: #{postfinder_forward.1} parent=5 // pred_region
        %s419 = ssub.s32 %s24, 1
        // Predicated region
        $region13: #{postfinder_forward.1} parent=11 // pred_check
          %p420 = pneg %p45
        $region14: #{postfinder_forward.1} parent=11 // pred_check_branch
          %422 = sbr.rel (%p420) target = $region16
        $region15: #{postfinder_forward.1} parent=11 // pred_region
          %s424 = ssub.s32 256, 256
          %425 = vsyncadd [#allocation4], %s424
          %s426 = sshll.u32 [#allocation3], 4
          %s427 = int_to_ptr.vmem [resolvable:$true] %s426
          %432 = dma.hbm_to_vmem [thread:$0]  %s0, 256, %s427, [#allocation4], 128, 128, 8
        $region16: #{postfinder_forward.1} parent=11 // pred_fallthru
          _
        // Predicated region
        $region17: #{postfinder_forward.1} parent=11 // pred_check
          %p433 = pneg %p66
        $region18: #{postfinder_forward.1} parent=11 // pred_check_branch
          %435 = sbr.rel (%p433) target = $region20
        $region19: #{postfinder_forward.1} parent=11 // pred_region
          %s437 = ssub.s32 1536, 1536
          %438 = vsyncadd [#allocation6], %s437
          %s439 = sshll.u32 [#allocation5], 4
          %s440 = int_to_ptr.vmem [resolvable:$true] %s439
          %445 = dma.hbm_to_vmem [thread:$0]  %s1, 1536, %s440, [#allocation6], 64, 64, 4
        $region20: #{postfinder_forward.1} parent=11 // pred_fallthru
          _
        // Predicated region
        $region21: #{postfinder_forward.1} parent=11 // pred_check
          %p446 = pneg %p87
        $region22: #{postfinder_forward.1} parent=11 // pred_check_branch
          %448 = sbr.rel (%p446) target = $region24
        $region23: #{postfinder_forward.1} parent=11 // pred_region
          %s450 = ssub.s32 1536, 1536
          %451 = vsyncadd [#allocation6], %s450
          %s452 = sshll.u32 [#allocation7], 4
          %s453 = int_to_ptr.vmem [resolvable:$true] %s452
          %458 = dma.hbm_to_vmem [thread:$0]  %s2, 1536, %s453, [#allocation6], 64, 64, 4
        $region24: #{postfinder_forward.1} parent=11 // pred_fallthru
          _
        // Predicated region
        $region25: #{postfinder_forward.1} parent=11 // pred_check
          %p459 = pneg %p108
        $region26: #{postfinder_forward.1} parent=11 // pred_check_branch
          %461 = sbr.rel (%p459) target = $region28
        $region27: #{postfinder_forward.1} parent=11 // pred_region
          %s463 = ssub.s32 64, 64
          %464 = vsyncadd [#allocation9], %s463
          %s465 = sshll.u32 [#allocation8], 4
          %s466 = int_to_ptr.vmem [resolvable:$true] %s465
          %471 = dma.hbm_to_vmem [thread:$0]  %s3, 64, %s466, [#allocation9], 16, 16, 1
        $region28: #{postfinder_forward.1} parent=11 // pred_fallthru
          _
        // Predicated region
        $region29: #{postfinder_forward.1} parent=11 // pred_check
          %p472 = pneg %p363
        $region30: #{postfinder_forward.1} parent=11 // pred_check_branch
          %474 = sbr.rel (%p472) target = $region32
        $region31: #{postfinder_forward.1} parent=11 // pred_region
          %s476 = ssub.s32 384, 384
          %477 = vsyncadd [#allocation6], %s476
          %s478 = sshll.u32 [#allocation17], 4
          %s479 = int_to_ptr.vmem [resolvable:$true] %s478
          %484 = dma.hbm_to_vmem [thread:$0]  %s13, 384, %s479, [#allocation6], 64, 64, 4
        $region32: #{postfinder_forward.1} parent=11 // pred_fallthru
          _
        // Predicated region
        $region33: #{postfinder_forward.1} parent=11 // pred_check
          %p485 = pneg %p384
        $region34: #{postfinder_forward.1} parent=11 // pred_check_branch
          %487 = sbr.rel (%p485) target = $region36
        $region35: #{postfinder_forward.1} parent=11 // pred_region
          _
        $region36: #{postfinder_forward.1} parent=11 // pred_fallthru
          _
      $region12: #{postfinder_forward.1} parent=5 // pred_fallthru
        _
      %p488 = scmp.lt.s32.totalorder %s24, 6
      // Predicated region
      $region37: #{postfinder_forward.1} parent=5 // pred_check
        %p489 = pneg %p488
      $region38: #{postfinder_forward.1} parent=5 // pred_check_branch
        %491 = sbr.rel (%p489) target = $region40
      $region39: #{postfinder_forward.1} parent=5 // pred_region
        // Predicated region
        $region41: #{postfinder_forward.1} parent=39 // pred_check
          %p492 = pneg %p128
        $region42: #{postfinder_forward.1} parent=39 // pred_check_branch
          %494 = sbr.rel (%p492) target = $region44
        $region43: #{postfinder_forward.1} parent=39 // pred_region
          %s495 = sand.u32 %s24, 1
          %s496 = scalar_lea.sflag [#allocation4], %s495
          %s497 = sand.u32 %s118, 1
          %s498 = smul.addr %s497, 144
          %s499 = scalar_lea.vmem [#allocation10], %s498
          %s501 = ssub.s32 2304, 2304
          %502 = vsyncadd %s496, %s501
          %s503 = smul.addr %s24, 36
          %s504 = smul.addr %s503, 64
          %s505 = scalar_lea.hbm %s4, %s504
          %s506 = sshll.u32 %s499, 4
          %s507 = int_to_ptr.vmem [resolvable:$true] %s506
          %512 = dma.hbm_to_vmem [thread:$0]  %s505, 2304, %s507, %s496, 64, 64, 4
        $region44: #{postfinder_forward.1} parent=39 // pred_fallthru
          _
        // Predicated region
        $region45: #{postfinder_forward.1} parent=39 // pred_check
          %p513 = pneg %p154
        $region46: #{postfinder_forward.1} parent=39 // pred_check_branch
          %515 = sbr.rel (%p513) target = $region48
        $region47: #{postfinder_forward.1} parent=39 // pred_region
          %s516 = sand.u32 %s24, 1
          %s517 = scalar_lea.sflag [#allocation4], %s516
          %s518 = sand.u32 %s144, 1
          %s519 = smul.addr %s518, 144
          %s520 = scalar_lea.vmem [#allocation11], %s519
          %s522 = ssub.s32 2304, 2304
          %523 = vsyncadd %s517, %s522
          %s524 = smul.addr %s24, 36
          %s525 = smul.addr %s524, 64
          %s526 = scalar_lea.hbm %s5, %s525
          %s527 = sshll.u32 %s520, 4
          %s528 = int_to_ptr.vmem [resolvable:$true] %s527
          %533 = dma.hbm_to_vmem [thread:$0]  %s526, 2304, %s528, %s517, 64, 64, 4
        $region48: #{postfinder_forward.1} parent=39 // pred_fallthru
          _
        // Predicated region
        $region49: #{postfinder_forward.1} parent=39 // pred_check
          %p534 = pneg %p180
        $region50: #{postfinder_forward.1} parent=39 // pred_check_branch
          %536 = sbr.rel (%p534) target = $region52
        $region51: #{postfinder_forward.1} parent=39 // pred_region
          %s537 = sand.u32 %s24, 1
          %s538 = scalar_lea.sflag [#allocation4], %s537
          %s539 = sand.u32 %s170, 1
          %s540 = smul.addr %s539, 144
          %s541 = scalar_lea.vmem [#allocation12], %s540
          %s543 = ssub.s32 2304, 2304
          %544 = vsyncadd %s538, %s543
          %s545 = smul.addr %s24, 36
          %s546 = smul.addr %s545, 64
          %s547 = scalar_lea.hbm %s6, %s546
          %s548 = sshll.u32 %s541, 4
          %s549 = int_to_ptr.vmem [resolvable:$true] %s548
          %554 = dma.hbm_to_vmem [thread:$0]  %s547, 2304, %s549, %s538, 64, 64, 4
        $region52: #{postfinder_forward.1} parent=39 // pred_fallthru
          _
        // Predicated region
        $region53: #{postfinder_forward.1} parent=39 // pred_check
          %p555 = pneg %p206
        $region54: #{postfinder_forward.1} parent=39 // pred_check_branch
          %557 = sbr.rel (%p555) target = $region56
        $region55: #{postfinder_forward.1} parent=39 // pred_region
          %s558 = sand.u32 %s24, 1
          %s559 = scalar_lea.sflag [#allocation4], %s558
          %s560 = sand.u32 %s196, 1
          %s561 = smul.addr %s560, 24
          %s562 = scalar_lea.vmem [#allocation13], %s561
          %s564 = ssub.s32 384, 384
          %565 = vsyncadd %s559, %s564
          %s566 = smul.addr %s24, 6
          %s567 = smul.addr %s566, 64
          %s568 = scalar_lea.hbm %s7, %s567
          %s569 = sshll.u32 %s562, 4
          %s570 = int_to_ptr.vmem [resolvable:$true] %s569
          %575 = dma.hbm_to_vmem [thread:$0]  %s568, 384, %s570, %s559, 64, 64, 4
        $region56: #{postfinder_forward.1} parent=39 // pred_fallthru
          _
        // Predicated region
        $region57: #{postfinder_forward.1} parent=39 // pred_check
          %p576 = pneg %p232
        $region58: #{postfinder_forward.1} parent=39 // pred_check_branch
          %578 = sbr.rel (%p576) target = $region60
        $region59: #{postfinder_forward.1} parent=39 // pred_region
          %p579 = scmp.lt.s32.totalorder %s24, 5
          %s580 = scalar_select %p579, %s24, 5
          %s581 = smul.addr %s580, 3
          %s582 = smul.addr %s581, 8
          %s583 = scalar_lea.vmem %s8, %s582
        $region60: #{postfinder_forward.1} parent=39 // pred_fallthru
          _
        // Predicated region
        $region61: #{postfinder_forward.1} parent=39 // pred_check
          %p584 = pneg %p258
        $region62: #{postfinder_forward.1} parent=39 // pred_check_branch
          %586 = sbr.rel (%p584) target = $region64
        $region63: #{postfinder_forward.1} parent=39 // pred_region
          %s587 = sand.u32 %s24, 1
          %s588 = scalar_lea.sflag [#allocation4], %s587
          %s589 = sand.u32 %s248, 1
          %s590 = smul.addr %s589, 384
          %s591 = scalar_lea.vmem [#allocation14], %s590
          %s593 = ssub.s32 6144, 6144
          %594 = vsyncadd %s588, %s593
          %s595 = smul.addr %s24, 96
          %s596 = smul.addr %s595, 64
          %s597 = scalar_lea.hbm %s9, %s596
          %s598 = sshll.u32 %s591, 4
          %s599 = int_to_ptr.vmem [resolvable:$true] %s598
          %604 = dma.hbm_to_vmem [thread:$0]  %s597, 6144, %s599, %s588, 1024, 1024, 64
        $region64: #{postfinder_forward.1} parent=39 // pred_fallthru
          _
        // Predicated region
        $region65: #{postfinder_forward.1} parent=39 // pred_check
          %p605 = pneg %p284
        $region66: #{postfinder_forward.1} parent=39 // pred_check_branch
          %607 = sbr.rel (%p605) target = $region68
        $region67: #{postfinder_forward.1} parent=39 // pred_region
          %p608 = scmp.lt.s32.totalorder %s24, 5
          %s609 = scalar_select %p608, %s24, 5
          %s610 = smul.addr %s609, 16
          %s611 = scalar_lea.vmem %s10, %s610
        $region68: #{postfinder_forward.1} parent=39 // pred_fallthru
          _
        // Predicated region
        $region69: #{postfinder_forward.1} parent=39 // pred_check
          %p612 = pneg %p310
        $region70: #{postfinder_forward.1} parent=39 // pred_check_branch
          %614 = sbr.rel (%p612) target = $region72
        $region71: #{postfinder_forward.1} parent=39 // pred_region
          %s615 = sand.u32 %s24, 1
          %s616 = scalar_lea.sflag [#allocation4], %s615
          %s617 = sand.u32 %s300, 1
          %s618 = smul.addr %s617, 1024
          %s619 = scalar_lea.vmem [#allocation15], %s618
          %s621 = ssub.s32 16384, 16384
          %622 = vsyncadd %s616, %s621
          %s623 = smul.addr %s24, 256
          %s624 = smul.addr %s623, 64
          %s625 = scalar_lea.hbm %s11, %s624
          %s626 = sshll.u32 %s619, 4
          %s627 = int_to_ptr.vmem [resolvable:$true] %s626
          %632 = dma.hbm_to_vmem [thread:$0]  %s625, 16384, %s627, %s616, 64, 64, 4
        $region72: #{postfinder_forward.1} parent=39 // pred_fallthru
          _
        // Predicated region
        $region73: #{postfinder_forward.1} parent=39 // pred_check
          %p633 = pneg %p336
        $region74: #{postfinder_forward.1} parent=39 // pred_check_branch
          %635 = sbr.rel (%p633) target = $region76
        $region75: #{postfinder_forward.1} parent=39 // pred_region
          %s636 = sand.u32 %s24, 1
          %s637 = scalar_lea.sflag [#allocation4], %s636
          %s638 = sand.u32 %s326, 1
          %s639 = smul.addr %s638, 8
          %s640 = scalar_lea.vmem [#allocation16], %s639
          %s642 = ssub.s32 128, 128
          %643 = vsyncadd %s637, %s642
          %s644 = smul.addr %s24, 128
          %s645 = scalar_lea.hbm %s12, %s644
          %s647 = sshll.u32 %s640, 4
          %s648 = int_to_ptr.vmem [resolvable:$true] %s647
          %650 = dma.hbm_to_vmem [thread:$0]  %s645, 128, %s648, %s637
        $region76: #{postfinder_forward.1} parent=39 // pred_fallthru
          _
      $region40: #{postfinder_forward.1} parent=5 // pred_fallthru
        _
      %p651 = scmp.le.s32.totalorder 1, %s24
      %p652 = scmp.lt.s32.totalorder %s24, 7
      %p653 = pnand %p651, %p652
      %p654 = pneg %p653
      // Predicated region
      $region77: #{postfinder_forward.1} parent=5 // pred_check
        _
      $region78: #{postfinder_forward.1} parent=5 // pred_check_branch
        %656 = sbr.rel (%p653) target = $region80
      $region79: #{postfinder_forward.1} parent=5 // pred_region
        %s657 = ssub.s32 %s24, 1
        // Predicated region
        $region81: #{postfinder_forward.1} parent=79 // pred_check
          %p658 = pneg %p45
        $region82: #{postfinder_forward.1} parent=79 // pred_check_branch
          %660 = sbr.rel (%p658) target = $region84
        $region83: #{postfinder_forward.1} parent=79 // pred_region
          %661 = dma.done [#allocation4], 256
        $region84: #{postfinder_forward.1} parent=79 // pred_fallthru
          _
        // Predicated region
        $region85: #{postfinder_forward.1} parent=79 // pred_check
          %p662 = pneg %p66
        $region86: #{postfinder_forward.1} parent=79 // pred_check_branch
          %664 = sbr.rel (%p662) target = $region88
        $region87: #{postfinder_forward.1} parent=79 // pred_region
          %665 = dma.done [#allocation6], 1536
        $region88: #{postfinder_forward.1} parent=79 // pred_fallthru
          _
        // Predicated region
        $region89: #{postfinder_forward.1} parent=79 // pred_check
          %p666 = pneg %p87
        $region90: #{postfinder_forward.1} parent=79 // pred_check_branch
          %668 = sbr.rel (%p666) target = $region92
        $region91: #{postfinder_forward.1} parent=79 // pred_region
          %669 = dma.done [#allocation6], 1536
        $region92: #{postfinder_forward.1} parent=79 // pred_fallthru
          _
        // Predicated region
        $region93: #{postfinder_forward.1} parent=79 // pred_check
          %p670 = pneg %p108
        $region94: #{postfinder_forward.1} parent=79 // pred_check_branch
          %672 = sbr.rel (%p670) target = $region96
        $region95: #{postfinder_forward.1} parent=79 // pred_region
          %673 = dma.done [#allocation9], 64
        $region96: #{postfinder_forward.1} parent=79 // pred_fallthru
          _
        %s674 = sand.u32 %s29, 1
        %s675 = scalar_lea.sflag [#allocation4], %s674
        %s676 = sand.u32 %s121, 1
        %s677 = smul.addr %s676, 144
        %s678 = scalar_lea.vmem [#allocation10], %s677
        // Predicated region
        $region97: #{postfinder_forward.1} parent=79 // pred_check
          %p679 = pneg %p134
        $region98: #{postfinder_forward.1} parent=79 // pred_check_branch
          %681 = sbr.rel (%p679) target = $region100
        $region99: #{postfinder_forward.1} parent=79 // pred_region
          %682 = dma.done %s675, 2304
        $region100: #{postfinder_forward.1} parent=79 // pred_fallthru
          _
        %s683 = sand.u32 %s29, 1
        %s684 = scalar_lea.sflag [#allocation4], %s683
        %s685 = sand.u32 %s147, 1
        %s686 = smul.addr %s685, 144
        %s687 = scalar_lea.vmem [#allocation11], %s686
        // Predicated region
        $region101: #{postfinder_forward.1} parent=79 // pred_check
          %p688 = pneg %p160
        $region102: #{postfinder_forward.1} parent=79 // pred_check_branch
          %690 = sbr.rel (%p688) target = $region104
        $region103: #{postfinder_forward.1} parent=79 // pred_region
          %691 = dma.done %s684, 2304
        $region104: #{postfinder_forward.1} parent=79 // pred_fallthru
          _
        %s692 = sand.u32 %s29, 1
        %s693 = scalar_lea.sflag [#allocation4], %s692
        %s694 = sand.u32 %s173, 1
        %s695 = smul.addr %s694, 144
        %s696 = scalar_lea.vmem [#allocation12], %s695
        // Predicated region
        $region105: #{postfinder_forward.1} parent=79 // pred_check
          %p697 = pneg %p186
        $region106: #{postfinder_forward.1} parent=79 // pred_check_branch
          %699 = sbr.rel (%p697) target = $region108
        $region107: #{postfinder_forward.1} parent=79 // pred_region
          %700 = dma.done %s693, 2304
        $region108: #{postfinder_forward.1} parent=79 // pred_fallthru
          _
        %s701 = sand.u32 %s29, 1
        %s702 = scalar_lea.sflag [#allocation4], %s701
        %s703 = sand.u32 %s199, 1
        %s704 = smul.addr %s703, 24
        %s705 = scalar_lea.vmem [#allocation13], %s704
        // Predicated region
        $region109: #{postfinder_forward.1} parent=79 // pred_check
          %p706 = pneg %p212
        $region110: #{postfinder_forward.1} parent=79 // pred_check_branch
          %708 = sbr.rel (%p706) target = $region112
        $region111: #{postfinder_forward.1} parent=79 // pred_region
          %709 = dma.done %s702, 384
        $region112: #{postfinder_forward.1} parent=79 // pred_fallthru
          _
        %s710 = sand.u32 %s29, 1
        %s711 = scalar_lea.sflag [#allocation4], %s710
        %s712 = sand.u32 %s251, 1
        %s713 = smul.addr %s712, 384
        %s714 = scalar_lea.vmem [#allocation14], %s713
        // Predicated region
        $region113: #{postfinder_forward.1} parent=79 // pred_check
          %p715 = pneg %p264
        $region114: #{postfinder_forward.1} parent=79 // pred_check_branch
          %717 = sbr.rel (%p715) target = $region116
        $region115: #{postfinder_forward.1} parent=79 // pred_region
          %718 = dma.done %s711, 6144
        $region116: #{postfinder_forward.1} parent=79 // pred_fallthru
          _
        %s719 = sand.u32 %s29, 1
        %s720 = scalar_lea.sflag [#allocation4], %s719
        %s721 = sand.u32 %s303, 1
        %s722 = smul.addr %s721, 1024
        %s723 = scalar_lea.vmem [#allocation15], %s722
        // Predicated region
        $region117: #{postfinder_forward.1} parent=79 // pred_check
          %p724 = pneg %p316
        $region118: #{postfinder_forward.1} parent=79 // pred_check_branch
          %726 = sbr.rel (%p724) target = $region120
        $region119: #{postfinder_forward.1} parent=79 // pred_region
          %727 = dma.done %s720, 16384
        $region120: #{postfinder_forward.1} parent=79 // pred_fallthru
          _
        %s728 = sand.u32 %s29, 1
        %s729 = scalar_lea.sflag [#allocation4], %s728
        %s730 = sand.u32 %s329, 1
        %s731 = smul.addr %s730, 8
        %s732 = scalar_lea.vmem [#allocation16], %s731
        // Predicated region
        $region121: #{postfinder_forward.1} parent=79 // pred_check
          %p733 = pneg %p342
        $region122: #{postfinder_forward.1} parent=79 // pred_check_branch
          %735 = sbr.rel (%p733) target = $region124
        $region123: #{postfinder_forward.1} parent=79 // pred_region
          %736 = dma.done %s729, 128
        $region124: #{postfinder_forward.1} parent=79 // pred_fallthru
          _
        // Predicated region
        $region125: #{postfinder_forward.1} parent=79 // pred_check
          %p737 = pneg %p363
        $region126: #{postfinder_forward.1} parent=79 // pred_check_branch
          %739 = sbr.rel (%p737) target = $region128
        $region127: #{postfinder_forward.1} parent=79 // pred_region
          %740 = dma.done [#allocation6], 384
        $region128: #{postfinder_forward.1} parent=79 // pred_fallthru
          _
        %p741 = pneg %p45
        %p742 = pneg %p42
        %p743 = pneg %p66
        %p744 = pneg %p63
        %p745 = pneg %p87
        %p746 = pneg %p84
        %p747 = pneg %p108
        %p748 = pneg %p105
        %s749 = sand.u32 %s29, 1
        %s750 = scalar_lea.sflag [#allocation4], %s749
        %s751 = sand.u32 %s121, 1
        %s752 = smul.addr %s751, 144
        %s753 = scalar_lea.vmem [#allocation10], %s752
        %p754 = pneg %p134
        %p755 = pneg %p131
        %s756 = sand.u32 %s29, 1
        %s757 = scalar_lea.sflag [#allocation4], %s756
        %s758 = sand.u32 %s147, 1
        %s759 = smul.addr %s758, 144
        %s760 = scalar_lea.vmem [#allocation11], %s759
        %p761 = pneg %p160
        %p762 = pneg %p157
        %s763 = sand.u32 %s29, 1
        %s764 = scalar_lea.sflag [#allocation4], %s763
        %s765 = sand.u32 %s173, 1
        %s766 = smul.addr %s765, 144
        %s767 = scalar_lea.vmem [#allocation12], %s766
        %p768 = pneg %p186
        %p769 = pneg %p183
        %s770 = sand.u32 %s29, 1
        %s771 = scalar_lea.sflag [#allocation4], %s770
        %s772 = sand.u32 %s199, 1
        %s773 = smul.addr %s772, 24
        %s774 = scalar_lea.vmem [#allocation13], %s773
        %p775 = pneg %p212
        %p776 = pneg %p209
        %p777 = scmp.lt.s32.totalorder %s29, 5
        %s778 = scalar_select %p777, %s29, 5
        %s779 = smul.addr %s778, 3
        %s780 = smul.addr %s779, 8
        %s781 = scalar_lea.vmem %s8, %s780
        %p782 = pneg %p238
        %p783 = pneg %p235
        %s784 = sand.u32 %s29, 1
        %s785 = scalar_lea.sflag [#allocation4], %s784
        %s786 = sand.u32 %s251, 1
        %s787 = smul.addr %s786, 384
        %s788 = scalar_lea.vmem [#allocation14], %s787
        %p789 = pneg %p264
        %p790 = pneg %p261
        %p791 = scmp.lt.s32.totalorder %s29, 5
        %s792 = scalar_select %p791, %s29, 5
        %s793 = smul.addr %s792, 16
        %s794 = scalar_lea.vmem %s10, %s793
        %p795 = pneg %p290
        %p796 = pneg %p287
        %s797 = sand.u32 %s29, 1
        %s798 = scalar_lea.sflag [#allocation4], %s797
        %s799 = sand.u32 %s303, 1
        %s800 = smul.addr %s799, 1024
        %s801 = scalar_lea.vmem [#allocation15], %s800
        %p802 = pneg %p316
        %p803 = pneg %p313
        %s804 = sand.u32 %s29, 1
        %s805 = scalar_lea.sflag [#allocation4], %s804
        %s806 = sand.u32 %s329, 1
        %s807 = smul.addr %s806, 8
        %s808 = scalar_lea.vmem [#allocation16], %s807
        %p809 = pneg %p342
        %p810 = pneg %p339
        %p811 = pneg %p363
        %p812 = pneg %p360
        %p813 = pneg %p384
        %p814 = pneg %p381
        %p815 = pneg %p405
        %p816 = pneg %p402
        %p817 = scmp.lt.s32.totalorder %s29, 5
        %s818 = scalar_select %p817, %s29, 5
        %s819 = smul.addr %s818, 3
        %s820 = smul.addr %s819, 8
        %s821 = scalar_lea.vmem %s8, %s820
        %p822 = scmp.lt.s32.totalorder %s29, 5
        %s823 = scalar_select %p822, %s29, 5
        %s824 = smul.addr %s823, 16
        %s825 = scalar_lea.vmem %s10, %s824
        %p827 = scmp.eq.s32.totalorder %s29, 0
        // Predicated region
        $region129: #{postfinder_forward.1} parent=79 // pred_check
          %p828 = pneg %p827
        $region130: #{postfinder_forward.1} parent=79 // pred_check_branch
          %830 = sbr.rel (%p828) target = $region132
        $region131: #{postfinder_forward.1} parent=79 // pred_region
          %v831 = vld [vmem:[#allocation3] sm:$0xff]
          %v832 = vld [vmem:[#allocation3 + $0x8] sm:$0xff]
          %v833 = vpack.c.bf16 %v831, %v831
          %v834 = vpack.c.bf16 %v832, %v832
          %v835 = vld [vmem:[#allocation5] sm:$0xf]
          %v836 = vld [vmem:[#allocation5 + $0x4] sm:$0xf]
          %v837 = vld [vmem:[#allocation5 + $0x8] sm:$0xf]
          %v838 = vld [vmem:[#allocation5 + $0xc] sm:$0xf]
          %v839 = vld [vmem:[#allocation5 + $0x10] sm:$0xf]
          %v840 = vld [vmem:[#allocation5 + $0x14] sm:$0xf]
          %v841 = vld [vmem:[#allocation8] sm:$0x1]
          %v843 = vlaneseq
          %v844 = vshrl.u32 %v843, 7
          %v845 = vsub.s32 0, %v844
          %v846 = vrot.slane %v841, %v845
          %v850 = vunpack.c.l.s4 1983009808
          %v851 = vunpack.c.0.s8 %v850
          %v852 = vlaneseq
          %v853 = vshrl.u32 %v852, 7
          %v854 = vsub.s32 %v851, %v853
          %v855 = vrot.slane %v833, %v854
          %v856 = vcombine.high %v855, %v855
          %v858 = vunpack.c.l.s4 1983009808
          %v859 = vunpack.c.0.s8 %v858
          %v860 = vlaneseq
          %v861 = vshrl.u32 %v860, 7
          %v862 = vsub.s32 %v859, %v861
          %v863 = vrot.slane %v834, %v862
          %v864 = vcombine.high %v863, %v863
          %vm865 = vcmask 1040384
          %vm866 = vcmask 1042434
          %vm867 = vmor %vm865, %vm866
          %vm868 = vcmask 1044484
          %vm869 = vmor %vm867, %vm868
          %vm870 = vcmask 1046534
          %vm871 = vmor %vm869, %vm870
          %v872 = vrot.slane %v855, 7
          %v873 = vrot.slane %v872, 2
          %v874 = vrot.slane %v856, 7
          %v875 = vsel %vm871, %v873, %v874
          %v876 = vrot.slane %v863, 7
          %v877 = vrot.slane %v876, 2
          %v878 = vrot.slane %v864, 7
          %v879 = vsel %vm871, %v877, %v878
          %v880 = vcombine.low %v875, %v879
          %v882 = vunpack.c.l.s4 1983009808
          %v883 = vunpack.c.0.s8 %v882
          %v884 = vlaneseq
          %v885 = vshrl.u32 %v884, 7
          %v886 = vsub.s32 %v883, %v885
          %v887 = vrot.slane %v880, %v886
          %v894 = vunpack.c.l.b16 %v835
          %v895 = vunpack.c.l.b16 %v836
          %v896 = vunpack.c.l.b16 %v837
          %v897 = vunpack.c.l.b16 %v838
          %v898 = vunpack.c.l.b16 %v839
          %v899 = vunpack.c.l.b16 %v840
          %v900 = vpack.c.b16 %v895, %v894
          %v901 = vpack.c.b16 %v897, %v896
          %v902 = vpack.c.b16 %v899, %v898
          %v906 = vcombine.low %v846, %v846
          %vm908 = vcmask 392192
          %v910 = vsel %vm908, %v887, 0
          %912 = vmatprep.subr.bf16.mxu0 0
          %913 = vmatpush1.bf16.msra.mxu0 0
          %914 = vmatprep.subr.bf16.mxu0 0
          %915 = vmatpush1.bf16.msra.mxu0 0
          %916 = vmatprep.subr.bf16.mxu0 0
          %917 = vmatpush1.bf16.msra.mxu0 0
          %918 = vmatprep.subr.bf16.mxu0 0
          %919 = vmatpush1.bf16.msra.mxu0 0
          %920 = vmatprep.subr.bf16.mxu0 0
          %921 = vmatpush1.bf16.msra.mxu0 0
          %922 = vmatprep.subr.bf16.mxu0 0
          %923 = vmatpush1.bf16.msra.mxu0 %v902
          %924 = vmatprep.subr.bf16.mxu0 0
          %925 = vmatpush1.bf16.msra.mxu0 %v901
          %926 = vmatprep.subr.bf16.mxu0 0
          %927 = vmatpush1.bf16.msra.mxu0 %v900
          %928 = vmatprep.subr.bf16.mxu0 0
          %929 = vmatpush2.bf16.msra.mxu0 0
          %930 = vmatprep.subr.bf16.mxu0 0
          %931 = vmatpush2.bf16.msra.mxu0 0
          %932 = vmatprep.subr.bf16.mxu0 0
          %933 = vmatpush2.bf16.msra.mxu0 0
          %934 = vmatprep.subr.bf16.mxu0 0
          %935 = vmatpush2.bf16.msra.mxu0 0
          %936 = vmatprep.subr.bf16.mxu0 0
          %937 = vmatpush2.bf16.msra.mxu0 0
          %938 = vmatprep.subr.bf16.mxu0 0
          %939 = vmatpush2.bf16.msra.mxu0 0
          %940 = vmatprep.subr.bf16.mxu0 0
          %941 = vmatpush2.bf16.msra.mxu0 0
          %942 = vmatprep.subr.bf16.mxu0 0
          %943 = vmatpush2.bf16.msra.mxu0 0
          %944 = vmatprep.mubr.bf16.mxu0 0
          %945 = vmatmul.mubr.bf16.gmra.mxu0 %v910
          %v946 = vpop.f32.mrf.mxu0
          %v947 = vadd.f32 %v906, %v946
          %v948 = vpop.f32.mrf.mxu0
          %v949 = vpop.f32.mrf.mxu0
          %v950 = vpop.f32.mrf.mxu0
          %951 = vdwg.mxu0
          %v953 = vcombine.high %v947, %v947
          %s955 = scalar_lea.vmem [#allocation5], 24
          %v956 = vld [vmem:[%s955] sm:$0xf]
          %v957 = vld [vmem:[%s955 + $0x4] sm:$0xf]
          %v958 = vld [vmem:[%s955 + $0x8] sm:$0xf]
          %v959 = vld [vmem:[%s955 + $0xc] sm:$0xf]
          %v960 = vld [vmem:[%s955 + $0x10] sm:$0xf]
          %v961 = vld [vmem:[%s955 + $0x14] sm:$0xf]
          %s962 = scalar_lea.vmem [#allocation8], 1
          %v963 = vld [vmem:[%s962] sm:$0x1]
          %v965 = vlaneseq
          %v966 = vshrl.u32 %v965, 7
          %v967 = vsub.s32 0, %v966
          %v968 = vrot.slane %v963, %v967
          %v975 = vunpack.c.l.b16 %v956
          %v976 = vunpack.c.l.b16 %v957
          %v977 = vunpack.c.l.b16 %v958
          %v978 = vunpack.c.l.b16 %v959
          %v979 = vunpack.c.l.b16 %v960
          %v980 = vunpack.c.l.b16 %v961
          %v981 = vpack.c.b16 %v976, %v975
          %v982 = vpack.c.b16 %v978, %v977
          %v983 = vpack.c.b16 %v980, %v979
          %v987 = vcombine.low %v968, %v968
          %989 = vmatprep.subr.bf16.mxu0 0
          %990 = vmatpush1.bf16.msra.mxu0 0
          %991 = vmatprep.subr.bf16.mxu0 0
          %992 = vmatpush1.bf16.msra.mxu0 0
          %993 = vmatprep.subr.bf16.mxu0 0
          %994 = vmatpush1.bf16.msra.mxu0 0
          %995 = vmatprep.subr.bf16.mxu0 0
          %996 = vmatpush1.bf16.msra.mxu0 0
          %997 = vmatprep.subr.bf16.mxu0 0
          %998 = vmatpush1.bf16.msra.mxu0 0
          %999 = vmatprep.subr.bf16.mxu0 0
          %1000 = vmatpush1.bf16.msra.mxu0 %v983
          %1001 = vmatprep.subr.bf16.mxu0 0
          %1002 = vmatpush1.bf16.msra.mxu0 %v982
          %1003 = vmatprep.subr.bf16.mxu0 0
          %1004 = vmatpush1.bf16.msra.mxu0 %v981
          %1005 = vmatprep.subr.bf16.mxu0 0
          %1006 = vmatpush2.bf16.msra.mxu0 0
          %1007 = vmatprep.subr.bf16.mxu0 0
          %1008 = vmatpush2.bf16.msra.mxu0 0
          %1009 = vmatprep.subr.bf16.mxu0 0
          %1010 = vmatpush2.bf16.msra.mxu0 0
          %1011 = vmatprep.subr.bf16.mxu0 0
          %1012 = vmatpush2.bf16.msra.mxu0 0
          %1013 = vmatprep.subr.bf16.mxu0 0
          %1014 = vmatpush2.bf16.msra.mxu0 0
          %1015 = vmatprep.subr.bf16.mxu0 0
          %1016 = vmatpush2.bf16.msra.mxu0 0
          %1017 = vmatprep.subr.bf16.mxu0 0
          %1018 = vmatpush2.bf16.msra.mxu0 0
          %1019 = vmatprep.subr.bf16.mxu0 0
          %1020 = vmatpush2.bf16.msra.mxu0 0
          %1021 = vmatprep.mubr.bf16.mxu0 0
          %1022 = vmatmul.mubr.bf16.gmra.mxu0 %v910
          %v1023 = vpop.f32.mrf.mxu0
          %v1024 = vadd.f32 %v987, %v1023
          %v1025 = vpop.f32.mrf.mxu0
          %v1026 = vpop.f32.mrf.mxu0
          %v1027 = vpop.f32.mrf.mxu0
          %1028 = vdwg.mxu0
          %v1030 = vcombine.high %v1024, %v1024
          %s1032 = scalar_lea.vmem [#allocation5], 48
          %v1033 = vld [vmem:[%s1032] sm:$0xf]
          %v1034 = vld [vmem:[%s1032 + $0x4] sm:$0xf]
          %v1035 = vld [vmem:[%s1032 + $0x8] sm:$0xf]
          %v1036 = vld [vmem:[%s1032 + $0xc] sm:$0xf]
          %v1037 = vld [vmem:[%s1032 + $0x10] sm:$0xf]
          %v1038 = vld [vmem:[%s1032 + $0x14] sm:$0xf]
          %s1039 = scalar_lea.vmem [#allocation8], 2
          %v1040 = vld [vmem:[%s1039] sm:$0x1]
          %v1042 = vlaneseq
          %v1043 = vshrl.u32 %v1042, 7
          %v1044 = vsub.s32 0, %v1043
          %v1045 = vrot.slane %v1040, %v1044
          %v1052 = vunpack.c.l.b16 %v1033
          %v1053 = vunpack.c.l.b16 %v1034
          %v1054 = vunpack.c.l.b16 %v1035
          %v1055 = vunpack.c.l.b16 %v1036
          %v1056 = vunpack.c.l.b16 %v1037
          %v1057 = vunpack.c.l.b16 %v1038
          %v1058 = vpack.c.b16 %v1053, %v1052
          %v1059 = vpack.c.b16 %v1055, %v1054
          %v1060 = vpack.c.b16 %v1057, %v1056
          %v1064 = vcombine.low %v1045, %v1045
          %1066 = vmatprep.subr.bf16.mxu0 0
          %1067 = vmatpush1.bf16.msra.mxu0 0
          %1068 = vmatprep.subr.bf16.mxu0 0
          %1069 = vmatpush1.bf16.msra.mxu0 0
          %1070 = vmatprep.subr.bf16.mxu0 0
          %1071 = vmatpush1.bf16.msra.mxu0 0
          %1072 = vmatprep.subr.bf16.mxu0 0
          %1073 = vmatpush1.bf16.msra.mxu0 0
          %1074 = vmatprep.subr.bf16.mxu0 0
          %1075 = vmatpush1.bf16.msra.mxu0 0
          %1076 = vmatprep.subr.bf16.mxu0 0
          %1077 = vmatpush1.bf16.msra.mxu0 %v1060
          %1078 = vmatprep.subr.bf16.mxu0 0
          %1079 = vmatpush1.bf16.msra.mxu0 %v1059
          %1080 = vmatprep.subr.bf16.mxu0 0
          %1081 = vmatpush1.bf16.msra.mxu0 %v1058
          %1082 = vmatprep.subr.bf16.mxu0 0
          %1083 = vmatpush2.bf16.msra.mxu0 0
          %1084 = vmatprep.subr.bf16.mxu0 0
          %1085 = vmatpush2.bf16.msra.mxu0 0
          %1086 = vmatprep.subr.bf16.mxu0 0
          %1087 = vmatpush2.bf16.msra.mxu0 0
          %1088 = vmatprep.subr.bf16.mxu0 0
          %1089 = vmatpush2.bf16.msra.mxu0 0
          %1090 = vmatprep.subr.bf16.mxu0 0
          %1091 = vmatpush2.bf16.msra.mxu0 0
          %1092 = vmatprep.subr.bf16.mxu0 0
          %1093 = vmatpush2.bf16.msra.mxu0 0
          %1094 = vmatprep.subr.bf16.mxu0 0
          %1095 = vmatpush2.bf16.msra.mxu0 0
          %1096 = vmatprep.subr.bf16.mxu0 0
          %1097 = vmatpush2.bf16.msra.mxu0 0
          %1098 = vmatprep.mubr.bf16.mxu0 0
          %1099 = vmatmul.mubr.bf16.gmra.mxu0 %v910
          %v1100 = vpop.f32.mrf.mxu0
          %v1101 = vadd.f32 %v1064, %v1100
          %v1102 = vpop.f32.mrf.mxu0
          %v1103 = vpop.f32.mrf.mxu0
          %v1104 = vpop.f32.mrf.mxu0
          %1105 = vdwg.mxu0
          %v1107 = vcombine.high %v1101, %v1101
          %s1109 = scalar_lea.vmem [#allocation5], 72
          %v1110 = vld [vmem:[%s1109] sm:$0xf]
          %v1111 = vld [vmem:[%s1109 + $0x4] sm:$0xf]
          %v1112 = vld [vmem:[%s1109 + $0x8] sm:$0xf]
          %v1113 = vld [vmem:[%s1109 + $0xc] sm:$0xf]
          %v1114 = vld [vmem:[%s1109 + $0x10] sm:$0xf]
          %v1115 = vld [vmem:[%s1109 + $0x14] sm:$0xf]
          %s1116 = scalar_lea.vmem [#allocation8], 3
          %v1117 = vld [vmem:[%s1116] sm:$0x1]
          %v1119 = vlaneseq
          %v1120 = vshrl.u32 %v1119, 7
          %v1121 = vsub.s32 0, %v1120
          %v1122 = vrot.slane %v1117, %v1121
          %v1129 = vunpack.c.l.b16 %v1110
          %v1130 = vunpack.c.l.b16 %v1111
          %v1131 = vunpack.c.l.b16 %v1112
          %v1132 = vunpack.c.l.b16 %v1113
          %v1133 = vunpack.c.l.b16 %v1114
          %v1134 = vunpack.c.l.b16 %v1115
          %v1135 = vpack.c.b16 %v1130, %v1129
          %v1136 = vpack.c.b16 %v1132, %v1131
          %v1137 = vpack.c.b16 %v1134, %v1133
          %v1141 = vcombine.low %v1122, %v1122
          %1143 = vmatprep.subr.bf16.mxu0 0
          %1144 = vmatpush1.bf16.msra.mxu0 0
          %1145 = vmatprep.subr.bf16.mxu0 0
          %1146 = vmatpush1.bf16.msra.mxu0 0
          %1147 = vmatprep.subr.bf16.mxu0 0
          %1148 = vmatpush1.bf16.msra.mxu0 0
          %1149 = vmatprep.subr.bf16.mxu0 0
          %1150 = vmatpush1.bf16.msra.mxu0 0
          %1151 = vmatprep.subr.bf16.mxu0 0
          %1152 = vmatpush1.bf16.msra.mxu0 0
          %1153 = vmatprep.subr.bf16.mxu0 0
          %1154 = vmatpush1.bf16.msra.mxu0 %v1137
          %1155 = vmatprep.subr.bf16.mxu0 0
          %1156 = vmatpush1.bf16.msra.mxu0 %v1136
          %1157 = vmatprep.subr.bf16.mxu0 0
          %1158 = vmatpush1.bf16.msra.mxu0 %v1135
          %1159 = vmatprep.subr.bf16.mxu0 0
          %1160 = vmatpush2.bf16.msra.mxu0 0
          %1161 = vmatprep.subr.bf16.mxu0 0
          %1162 = vmatpush2.bf16.msra.mxu0 0
          %1163 = vmatprep.subr.bf16.mxu0 0
          %1164 = vmatpush2.bf16.msra.mxu0 0
          %1165 = vmatprep.subr.bf16.mxu0 0
          %1166 = vmatpush2.bf16.msra.mxu0 0
          %1167 = vmatprep.subr.bf16.mxu0 0
          %1168 = vmatpush2.bf16.msra.mxu0 0
          %1169 = vmatprep.subr.bf16.mxu0 0
          %1170 = vmatpush2.bf16.msra.mxu0 0
          %1171 = vmatprep.subr.bf16.mxu0 0
          %1172 = vmatpush2.bf16.msra.mxu0 0
          %1173 = vmatprep.subr.bf16.mxu0 0
          %1174 = vmatpush2.bf16.msra.mxu0 0
          %1175 = vmatprep.mubr.bf16.mxu0 0
          %1176 = vmatmul.mubr.bf16.gmra.mxu0 %v910
          %v1177 = vpop.f32.mrf.mxu0
          %v1178 = vadd.f32 %v1141, %v1177
          %v1179 = vpop.f32.mrf.mxu0
          %v1180 = vpop.f32.mrf.mxu0
          %v1181 = vpop.f32.mrf.mxu0
          %1182 = vdwg.mxu0
          %v1184 = vcombine.high %v1178, %v1178
          %v1186 = vld [vmem:[#allocation7] sm:$0xf]
          %v1187 = vld [vmem:[#allocation7 + $0x4] sm:$0xf]
          %v1188 = vld [vmem:[#allocation7 + $0x8] sm:$0xf]
          %v1189 = vld [vmem:[#allocation7 + $0xc] sm:$0xf]
          %v1190 = vld [vmem:[#allocation7 + $0x10] sm:$0xf]
          %v1191 = vld [vmem:[#allocation7 + $0x14] sm:$0xf]
          %s1192 = scalar_lea.vmem [#allocation7], 24
          %v1193 = vld [vmem:[%s1192] sm:$0xf]
          %v1194 = vld [vmem:[%s1192 + $0x4] sm:$0xf]
          %v1195 = vld [vmem:[%s1192 + $0x8] sm:$0xf]
          %v1196 = vld [vmem:[%s1192 + $0xc] sm:$0xf]
          %v1197 = vld [vmem:[%s1192 + $0x10] sm:$0xf]
          %v1198 = vld [vmem:[%s1192 + $0x14] sm:$0xf]
          %s1199 = scalar_lea.vmem [#allocation7], 48
          %v1200 = vld [vmem:[%s1199] sm:$0xf]
          %v1201 = vld [vmem:[%s1199 + $0x4] sm:$0xf]
          %v1202 = vld [vmem:[%s1199 + $0x8] sm:$0xf]
          %v1203 = vld [vmem:[%s1199 + $0xc] sm:$0xf]
          %v1204 = vld [vmem:[%s1199 + $0x10] sm:$0xf]
          %v1205 = vld [vmem:[%s1199 + $0x14] sm:$0xf]
          %s1206 = scalar_lea.vmem [#allocation7], 72
          %v1207 = vld [vmem:[%s1206] sm:$0xf]
          %v1208 = vld [vmem:[%s1206 + $0x4] sm:$0xf]
          %v1209 = vld [vmem:[%s1206 + $0x8] sm:$0xf]
          %v1210 = vld [vmem:[%s1206 + $0xc] sm:$0xf]
          %v1211 = vld [vmem:[%s1206 + $0x10] sm:$0xf]
          %v1212 = vld [vmem:[%s1206 + $0x14] sm:$0xf]
          %v1219 = vunpack.c.l.b16 %v1186
          %v1220 = vunpack.c.l.b16 %v1187
          %v1221 = vunpack.c.l.b16 %v1188
          %v1222 = vunpack.c.l.b16 %v1189
          %v1223 = vunpack.c.l.b16 %v1190
          %v1224 = vunpack.c.l.b16 %v1191
          %v1225 = vpack.c.b16 %v1220, %v1219
          %v1226 = vpack.c.b16 %v1222, %v1221
          %v1227 = vpack.c.b16 %v1224, %v1223
          %v1232 = vsel %vm908, 0, 0
          %1234 = vmatprep.subr.bf16.mxu0 0
          %1235 = vmatpush1.bf16.msra.mxu0 0
          %1236 = vmatprep.subr.bf16.mxu0 0
          %1237 = vmatpush1.bf16.msra.mxu0 0
          %1238 = vmatprep.subr.bf16.mxu0 0
          %1239 = vmatpush1.bf16.msra.mxu0 0
          %1240 = vmatprep.subr.bf16.mxu0 0
          %1241 = vmatpush1.bf16.msra.mxu0 0
          %1242 = vmatprep.subr.bf16.mxu0 0
          %1243 = vmatpush1.bf16.msra.mxu0 0
          %1244 = vmatprep.subr.bf16.mxu0 0
          %1245 = vmatpush1.bf16.msra.mxu0 %v1227
          %1246 = vmatprep.subr.bf16.mxu0 0
          %1247 = vmatpush1.bf16.msra.mxu0 %v1226
          %1248 = vmatprep.subr.bf16.mxu0 0
          %1249 = vmatpush1.bf16.msra.mxu0 %v1225
          %1250 = vmatprep.subr.bf16.mxu0 0
          %1251 = vmatpush2.bf16.msra.mxu0 0
          %1252 = vmatprep.subr.bf16.mxu0 0
          %1253 = vmatpush2.bf16.msra.mxu0 0
          %1254 = vmatprep.subr.bf16.mxu0 0
          %1255 = vmatpush2.bf16.msra.mxu0 0
          %1256 = vmatprep.subr.bf16.mxu0 0
          %1257 = vmatpush2.bf16.msra.mxu0 0
          %1258 = vmatprep.subr.bf16.mxu0 0
          %1259 = vmatpush2.bf16.msra.mxu0 0
          %1260 = vmatprep.subr.bf16.mxu0 0
          %1261 = vmatpush2.bf16.msra.mxu0 0
          %1262 = vmatprep.subr.bf16.mxu0 0
          %1263 = vmatpush2.bf16.msra.mxu0 0
          %1264 = vmatprep.subr.bf16.mxu0 0
          %1265 = vmatpush2.bf16.msra.mxu0 0
          %1266 = vmatprep.mubr.bf16.mxu0 0
          %1267 = vmatmul.mubr.bf16.gmra.mxu0 %v1232
          %v1268 = vpop.f32.mrf.mxu0
          %v1269 = vadd.f32 0.0, %v1268
          %v1270 = vpop.f32.mrf.mxu0
          %v1271 = vpop.f32.mrf.mxu0
          %v1272 = vpop.f32.mrf.mxu0
          %1273 = vdwg.mxu0
          %v1275 = vrot.slane %v1269, 1
          %v1278 = vadd.f32 %v947, %v1269
          %v1279 = vadd.f32 %v953, %v1275
          %v1286 = vunpack.c.l.b16 %v1193
          %v1287 = vunpack.c.l.b16 %v1194
          %v1288 = vunpack.c.l.b16 %v1195
          %v1289 = vunpack.c.l.b16 %v1196
          %v1290 = vunpack.c.l.b16 %v1197
          %v1291 = vunpack.c.l.b16 %v1198
          %v1292 = vpack.c.b16 %v1287, %v1286
          %v1293 = vpack.c.b16 %v1289, %v1288
          %v1294 = vpack.c.b16 %v1291, %v1290
          %1298 = vmatprep.subr.bf16.mxu0 0
          %1299 = vmatpush1.bf16.msra.mxu0 0
          %1300 = vmatprep.subr.bf16.mxu0 0
          %1301 = vmatpush1.bf16.msra.mxu0 0
          %1302 = vmatprep.subr.bf16.mxu0 0
          %1303 = vmatpush1.bf16.msra.mxu0 0
          %1304 = vmatprep.subr.bf16.mxu0 0
          %1305 = vmatpush1.bf16.msra.mxu0 0
          %1306 = vmatprep.subr.bf16.mxu0 0
          %1307 = vmatpush1.bf16.msra.mxu0 0
          %1308 = vmatprep.subr.bf16.mxu0 0
          %1309 = vmatpush1.bf16.msra.mxu0 %v1294
          %1310 = vmatprep.subr.bf16.mxu0 0
          %1311 = vmatpush1.bf16.msra.mxu0 %v1293
          %1312 = vmatprep.subr.bf16.mxu0 0
          %1313 = vmatpush1.bf16.msra.mxu0 %v1292
          %1314 = vmatprep.subr.bf16.mxu0 0
          %1315 = vmatpush2.bf16.msra.mxu0 0
          %1316 = vmatprep.subr.bf16.mxu0 0
          %1317 = vmatpush2.bf16.msra.mxu0 0
          %1318 = vmatprep.subr.bf16.mxu0 0
          %1319 = vmatpush2.bf16.msra.mxu0 0
          %1320 = vmatprep.subr.bf16.mxu0 0
          %1321 = vmatpush2.bf16.msra.mxu0 0
          %1322 = vmatprep.subr.bf16.mxu0 0
          %1323 = vmatpush2.bf16.msra.mxu0 0
          %1324 = vmatprep.subr.bf16.mxu0 0
          %1325 = vmatpush2.bf16.msra.mxu0 0
          %1326 = vmatprep.subr.bf16.mxu0 0
          %1327 = vmatpush2.bf16.msra.mxu0 0
          %1328 = vmatprep.subr.bf16.mxu0 0
          %1329 = vmatpush2.bf16.msra.mxu0 0
          %1330 = vmatprep.mubr.bf16.mxu0 0
          %1331 = vmatmul.mubr.bf16.gmra.mxu0 %v1232
          %v1332 = vpop.f32.mrf.mxu0
          %v1333 = vadd.f32 0.0, %v1332
          %v1334 = vpop.f32.mrf.mxu0
          %v1335 = vpop.f32.mrf.mxu0
          %v1336 = vpop.f32.mrf.mxu0
          %1337 = vdwg.mxu0
          %v1339 = vrot.slane %v1333, 1
          %v1342 = vadd.f32 %v1024, %v1333
          %v1343 = vadd.f32 %v1030, %v1339
          %v1350 = vunpack.c.l.b16 %v1200
          %v1351 = vunpack.c.l.b16 %v1201
          %v1352 = vunpack.c.l.b16 %v1202
          %v1353 = vunpack.c.l.b16 %v1203
          %v1354 = vunpack.c.l.b16 %v1204
          %v1355 = vunpack.c.l.b16 %v1205
          %v1356 = vpack.c.b16 %v1351, %v1350
          %v1357 = vpack.c.b16 %v1353, %v1352
          %v1358 = vpack.c.b16 %v1355, %v1354
          %1362 = vmatprep.subr.bf16.mxu0 0
          %1363 = vmatpush1.bf16.msra.mxu0 0
          %1364 = vmatprep.subr.bf16.mxu0 0
          %1365 = vmatpush1.bf16.msra.mxu0 0
          %1366 = vmatprep.subr.bf16.mxu0 0
          %1367 = vmatpush1.bf16.msra.mxu0 0
          %1368 = vmatprep.subr.bf16.mxu0 0
          %1369 = vmatpush1.bf16.msra.mxu0 0
          %1370 = vmatprep.subr.bf16.mxu0 0
          %1371 = vmatpush1.bf16.msra.mxu0 0
          %1372 = vmatprep.subr.bf16.mxu0 0
          %1373 = vmatpush1.bf16.msra.mxu0 %v1358
          %1374 = vmatprep.subr.bf16.mxu0 0
          %1375 = vmatpush1.bf16.msra.mxu0 %v1357
          %1376 = vmatprep.subr.bf16.mxu0 0
          %1377 = vmatpush1.bf16.msra.mxu0 %v1356
          %1378 = vmatprep.subr.bf16.mxu0 0
          %1379 = vmatpush2.bf16.msra.mxu0 0
          %1380 = vmatprep.subr.bf16.mxu0 0
          %1381 = vmatpush2.bf16.msra.mxu0 0
          %1382 = vmatprep.subr.bf16.mxu0 0
          %1383 = vmatpush2.bf16.msra.mxu0 0
          %1384 = vmatprep.subr.bf16.mxu0 0
          %1385 = vmatpush2.bf16.msra.mxu0 0
          %1386 = vmatprep.subr.bf16.mxu0 0
          %1387 = vmatpush2.bf16.msra.mxu0 0
          %1388 = vmatprep.subr.bf16.mxu0 0
          %1389 = vmatpush2.bf16.msra.mxu0 0
          %1390 = vmatprep.subr.bf16.mxu0 0
          %1391 = vmatpush2.bf16.msra.mxu0 0
          %1392 = vmatprep.subr.bf16.mxu0 0
          %1393 = vmatpush2.bf16.msra.mxu0 0
          %1394 = vmatprep.mubr.bf16.mxu0 0
          %1395 = vmatmul.mubr.bf16.gmra.mxu0 %v1232
          %v1396 = vpop.f32.mrf.mxu0
          %v1397 = vadd.f32 0.0, %v1396
          %v1398 = vpop.f32.mrf.mxu0
          %v1399 = vpop.f32.mrf.mxu0
          %v1400 = vpop.f32.mrf.mxu0
          %1401 = vdwg.mxu0
          %v1403 = vrot.slane %v1397, 1
          %v1406 = vadd.f32 %v1101, %v1397
          %v1407 = vadd.f32 %v1107, %v1403
          %v1414 = vunpack.c.l.b16 %v1207
          %v1415 = vunpack.c.l.b16 %v1208
          %v1416 = vunpack.c.l.b16 %v1209
          %v1417 = vunpack.c.l.b16 %v1210
          %v1418 = vunpack.c.l.b16 %v1211
          %v1419 = vunpack.c.l.b16 %v1212
          %v1420 = vpack.c.b16 %v1415, %v1414
          %v1421 = vpack.c.b16 %v1417, %v1416
          %v1422 = vpack.c.b16 %v1419, %v1418
          %1426 = vmatprep.subr.bf16.mxu0 0
          %1427 = vmatpush1.bf16.msra.mxu0 0
          %1428 = vmatprep.subr.bf16.mxu0 0
          %1429 = vmatpush1.bf16.msra.mxu0 0
          %1430 = vmatprep.subr.bf16.mxu0 0
          %1431 = vmatpush1.bf16.msra.mxu0 0
          %1432 = vmatprep.subr.bf16.mxu0 0
          %1433 = vmatpush1.bf16.msra.mxu0 0
          %1434 = vmatprep.subr.bf16.mxu0 0
          %1435 = vmatpush1.bf16.msra.mxu0 0
          %1436 = vmatprep.subr.bf16.mxu0 0
          %1437 = vmatpush1.bf16.msra.mxu0 %v1422
          %1438 = vmatprep.subr.bf16.mxu0 0
          %1439 = vmatpush1.bf16.msra.mxu0 %v1421
          %1440 = vmatprep.subr.bf16.mxu0 0
          %1441 = vmatpush1.bf16.msra.mxu0 %v1420
          %1442 = vmatprep.subr.bf16.mxu0 0
          %1443 = vmatpush2.bf16.msra.mxu0 0
          %1444 = vmatprep.subr.bf16.mxu0 0
          %1445 = vmatpush2.bf16.msra.mxu0 0
          %1446 = vmatprep.subr.bf16.mxu0 0
          %1447 = vmatpush2.bf16.msra.mxu0 0
          %1448 = vmatprep.subr.bf16.mxu0 0
          %1449 = vmatpush2.bf16.msra.mxu0 0
          %1450 = vmatprep.subr.bf16.mxu0 0
          %1451 = vmatpush2.bf16.msra.mxu0 0
          %1452 = vmatprep.subr.bf16.mxu0 0
          %1453 = vmatpush2.bf16.msra.mxu0 0
          %1454 = vmatprep.subr.bf16.mxu0 0
          %1455 = vmatpush2.bf16.msra.mxu0 0
          %1456 = vmatprep.subr.bf16.mxu0 0
          %1457 = vmatpush2.bf16.msra.mxu0 0
          %1458 = vmatprep.mubr.bf16.mxu0 0
          %1459 = vmatmul.mubr.bf16.gmra.mxu0 %v1232
          %v1460 = vpop.f32.mrf.mxu0
          %v1461 = vadd.f32 0.0, %v1460
          %v1462 = vpop.f32.mrf.mxu0
          %v1463 = vpop.f32.mrf.mxu0
          %v1464 = vpop.f32.mrf.mxu0
          %1465 = vdwg.mxu0
          %v1467 = vrot.slane %v1461, 1
          %v1470 = vadd.f32 %v1178, %v1461
          %v1471 = vadd.f32 %v1184, %v1467
          %v1472 = vxor.u32 %v1278, 2147483648
          %v1473 = vxor.u32 %v1279, 2147483648
          %v1474 = vmul.f32 %v1472, 1.442695
          %v1475 = vpow.pop %v1474
          %v1476 = vmul.f32 %v1473, 1.442695
          %v1477 = vpow.pop %v1476
          %v1478 = vadd.f32 %v1475, 1.0
          %v1479 = vadd.f32 %v1477, 1.0
          %v1480 = vrcp.pop %v1478
          %v1481 = vmul.f32 1.0, %v1480
          %v1482 = vrcp.pop %v1479
          %v1483 = vmul.f32 1.0, %v1482
          %v1484 = vxor.u32 %v1342, 2147483648
          %v1485 = vxor.u32 %v1343, 2147483648
          %v1486 = vmul.f32 %v1484, 1.442695
          %v1487 = vpow.pop %v1486
          %v1488 = vmul.f32 %v1485, 1.442695
          %v1489 = vpow.pop %v1488
          %v1490 = vadd.f32 %v1487, 1.0
          %v1491 = vadd.f32 %v1489, 1.0
          %v1492 = vrcp.pop %v1490
          %v1493 = vmul.f32 1.0, %v1492
          %v1494 = vrcp.pop %v1491
          %v1495 = vmul.f32 1.0, %v1494
          %v1496 = vtanh.pop %v1406
          %v1497 = vtanh.pop %v1407
          %v1498 = vxor.u32 %v1470, 2147483648
          %v1499 = vxor.u32 %v1471, 2147483648
          %v1500 = vmul.f32 %v1498, 1.442695
          %v1501 = vpow.pop %v1500
          %v1502 = vmul.f32 %v1499, 1.442695
          %v1503 = vpow.pop %v1502
          %v1504 = vadd.f32 %v1501, 1.0
          %v1505 = vadd.f32 %v1503, 1.0
          %v1506 = vrcp.pop %v1504
          %v1507 = vmul.f32 1.0, %v1506
          %v1508 = vrcp.pop %v1505
          %v1509 = vmul.f32 1.0, %v1508
          %v1510 = vmul.f32 %v1493, 0.0
          %v1511 = vmul.f32 %v1495, 0.0
          %v1512 = vmul.f32 %v1481, %v1496
          %v1513 = vmul.f32 %v1483, %v1497
          %v1514 = vadd.f32 %v1510, %v1512
          %v1515 = vadd.f32 %v1511, %v1513
          %v1516 = vtanh.pop %v1514
          %v1517 = vtanh.pop %v1515
          %v1518 = vmul.f32 %v1507, %v1516
          %v1519 = vmul.f32 %v1509, %v1517
          %v1520 = vpack.c.bf16 %v1518, %v1518
          %v1521 = vpack.c.bf16 %v1519, %v1519
          %v1524 = vunpack.c.l.b16 %v1520
          %v1525 = vunpack.c.l.b16 %v1521
          %v1526 = vrot.slane %v1525, 7
          %vm1527 = vcmask 1041409
          %v1528 = vsel %vm1527, %v1526, %v1524
          %v1529 = vpack.c.b16 %v1528, %v1528
          %v1531 = vsel %vm908, %v1529, 0
          %1533 = vmatprep.subr.bf16.mxu0 0
          %1534 = vmatpush1.bf16.msra.mxu0 0
          %1535 = vmatprep.subr.bf16.mxu0 0
          %1536 = vmatpush1.bf16.msra.mxu0 0
          %1537 = vmatprep.subr.bf16.mxu0 0
          %1538 = vmatpush1.bf16.msra.mxu0 0
          %1539 = vmatprep.subr.bf16.mxu0 0
          %1540 = vmatpush1.bf16.msra.mxu0 0
          %1541 = vmatprep.subr.bf16.mxu0 0
          %1542 = vmatpush1.bf16.msra.mxu0 0
          %1543 = vmatprep.subr.bf16.mxu0 0
          %1544 = vmatpush1.bf16.msra.mxu0 %v1227
          %1545 = vmatprep.subr.bf16.mxu0 0
          %1546 = vmatpush1.bf16.msra.mxu0 %v1226
          %1547 = vmatprep.subr.bf16.mxu0 0
          %1548 = vmatpush1.bf16.msra.mxu0 %v1225
          %1549 = vmatprep.subr.bf16.mxu0 0
          %1550 = vmatpush2.bf16.msra.mxu0 0
          %1551 = vmatprep.subr.bf16.mxu0 0
          %1552 = vmatpush2.bf16.msra.mxu0 0
          %1553 = vmatprep.subr.bf16.mxu0 0
          %1554 = vmatpush2.bf16.msra.mxu0 0
          %1555 = vmatprep.subr.bf16.mxu0 0
          %1556 = vmatpush2.bf16.msra.mxu0 0
          %1557 = vmatprep.subr.bf16.mxu0 0
          %1558 = vmatpush2.bf16.msra.mxu0 0
          %1559 = vmatprep.subr.bf16.mxu0 0
          %1560 = vmatpush2.bf16.msra.mxu0 0
          %1561 = vmatprep.subr.bf16.mxu0 0
          %1562 = vmatpush2.bf16.msra.mxu0 0
          %1563 = vmatprep.subr.bf16.mxu0 0
          %1564 = vmatpush2.bf16.msra.mxu0 0
          %1565 = vmatprep.mubr.bf16.mxu0 0
          %1566 = vmatmul.mubr.bf16.gmra.mxu0 %v1531
          %v1567 = vpop.f32.mrf.mxu0
          %v1568 = vadd.f32 0.0, %v1567
          %v1569 = vpop.f32.mrf.mxu0
          %v1570 = vpop.f32.mrf.mxu0
          %v1571 = vpop.f32.mrf.mxu0
          %1572 = vdwg.mxu0
          %v1574 = vrot.slane %v1568, 7
          %v1577 = vadd.f32 %v947, %v1574
          %v1578 = vadd.f32 %v953, %v1568
          %1579 = vmatprep.subr.bf16.mxu0 0
          %1580 = vmatpush1.bf16.msra.mxu0 0
          %1581 = vmatprep.subr.bf16.mxu0 0
          %1582 = vmatpush1.bf16.msra.mxu0 0
          %1583 = vmatprep.subr.bf16.mxu0 0
          %1584 = vmatpush1.bf16.msra.mxu0 0
          %1585 = vmatprep.subr.bf16.mxu0 0
          %1586 = vmatpush1.bf16.msra.mxu0 0
          %1587 = vmatprep.subr.bf16.mxu0 0
          %1588 = vmatpush1.bf16.msra.mxu0 0
          %1589 = vmatprep.subr.bf16.mxu0 0
          %1590 = vmatpush1.bf16.msra.mxu0 %v1294
          %1591 = vmatprep.subr.bf16.mxu0 0
          %1592 = vmatpush1.bf16.msra.mxu0 %v1293
          %1593 = vmatprep.subr.bf16.mxu0 0
          %1594 = vmatpush1.bf16.msra.mxu0 %v1292
          %1595 = vmatprep.subr.bf16.mxu0 0
          %1596 = vmatpush2.bf16.msra.mxu0 0
          %1597 = vmatprep.subr.bf16.mxu0 0
          %1598 = vmatpush2.bf16.msra.mxu0 0
          %1599 = vmatprep.subr.bf16.mxu0 0
          %1600 = vmatpush2.bf16.msra.mxu0 0
          %1601 = vmatprep.subr.bf16.mxu0 0
          %1602 = vmatpush2.bf16.msra.mxu0 0
          %1603 = vmatprep.subr.bf16.mxu0 0
          %1604 = vmatpush2.bf16.msra.mxu0 0
          %1605 = vmatprep.subr.bf16.mxu0 0
          %1606 = vmatpush2.bf16.msra.mxu0 0
          %1607 = vmatprep.subr.bf16.mxu0 0
          %1608 = vmatpush2.bf16.msra.mxu0 0
          %1609 = vmatprep.subr.bf16.mxu0 0
          %1610 = vmatpush2.bf16.msra.mxu0 0
          %1611 = vmatprep.mubr.bf16.mxu0 0
          %1612 = vmatmul.mubr.bf16.gmra.mxu0 %v1531
          %v1613 = vpop.f32.mrf.mxu0
          %v1614 = vadd.f32 0.0, %v1613
          %v1615 = vpop.f32.mrf.mxu0
          %v1616 = vpop.f32.mrf.mxu0
          %v1617 = vpop.f32.mrf.mxu0
          %1618 = vdwg.mxu0
          %v1620 = vrot.slane %v1614, 7
          %v1623 = vadd.f32 %v1024, %v1620
          %v1624 = vadd.f32 %v1030, %v1614
          %1625 = vmatprep.subr.bf16.mxu0 0
          %1626 = vmatpush1.bf16.msra.mxu0 0
          %1627 = vmatprep.subr.bf16.mxu0 0
          %1628 = vmatpush1.bf16.msra.mxu0 0
          %1629 = vmatprep.subr.bf16.mxu0 0
          %1630 = vmatpush1.bf16.msra.mxu0 0
          %1631 = vmatprep.subr.bf16.mxu0 0
          %1632 = vmatpush1.bf16.msra.mxu0 0
          %1633 = vmatprep.subr.bf16.mxu0 0
          %1634 = vmatpush1.bf16.msra.mxu0 0
          %1635 = vmatprep.subr.bf16.mxu0 0
          %1636 = vmatpush1.bf16.msra.mxu0 %v1358
          %1637 = vmatprep.subr.bf16.mxu0 0
          %1638 = vmatpush1.bf16.msra.mxu0 %v1357
          %1639 = vmatprep.subr.bf16.mxu0 0
          %1640 = vmatpush1.bf16.msra.mxu0 %v1356
          %1641 = vmatprep.subr.bf16.mxu0 0
          %1642 = vmatpush2.bf16.msra.mxu0 0
          %1643 = vmatprep.subr.bf16.mxu0 0
          %1644 = vmatpush2.bf16.msra.mxu0 0
          %1645 = vmatprep.subr.bf16.mxu0 0
          %1646 = vmatpush2.bf16.msra.mxu0 0
          %1647 = vmatprep.subr.bf16.mxu0 0
          %1648 = vmatpush2.bf16.msra.mxu0 0
          %1649 = vmatprep.subr.bf16.mxu0 0
          %1650 = vmatpush2.bf16.msra.mxu0 0
          %1651 = vmatprep.subr.bf16.mxu0 0
          %1652 = vmatpush2.bf16.msra.mxu0 0
          %1653 = vmatprep.subr.bf16.mxu0 0
          %1654 = vmatpush2.bf16.msra.mxu0 0
          %1655 = vmatprep.subr.bf16.mxu0 0
          %1656 = vmatpush2.bf16.msra.mxu0 0
          %1657 = vmatprep.mubr.bf16.mxu0 0
          %1658 = vmatmul.mubr.bf16.gmra.mxu0 %v1531
          %v1659 = vpop.f32.mrf.mxu0
          %v1660 = vadd.f32 0.0, %v1659
          %v1661 = vpop.f32.mrf.mxu0
          %v1662 = vpop.f32.mrf.mxu0
          %v1663 = vpop.f32.mrf.mxu0
          %1664 = vdwg.mxu0
          %v1666 = vrot.slane %v1660, 7
          %v1669 = vadd.f32 %v1101, %v1666
          %v1670 = vadd.f32 %v1107, %v1660
          %1671 = vmatprep.subr.bf16.mxu0 0
          %1672 = vmatpush1.bf16.msra.mxu0 0
          %1673 = vmatprep.subr.bf16.mxu0 0
          %1674 = vmatpush1.bf16.msra.mxu0 0
          %1675 = vmatprep.subr.bf16.mxu0 0
          %1676 = vmatpush1.bf16.msra.mxu0 0
          %1677 = vmatprep.subr.bf16.mxu0 0
          %1678 = vmatpush1.bf16.msra.mxu0 0
          %1679 = vmatprep.subr.bf16.mxu0 0
          %1680 = vmatpush1.bf16.msra.mxu0 0
          %1681 = vmatprep.subr.bf16.mxu0 0
          %1682 = vmatpush1.bf16.msra.mxu0 %v1422
          %1683 = vmatprep.subr.bf16.mxu0 0
          %1684 = vmatpush1.bf16.msra.mxu0 %v1421
          %1685 = vmatprep.subr.bf16.mxu0 0
          %1686 = vmatpush1.bf16.msra.mxu0 %v1420
          %1687 = vmatprep.subr.bf16.mxu0 0
          %1688 = vmatpush2.bf16.msra.mxu0 0
          %1689 = vmatprep.subr.bf16.mxu0 0
          %1690 = vmatpush2.bf16.msra.mxu0 0
          %1691 = vmatprep.subr.bf16.mxu0 0
          %1692 = vmatpush2.bf16.msra.mxu0 0
          %1693 = vmatprep.subr.bf16.mxu0 0
          %1694 = vmatpush2.bf16.msra.mxu0 0
          %1695 = vmatprep.subr.bf16.mxu0 0
          %1696 = vmatpush2.bf16.msra.mxu0 0
          %1697 = vmatprep.subr.bf16.mxu0 0
          %1698 = vmatpush2.bf16.msra.mxu0 0
          %1699 = vmatprep.subr.bf16.mxu0 0
          %1700 = vmatpush2.bf16.msra.mxu0 0
          %1701 = vmatprep.subr.bf16.mxu0 0
          %1702 = vmatpush2.bf16.msra.mxu0 0
          %1703 = vmatprep.mubr.bf16.mxu0 0
          %1704 = vmatmul.mubr.bf16.gmra.mxu0 %v1531
          %v1705 = vpop.f32.mrf.mxu0
          %v1706 = vadd.f32 0.0, %v1705
          %v1707 = vpop.f32.mrf.mxu0
          %v1708 = vpop.f32.mrf.mxu0
          %v1709 = vpop.f32.mrf.mxu0
          %1710 = vdwg.mxu0
          %v1712 = vrot.slane %v1706, 7
          %v1715 = vadd.f32 %v1178, %v1712
          %v1716 = vadd.f32 %v1184, %v1706
          %v1717 = vxor.u32 %v1577, 2147483648
          %v1718 = vxor.u32 %v1578, 2147483648
          %v1719 = vmul.f32 %v1717, 1.442695
          %v1720 = vpow.pop %v1719
          %v1721 = vmul.f32 %v1718, 1.442695
          %v1722 = vpow.pop %v1721
          %v1723 = vadd.f32 %v1720, 1.0
          %v1724 = vadd.f32 %v1722, 1.0
          %v1725 = vrcp.pop %v1723
          %v1726 = vmul.f32 1.0, %v1725
          %v1727 = vrcp.pop %v1724
          %v1728 = vmul.f32 1.0, %v1727
          %v1729 = vxor.u32 %v1623, 2147483648
          %v1730 = vxor.u32 %v1624, 2147483648
          %v1731 = vmul.f32 %v1729, 1.442695
          %v1732 = vpow.pop %v1731
          %v1733 = vmul.f32 %v1730, 1.442695
          %v1734 = vpow.pop %v1733
          %v1735 = vadd.f32 %v1732, 1.0
          %v1736 = vadd.f32 %v1734, 1.0
          %v1737 = vrcp.pop %v1735
          %v1738 = vmul.f32 1.0, %v1737
          %v1739 = vrcp.pop %v1736
          %v1740 = vmul.f32 1.0, %v1739
          %v1741 = vtanh.pop %v1669
          %v1742 = vtanh.pop %v1670
          %v1743 = vxor.u32 %v1715, 2147483648
          %v1744 = vxor.u32 %v1716, 2147483648
          %v1745 = vmul.f32 %v1743, 1.442695
          %v1746 = vpow.pop %v1745
          %v1747 = vmul.f32 %v1744, 1.442695
          %v1748 = vpow.pop %v1747
          %v1749 = vadd.f32 %v1746, 1.0
          %v1750 = vadd.f32 %v1748, 1.0
          %v1751 = vrcp.pop %v1749
          %v1752 = vmul.f32 1.0, %v1751
          %v1753 = vrcp.pop %v1750
          %v1754 = vmul.f32 1.0, %v1753
          %v1757 = vrot.slane %v1514, 7
          %v1758 = vrot.slane %v1515, 7
          %v1761 = vmul.f32 %v1738, %v1757
          %v1762 = vmul.f32 %v1740, %v1758
          %v1763 = vmul.f32 %v1726, %v1741
          %v1764 = vmul.f32 %v1728, %v1742
          %v1765 = vadd.f32 %v1761, %v1763
          %v1766 = vadd.f32 %v1762, %v1764
          %v1767 = vtanh.pop %v1765
          %v1768 = vtanh.pop %v1766
          %v1769 = vmul.f32 %v1752, %v1767
          %v1770 = vmul.f32 %v1754, %v1768
          %v1771 = vpack.c.bf16 %v1769, %v1769
          %v1772 = vpack.c.bf16 %v1770, %v1770
          %v1775 = vunpack.c.l.b16 %v1771
          %v1776 = vunpack.c.l.b16 %v1772
          %v1777 = vrot.slane %v1775, 1
          %v1778 = vsel %vm1527, %v1776, %v1777
          %v1779 = vpack.c.b16 %v1778, %v1778
          %v1781 = vsel %vm908, %v1779, 0
          %1783 = vmatprep.subr.bf16.mxu0 0
          %1784 = vmatpush1.bf16.msra.mxu0 0
          %1785 = vmatprep.subr.bf16.mxu0 0
          %1786 = vmatpush1.bf16.msra.mxu0 0
          %1787 = vmatprep.subr.bf16.mxu0 0
          %1788 = vmatpush1.bf16.msra.mxu0 0
          %1789 = vmatprep.subr.bf16.mxu0 0
          %1790 = vmatpush1.bf16.msra.mxu0 0
          %1791 = vmatprep.subr.bf16.mxu0 0
          %1792 = vmatpush1.bf16.msra.mxu0 0
          %1793 = vmatprep.subr.bf16.mxu0 0
          %1794 = vmatpush1.bf16.msra.mxu0 %v1227
          %1795 = vmatprep.subr.bf16.mxu0 0
          %1796 = vmatpush1.bf16.msra.mxu0 %v1226
          %1797 = vmatprep.subr.bf16.mxu0 0
          %1798 = vmatpush1.bf16.msra.mxu0 %v1225
          %1799 = vmatprep.subr.bf16.mxu0 0
          %1800 = vmatpush2.bf16.msra.mxu0 0
          %1801 = vmatprep.subr.bf16.mxu0 0
          %1802 = vmatpush2.bf16.msra.mxu0 0
          %1803 = vmatprep.subr.bf16.mxu0 0
          %1804 = vmatpush2.bf16.msra.mxu0 0
          %1805 = vmatprep.subr.bf16.mxu0 0
          %1806 = vmatpush2.bf16.msra.mxu0 0
          %1807 = vmatprep.subr.bf16.mxu0 0
          %1808 = vmatpush2.bf16.msra.mxu0 0
          %1809 = vmatprep.subr.bf16.mxu0 0
          %1810 = vmatpush2.bf16.msra.mxu0 0
          %1811 = vmatprep.subr.bf16.mxu0 0
          %1812 = vmatpush2.bf16.msra.mxu0 0
          %1813 = vmatprep.subr.bf16.mxu0 0
          %1814 = vmatpush2.bf16.msra.mxu0 0
          %1815 = vmatprep.mubr.bf16.mxu0 0
          %1816 = vmatmul.mubr.bf16.gmra.mxu0 %v1781
          %v1817 = vpop.f32.mrf.mxu0
          %v1818 = vadd.f32 0.0, %v1817
          %v1819 = vpop.f32.mrf.mxu0
          %v1820 = vpop.f32.mrf.mxu0
          %v1821 = vpop.f32.mrf.mxu0
          %1822 = vdwg.mxu0
          %v1824 = vrot.slane %v1818, 6
          %v1825 = vrot.slane %v1818, 7
          %v1828 = vadd.f32 %v947, %v1824
          %v1829 = vadd.f32 %v953, %v1825
          %1830 = vmatprep.subr.bf16.mxu0 0
          %1831 = vmatpush1.bf16.msra.mxu0 0
          %1832 = vmatprep.subr.bf16.mxu0 0
          %1833 = vmatpush1.bf16.msra.mxu0 0
          %1834 = vmatprep.subr.bf16.mxu0 0
          %1835 = vmatpush1.bf16.msra.mxu0 0
          %1836 = vmatprep.subr.bf16.mxu0 0
          %1837 = vmatpush1.bf16.msra.mxu0 0
          %1838 = vmatprep.subr.bf16.mxu0 0
          %1839 = vmatpush1.bf16.msra.mxu0 0
          %1840 = vmatprep.subr.bf16.mxu0 0
          %1841 = vmatpush1.bf16.msra.mxu0 %v1294
          %1842 = vmatprep.subr.bf16.mxu0 0
          %1843 = vmatpush1.bf16.msra.mxu0 %v1293
          %1844 = vmatprep.subr.bf16.mxu0 0
          %1845 = vmatpush1.bf16.msra.mxu0 %v1292
          %1846 = vmatprep.subr.bf16.mxu0 0
          %1847 = vmatpush2.bf16.msra.mxu0 0
          %1848 = vmatprep.subr.bf16.mxu0 0
          %1849 = vmatpush2.bf16.msra.mxu0 0
          %1850 = vmatprep.subr.bf16.mxu0 0
          %1851 = vmatpush2.bf16.msra.mxu0 0
          %1852 = vmatprep.subr.bf16.mxu0 0
          %1853 = vmatpush2.bf16.msra.mxu0 0
          %1854 = vmatprep.subr.bf16.mxu0 0
          %1855 = vmatpush2.bf16.msra.mxu0 0
          %1856 = vmatprep.subr.bf16.mxu0 0
          %1857 = vmatpush2.bf16.msra.mxu0 0
          %1858 = vmatprep.subr.bf16.mxu0 0
          %1859 = vmatpush2.bf16.msra.mxu0 0
          %1860 = vmatprep.subr.bf16.mxu0 0
          %1861 = vmatpush2.bf16.msra.mxu0 0
          %1862 = vmatprep.mubr.bf16.mxu0 0
          %1863 = vmatmul.mubr.bf16.gmra.mxu0 %v1781
          %v1864 = vpop.f32.mrf.mxu0
          %v1865 = vadd.f32 0.0, %v1864
          %v1866 = vpop.f32.mrf.mxu0
          %v1867 = vpop.f32.mrf.mxu0
          %v1868 = vpop.f32.mrf.mxu0
          %1869 = vdwg.mxu0
          %v1871 = vrot.slane %v1865, 6
          %v1872 = vrot.slane %v1865, 7
          %v1875 = vadd.f32 %v1024, %v1871
          %v1876 = vadd.f32 %v1030, %v1872
          %1877 = vmatprep.subr.bf16.mxu0 0
          %1878 = vmatpush1.bf16.msra.mxu0 0
          %1879 = vmatprep.subr.bf16.mxu0 0
          %1880 = vmatpush1.bf16.msra.mxu0 0
          %1881 = vmatprep.subr.bf16.mxu0 0
          %1882 = vmatpush1.bf16.msra.mxu0 0
          %1883 = vmatprep.subr.bf16.mxu0 0
          %1884 = vmatpush1.bf16.msra.mxu0 0
          %1885 = vmatprep.subr.bf16.mxu0 0
          %1886 = vmatpush1.bf16.msra.mxu0 0
          %1887 = vmatprep.subr.bf16.mxu0 0
          %1888 = vmatpush1.bf16.msra.mxu0 %v1358
          %1889 = vmatprep.subr.bf16.mxu0 0
          %1890 = vmatpush1.bf16.msra.mxu0 %v1357
          %1891 = vmatprep.subr.bf16.mxu0 0
          %1892 = vmatpush1.bf16.msra.mxu0 %v1356
          %1893 = vmatprep.subr.bf16.mxu0 0
          %1894 = vmatpush2.bf16.msra.mxu0 0
          %1895 = vmatprep.subr.bf16.mxu0 0
          %1896 = vmatpush2.bf16.msra.mxu0 0
          %1897 = vmatprep.subr.bf16.mxu0 0
          %1898 = vmatpush2.bf16.msra.mxu0 0
          %1899 = vmatprep.subr.bf16.mxu0 0
          %1900 = vmatpush2.bf16.msra.mxu0 0
          %1901 = vmatprep.subr.bf16.mxu0 0
          %1902 = vmatpush2.bf16.msra.mxu0 0
          %1903 = vmatprep.subr.bf16.mxu0 0
          %1904 = vmatpush2.bf16.msra.mxu0 0
          %1905 = vmatprep.subr.bf16.mxu0 0
          %1906 = vmatpush2.bf16.msra.mxu0 0
          %1907 = vmatprep.subr.bf16.mxu0 0
          %1908 = vmatpush2.bf16.msra.mxu0 0
          %1909 = vmatprep.mubr.bf16.mxu0 0
          %1910 = vmatmul.mubr.bf16.gmra.mxu0 %v1781
          %v1911 = vpop.f32.mrf.mxu0
          %v1912 = vadd.f32 0.0, %v1911
          %v1913 = vpop.f32.mrf.mxu0
          %v1914 = vpop.f32.mrf.mxu0
          %v1915 = vpop.f32.mrf.mxu0
          %1916 = vdwg.mxu0
          %v1918 = vrot.slane %v1912, 6
          %v1919 = vrot.slane %v1912, 7
          %v1922 = vadd.f32 %v1101, %v1918
          %v1923 = vadd.f32 %v1107, %v1919
          %1924 = vmatprep.subr.bf16.mxu0 0
          %1925 = vmatpush1.bf16.msra.mxu0 0
          %1926 = vmatprep.subr.bf16.mxu0 0
          %1927 = vmatpush1.bf16.msra.mxu0 0
          %1928 = vmatprep.subr.bf16.mxu0 0
          %1929 = vmatpush1.bf16.msra.mxu0 0
          %1930 = vmatprep.subr.bf16.mxu0 0
          %1931 = vmatpush1.bf16.msra.mxu0 0
          %1932 = vmatprep.subr.bf16.mxu0 0
          %1933 = vmatpush1.bf16.msra.mxu0 0
          %1934 = vmatprep.subr.bf16.mxu0 0
          %1935 = vmatpush1.bf16.msra.mxu0 %v1422
          %1936 = vmatprep.subr.bf16.mxu0 0
          %1937 = vmatpush1.bf16.msra.mxu0 %v1421
          %1938 = vmatprep.subr.bf16.mxu0 0
          %1939 = vmatpush1.bf16.msra.mxu0 %v1420
          %1940 = vmatprep.subr.bf16.mxu0 0
          %1941 = vmatpush2.bf16.msra.mxu0 0
          %1942 = vmatprep.subr.bf16.mxu0 0
          %1943 = vmatpush2.bf16.msra.mxu0 0
          %1944 = vmatprep.subr.bf16.mxu0 0
          %1945 = vmatpush2.bf16.msra.mxu0 0
          %1946 = vmatprep.subr.bf16.mxu0 0
          %1947 = vmatpush2.bf16.msra.mxu0 0
          %1948 = vmatprep.subr.bf16.mxu0 0
          %1949 = vmatpush2.bf16.msra.mxu0 0
          %1950 = vmatprep.subr.bf16.mxu0 0
          %1951 = vmatpush2.bf16.msra.mxu0 0
          %1952 = vmatprep.subr.bf16.mxu0 0
          %1953 = vmatpush2.bf16.msra.mxu0 0
          %1954 = vmatprep.subr.bf16.mxu0 0
          %1955 = vmatpush2.bf16.msra.mxu0 0
          %1956 = vmatprep.mubr.bf16.mxu0 0
          %1957 = vmatmul.mubr.bf16.gmra.mxu0 %v1781
          %v1958 = vpop.f32.mrf.mxu0
          %v1959 = vadd.f32 0.0, %v1958
          %v1960 = vpop.f32.mrf.mxu0
          %v1961 = vpop.f32.mrf.mxu0
          %v1962 = vpop.f32.mrf.mxu0
          %1963 = vdwg.mxu0
          %v1965 = vrot.slane %v1959, 6
          %v1966 = vrot.slane %v1959, 7
          %v1969 = vadd.f32 %v1178, %v1965
          %v1970 = vadd.f32 %v1184, %v1966
          %v1971 = vxor.u32 %v1828, 2147483648
          %v1972 = vxor.u32 %v1829, 2147483648
          %v1973 = vmul.f32 %v1971, 1.442695
          %v1974 = vpow.pop %v1973
          %v1975 = vmul.f32 %v1972, 1.442695
          %v1976 = vpow.pop %v1975
          %v1977 = vadd.f32 %v1974, 1.0
          %v1978 = vadd.f32 %v1976, 1.0
          %v1979 = vrcp.pop %v1977
          %v1980 = vmul.f32 1.0, %v1979
          %v1981 = vrcp.pop %v1978
          %v1982 = vmul.f32 1.0, %v1981
          %v1983 = vxor.u32 %v1875, 2147483648
          %v1984 = vxor.u32 %v1876, 2147483648
          %v1985 = vmul.f32 %v1983, 1.442695
          %v1986 = vpow.pop %v1985
          %v1987 = vmul.f32 %v1984, 1.442695
          %v1988 = vpow.pop %v1987
          %v1989 = vadd.f32 %v1986, 1.0
          %v1990 = vadd.f32 %v1988, 1.0
          %v1991 = vrcp.pop %v1989
          %v1992 = vmul.f32 1.0, %v1991
          %v1993 = vrcp.pop %v1990
          %v1994 = vmul.f32 1.0, %v1993
          %v1995 = vtanh.pop %v1922
          %v1996 = vtanh.pop %v1923
          %v1997 = vxor.u32 %v1969, 2147483648
          %v1998 = vxor.u32 %v1970, 2147483648
          %v1999 = vmul.f32 %v1997, 1.442695
          %v2000 = vpow.pop %v1999
          %v2001 = vmul.f32 %v1998, 1.442695
          %v2002 = vpow.pop %v2001
          %v2003 = vadd.f32 %v2000, 1.0
          %v2004 = vadd.f32 %v2002, 1.0
          %v2005 = vrcp.pop %v2003
          %v2006 = vmul.f32 1.0, %v2005
          %v2007 = vrcp.pop %v2004
          %v2008 = vmul.f32 1.0, %v2007
          %v2011 = vrot.slane %v1765, 7
          %v2012 = vrot.slane %v1766, 7
          %v2015 = vmul.f32 %v1992, %v2011
          %v2016 = vmul.f32 %v1994, %v2012
          %v2017 = vmul.f32 %v1980, %v1995
          %v2018 = vmul.f32 %v1982, %v1996
          %v2019 = vadd.f32 %v2015, %v2017
          %v2020 = vadd.f32 %v2016, %v2018
          %v2021 = vtanh.pop %v2019
          %v2022 = vtanh.pop %v2020
          %v2023 = vmul.f32 %v2006, %v2021
          %v2024 = vmul.f32 %v2008, %v2022
          %v2025 = vpack.c.bf16 %v2023, %v2023
          %v2026 = vpack.c.bf16 %v2024, %v2024
          %v2029 = vunpack.c.l.b16 %v2025
          %v2030 = vunpack.c.l.b16 %v2026
          %v2031 = vrot.slane %v2029, 2
          %v2032 = vrot.slane %v2030, 1
          %v2033 = vsel %vm1527, %v2032, %v2031
          %v2034 = vpack.c.b16 %v2033, %v2033
          %v2036 = vsel %vm908, %v2034, 0
          %2038 = vmatprep.subr.bf16.mxu0 0
          %2039 = vmatpush1.bf16.msra.mxu0 0
          %2040 = vmatprep.subr.bf16.mxu0 0
          %2041 = vmatpush1.bf16.msra.mxu0 0
          %2042 = vmatprep.subr.bf16.mxu0 0
          %2043 = vmatpush1.bf16.msra.mxu0 0
          %2044 = vmatprep.subr.bf16.mxu0 0
          %2045 = vmatpush1.bf16.msra.mxu0 0
          %2046 = vmatprep.subr.bf16.mxu0 0
          %2047 = vmatpush1.bf16.msra.mxu0 0
          %2048 = vmatprep.subr.bf16.mxu0 0
          %2049 = vmatpush1.bf16.msra.mxu0 %v1227
          %2050 = vmatprep.subr.bf16.mxu0 0
          %2051 = vmatpush1.bf16.msra.mxu0 %v1226
          %2052 = vmatprep.subr.bf16.mxu0 0
          %2053 = vmatpush1.bf16.msra.mxu0 %v1225
          %2054 = vmatprep.subr.bf16.mxu0 0
          %2055 = vmatpush2.bf16.msra.mxu0 0
          %2056 = vmatprep.subr.bf16.mxu0 0
          %2057 = vmatpush2.bf16.msra.mxu0 0
          %2058 = vmatprep.subr.bf16.mxu0 0
          %2059 = vmatpush2.bf16.msra.mxu0 0
          %2060 = vmatprep.subr.bf16.mxu0 0
          %2061 = vmatpush2.bf16.msra.mxu0 0
          %2062 = vmatprep.subr.bf16.mxu0 0
          %2063 = vmatpush2.bf16.msra.mxu0 0
          %2064 = vmatprep.subr.bf16.mxu0 0
          %2065 = vmatpush2.bf16.msra.mxu0 0
          %2066 = vmatprep.subr.bf16.mxu0 0
          %2067 = vmatpush2.bf16.msra.mxu0 0
          %2068 = vmatprep.subr.bf16.mxu0 0
          %2069 = vmatpush2.bf16.msra.mxu0 0
          %2070 = vmatprep.mubr.bf16.mxu0 0
          %2071 = vmatmul.mubr.bf16.gmra.mxu0 %v2036
          %v2072 = vpop.f32.mrf.mxu0
          %v2073 = vadd.f32 0.0, %v2072
          %v2074 = vpop.f32.mrf.mxu0
          %v2075 = vpop.f32.mrf.mxu0
          %v2076 = vpop.f32.mrf.mxu0
          %2077 = vdwg.mxu0
          %v2079 = vrot.slane %v2073, 5
          %v2080 = vrot.slane %v2073, 6
          %v2083 = vadd.f32 %v947, %v2079
          %v2084 = vadd.f32 %v953, %v2080
          %2085 = vmatprep.subr.bf16.mxu0 0
          %2086 = vmatpush1.bf16.msra.mxu0 0
          %2087 = vmatprep.subr.bf16.mxu0 0
          %2088 = vmatpush1.bf16.msra.mxu0 0
          %2089 = vmatprep.subr.bf16.mxu0 0
          %2090 = vmatpush1.bf16.msra.mxu0 0
          %2091 = vmatprep.subr.bf16.mxu0 0
          %2092 = vmatpush1.bf16.msra.mxu0 0
          %2093 = vmatprep.subr.bf16.mxu0 0
          %2094 = vmatpush1.bf16.msra.mxu0 0
          %2095 = vmatprep.subr.bf16.mxu0 0
          %2096 = vmatpush1.bf16.msra.mxu0 %v1294
          %2097 = vmatprep.subr.bf16.mxu0 0
          %2098 = vmatpush1.bf16.msra.mxu0 %v1293
          %2099 = vmatprep.subr.bf16.mxu0 0
          %2100 = vmatpush1.bf16.msra.mxu0 %v1292
          %2101 = vmatprep.subr.bf16.mxu0 0
          %2102 = vmatpush2.bf16.msra.mxu0 0
          %2103 = vmatprep.subr.bf16.mxu0 0
          %2104 = vmatpush2.bf16.msra.mxu0 0
          %2105 = vmatprep.subr.bf16.mxu0 0
          %2106 = vmatpush2.bf16.msra.mxu0 0
          %2107 = vmatprep.subr.bf16.mxu0 0
          %2108 = vmatpush2.bf16.msra.mxu0 0
          %2109 = vmatprep.subr.bf16.mxu0 0
          %2110 = vmatpush2.bf16.msra.mxu0 0
          %2111 = vmatprep.subr.bf16.mxu0 0
          %2112 = vmatpush2.bf16.msra.mxu0 0
          %2113 = vmatprep.subr.bf16.mxu0 0
          %2114 = vmatpush2.bf16.msra.mxu0 0
          %2115 = vmatprep.subr.bf16.mxu0 0
          %2116 = vmatpush2.bf16.msra.mxu0 0
          %2117 = vmatprep.mubr.bf16.mxu0 0
          %2118 = vmatmul.mubr.bf16.gmra.mxu0 %v2036
          %v2119 = vpop.f32.mrf.mxu0
          %v2120 = vadd.f32 0.0, %v2119
          %v2121 = vpop.f32.mrf.mxu0
          %v2122 = vpop.f32.mrf.mxu0
          %v2123 = vpop.f32.mrf.mxu0
          %2124 = vdwg.mxu0
          %v2126 = vrot.slane %v2120, 5
          %v2127 = vrot.slane %v2120, 6
          %v2130 = vadd.f32 %v1024, %v2126
          %v2131 = vadd.f32 %v1030, %v2127
          %2132 = vmatprep.subr.bf16.mxu0 0
          %2133 = vmatpush1.bf16.msra.mxu0 0
          %2134 = vmatprep.subr.bf16.mxu0 0
          %2135 = vmatpush1.bf16.msra.mxu0 0
          %2136 = vmatprep.subr.bf16.mxu0 0
          %2137 = vmatpush1.bf16.msra.mxu0 0
          %2138 = vmatprep.subr.bf16.mxu0 0
          %2139 = vmatpush1.bf16.msra.mxu0 0
          %2140 = vmatprep.subr.bf16.mxu0 0
          %2141 = vmatpush1.bf16.msra.mxu0 0
          %2142 = vmatprep.subr.bf16.mxu0 0
          %2143 = vmatpush1.bf16.msra.mxu0 %v1358
          %2144 = vmatprep.subr.bf16.mxu0 0
          %2145 = vmatpush1.bf16.msra.mxu0 %v1357
          %2146 = vmatprep.subr.bf16.mxu0 0
          %2147 = vmatpush1.bf16.msra.mxu0 %v1356
          %2148 = vmatprep.subr.bf16.mxu0 0
          %2149 = vmatpush2.bf16.msra.mxu0 0
          %2150 = vmatprep.subr.bf16.mxu0 0
          %2151 = vmatpush2.bf16.msra.mxu0 0
          %2152 = vmatprep.subr.bf16.mxu0 0
          %2153 = vmatpush2.bf16.msra.mxu0 0
          %2154 = vmatprep.subr.bf16.mxu0 0
          %2155 = vmatpush2.bf16.msra.mxu0 0
          %2156 = vmatprep.subr.bf16.mxu0 0
          %2157 = vmatpush2.bf16.msra.mxu0 0
          %2158 = vmatprep.subr.bf16.mxu0 0
          %2159 = vmatpush2.bf16.msra.mxu0 0
          %2160 = vmatprep.subr.bf16.mxu0 0
          %2161 = vmatpush2.bf16.msra.mxu0 0
          %2162 = vmatprep.subr.bf16.mxu0 0
          %2163 = vmatpush2.bf16.msra.mxu0 0
          %2164 = vmatprep.mubr.bf16.mxu0 0
          %2165 = vmatmul.mubr.bf16.gmra.mxu0 %v2036
          %v2166 = vpop.f32.mrf.mxu0
          %v2167 = vadd.f32 0.0, %v2166
          %v2168 = vpop.f32.mrf.mxu0
          %v2169 = vpop.f32.mrf.mxu0
          %v2170 = vpop.f32.mrf.mxu0
          %2171 = vdwg.mxu0
          %v2173 = vrot.slane %v2167, 5
          %v2174 = vrot.slane %v2167, 6
          %v2177 = vadd.f32 %v1101, %v2173
          %v2178 = vadd.f32 %v1107, %v2174
          %2179 = vmatprep.subr.bf16.mxu0 0
          %2180 = vmatpush1.bf16.msra.mxu0 0
          %2181 = vmatprep.subr.bf16.mxu0 0
          %2182 = vmatpush1.bf16.msra.mxu0 0
          %2183 = vmatprep.subr.bf16.mxu0 0
          %2184 = vmatpush1.bf16.msra.mxu0 0
          %2185 = vmatprep.subr.bf16.mxu0 0
          %2186 = vmatpush1.bf16.msra.mxu0 0
          %2187 = vmatprep.subr.bf16.mxu0 0
          %2188 = vmatpush1.bf16.msra.mxu0 0
          %2189 = vmatprep.subr.bf16.mxu0 0
          %2190 = vmatpush1.bf16.msra.mxu0 %v1422
          %2191 = vmatprep.subr.bf16.mxu0 0
          %2192 = vmatpush1.bf16.msra.mxu0 %v1421
          %2193 = vmatprep.subr.bf16.mxu0 0
          %2194 = vmatpush1.bf16.msra.mxu0 %v1420
          %2195 = vmatprep.subr.bf16.mxu0 0
          %2196 = vmatpush2.bf16.msra.mxu0 0
          %2197 = vmatprep.subr.bf16.mxu0 0
          %2198 = vmatpush2.bf16.msra.mxu0 0
          %2199 = vmatprep.subr.bf16.mxu0 0
          %2200 = vmatpush2.bf16.msra.mxu0 0
          %2201 = vmatprep.subr.bf16.mxu0 0
          %2202 = vmatpush2.bf16.msra.mxu0 0
          %2203 = vmatprep.subr.bf16.mxu0 0
          %2204 = vmatpush2.bf16.msra.mxu0 0
          %2205 = vmatprep.subr.bf16.mxu0 0
          %2206 = vmatpush2.bf16.msra.mxu0 0
          %2207 = vmatprep.subr.bf16.mxu0 0
          %2208 = vmatpush2.bf16.msra.mxu0 0
          %2209 = vmatprep.subr.bf16.mxu0 0
          %2210 = vmatpush2.bf16.msra.mxu0 0
          %2211 = vmatprep.mubr.bf16.mxu0 0
          %2212 = vmatmul.mubr.bf16.gmra.mxu0 %v2036
          %v2213 = vpop.f32.mrf.mxu0
          %v2214 = vadd.f32 0.0, %v2213
          %v2215 = vpop.f32.mrf.mxu0
          %v2216 = vpop.f32.mrf.mxu0
          %v2217 = vpop.f32.mrf.mxu0
          %2218 = vdwg.mxu0
          %v2220 = vrot.slane %v2214, 5
          %v2221 = vrot.slane %v2214, 6
          %v2224 = vadd.f32 %v1178, %v2220
          %v2225 = vadd.f32 %v1184, %v2221
          %v2226 = vxor.u32 %v2083, 2147483648
          %v2227 = vxor.u32 %v2084, 2147483648
          %v2228 = vmul.f32 %v2226, 1.442695
          %v2229 = vpow.pop %v2228
          %v2230 = vmul.f32 %v2227, 1.442695
          %v2231 = vpow.pop %v2230
          %v2232 = vadd.f32 %v2229, 1.0
          %v2233 = vadd.f32 %v2231, 1.0
          %v2234 = vrcp.pop %v2232
          %v2235 = vmul.f32 1.0, %v2234
          %v2236 = vrcp.pop %v2233
          %v2237 = vmul.f32 1.0, %v2236
          %v2238 = vxor.u32 %v2130, 2147483648
          %v2239 = vxor.u32 %v2131, 2147483648
          %v2240 = vmul.f32 %v2238, 1.442695
          %v2241 = vpow.pop %v2240
          %v2242 = vmul.f32 %v2239, 1.442695
          %v2243 = vpow.pop %v2242
          %v2244 = vadd.f32 %v2241, 1.0
          %v2245 = vadd.f32 %v2243, 1.0
          %v2246 = vrcp.pop %v2244
          %v2247 = vmul.f32 1.0, %v2246
          %v2248 = vrcp.pop %v2245
          %v2249 = vmul.f32 1.0, %v2248
          %v2250 = vtanh.pop %v2177
          %v2251 = vtanh.pop %v2178
          %v2252 = vxor.u32 %v2224, 2147483648
          %v2253 = vxor.u32 %v2225, 2147483648
          %v2254 = vmul.f32 %v2252, 1.442695
          %v2255 = vpow.pop %v2254
          %v2256 = vmul.f32 %v2253, 1.442695
          %v2257 = vpow.pop %v2256
          %v2258 = vadd.f32 %v2255, 1.0
          %v2259 = vadd.f32 %v2257, 1.0
          %v2260 = vrcp.pop %v2258
          %v2261 = vmul.f32 1.0, %v2260
          %v2262 = vrcp.pop %v2259
          %v2263 = vmul.f32 1.0, %v2262
          %v2266 = vrot.slane %v2019, 7
          %v2267 = vrot.slane %v2020, 7
          %v2270 = vmul.f32 %v2247, %v2266
          %v2271 = vmul.f32 %v2249, %v2267
          %v2272 = vmul.f32 %v2235, %v2250
          %v2273 = vmul.f32 %v2237, %v2251
          %v2274 = vadd.f32 %v2270, %v2272
          %v2275 = vadd.f32 %v2271, %v2273
          %v2276 = vtanh.pop %v2274
          %v2277 = vtanh.pop %v2275
          %v2278 = vmul.f32 %v2261, %v2276
          %v2279 = vmul.f32 %v2263, %v2277
          %2280 = vst.msk [vmem:[#allocation2] sm:$0xff] %vm908, 0.0
          %2281 = vst.msk [vmem:[#allocation2 + $0x8] sm:$0xff] %vm908, 0.0
          %2282 = vst.msk [vmem:[#allocation2 + $0x10] sm:$0xff] %vm908, 0.0
          %2283 = vst.msk [vmem:[#allocation2 + $0x18] sm:$0xff] %vm908, 0.0
          %vm2284 = vcmask 388099
          %2285 = vst.msk [vmem:[#allocation2 - $0x3] sm:$0x8] %vm2284, %v2278
          %2286 = vst.msk [vmem:[#allocation2 + $0x1] sm:$0xff] %vm908, %v831
          %s2287 = scalar_lea.vmem [#allocation2], 16
          %2288 = vst.msk [vmem:[%s2287 - $0x3] sm:$0x8] %vm2284, %v2279
          %2289 = vst.msk [vmem:[%s2287 + $0x1] sm:$0xff] %vm908, %v832
        $region132: #{postfinder_forward.1} parent=79 // pred_fallthru
          _
        %v2290 = vld [vmem:[#allocation2] sm:$0xff]
        %v2291 = vld [vmem:[#allocation2 + $0x8] sm:$0xff]
        %v2292 = vld [vmem:[#allocation2 + $0x10] sm:$0xff]
        %v2293 = vld [vmem:[#allocation2 + $0x18] sm:$0xff]
        %v2294 = vpack.c.bf16 %v2291, %v2290
        %v2295 = vpack.c.bf16 %v2293, %v2292
        %v2296 = vld [vmem:[%s732] sm:$0xff]
        %v2297 = vld [vmem:[%s821] sm:$0xff]
        %v2298 = vld [vmem:[%s821 + $0x8] sm:$0xff]
        %v2299 = vld [vmem:[%s821 + $0x10] sm:$0x3]
        %v2300 = vlaneseq
        %v2301 = vand.u32 %v2300, 127
        %vm2302 = vcmp.ge.s32.totalorder %v2301, 9
        %v2303 = vsel %vm2302, -1e+30, 0.0
        %v2304 = vld [vmem:[%s678] sm:$0xf]
        %v2305 = vld [vmem:[%s678 + $0x4] sm:$0xf]
        %v2306 = vld [vmem:[%s678 + $0x8] sm:$0xf]
        %v2307 = vld [vmem:[%s678 + $0xc] sm:$0xf]
        %v2308 = vld [vmem:[%s678 + $0x10] sm:$0xf]
        %v2309 = vld [vmem:[%s678 + $0x14] sm:$0xf]
        %v2310 = vlaneseq
        %v2311 = vshrl.u32 %v2310, 7
        %v2312 = vsub.s32 0, %v2311
        %v2313 = vrot.slane %v2297, %v2312
        %v2320 = vunpack.c.l.b16 %v2304
        %v2321 = vunpack.c.l.b16 %v2305
        %v2322 = vunpack.c.l.b16 %v2306
        %v2323 = vunpack.c.l.b16 %v2307
        %v2324 = vunpack.c.l.b16 %v2308
        %v2325 = vunpack.c.l.b16 %v2309
        %v2326 = vpack.c.b16 %v2321, %v2320
        %v2327 = vpack.c.b16 %v2323, %v2322
        %v2328 = vpack.c.b16 %v2325, %v2324
        %vm2332 = vcmask 392192
        %v2334 = vsel %vm2332, %v2294, 0
        %v2337 = vsel %vm2332, %v2295, 0
        %2339 = vmatprep.subr.bf16.mxu0 0
        %2340 = vmatpush1.bf16.msra.mxu0 0
        %2341 = vmatprep.subr.bf16.mxu0 0
        %2342 = vmatpush1.bf16.msra.mxu0 0
        %2343 = vmatprep.subr.bf16.mxu0 0
        %2344 = vmatpush1.bf16.msra.mxu0 0
        %2345 = vmatprep.subr.bf16.mxu0 0
        %2346 = vmatpush1.bf16.msra.mxu0 0
        %2347 = vmatprep.subr.bf16.mxu0 0
        %2348 = vmatpush1.bf16.msra.mxu0 0
        %2349 = vmatprep.subr.bf16.mxu0 0
        %2350 = vmatpush1.bf16.msra.mxu0 %v2328
        %2351 = vmatprep.subr.bf16.mxu0 0
        %2352 = vmatpush1.bf16.msra.mxu0 %v2327
        %2353 = vmatprep.subr.bf16.mxu0 0
        %2354 = vmatpush1.bf16.msra.mxu0 %v2326
        %2355 = vmatprep.subr.bf16.mxu0 0
        %2356 = vmatpush2.bf16.msra.mxu0 0
        %2357 = vmatprep.subr.bf16.mxu0 0
        %2358 = vmatpush2.bf16.msra.mxu0 0
        %2359 = vmatprep.subr.bf16.mxu0 0
        %2360 = vmatpush2.bf16.msra.mxu0 0
        %2361 = vmatprep.subr.bf16.mxu0 0
        %2362 = vmatpush2.bf16.msra.mxu0 0
        %2363 = vmatprep.subr.bf16.mxu0 0
        %2364 = vmatpush2.bf16.msra.mxu0 0
        %2365 = vmatprep.subr.bf16.mxu0 0
        %2366 = vmatpush2.bf16.msra.mxu0 0
        %2367 = vmatprep.subr.bf16.mxu0 0
        %2368 = vmatpush2.bf16.msra.mxu0 0
        %2369 = vmatprep.subr.bf16.mxu0 0
        %2370 = vmatpush2.bf16.msra.mxu0 0
        %2371 = vmatprep.mubr.bf16.mxu0 0
        %2372 = vmatmul.mubr.bf16.gmra.mxu0 %v2334
        %v2373 = vpop.f32.mrf.mxu0
        %v2374 = vadd.f32 %v2313, %v2373
        %v2375 = vpop.f32.mrf.mxu0
        %v2376 = vpop.f32.mrf.mxu0
        %v2377 = vadd.f32 %v2313, %v2376
        %v2378 = vpop.f32.mrf.mxu0
        %2379 = vmatprep.mubr.bf16.mxu0 0
        %2380 = vmatmul.mubr.bf16.gmra.mxu0 %v2337
        %v2381 = vpop.f32.mrf.mxu0
        %v2382 = vadd.f32 %v2313, %v2381
        %v2383 = vpop.f32.mrf.mxu0
        %v2384 = vpop.f32.mrf.mxu0
        %v2385 = vadd.f32 %v2313, %v2384
        %v2386 = vpop.f32.mrf.mxu0
        %2387 = vdwg.mxu0
        %v2388 = vld [vmem:[%s687] sm:$0xf]
        %v2389 = vld [vmem:[%s687 + $0x4] sm:$0xf]
        %v2390 = vld [vmem:[%s687 + $0x8] sm:$0xf]
        %v2391 = vld [vmem:[%s687 + $0xc] sm:$0xf]
        %v2392 = vld [vmem:[%s687 + $0x10] sm:$0xf]
        %v2393 = vld [vmem:[%s687 + $0x14] sm:$0xf]
        %v2394 = vlaneseq
        %v2395 = vshrl.u32 %v2394, 7
        %v2396 = vsub.s32 6, %v2395
        %v2397 = vrot.slane %v2297, %v2396
        %v2404 = vunpack.c.l.b16 %v2388
        %v2405 = vunpack.c.l.b16 %v2389
        %v2406 = vunpack.c.l.b16 %v2390
        %v2407 = vunpack.c.l.b16 %v2391
        %v2408 = vunpack.c.l.b16 %v2392
        %v2409 = vunpack.c.l.b16 %v2393
        %v2410 = vpack.c.b16 %v2405, %v2404
        %v2411 = vpack.c.b16 %v2407, %v2406
        %v2412 = vpack.c.b16 %v2409, %v2408
        %2416 = vmatprep.subr.bf16.mxu0 0
        %2417 = vmatpush1.bf16.msra.mxu0 0
        %2418 = vmatprep.subr.bf16.mxu0 0
        %2419 = vmatpush1.bf16.msra.mxu0 0
        %2420 = vmatprep.subr.bf16.mxu0 0
        %2421 = vmatpush1.bf16.msra.mxu0 0
        %2422 = vmatprep.subr.bf16.mxu0 0
        %2423 = vmatpush1.bf16.msra.mxu0 0
        %2424 = vmatprep.subr.bf16.mxu0 0
        %2425 = vmatpush1.bf16.msra.mxu0 0
        %2426 = vmatprep.subr.bf16.mxu0 0
        %2427 = vmatpush1.bf16.msra.mxu0 %v2412
        %2428 = vmatprep.subr.bf16.mxu0 0
        %2429 = vmatpush1.bf16.msra.mxu0 %v2411
        %2430 = vmatprep.subr.bf16.mxu0 0
        %2431 = vmatpush1.bf16.msra.mxu0 %v2410
        %2432 = vmatprep.subr.bf16.mxu0 0
        %2433 = vmatpush2.bf16.msra.mxu0 0
        %2434 = vmatprep.subr.bf16.mxu0 0
        %2435 = vmatpush2.bf16.msra.mxu0 0
        %2436 = vmatprep.subr.bf16.mxu0 0
        %2437 = vmatpush2.bf16.msra.mxu0 0
        %2438 = vmatprep.subr.bf16.mxu0 0
        %2439 = vmatpush2.bf16.msra.mxu0 0
        %2440 = vmatprep.subr.bf16.mxu0 0
        %2441 = vmatpush2.bf16.msra.mxu0 0
        %2442 = vmatprep.subr.bf16.mxu0 0
        %2443 = vmatpush2.bf16.msra.mxu0 0
        %2444 = vmatprep.subr.bf16.mxu0 0
        %2445 = vmatpush2.bf16.msra.mxu0 0
        %2446 = vmatprep.subr.bf16.mxu0 0
        %2447 = vmatpush2.bf16.msra.mxu0 0
        %2448 = vmatprep.mubr.bf16.mxu0 0
        %2449 = vmatmul.mubr.bf16.gmra.mxu0 %v2334
        %v2450 = vpop.f32.mrf.mxu0
        %v2451 = vadd.f32 %v2397, %v2450
        %v2452 = vpop.f32.mrf.mxu0
        %v2453 = vpop.f32.mrf.mxu0
        %v2454 = vadd.f32 %v2397, %v2453
        %v2455 = vpop.f32.mrf.mxu0
        %2456 = vmatprep.mubr.bf16.mxu0 0
        %2457 = vmatmul.mubr.bf16.gmra.mxu0 %v2337
        %v2458 = vpop.f32.mrf.mxu0
        %v2459 = vadd.f32 %v2397, %v2458
        %v2460 = vpop.f32.mrf.mxu0
        %v2461 = vpop.f32.mrf.mxu0
        %v2462 = vadd.f32 %v2397, %v2461
        %v2463 = vpop.f32.mrf.mxu0
        %2464 = vdwg.mxu0
        %v2465 = vld [vmem:[%s696] sm:$0xf]
        %v2466 = vld [vmem:[%s696 + $0x4] sm:$0xf]
        %v2467 = vld [vmem:[%s696 + $0x8] sm:$0xf]
        %v2468 = vld [vmem:[%s696 + $0xc] sm:$0xf]
        %v2469 = vld [vmem:[%s696 + $0x10] sm:$0xf]
        %v2470 = vld [vmem:[%s696 + $0x14] sm:$0xf]
        %v2471 = vlaneseq
        %v2472 = vshrl.u32 %v2471, 7
        %v2473 = vsub.s32 4, %v2472
        %v2474 = vrot.slane %v2298, %v2473
        %v2481 = vunpack.c.l.b16 %v2465
        %v2482 = vunpack.c.l.b16 %v2466
        %v2483 = vunpack.c.l.b16 %v2467
        %v2484 = vunpack.c.l.b16 %v2468
        %v2485 = vunpack.c.l.b16 %v2469
        %v2486 = vunpack.c.l.b16 %v2470
        %v2487 = vpack.c.b16 %v2482, %v2481
        %v2488 = vpack.c.b16 %v2484, %v2483
        %v2489 = vpack.c.b16 %v2486, %v2485
        %2493 = vmatprep.subr.bf16.mxu0 0
        %2494 = vmatpush1.bf16.msra.mxu0 0
        %2495 = vmatprep.subr.bf16.mxu0 0
        %2496 = vmatpush1.bf16.msra.mxu0 0
        %2497 = vmatprep.subr.bf16.mxu0 0
        %2498 = vmatpush1.bf16.msra.mxu0 0
        %2499 = vmatprep.subr.bf16.mxu0 0
        %2500 = vmatpush1.bf16.msra.mxu0 0
        %2501 = vmatprep.subr.bf16.mxu0 0
        %2502 = vmatpush1.bf16.msra.mxu0 0
        %2503 = vmatprep.subr.bf16.mxu0 0
        %2504 = vmatpush1.bf16.msra.mxu0 %v2489
        %2505 = vmatprep.subr.bf16.mxu0 0
        %2506 = vmatpush1.bf16.msra.mxu0 %v2488
        %2507 = vmatprep.subr.bf16.mxu0 0
        %2508 = vmatpush1.bf16.msra.mxu0 %v2487
        %2509 = vmatprep.subr.bf16.mxu0 0
        %2510 = vmatpush2.bf16.msra.mxu0 0
        %2511 = vmatprep.subr.bf16.mxu0 0
        %2512 = vmatpush2.bf16.msra.mxu0 0
        %2513 = vmatprep.subr.bf16.mxu0 0
        %2514 = vmatpush2.bf16.msra.mxu0 0
        %2515 = vmatprep.subr.bf16.mxu0 0
        %2516 = vmatpush2.bf16.msra.mxu0 0
        %2517 = vmatprep.subr.bf16.mxu0 0
        %2518 = vmatpush2.bf16.msra.mxu0 0
        %2519 = vmatprep.subr.bf16.mxu0 0
        %2520 = vmatpush2.bf16.msra.mxu0 0
        %2521 = vmatprep.subr.bf16.mxu0 0
        %2522 = vmatpush2.bf16.msra.mxu0 0
        %2523 = vmatprep.subr.bf16.mxu0 0
        %2524 = vmatpush2.bf16.msra.mxu0 0
        %2525 = vmatprep.mubr.bf16.mxu0 0
        %2526 = vmatmul.mubr.bf16.gmra.mxu0 %v2334
        %v2527 = vpop.f32.mrf.mxu0
        %v2528 = vadd.f32 %v2474, %v2527
        %v2529 = vpop.f32.mrf.mxu0
        %v2530 = vpop.f32.mrf.mxu0
        %v2531 = vadd.f32 %v2474, %v2530
        %v2532 = vpop.f32.mrf.mxu0
        %2533 = vmatprep.mubr.bf16.mxu0 0
        %2534 = vmatmul.mubr.bf16.gmra.mxu0 %v2337
        %v2535 = vpop.f32.mrf.mxu0
        %v2536 = vadd.f32 %v2474, %v2535
        %v2537 = vpop.f32.mrf.mxu0
        %v2538 = vpop.f32.mrf.mxu0
        %v2539 = vadd.f32 %v2474, %v2538
        %v2540 = vpop.f32.mrf.mxu0
        %2541 = vdwg.mxu0
        %vm2542 = vcmask 64512
        %v2544 = vsel %vm2542, %v2374, 0
        %v2547 = vsel %vm2542, %v2377, 0
        %v2550 = vsel %vm2542, %v2451, 0
        %v2553 = vsel %vm2542, %v2454, 0
        %2555 = vmatprep.subr.mxu0 0.0
        %2556 = vmatpush1.xpose.msra.mxu0 0.0
        %2557 = vmatprep.subr.mxu0 0.0
        %2558 = vmatpush1.xpose.msra.mxu0 0.0
        %2559 = vmatprep.subr.mxu0 0.0
        %2560 = vmatpush1.xpose.msra.mxu0 0.0
        %2561 = vmatprep.subr.mxu0 0.0
        %2562 = vmatpush1.xpose.msra.mxu0 0.0
        %2563 = vmatprep.subr.mxu0 0.0
        %2564 = vmatpush1.xpose.msra.mxu0 0.0
        %2565 = vmatprep.subr.mxu0 0.0
        %2566 = vmatpush1.xpose.msra.mxu0 0.0
        %2567 = vmatprep.subr.mxu0 0.0
        %2568 = vmatpush1.xpose.msra.mxu0 0.0
        %2569 = vmatprep.subr.mxu0 0.0
        %2570 = vmatpush1.xpose.msra.mxu0 0.0
        %2571 = vmatprep.subr.mxu0 0.0
        %2572 = vmatpush1.xpose.msra.mxu0 0.0
        %2573 = vmatprep.subr.mxu0 0.0
        %2574 = vmatpush1.xpose.msra.mxu0 0.0
        %2575 = vmatprep.subr.mxu0 0.0
        %2576 = vmatpush1.xpose.msra.mxu0 0.0
        %2577 = vmatprep.subr.mxu0 0.0
        %2578 = vmatpush1.xpose.msra.mxu0 0.0
        %2579 = vmatprep.subr.mxu0 0.0
        %2580 = vmatpush1.xpose.msra.mxu0 0.0
        %2581 = vmatprep.subr.mxu0 0.0
        %2582 = vmatpush1.xpose.msra.mxu0 0.0
        %2583 = vmatprep.subr.mxu0 0.0
        %2584 = vmatpush1.xpose.msra.mxu0 %v2553
        %2585 = vmatprep.subr.mxu0 0.0
        %2586 = vmatpush1.xpose.msra.mxu0 %v2550
        %2587 = vmatprep.subr.mxu0 0.0
        %2588 = vmatpush2.xpose.msra.mxu0 0.0
        %2589 = vmatprep.subr.mxu0 0.0
        %2590 = vmatpush2.xpose.msra.mxu0 0.0
        %2591 = vmatprep.subr.mxu0 0.0
        %2592 = vmatpush2.xpose.msra.mxu0 0.0
        %2593 = vmatprep.subr.mxu0 0.0
        %2594 = vmatpush2.xpose.msra.mxu0 0.0
        %2595 = vmatprep.subr.mxu0 0.0
        %2596 = vmatpush2.xpose.msra.mxu0 0.0
        %2597 = vmatprep.subr.mxu0 0.0
        %2598 = vmatpush2.xpose.msra.mxu0 0.0
        %2599 = vmatprep.subr.mxu0 0.0
        %2600 = vmatpush2.xpose.msra.mxu0 0.0
        %2601 = vmatprep.subr.mxu0 0.0
        %2602 = vmatpush2.xpose.msra.mxu0 0.0
        %2603 = vmatprep.subr.mxu0 0.0
        %2604 = vmatpush2.xpose.msra.mxu0 0.0
        %2605 = vmatprep.subr.mxu0 0.0
        %2606 = vmatpush2.xpose.msra.mxu0 0.0
        %2607 = vmatprep.subr.mxu0 0.0
        %2608 = vmatpush2.xpose.msra.mxu0 0.0
        %2609 = vmatprep.subr.mxu0 0.0
        %2610 = vmatpush2.xpose.msra.mxu0 0.0
        %2611 = vmatprep.subr.mxu0 0.0
        %2612 = vmatpush2.xpose.msra.mxu0 0.0
        %2613 = vmatprep.subr.mxu0 0.0
        %2614 = vmatpush2.xpose.msra.mxu0 0.0
        %2615 = vmatprep.subr.mxu0 0.0
        %2616 = vmatpush2.xpose.msra.mxu0 0.0
        %2617 = vmatprep.subr.mxu0 0.0
        %2618 = vmatpush2.xpose.msra.mxu0 0.0
        %2619 = vmatprep.mubr.f32.mxu0 0.0
        %2620 = vmatmul.mubr.f32.gmra.mxu0 %v2544
        %v2621 = vpop.f32.mrf.mxu0
        %v2622 = vadd.f32 0.0, %v2621
        %v2623 = vpop.f32.mrf.mxu0
        %2624 = vmatprep.mubr.f32.mxu0 0.0
        %2625 = vmatmul.mubr.f32.gmra.mxu0 %v2547
        %v2626 = vpop.f32.mrf.mxu0
        %v2627 = vadd.f32 0.0, %v2626
        %v2628 = vpop.f32.mrf.mxu0
        %2629 = vdwg.mxu0
        %v2631 = vsel %vm2542, %v2382, 0
        %v2634 = vsel %vm2542, %v2385, 0
        %v2637 = vsel %vm2542, %v2459, 0
        %v2640 = vsel %vm2542, %v2462, 0
        %2642 = vmatprep.subr.mxu0 0.0
        %2643 = vmatpush1.xpose.msra.mxu0 0.0
        %2644 = vmatprep.subr.mxu0 0.0
        %2645 = vmatpush1.xpose.msra.mxu0 0.0
        %2646 = vmatprep.subr.mxu0 0.0
        %2647 = vmatpush1.xpose.msra.mxu0 0.0
        %2648 = vmatprep.subr.mxu0 0.0
        %2649 = vmatpush1.xpose.msra.mxu0 0.0
        %2650 = vmatprep.subr.mxu0 0.0
        %2651 = vmatpush1.xpose.msra.mxu0 0.0
        %2652 = vmatprep.subr.mxu0 0.0
        %2653 = vmatpush1.xpose.msra.mxu0 0.0
        %2654 = vmatprep.subr.mxu0 0.0
        %2655 = vmatpush1.xpose.msra.mxu0 0.0
        %2656 = vmatprep.subr.mxu0 0.0
        %2657 = vmatpush1.xpose.msra.mxu0 0.0
        %2658 = vmatprep.subr.mxu0 0.0
        %2659 = vmatpush1.xpose.msra.mxu0 0.0
        %2660 = vmatprep.subr.mxu0 0.0
        %2661 = vmatpush1.xpose.msra.mxu0 0.0
        %2662 = vmatprep.subr.mxu0 0.0
        %2663 = vmatpush1.xpose.msra.mxu0 0.0
        %2664 = vmatprep.subr.mxu0 0.0
        %2665 = vmatpush1.xpose.msra.mxu0 0.0
        %2666 = vmatprep.subr.mxu0 0.0
        %2667 = vmatpush1.xpose.msra.mxu0 0.0
        %2668 = vmatprep.subr.mxu0 0.0
        %2669 = vmatpush1.xpose.msra.mxu0 0.0
        %2670 = vmatprep.subr.mxu0 0.0
        %2671 = vmatpush1.xpose.msra.mxu0 %v2640
        %2672 = vmatprep.subr.mxu0 0.0
        %2673 = vmatpush1.xpose.msra.mxu0 %v2637
        %2674 = vmatprep.subr.mxu0 0.0
        %2675 = vmatpush2.xpose.msra.mxu0 0.0
        %2676 = vmatprep.subr.mxu0 0.0
        %2677 = vmatpush2.xpose.msra.mxu0 0.0
        %2678 = vmatprep.subr.mxu0 0.0
        %2679 = vmatpush2.xpose.msra.mxu0 0.0
        %2680 = vmatprep.subr.mxu0 0.0
        %2681 = vmatpush2.xpose.msra.mxu0 0.0
        %2682 = vmatprep.subr.mxu0 0.0
        %2683 = vmatpush2.xpose.msra.mxu0 0.0
        %2684 = vmatprep.subr.mxu0 0.0
        %2685 = vmatpush2.xpose.msra.mxu0 0.0
        %2686 = vmatprep.subr.mxu0 0.0
        %2687 = vmatpush2.xpose.msra.mxu0 0.0
        %2688 = vmatprep.subr.mxu0 0.0
        %2689 = vmatpush2.xpose.msra.mxu0 0.0
        %2690 = vmatprep.subr.mxu0 0.0
        %2691 = vmatpush2.xpose.msra.mxu0 0.0
        %2692 = vmatprep.subr.mxu0 0.0
        %2693 = vmatpush2.xpose.msra.mxu0 0.0
        %2694 = vmatprep.subr.mxu0 0.0
        %2695 = vmatpush2.xpose.msra.mxu0 0.0
        %2696 = vmatprep.subr.mxu0 0.0
        %2697 = vmatpush2.xpose.msra.mxu0 0.0
        %2698 = vmatprep.subr.mxu0 0.0
        %2699 = vmatpush2.xpose.msra.mxu0 0.0
        %2700 = vmatprep.subr.mxu0 0.0
        %2701 = vmatpush2.xpose.msra.mxu0 0.0
        %2702 = vmatprep.subr.mxu0 0.0
        %2703 = vmatpush2.xpose.msra.mxu0 0.0
        %2704 = vmatprep.subr.mxu0 0.0
        %2705 = vmatpush2.xpose.msra.mxu0 0.0
        %2706 = vmatprep.mubr.f32.mxu0 0.0
        %2707 = vmatmul.mubr.f32.gmra.mxu0 %v2631
        %v2708 = vpop.f32.mrf.mxu0
        %v2709 = vadd.f32 0.0, %v2708
        %v2710 = vpop.f32.mrf.mxu0
        %2711 = vmatprep.mubr.f32.mxu0 0.0
        %2712 = vmatmul.mubr.f32.gmra.mxu0 %v2634
        %v2713 = vpop.f32.mrf.mxu0
        %v2714 = vadd.f32 0.0, %v2713
        %v2715 = vpop.f32.mrf.mxu0
        %2716 = vdwg.mxu0
        %v2717 = vmul.f32 %v2622, 0.35355338
        %v2718 = vmul.f32 %v2627, 0.35355338
        %v2719 = vmul.f32 %v2709, 0.35355338
        %v2720 = vmul.f32 %v2714, 0.35355338
        %v2721 = vadd.f32 %v2717, %v2303
        %v2722 = vadd.f32 %v2718, %v2303
        %v2723 = vadd.f32 %v2719, %v2303
        %v2724 = vadd.f32 %v2720, %v2303
        %vm2725 = vcmask 130048
        %v2726 = vsel %vm2725, %v2721, -inf
        %2727 = vmax.xlane.f32.xlu0 %v2726
        %v2728 = vpop.xlane.xlu0 %2727
        %v2729 = vsel %vm2725, %v2722, -inf
        %2730 = vmax.xlane.f32.xlu0 %v2729
        %v2731 = vpop.xlane.xlu0 %2730
        %v2732 = vsel %vm2725, %v2723, -inf
        %2733 = vmax.xlane.f32.xlu0 %v2732
        %v2734 = vpop.xlane.xlu0 %2733
        %v2735 = vsel %vm2725, %v2724, -inf
        %2736 = vmax.xlane.f32.xlu0 %v2735
        %v2737 = vpop.xlane.xlu0 %2736
        %v2738 = vsub.f32 %v2721, %v2728
        %v2739 = vsub.f32 %v2722, %v2731
        %v2740 = vsub.f32 %v2723, %v2734
        %v2741 = vsub.f32 %v2724, %v2737
        %v2742 = vmul.f32 %v2738, 1.442695
        %v2743 = vpow.pop %v2742
        %v2744 = vmul.f32 %v2739, 1.442695
        %v2745 = vpow.pop %v2744
        %v2746 = vmul.f32 %v2740, 1.442695
        %v2747 = vpow.pop %v2746
        %v2748 = vmul.f32 %v2741, 1.442695
        %v2749 = vpow.pop %v2748
        %v2750 = vsel %vm2725, %v2743, 0.0
        %2751 = vadd.xlane.f32.xlu0 %v2750
        %v2752 = vpop.xlane.xlu0 %2751
        %v2753 = vsel %vm2725, %v2745, 0.0
        %2754 = vadd.xlane.f32.xlu0 %v2753
        %v2755 = vpop.xlane.xlu0 %2754
        %v2756 = vsel %vm2725, %v2747, 0.0
        %2757 = vadd.xlane.f32.xlu0 %v2756
        %v2758 = vpop.xlane.xlu0 %2757
        %v2759 = vsel %vm2725, %v2749, 0.0
        %2760 = vadd.xlane.f32.xlu0 %v2759
        %v2761 = vpop.xlane.xlu0 %2760
        %v2762 = vrcp.pop %v2752
        %v2763 = vrcp.pop %v2755
        %v2764 = vrcp.pop %v2758
        %v2765 = vrcp.pop %v2761
        %v2766 = vmul.f32 %v2743, %v2762
        %v2767 = vmul.f32 %v2745, %v2763
        %v2768 = vmul.f32 %v2747, %v2764
        %v2769 = vmul.f32 %v2749, %v2765
        %v2771 = vsel %vm2725, %v2766, 0
        %v2774 = vsel %vm2725, %v2767, 0
        %2776 = vmatprep.subr.mxu0 0.0
        %2777 = vmatpush1.msra.mxu0 0.0
        %2778 = vmatprep.subr.mxu0 0.0
        %2779 = vmatpush1.msra.mxu0 0.0
        %2780 = vmatprep.subr.mxu0 0.0
        %2781 = vmatpush1.msra.mxu0 0.0
        %2782 = vmatprep.subr.mxu0 0.0
        %2783 = vmatpush1.msra.mxu0 0.0
        %2784 = vmatprep.subr.mxu0 0.0
        %2785 = vmatpush1.msra.mxu0 0.0
        %2786 = vmatprep.subr.mxu0 0.0
        %2787 = vmatpush1.msra.mxu0 0.0
        %2788 = vmatprep.subr.mxu0 0.0
        %2789 = vmatpush1.msra.mxu0 0.0
        %2790 = vmatprep.subr.mxu0 0.0
        %2791 = vmatpush1.msra.mxu0 0.0
        %2792 = vmatprep.subr.mxu0 0.0
        %2793 = vmatpush1.msra.mxu0 0.0
        %2794 = vmatprep.subr.mxu0 0.0
        %2795 = vmatpush1.msra.mxu0 0.0
        %2796 = vmatprep.subr.mxu0 0.0
        %2797 = vmatpush1.msra.mxu0 0.0
        %2798 = vmatprep.subr.mxu0 0.0
        %2799 = vmatpush1.msra.mxu0 0.0
        %2800 = vmatprep.subr.mxu0 0.0
        %2801 = vmatpush1.msra.mxu0 0.0
        %2802 = vmatprep.subr.mxu0 0.0
        %2803 = vmatpush1.msra.mxu0 0.0
        %2804 = vmatprep.subr.mxu0 0.0
        %2805 = vmatpush1.msra.mxu0 %v2531
        %2806 = vmatprep.subr.mxu0 0.0
        %2807 = vmatpush1.msra.mxu0 %v2528
        %2808 = vmatprep.subr.mxu0 0.0
        %2809 = vmatpush2.msra.mxu0 0.0
        %2810 = vmatprep.subr.mxu0 0.0
        %2811 = vmatpush2.msra.mxu0 0.0
        %2812 = vmatprep.subr.mxu0 0.0
        %2813 = vmatpush2.msra.mxu0 0.0
        %2814 = vmatprep.subr.mxu0 0.0
        %2815 = vmatpush2.msra.mxu0 0.0
        %2816 = vmatprep.subr.mxu0 0.0
        %2817 = vmatpush2.msra.mxu0 0.0
        %2818 = vmatprep.subr.mxu0 0.0
        %2819 = vmatpush2.msra.mxu0 0.0
        %2820 = vmatprep.subr.mxu0 0.0
        %2821 = vmatpush2.msra.mxu0 0.0
        %2822 = vmatprep.subr.mxu0 0.0
        %2823 = vmatpush2.msra.mxu0 0.0
        %2824 = vmatprep.subr.mxu0 0.0
        %2825 = vmatpush2.msra.mxu0 0.0
        %2826 = vmatprep.subr.mxu0 0.0
        %2827 = vmatpush2.msra.mxu0 0.0
        %2828 = vmatprep.subr.mxu0 0.0
        %2829 = vmatpush2.msra.mxu0 0.0
        %2830 = vmatprep.subr.mxu0 0.0
        %2831 = vmatpush2.msra.mxu0 0.0
        %2832 = vmatprep.subr.mxu0 0.0
        %2833 = vmatpush2.msra.mxu0 0.0
        %2834 = vmatprep.subr.mxu0 0.0
        %2835 = vmatpush2.msra.mxu0 0.0
        %2836 = vmatprep.subr.mxu0 0.0
        %2837 = vmatpush2.msra.mxu0 0.0
        %2838 = vmatprep.subr.mxu0 0.0
        %2839 = vmatpush2.msra.mxu0 0.0
        %2840 = vmatprep.mubr.f32.mxu0 0.0
        %2841 = vmatmul.mubr.f32.gmra.mxu0 %v2771
        %v2842 = vpop.f32.mrf.mxu0
        %v2843 = vadd.f32 0.0, %v2842
        %v2844 = vpop.f32.mrf.mxu0
        %2845 = vmatprep.mubr.f32.mxu0 0.0
        %2846 = vmatmul.mubr.f32.gmra.mxu0 %v2774
        %v2847 = vpop.f32.mrf.mxu0
        %v2848 = vadd.f32 0.0, %v2847
        %v2849 = vpop.f32.mrf.mxu0
        %2850 = vdwg.mxu0
        %v2852 = vsel %vm2725, %v2768, 0
        %v2855 = vsel %vm2725, %v2769, 0
        %2857 = vmatprep.subr.mxu0 0.0
        %2858 = vmatpush1.msra.mxu0 0.0
        %2859 = vmatprep.subr.mxu0 0.0
        %2860 = vmatpush1.msra.mxu0 0.0
        %2861 = vmatprep.subr.mxu0 0.0
        %2862 = vmatpush1.msra.mxu0 0.0
        %2863 = vmatprep.subr.mxu0 0.0
        %2864 = vmatpush1.msra.mxu0 0.0
        %2865 = vmatprep.subr.mxu0 0.0
        %2866 = vmatpush1.msra.mxu0 0.0
        %2867 = vmatprep.subr.mxu0 0.0
        %2868 = vmatpush1.msra.mxu0 0.0
        %2869 = vmatprep.subr.mxu0 0.0
        %2870 = vmatpush1.msra.mxu0 0.0
        %2871 = vmatprep.subr.mxu0 0.0
        %2872 = vmatpush1.msra.mxu0 0.0
        %2873 = vmatprep.subr.mxu0 0.0
        %2874 = vmatpush1.msra.mxu0 0.0
        %2875 = vmatprep.subr.mxu0 0.0
        %2876 = vmatpush1.msra.mxu0 0.0
        %2877 = vmatprep.subr.mxu0 0.0
        %2878 = vmatpush1.msra.mxu0 0.0
        %2879 = vmatprep.subr.mxu0 0.0
        %2880 = vmatpush1.msra.mxu0 0.0
        %2881 = vmatprep.subr.mxu0 0.0
        %2882 = vmatpush1.msra.mxu0 0.0
        %2883 = vmatprep.subr.mxu0 0.0
        %2884 = vmatpush1.msra.mxu0 0.0
        %2885 = vmatprep.subr.mxu0 0.0
        %2886 = vmatpush1.msra.mxu0 %v2539
        %2887 = vmatprep.subr.mxu0 0.0
        %2888 = vmatpush1.msra.mxu0 %v2536
        %2889 = vmatprep.subr.mxu0 0.0
        %2890 = vmatpush2.msra.mxu0 0.0
        %2891 = vmatprep.subr.mxu0 0.0
        %2892 = vmatpush2.msra.mxu0 0.0
        %2893 = vmatprep.subr.mxu0 0.0
        %2894 = vmatpush2.msra.mxu0 0.0
        %2895 = vmatprep.subr.mxu0 0.0
        %2896 = vmatpush2.msra.mxu0 0.0
        %2897 = vmatprep.subr.mxu0 0.0
        %2898 = vmatpush2.msra.mxu0 0.0
        %2899 = vmatprep.subr.mxu0 0.0
        %2900 = vmatpush2.msra.mxu0 0.0
        %2901 = vmatprep.subr.mxu0 0.0
        %2902 = vmatpush2.msra.mxu0 0.0
        %2903 = vmatprep.subr.mxu0 0.0
        %2904 = vmatpush2.msra.mxu0 0.0
        %2905 = vmatprep.subr.mxu0 0.0
        %2906 = vmatpush2.msra.mxu0 0.0
        %2907 = vmatprep.subr.mxu0 0.0
        %2908 = vmatpush2.msra.mxu0 0.0
        %2909 = vmatprep.subr.mxu0 0.0
        %2910 = vmatpush2.msra.mxu0 0.0
        %2911 = vmatprep.subr.mxu0 0.0
        %2912 = vmatpush2.msra.mxu0 0.0
        %2913 = vmatprep.subr.mxu0 0.0
        %2914 = vmatpush2.msra.mxu0 0.0
        %2915 = vmatprep.subr.mxu0 0.0
        %2916 = vmatpush2.msra.mxu0 0.0
        %2917 = vmatprep.subr.mxu0 0.0
        %2918 = vmatpush2.msra.mxu0 0.0
        %2919 = vmatprep.subr.mxu0 0.0
        %2920 = vmatpush2.msra.mxu0 0.0
        %2921 = vmatprep.mubr.f32.mxu0 0.0
        %2922 = vmatmul.mubr.f32.gmra.mxu0 %v2852
        %v2923 = vpop.f32.mrf.mxu0
        %v2924 = vadd.f32 0.0, %v2923
        %v2925 = vpop.f32.mrf.mxu0
        %2926 = vmatprep.mubr.f32.mxu0 0.0
        %2927 = vmatmul.mubr.f32.gmra.mxu0 %v2855
        %v2928 = vpop.f32.mrf.mxu0
        %v2929 = vadd.f32 0.0, %v2928
        %v2930 = vpop.f32.mrf.mxu0
        %2931 = vdwg.mxu0
        %v2932 = vpack.c.bf16 %v2848, %v2843
        %v2933 = vpack.c.bf16 %v2929, %v2924
        %v2934 = vld [vmem:[%s705] sm:$0xf]
        %s2935 = scalar_lea.vmem %s678, 24 [#allocation10]
        %v2936 = vld [vmem:[%s2935] sm:$0xf]
        %v2937 = vld [vmem:[%s2935 + $0x4] sm:$0xf]
        %v2938 = vld [vmem:[%s2935 + $0x8] sm:$0xf]
        %v2939 = vld [vmem:[%s2935 + $0xc] sm:$0xf]
        %v2940 = vld [vmem:[%s2935 + $0x10] sm:$0xf]
        %v2941 = vld [vmem:[%s2935 + $0x14] sm:$0xf]
        %v2942 = vlaneseq
        %v2943 = vshrl.u32 %v2942, 7
        %v2944 = vsub.s32 1, %v2943
        %v2945 = vrot.slane %v2297, %v2944
        %v2952 = vunpack.c.l.b16 %v2936
        %v2953 = vunpack.c.l.b16 %v2937
        %v2954 = vunpack.c.l.b16 %v2938
        %v2955 = vunpack.c.l.b16 %v2939
        %v2956 = vunpack.c.l.b16 %v2940
        %v2957 = vunpack.c.l.b16 %v2941
        %v2958 = vpack.c.b16 %v2953, %v2952
        %v2959 = vpack.c.b16 %v2955, %v2954
        %v2960 = vpack.c.b16 %v2957, %v2956
        %2964 = vmatprep.subr.bf16.mxu0 0
        %2965 = vmatpush1.bf16.msra.mxu0 0
        %2966 = vmatprep.subr.bf16.mxu0 0
        %2967 = vmatpush1.bf16.msra.mxu0 0
        %2968 = vmatprep.subr.bf16.mxu0 0
        %2969 = vmatpush1.bf16.msra.mxu0 0
        %2970 = vmatprep.subr.bf16.mxu0 0
        %2971 = vmatpush1.bf16.msra.mxu0 0
        %2972 = vmatprep.subr.bf16.mxu0 0
        %2973 = vmatpush1.bf16.msra.mxu0 0
        %2974 = vmatprep.subr.bf16.mxu0 0
        %2975 = vmatpush1.bf16.msra.mxu0 %v2960
        %2976 = vmatprep.subr.bf16.mxu0 0
        %2977 = vmatpush1.bf16.msra.mxu0 %v2959
        %2978 = vmatprep.subr.bf16.mxu0 0
        %2979 = vmatpush1.bf16.msra.mxu0 %v2958
        %2980 = vmatprep.subr.bf16.mxu0 0
        %2981 = vmatpush2.bf16.msra.mxu0 0
        %2982 = vmatprep.subr.bf16.mxu0 0
        %2983 = vmatpush2.bf16.msra.mxu0 0
        %2984 = vmatprep.subr.bf16.mxu0 0
        %2985 = vmatpush2.bf16.msra.mxu0 0
        %2986 = vmatprep.subr.bf16.mxu0 0
        %2987 = vmatpush2.bf16.msra.mxu0 0
        %2988 = vmatprep.subr.bf16.mxu0 0
        %2989 = vmatpush2.bf16.msra.mxu0 0
        %2990 = vmatprep.subr.bf16.mxu0 0
        %2991 = vmatpush2.bf16.msra.mxu0 0
        %2992 = vmatprep.subr.bf16.mxu0 0
        %2993 = vmatpush2.bf16.msra.mxu0 0
        %2994 = vmatprep.subr.bf16.mxu0 0
        %2995 = vmatpush2.bf16.msra.mxu0 0
        %2996 = vmatprep.mubr.bf16.mxu0 0
        %2997 = vmatmul.mubr.bf16.gmra.mxu0 %v2334
        %v2998 = vpop.f32.mrf.mxu0
        %v2999 = vadd.f32 %v2945, %v2998
        %v3000 = vpop.f32.mrf.mxu0
        %v3001 = vpop.f32.mrf.mxu0
        %v3002 = vadd.f32 %v2945, %v3001
        %v3003 = vpop.f32.mrf.mxu0
        %3004 = vmatprep.mubr.bf16.mxu0 0
        %3005 = vmatmul.mubr.bf16.gmra.mxu0 %v2337
        %v3006 = vpop.f32.mrf.mxu0
        %v3007 = vadd.f32 %v2945, %v3006
        %v3008 = vpop.f32.mrf.mxu0
        %v3009 = vpop.f32.mrf.mxu0
        %v3010 = vadd.f32 %v2945, %v3009
        %v3011 = vpop.f32.mrf.mxu0
        %3012 = vdwg.mxu0
        %s3013 = scalar_lea.vmem %s687, 24 [#allocation11]
        %v3014 = vld [vmem:[%s3013] sm:$0xf]
        %v3015 = vld [vmem:[%s3013 + $0x4] sm:$0xf]
        %v3016 = vld [vmem:[%s3013 + $0x8] sm:$0xf]
        %v3017 = vld [vmem:[%s3013 + $0xc] sm:$0xf]
        %v3018 = vld [vmem:[%s3013 + $0x10] sm:$0xf]
        %v3019 = vld [vmem:[%s3013 + $0x14] sm:$0xf]
        %v3020 = vlaneseq
        %v3021 = vshrl.u32 %v3020, 7
        %v3022 = vsub.s32 7, %v3021
        %v3023 = vrot.slane %v2297, %v3022
        %v3030 = vunpack.c.l.b16 %v3014
        %v3031 = vunpack.c.l.b16 %v3015
        %v3032 = vunpack.c.l.b16 %v3016
        %v3033 = vunpack.c.l.b16 %v3017
        %v3034 = vunpack.c.l.b16 %v3018
        %v3035 = vunpack.c.l.b16 %v3019
        %v3036 = vpack.c.b16 %v3031, %v3030
        %v3037 = vpack.c.b16 %v3033, %v3032
        %v3038 = vpack.c.b16 %v3035, %v3034
        %3042 = vmatprep.subr.bf16.mxu0 0
        %3043 = vmatpush1.bf16.msra.mxu0 0
        %3044 = vmatprep.subr.bf16.mxu0 0
        %3045 = vmatpush1.bf16.msra.mxu0 0
        %3046 = vmatprep.subr.bf16.mxu0 0
        %3047 = vmatpush1.bf16.msra.mxu0 0
        %3048 = vmatprep.subr.bf16.mxu0 0
        %3049 = vmatpush1.bf16.msra.mxu0 0
        %3050 = vmatprep.subr.bf16.mxu0 0
        %3051 = vmatpush1.bf16.msra.mxu0 0
        %3052 = vmatprep.subr.bf16.mxu0 0
        %3053 = vmatpush1.bf16.msra.mxu0 %v3038
        %3054 = vmatprep.subr.bf16.mxu0 0
        %3055 = vmatpush1.bf16.msra.mxu0 %v3037
        %3056 = vmatprep.subr.bf16.mxu0 0
        %3057 = vmatpush1.bf16.msra.mxu0 %v3036
        %3058 = vmatprep.subr.bf16.mxu0 0
        %3059 = vmatpush2.bf16.msra.mxu0 0
        %3060 = vmatprep.subr.bf16.mxu0 0
        %3061 = vmatpush2.bf16.msra.mxu0 0
        %3062 = vmatprep.subr.bf16.mxu0 0
        %3063 = vmatpush2.bf16.msra.mxu0 0
        %3064 = vmatprep.subr.bf16.mxu0 0
        %3065 = vmatpush2.bf16.msra.mxu0 0
        %3066 = vmatprep.subr.bf16.mxu0 0
        %3067 = vmatpush2.bf16.msra.mxu0 0
        %3068 = vmatprep.subr.bf16.mxu0 0
        %3069 = vmatpush2.bf16.msra.mxu0 0
        %3070 = vmatprep.subr.bf16.mxu0 0
        %3071 = vmatpush2.bf16.msra.mxu0 0
        %3072 = vmatprep.subr.bf16.mxu0 0
        %3073 = vmatpush2.bf16.msra.mxu0 0
        %3074 = vmatprep.mubr.bf16.mxu0 0
        %3075 = vmatmul.mubr.bf16.gmra.mxu0 %v2334
        %v3076 = vpop.f32.mrf.mxu0
        %v3077 = vadd.f32 %v3023, %v3076
        %v3078 = vpop.f32.mrf.mxu0
        %v3079 = vpop.f32.mrf.mxu0
        %v3080 = vadd.f32 %v3023, %v3079
        %v3081 = vpop.f32.mrf.mxu0
        %3082 = vmatprep.mubr.bf16.mxu0 0
        %3083 = vmatmul.mubr.bf16.gmra.mxu0 %v2337
        %v3084 = vpop.f32.mrf.mxu0
        %v3085 = vadd.f32 %v3023, %v3084
        %v3086 = vpop.f32.mrf.mxu0
        %v3087 = vpop.f32.mrf.mxu0
        %v3088 = vadd.f32 %v3023, %v3087
        %v3089 = vpop.f32.mrf.mxu0
        %3090 = vdwg.mxu0
        %s3091 = scalar_lea.vmem %s696, 24 [#allocation12]
        %v3092 = vld [vmem:[%s3091] sm:$0xf]
        %v3093 = vld [vmem:[%s3091 + $0x4] sm:$0xf]
        %v3094 = vld [vmem:[%s3091 + $0x8] sm:$0xf]
        %v3095 = vld [vmem:[%s3091 + $0xc] sm:$0xf]
        %v3096 = vld [vmem:[%s3091 + $0x10] sm:$0xf]
        %v3097 = vld [vmem:[%s3091 + $0x14] sm:$0xf]
        %v3098 = vlaneseq
        %v3099 = vshrl.u32 %v3098, 7
        %v3100 = vsub.s32 5, %v3099
        %v3101 = vrot.slane %v2298, %v3100
        %v3108 = vunpack.c.l.b16 %v3092
        %v3109 = vunpack.c.l.b16 %v3093
        %v3110 = vunpack.c.l.b16 %v3094
        %v3111 = vunpack.c.l.b16 %v3095
        %v3112 = vunpack.c.l.b16 %v3096
        %v3113 = vunpack.c.l.b16 %v3097
        %v3114 = vpack.c.b16 %v3109, %v3108
        %v3115 = vpack.c.b16 %v3111, %v3110
        %v3116 = vpack.c.b16 %v3113, %v3112
        %3120 = vmatprep.subr.bf16.mxu0 0
        %3121 = vmatpush1.bf16.msra.mxu0 0
        %3122 = vmatprep.subr.bf16.mxu0 0
        %3123 = vmatpush1.bf16.msra.mxu0 0
        %3124 = vmatprep.subr.bf16.mxu0 0
        %3125 = vmatpush1.bf16.msra.mxu0 0
        %3126 = vmatprep.subr.bf16.mxu0 0
        %3127 = vmatpush1.bf16.msra.mxu0 0
        %3128 = vmatprep.subr.bf16.mxu0 0
        %3129 = vmatpush1.bf16.msra.mxu0 0
        %3130 = vmatprep.subr.bf16.mxu0 0
        %3131 = vmatpush1.bf16.msra.mxu0 %v3116
        %3132 = vmatprep.subr.bf16.mxu0 0
        %3133 = vmatpush1.bf16.msra.mxu0 %v3115
        %3134 = vmatprep.subr.bf16.mxu0 0
        %3135 = vmatpush1.bf16.msra.mxu0 %v3114
        %3136 = vmatprep.subr.bf16.mxu0 0
        %3137 = vmatpush2.bf16.msra.mxu0 0
        %3138 = vmatprep.subr.bf16.mxu0 0
        %3139 = vmatpush2.bf16.msra.mxu0 0
        %3140 = vmatprep.subr.bf16.mxu0 0
        %3141 = vmatpush2.bf16.msra.mxu0 0
        %3142 = vmatprep.subr.bf16.mxu0 0
        %3143 = vmatpush2.bf16.msra.mxu0 0
        %3144 = vmatprep.subr.bf16.mxu0 0
        %3145 = vmatpush2.bf16.msra.mxu0 0
        %3146 = vmatprep.subr.bf16.mxu0 0
        %3147 = vmatpush2.bf16.msra.mxu0 0
        %3148 = vmatprep.subr.bf16.mxu0 0
        %3149 = vmatpush2.bf16.msra.mxu0 0
        %3150 = vmatprep.subr.bf16.mxu0 0
        %3151 = vmatpush2.bf16.msra.mxu0 0
        %3152 = vmatprep.mubr.bf16.mxu0 0
        %3153 = vmatmul.mubr.bf16.gmra.mxu0 %v2334
        %v3154 = vpop.f32.mrf.mxu0
        %v3155 = vadd.f32 %v3101, %v3154
        %v3156 = vpop.f32.mrf.mxu0
        %v3157 = vpop.f32.mrf.mxu0
        %v3158 = vadd.f32 %v3101, %v3157
        %v3159 = vpop.f32.mrf.mxu0
        %3160 = vmatprep.mubr.bf16.mxu0 0
        %3161 = vmatmul.mubr.bf16.gmra.mxu0 %v2337
        %v3162 = vpop.f32.mrf.mxu0
        %v3163 = vadd.f32 %v3101, %v3162
        %v3164 = vpop.f32.mrf.mxu0
        %v3165 = vpop.f32.mrf.mxu0
        %v3166 = vadd.f32 %v3101, %v3165
        %v3167 = vpop.f32.mrf.mxu0
        %3168 = vdwg.mxu0
        %v3170 = vsel %vm2542, %v2999, 0
        %v3173 = vsel %vm2542, %v3002, 0
        %v3176 = vsel %vm2542, %v3077, 0
        %v3179 = vsel %vm2542, %v3080, 0
        %3181 = vmatprep.subr.mxu0 0.0
        %3182 = vmatpush1.xpose.msra.mxu0 0.0
        %3183 = vmatprep.subr.mxu0 0.0
        %3184 = vmatpush1.xpose.msra.mxu0 0.0
        %3185 = vmatprep.subr.mxu0 0.0
        %3186 = vmatpush1.xpose.msra.mxu0 0.0
        %3187 = vmatprep.subr.mxu0 0.0
        %3188 = vmatpush1.xpose.msra.mxu0 0.0
        %3189 = vmatprep.subr.mxu0 0.0
        %3190 = vmatpush1.xpose.msra.mxu0 0.0
        %3191 = vmatprep.subr.mxu0 0.0
        %3192 = vmatpush1.xpose.msra.mxu0 0.0
        %3193 = vmatprep.subr.mxu0 0.0
        %3194 = vmatpush1.xpose.msra.mxu0 0.0
        %3195 = vmatprep.subr.mxu0 0.0
        %3196 = vmatpush1.xpose.msra.mxu0 0.0
        %3197 = vmatprep.subr.mxu0 0.0
        %3198 = vmatpush1.xpose.msra.mxu0 0.0
        %3199 = vmatprep.subr.mxu0 0.0
        %3200 = vmatpush1.xpose.msra.mxu0 0.0
        %3201 = vmatprep.subr.mxu0 0.0
        %3202 = vmatpush1.xpose.msra.mxu0 0.0
        %3203 = vmatprep.subr.mxu0 0.0
        %3204 = vmatpush1.xpose.msra.mxu0 0.0
        %3205 = vmatprep.subr.mxu0 0.0
        %3206 = vmatpush1.xpose.msra.mxu0 0.0
        %3207 = vmatprep.subr.mxu0 0.0
        %3208 = vmatpush1.xpose.msra.mxu0 0.0
        %3209 = vmatprep.subr.mxu0 0.0
        %3210 = vmatpush1.xpose.msra.mxu0 %v3179
        %3211 = vmatprep.subr.mxu0 0.0
        %3212 = vmatpush1.xpose.msra.mxu0 %v3176
        %3213 = vmatprep.subr.mxu0 0.0
        %3214 = vmatpush2.xpose.msra.mxu0 0.0
        %3215 = vmatprep.subr.mxu0 0.0
        %3216 = vmatpush2.xpose.msra.mxu0 0.0
        %3217 = vmatprep.subr.mxu0 0.0
        %3218 = vmatpush2.xpose.msra.mxu0 0.0
        %3219 = vmatprep.subr.mxu0 0.0
        %3220 = vmatpush2.xpose.msra.mxu0 0.0
        %3221 = vmatprep.subr.mxu0 0.0
        %3222 = vmatpush2.xpose.msra.mxu0 0.0
        %3223 = vmatprep.subr.mxu0 0.0
        %3224 = vmatpush2.xpose.msra.mxu0 0.0
        %3225 = vmatprep.subr.mxu0 0.0
        %3226 = vmatpush2.xpose.msra.mxu0 0.0
        %3227 = vmatprep.subr.mxu0 0.0
        %3228 = vmatpush2.xpose.msra.mxu0 0.0
        %3229 = vmatprep.subr.mxu0 0.0
        %3230 = vmatpush2.xpose.msra.mxu0 0.0
        %3231 = vmatprep.subr.mxu0 0.0
        %3232 = vmatpush2.xpose.msra.mxu0 0.0
        %3233 = vmatprep.subr.mxu0 0.0
        %3234 = vmatpush2.xpose.msra.mxu0 0.0
        %3235 = vmatprep.subr.mxu0 0.0
        %3236 = vmatpush2.xpose.msra.mxu0 0.0
        %3237 = vmatprep.subr.mxu0 0.0
        %3238 = vmatpush2.xpose.msra.mxu0 0.0
        %3239 = vmatprep.subr.mxu0 0.0
        %3240 = vmatpush2.xpose.msra.mxu0 0.0
        %3241 = vmatprep.subr.mxu0 0.0
        %3242 = vmatpush2.xpose.msra.mxu0 0.0
        %3243 = vmatprep.subr.mxu0 0.0
        %3244 = vmatpush2.xpose.msra.mxu0 0.0
        %3245 = vmatprep.mubr.f32.mxu0 0.0
        %3246 = vmatmul.mubr.f32.gmra.mxu0 %v3170
        %v3247 = vpop.f32.mrf.mxu0
        %v3248 = vadd.f32 0.0, %v3247
        %v3249 = vpop.f32.mrf.mxu0
        %3250 = vmatprep.mubr.f32.mxu0 0.0
        %3251 = vmatmul.mubr.f32.gmra.mxu0 %v3173
        %v3252 = vpop.f32.mrf.mxu0
        %v3253 = vadd.f32 0.0, %v3252
        %v3254 = vpop.f32.mrf.mxu0
        %3255 = vdwg.mxu0
        %v3257 = vsel %vm2542, %v3007, 0
        %v3260 = vsel %vm2542, %v3010, 0
        %v3263 = vsel %vm2542, %v3085, 0
        %v3266 = vsel %vm2542, %v3088, 0
        %3268 = vmatprep.subr.mxu0 0.0
        %3269 = vmatpush1.xpose.msra.mxu0 0.0
        %3270 = vmatprep.subr.mxu0 0.0
        %3271 = vmatpush1.xpose.msra.mxu0 0.0
        %3272 = vmatprep.subr.mxu0 0.0
        %3273 = vmatpush1.xpose.msra.mxu0 0.0
        %3274 = vmatprep.subr.mxu0 0.0
        %3275 = vmatpush1.xpose.msra.mxu0 0.0
        %3276 = vmatprep.subr.mxu0 0.0
        %3277 = vmatpush1.xpose.msra.mxu0 0.0
        %3278 = vmatprep.subr.mxu0 0.0
        %3279 = vmatpush1.xpose.msra.mxu0 0.0
        %3280 = vmatprep.subr.mxu0 0.0
        %3281 = vmatpush1.xpose.msra.mxu0 0.0
        %3282 = vmatprep.subr.mxu0 0.0
        %3283 = vmatpush1.xpose.msra.mxu0 0.0
        %3284 = vmatprep.subr.mxu0 0.0
        %3285 = vmatpush1.xpose.msra.mxu0 0.0
        %3286 = vmatprep.subr.mxu0 0.0
        %3287 = vmatpush1.xpose.msra.mxu0 0.0
        %3288 = vmatprep.subr.mxu0 0.0
        %3289 = vmatpush1.xpose.msra.mxu0 0.0
        %3290 = vmatprep.subr.mxu0 0.0
        %3291 = vmatpush1.xpose.msra.mxu0 0.0
        %3292 = vmatprep.subr.mxu0 0.0
        %3293 = vmatpush1.xpose.msra.mxu0 0.0
        %3294 = vmatprep.subr.mxu0 0.0
        %3295 = vmatpush1.xpose.msra.mxu0 0.0
        %3296 = vmatprep.subr.mxu0 0.0
        %3297 = vmatpush1.xpose.msra.mxu0 %v3266
        %3298 = vmatprep.subr.mxu0 0.0
        %3299 = vmatpush1.xpose.msra.mxu0 %v3263
        %3300 = vmatprep.subr.mxu0 0.0
        %3301 = vmatpush2.xpose.msra.mxu0 0.0
        %3302 = vmatprep.subr.mxu0 0.0
        %3303 = vmatpush2.xpose.msra.mxu0 0.0
        %3304 = vmatprep.subr.mxu0 0.0
        %3305 = vmatpush2.xpose.msra.mxu0 0.0
        %3306 = vmatprep.subr.mxu0 0.0
        %3307 = vmatpush2.xpose.msra.mxu0 0.0
        %3308 = vmatprep.subr.mxu0 0.0
        %3309 = vmatpush2.xpose.msra.mxu0 0.0
        %3310 = vmatprep.subr.mxu0 0.0
        %3311 = vmatpush2.xpose.msra.mxu0 0.0
        %3312 = vmatprep.subr.mxu0 0.0
        %3313 = vmatpush2.xpose.msra.mxu0 0.0
        %3314 = vmatprep.subr.mxu0 0.0
        %3315 = vmatpush2.xpose.msra.mxu0 0.0
        %3316 = vmatprep.subr.mxu0 0.0
        %3317 = vmatpush2.xpose.msra.mxu0 0.0
        %3318 = vmatprep.subr.mxu0 0.0
        %3319 = vmatpush2.xpose.msra.mxu0 0.0
        %3320 = vmatprep.subr.mxu0 0.0
        %3321 = vmatpush2.xpose.msra.mxu0 0.0
        %3322 = vmatprep.subr.mxu0 0.0
        %3323 = vmatpush2.xpose.msra.mxu0 0.0
        %3324 = vmatprep.subr.mxu0 0.0
        %3325 = vmatpush2.xpose.msra.mxu0 0.0
        %3326 = vmatprep.subr.mxu0 0.0
        %3327 = vmatpush2.xpose.msra.mxu0 0.0
        %3328 = vmatprep.subr.mxu0 0.0
        %3329 = vmatpush2.xpose.msra.mxu0 0.0
        %3330 = vmatprep.subr.mxu0 0.0
        %3331 = vmatpush2.xpose.msra.mxu0 0.0
        %3332 = vmatprep.mubr.f32.mxu0 0.0
        %3333 = vmatmul.mubr.f32.gmra.mxu0 %v3257
        %v3334 = vpop.f32.mrf.mxu0
        %v3335 = vadd.f32 0.0, %v3334
        %v3336 = vpop.f32.mrf.mxu0
        %3337 = vmatprep.mubr.f32.mxu0 0.0
        %3338 = vmatmul.mubr.f32.gmra.mxu0 %v3260
        %v3339 = vpop.f32.mrf.mxu0
        %v3340 = vadd.f32 0.0, %v3339
        %v3341 = vpop.f32.mrf.mxu0
        %3342 = vdwg.mxu0
        %v3343 = vmul.f32 %v3248, 0.35355338
        %v3344 = vmul.f32 %v3253, 0.35355338
        %v3345 = vmul.f32 %v3335, 0.35355338
        %v3346 = vmul.f32 %v3340, 0.35355338
        %v3347 = vadd.f32 %v3343, %v2303
        %v3348 = vadd.f32 %v3344, %v2303
        %v3349 = vadd.f32 %v3345, %v2303
        %v3350 = vadd.f32 %v3346, %v2303
        %v3351 = vsel %vm2725, %v3347, -inf
        %3352 = vmax.xlane.f32.xlu0 %v3351
        %v3353 = vpop.xlane.xlu0 %3352
        %v3354 = vsel %vm2725, %v3348, -inf
        %3355 = vmax.xlane.f32.xlu0 %v3354
        %v3356 = vpop.xlane.xlu0 %3355
        %v3357 = vsel %vm2725, %v3349, -inf
        %3358 = vmax.xlane.f32.xlu0 %v3357
        %v3359 = vpop.xlane.xlu0 %3358
        %v3360 = vsel %vm2725, %v3350, -inf
        %3361 = vmax.xlane.f32.xlu0 %v3360
        %v3362 = vpop.xlane.xlu0 %3361
        %v3363 = vsub.f32 %v3347, %v3353
        %v3364 = vsub.f32 %v3348, %v3356
        %v3365 = vsub.f32 %v3349, %v3359
        %v3366 = vsub.f32 %v3350, %v3362
        %v3367 = vmul.f32 %v3363, 1.442695
        %v3368 = vpow.pop %v3367
        %v3369 = vmul.f32 %v3364, 1.442695
        %v3370 = vpow.pop %v3369
        %v3371 = vmul.f32 %v3365, 1.442695
        %v3372 = vpow.pop %v3371
        %v3373 = vmul.f32 %v3366, 1.442695
        %v3374 = vpow.pop %v3373
        %v3375 = vsel %vm2725, %v3368, 0.0
        %3376 = vadd.xlane.f32.xlu0 %v3375
        %v3377 = vpop.xlane.xlu0 %3376
        %v3378 = vsel %vm2725, %v3370, 0.0
        %3379 = vadd.xlane.f32.xlu0 %v3378
        %v3380 = vpop.xlane.xlu0 %3379
        %v3381 = vsel %vm2725, %v3372, 0.0
        %3382 = vadd.xlane.f32.xlu0 %v3381
        %v3383 = vpop.xlane.xlu0 %3382
        %v3384 = vsel %vm2725, %v3374, 0.0
        %3385 = vadd.xlane.f32.xlu0 %v3384
        %v3386 = vpop.xlane.xlu0 %3385
        %v3387 = vrcp.pop %v3377
        %v3388 = vrcp.pop %v3380
        %v3389 = vrcp.pop %v3383
        %v3390 = vrcp.pop %v3386
        %v3391 = vmul.f32 %v3368, %v3387
        %v3392 = vmul.f32 %v3370, %v3388
        %v3393 = vmul.f32 %v3372, %v3389
        %v3394 = vmul.f32 %v3374, %v3390
        %v3396 = vsel %vm2725, %v3391, 0
        %v3399 = vsel %vm2725, %v3392, 0
        %3401 = vmatprep.subr.mxu0 0.0
        %3402 = vmatpush1.msra.mxu0 0.0
        %3403 = vmatprep.subr.mxu0 0.0
        %3404 = vmatpush1.msra.mxu0 0.0
        %3405 = vmatprep.subr.mxu0 0.0
        %3406 = vmatpush1.msra.mxu0 0.0
        %3407 = vmatprep.subr.mxu0 0.0
        %3408 = vmatpush1.msra.mxu0 0.0
        %3409 = vmatprep.subr.mxu0 0.0
        %3410 = vmatpush1.msra.mxu0 0.0
        %3411 = vmatprep.subr.mxu0 0.0
        %3412 = vmatpush1.msra.mxu0 0.0
        %3413 = vmatprep.subr.mxu0 0.0
        %3414 = vmatpush1.msra.mxu0 0.0
        %3415 = vmatprep.subr.mxu0 0.0
        %3416 = vmatpush1.msra.mxu0 0.0
        %3417 = vmatprep.subr.mxu0 0.0
        %3418 = vmatpush1.msra.mxu0 0.0
        %3419 = vmatprep.subr.mxu0 0.0
        %3420 = vmatpush1.msra.mxu0 0.0
        %3421 = vmatprep.subr.mxu0 0.0
        %3422 = vmatpush1.msra.mxu0 0.0
        %3423 = vmatprep.subr.mxu0 0.0
        %3424 = vmatpush1.msra.mxu0 0.0
        %3425 = vmatprep.subr.mxu0 0.0
        %3426 = vmatpush1.msra.mxu0 0.0
        %3427 = vmatprep.subr.mxu0 0.0
        %3428 = vmatpush1.msra.mxu0 0.0
        %3429 = vmatprep.subr.mxu0 0.0
        %3430 = vmatpush1.msra.mxu0 %v3158
        %3431 = vmatprep.subr.mxu0 0.0
        %3432 = vmatpush1.msra.mxu0 %v3155
        %3433 = vmatprep.subr.mxu0 0.0
        %3434 = vmatpush2.msra.mxu0 0.0
        %3435 = vmatprep.subr.mxu0 0.0
        %3436 = vmatpush2.msra.mxu0 0.0
        %3437 = vmatprep.subr.mxu0 0.0
        %3438 = vmatpush2.msra.mxu0 0.0
        %3439 = vmatprep.subr.mxu0 0.0
        %3440 = vmatpush2.msra.mxu0 0.0
        %3441 = vmatprep.subr.mxu0 0.0
        %3442 = vmatpush2.msra.mxu0 0.0
        %3443 = vmatprep.subr.mxu0 0.0
        %3444 = vmatpush2.msra.mxu0 0.0
        %3445 = vmatprep.subr.mxu0 0.0
        %3446 = vmatpush2.msra.mxu0 0.0
        %3447 = vmatprep.subr.mxu0 0.0
        %3448 = vmatpush2.msra.mxu0 0.0
        %3449 = vmatprep.subr.mxu0 0.0
        %3450 = vmatpush2.msra.mxu0 0.0
        %3451 = vmatprep.subr.mxu0 0.0
        %3452 = vmatpush2.msra.mxu0 0.0
        %3453 = vmatprep.subr.mxu0 0.0
        %3454 = vmatpush2.msra.mxu0 0.0
        %3455 = vmatprep.subr.mxu0 0.0
        %3456 = vmatpush2.msra.mxu0 0.0
        %3457 = vmatprep.subr.mxu0 0.0
        %3458 = vmatpush2.msra.mxu0 0.0
        %3459 = vmatprep.subr.mxu0 0.0
        %3460 = vmatpush2.msra.mxu0 0.0
        %3461 = vmatprep.subr.mxu0 0.0
        %3462 = vmatpush2.msra.mxu0 0.0
        %3463 = vmatprep.subr.mxu0 0.0
        %3464 = vmatpush2.msra.mxu0 0.0
        %3465 = vmatprep.mubr.f32.mxu0 0.0
        %3466 = vmatmul.mubr.f32.gmra.mxu0 %v3396
        %v3467 = vpop.f32.mrf.mxu0
        %v3468 = vadd.f32 0.0, %v3467
        %v3469 = vpop.f32.mrf.mxu0
        %3470 = vmatprep.mubr.f32.mxu0 0.0
        %3471 = vmatmul.mubr.f32.gmra.mxu0 %v3399
        %v3472 = vpop.f32.mrf.mxu0
        %v3473 = vadd.f32 0.0, %v3472
        %v3474 = vpop.f32.mrf.mxu0
        %3475 = vdwg.mxu0
        %v3477 = vsel %vm2725, %v3393, 0
        %v3480 = vsel %vm2725, %v3394, 0
        %3482 = vmatprep.subr.mxu0 0.0
        %3483 = vmatpush1.msra.mxu0 0.0
        %3484 = vmatprep.subr.mxu0 0.0
        %3485 = vmatpush1.msra.mxu0 0.0
        %3486 = vmatprep.subr.mxu0 0.0
        %3487 = vmatpush1.msra.mxu0 0.0
        %3488 = vmatprep.subr.mxu0 0.0
        %3489 = vmatpush1.msra.mxu0 0.0
        %3490 = vmatprep.subr.mxu0 0.0
        %3491 = vmatpush1.msra.mxu0 0.0
        %3492 = vmatprep.subr.mxu0 0.0
        %3493 = vmatpush1.msra.mxu0 0.0
        %3494 = vmatprep.subr.mxu0 0.0
        %3495 = vmatpush1.msra.mxu0 0.0
        %3496 = vmatprep.subr.mxu0 0.0
        %3497 = vmatpush1.msra.mxu0 0.0
        %3498 = vmatprep.subr.mxu0 0.0
        %3499 = vmatpush1.msra.mxu0 0.0
        %3500 = vmatprep.subr.mxu0 0.0
        %3501 = vmatpush1.msra.mxu0 0.0
        %3502 = vmatprep.subr.mxu0 0.0
        %3503 = vmatpush1.msra.mxu0 0.0
        %3504 = vmatprep.subr.mxu0 0.0
        %3505 = vmatpush1.msra.mxu0 0.0
        %3506 = vmatprep.subr.mxu0 0.0
        %3507 = vmatpush1.msra.mxu0 0.0
        %3508 = vmatprep.subr.mxu0 0.0
        %3509 = vmatpush1.msra.mxu0 0.0
        %3510 = vmatprep.subr.mxu0 0.0
        %3511 = vmatpush1.msra.mxu0 %v3166
        %3512 = vmatprep.subr.mxu0 0.0
        %3513 = vmatpush1.msra.mxu0 %v3163
        %3514 = vmatprep.subr.mxu0 0.0
        %3515 = vmatpush2.msra.mxu0 0.0
        %3516 = vmatprep.subr.mxu0 0.0
        %3517 = vmatpush2.msra.mxu0 0.0
        %3518 = vmatprep.subr.mxu0 0.0
        %3519 = vmatpush2.msra.mxu0 0.0
        %3520 = vmatprep.subr.mxu0 0.0
        %3521 = vmatpush2.msra.mxu0 0.0
        %3522 = vmatprep.subr.mxu0 0.0
        %3523 = vmatpush2.msra.mxu0 0.0
        %3524 = vmatprep.subr.mxu0 0.0
        %3525 = vmatpush2.msra.mxu0 0.0
        %3526 = vmatprep.subr.mxu0 0.0
        %3527 = vmatpush2.msra.mxu0 0.0
        %3528 = vmatprep.subr.mxu0 0.0
        %3529 = vmatpush2.msra.mxu0 0.0
        %3530 = vmatprep.subr.mxu0 0.0
        %3531 = vmatpush2.msra.mxu0 0.0
        %3532 = vmatprep.subr.mxu0 0.0
        %3533 = vmatpush2.msra.mxu0 0.0
        %3534 = vmatprep.subr.mxu0 0.0
        %3535 = vmatpush2.msra.mxu0 0.0
        %3536 = vmatprep.subr.mxu0 0.0
        %3537 = vmatpush2.msra.mxu0 0.0
        %3538 = vmatprep.subr.mxu0 0.0
        %3539 = vmatpush2.msra.mxu0 0.0
        %3540 = vmatprep.subr.mxu0 0.0
        %3541 = vmatpush2.msra.mxu0 0.0
        %3542 = vmatprep.subr.mxu0 0.0
        %3543 = vmatpush2.msra.mxu0 0.0
        %3544 = vmatprep.subr.mxu0 0.0
        %3545 = vmatpush2.msra.mxu0 0.0
        %3546 = vmatprep.mubr.f32.mxu0 0.0
        %3547 = vmatmul.mubr.f32.gmra.mxu0 %v3477
        %v3548 = vpop.f32.mrf.mxu0
        %v3549 = vadd.f32 0.0, %v3548
        %v3550 = vpop.f32.mrf.mxu0
        %3551 = vmatprep.mubr.f32.mxu0 0.0
        %3552 = vmatmul.mubr.f32.gmra.mxu0 %v3480
        %v3553 = vpop.f32.mrf.mxu0
        %v3554 = vadd.f32 0.0, %v3553
        %v3555 = vpop.f32.mrf.mxu0
        %3556 = vdwg.mxu0
        %v3557 = vpack.c.bf16 %v3473, %v3468
        %v3558 = vpack.c.bf16 %v3554, %v3549
        %s3559 = scalar_lea.vmem %s705, 4 [#allocation13]
        %v3560 = vld [vmem:[%s3559] sm:$0xf]
        %v3562 = vsel %vm2542, %v3557, 0
        %v3565 = vsel %vm2542, %v3558, 0
        %vm3567 = vcmask 1043456
        %v3569 = vsel %vm3567, %v3560, 0
        %3571 = vmatprep.subr.bf16.mxu0 0
        %3572 = vmatpush1.bf16.msra.mxu0 0
        %3573 = vmatprep.subr.bf16.mxu0 0
        %3574 = vmatpush1.bf16.msra.mxu0 0
        %3575 = vmatprep.subr.bf16.mxu0 0
        %3576 = vmatpush1.bf16.msra.mxu0 0
        %3577 = vmatprep.subr.bf16.mxu0 0
        %3578 = vmatpush1.bf16.msra.mxu0 0
        %3579 = vmatprep.subr.bf16.mxu0 0
        %3580 = vmatpush1.bf16.msra.mxu0 0
        %3581 = vmatprep.subr.bf16.mxu0 0
        %3582 = vmatpush1.bf16.msra.mxu0 0
        %3583 = vmatprep.subr.bf16.mxu0 0
        %3584 = vmatpush1.bf16.msra.mxu0 0
        %3585 = vmatprep.subr.bf16.mxu0 0
        %3586 = vmatpush1.bf16.msra.mxu0 %v3569
        %3587 = vmatprep.subr.bf16.mxu0 0
        %3588 = vmatpush2.bf16.msra.mxu0 0
        %3589 = vmatprep.subr.bf16.mxu0 0
        %3590 = vmatpush2.bf16.msra.mxu0 0
        %3591 = vmatprep.subr.bf16.mxu0 0
        %3592 = vmatpush2.bf16.msra.mxu0 0
        %3593 = vmatprep.subr.bf16.mxu0 0
        %3594 = vmatpush2.bf16.msra.mxu0 0
        %3595 = vmatprep.subr.bf16.mxu0 0
        %3596 = vmatpush2.bf16.msra.mxu0 0
        %3597 = vmatprep.subr.bf16.mxu0 0
        %3598 = vmatpush2.bf16.msra.mxu0 0
        %3599 = vmatprep.subr.bf16.mxu0 0
        %3600 = vmatpush2.bf16.msra.mxu0 0
        %3601 = vmatprep.subr.bf16.mxu0 0
        %3602 = vmatpush2.bf16.msra.mxu0 0
        %3603 = vmatprep.mubr.bf16.mxu0 0
        %3604 = vmatmul.mubr.bf16.gmra.mxu0 %v3562
        %v3605 = vpop.f32.mrf.mxu0
        %v3606 = vadd.f32 0.0, %v3605
        %v3607 = vpop.f32.mrf.mxu0
        %v3608 = vpop.f32.mrf.mxu0
        %v3609 = vadd.f32 0.0, %v3608
        %v3610 = vpop.f32.mrf.mxu0
        %3611 = vmatprep.mubr.bf16.mxu0 0
        %3612 = vmatmul.mubr.bf16.gmra.mxu0 %v3565
        %v3613 = vpop.f32.mrf.mxu0
        %v3614 = vadd.f32 0.0, %v3613
        %v3615 = vpop.f32.mrf.mxu0
        %v3616 = vpop.f32.mrf.mxu0
        %v3617 = vadd.f32 0.0, %v3616
        %v3618 = vpop.f32.mrf.mxu0
        %3619 = vdwg.mxu0
        %v3621 = vsel %vm2542, %v2932, 0
        %v3624 = vsel %vm2542, %v2933, 0
        %v3627 = vsel %vm3567, %v2934, 0
        %3629 = vmatprep.subr.bf16.mxu0 0
        %3630 = vmatpush1.bf16.msra.mxu0 0
        %3631 = vmatprep.subr.bf16.mxu0 0
        %3632 = vmatpush1.bf16.msra.mxu0 0
        %3633 = vmatprep.subr.bf16.mxu0 0
        %3634 = vmatpush1.bf16.msra.mxu0 0
        %3635 = vmatprep.subr.bf16.mxu0 0
        %3636 = vmatpush1.bf16.msra.mxu0 0
        %3637 = vmatprep.subr.bf16.mxu0 0
        %3638 = vmatpush1.bf16.msra.mxu0 0
        %3639 = vmatprep.subr.bf16.mxu0 0
        %3640 = vmatpush1.bf16.msra.mxu0 0
        %3641 = vmatprep.subr.bf16.mxu0 0
        %3642 = vmatpush1.bf16.msra.mxu0 0
        %3643 = vmatprep.subr.bf16.mxu0 0
        %3644 = vmatpush1.bf16.msra.mxu0 %v3627
        %3645 = vmatprep.subr.bf16.mxu0 0
        %3646 = vmatpush2.bf16.msra.mxu0 0
        %3647 = vmatprep.subr.bf16.mxu0 0
        %3648 = vmatpush2.bf16.msra.mxu0 0
        %3649 = vmatprep.subr.bf16.mxu0 0
        %3650 = vmatpush2.bf16.msra.mxu0 0
        %3651 = vmatprep.subr.bf16.mxu0 0
        %3652 = vmatpush2.bf16.msra.mxu0 0
        %3653 = vmatprep.subr.bf16.mxu0 0
        %3654 = vmatpush2.bf16.msra.mxu0 0
        %3655 = vmatprep.subr.bf16.mxu0 0
        %3656 = vmatpush2.bf16.msra.mxu0 0
        %3657 = vmatprep.subr.bf16.mxu0 0
        %3658 = vmatpush2.bf16.msra.mxu0 0
        %3659 = vmatprep.subr.bf16.mxu0 0
        %3660 = vmatpush2.bf16.msra.mxu0 0
        %3661 = vmatprep.mubr.bf16.mxu0 0
        %3662 = vmatmul.mubr.bf16.gmra.mxu0 %v3621
        %v3663 = vpop.f32.mrf.mxu0
        %v3664 = vadd.f32 %v3606, %v3663
        %v3665 = vpop.f32.mrf.mxu0
        %v3666 = vpop.f32.mrf.mxu0
        %v3667 = vadd.f32 %v3609, %v3666
        %v3668 = vpop.f32.mrf.mxu0
        %3669 = vmatprep.mubr.bf16.mxu0 0
        %3670 = vmatmul.mubr.bf16.gmra.mxu0 %v3624
        %v3671 = vpop.f32.mrf.mxu0
        %v3672 = vadd.f32 %v3614, %v3671
        %v3673 = vpop.f32.mrf.mxu0
        %v3674 = vpop.f32.mrf.mxu0
        %v3675 = vadd.f32 %v3617, %v3674
        %v3676 = vpop.f32.mrf.mxu0
        %3677 = vdwg.mxu0
        %s3678 = scalar_lea.vmem %s678, 48 [#allocation10]
        %v3679 = vld [vmem:[%s3678] sm:$0xf]
        %v3680 = vld [vmem:[%s3678 + $0x4] sm:$0xf]
        %v3681 = vld [vmem:[%s3678 + $0x8] sm:$0xf]
        %v3682 = vld [vmem:[%s3678 + $0xc] sm:$0xf]
        %v3683 = vld [vmem:[%s3678 + $0x10] sm:$0xf]
        %v3684 = vld [vmem:[%s3678 + $0x14] sm:$0xf]
        %v3685 = vlaneseq
        %v3686 = vshrl.u32 %v3685, 7
        %v3687 = vsub.s32 2, %v3686
        %v3688 = vrot.slane %v2297, %v3687
        %v3695 = vunpack.c.l.b16 %v3679
        %v3696 = vunpack.c.l.b16 %v3680
        %v3697 = vunpack.c.l.b16 %v3681
        %v3698 = vunpack.c.l.b16 %v3682
        %v3699 = vunpack.c.l.b16 %v3683
        %v3700 = vunpack.c.l.b16 %v3684
        %v3701 = vpack.c.b16 %v3696, %v3695
        %v3702 = vpack.c.b16 %v3698, %v3697
        %v3703 = vpack.c.b16 %v3700, %v3699
        %3707 = vmatprep.subr.bf16.mxu0 0
        %3708 = vmatpush1.bf16.msra.mxu0 0
        %3709 = vmatprep.subr.bf16.mxu0 0
        %3710 = vmatpush1.bf16.msra.mxu0 0
        %3711 = vmatprep.subr.bf16.mxu0 0
        %3712 = vmatpush1.bf16.msra.mxu0 0
        %3713 = vmatprep.subr.bf16.mxu0 0
        %3714 = vmatpush1.bf16.msra.mxu0 0
        %3715 = vmatprep.subr.bf16.mxu0 0
        %3716 = vmatpush1.bf16.msra.mxu0 0
        %3717 = vmatprep.subr.bf16.mxu0 0
        %3718 = vmatpush1.bf16.msra.mxu0 %v3703
        %3719 = vmatprep.subr.bf16.mxu0 0
        %3720 = vmatpush1.bf16.msra.mxu0 %v3702
        %3721 = vmatprep.subr.bf16.mxu0 0
        %3722 = vmatpush1.bf16.msra.mxu0 %v3701
        %3723 = vmatprep.subr.bf16.mxu0 0
        %3724 = vmatpush2.bf16.msra.mxu0 0
        %3725 = vmatprep.subr.bf16.mxu0 0
        %3726 = vmatpush2.bf16.msra.mxu0 0
        %3727 = vmatprep.subr.bf16.mxu0 0
        %3728 = vmatpush2.bf16.msra.mxu0 0
        %3729 = vmatprep.subr.bf16.mxu0 0
        %3730 = vmatpush2.bf16.msra.mxu0 0
        %3731 = vmatprep.subr.bf16.mxu0 0
        %3732 = vmatpush2.bf16.msra.mxu0 0
        %3733 = vmatprep.subr.bf16.mxu0 0
        %3734 = vmatpush2.bf16.msra.mxu0 0
        %3735 = vmatprep.subr.bf16.mxu0 0
        %3736 = vmatpush2.bf16.msra.mxu0 0
        %3737 = vmatprep.subr.bf16.mxu0 0
        %3738 = vmatpush2.bf16.msra.mxu0 0
        %3739 = vmatprep.mubr.bf16.mxu0 0
        %3740 = vmatmul.mubr.bf16.gmra.mxu0 %v2334
        %v3741 = vpop.f32.mrf.mxu0
        %v3742 = vadd.f32 %v3688, %v3741
        %v3743 = vpop.f32.mrf.mxu0
        %v3744 = vpop.f32.mrf.mxu0
        %v3745 = vadd.f32 %v3688, %v3744
        %v3746 = vpop.f32.mrf.mxu0
        %3747 = vmatprep.mubr.bf16.mxu0 0
        %3748 = vmatmul.mubr.bf16.gmra.mxu0 %v2337
        %v3749 = vpop.f32.mrf.mxu0
        %v3750 = vadd.f32 %v3688, %v3749
        %v3751 = vpop.f32.mrf.mxu0
        %v3752 = vpop.f32.mrf.mxu0
        %v3753 = vadd.f32 %v3688, %v3752
        %v3754 = vpop.f32.mrf.mxu0
        %3755 = vdwg.mxu0
        %s3756 = scalar_lea.vmem %s687, 48 [#allocation11]
        %v3757 = vld [vmem:[%s3756] sm:$0xf]
        %v3758 = vld [vmem:[%s3756 + $0x4] sm:$0xf]
        %v3759 = vld [vmem:[%s3756 + $0x8] sm:$0xf]
        %v3760 = vld [vmem:[%s3756 + $0xc] sm:$0xf]
        %v3761 = vld [vmem:[%s3756 + $0x10] sm:$0xf]
        %v3762 = vld [vmem:[%s3756 + $0x14] sm:$0xf]
        %v3763 = vlaneseq
        %v3764 = vshrl.u32 %v3763, 7
        %v3765 = vsub.s32 0, %v3764
        %v3766 = vrot.slane %v2298, %v3765
        %v3773 = vunpack.c.l.b16 %v3757
        %v3774 = vunpack.c.l.b16 %v3758
        %v3775 = vunpack.c.l.b16 %v3759
        %v3776 = vunpack.c.l.b16 %v3760
        %v3777 = vunpack.c.l.b16 %v3761
        %v3778 = vunpack.c.l.b16 %v3762
        %v3779 = vpack.c.b16 %v3774, %v3773
        %v3780 = vpack.c.b16 %v3776, %v3775
        %v3781 = vpack.c.b16 %v3778, %v3777
        %3785 = vmatprep.subr.bf16.mxu0 0
        %3786 = vmatpush1.bf16.msra.mxu0 0
        %3787 = vmatprep.subr.bf16.mxu0 0
        %3788 = vmatpush1.bf16.msra.mxu0 0
        %3789 = vmatprep.subr.bf16.mxu0 0
        %3790 = vmatpush1.bf16.msra.mxu0 0
        %3791 = vmatprep.subr.bf16.mxu0 0
        %3792 = vmatpush1.bf16.msra.mxu0 0
        %3793 = vmatprep.subr.bf16.mxu0 0
        %3794 = vmatpush1.bf16.msra.mxu0 0
        %3795 = vmatprep.subr.bf16.mxu0 0
        %3796 = vmatpush1.bf16.msra.mxu0 %v3781
        %3797 = vmatprep.subr.bf16.mxu0 0
        %3798 = vmatpush1.bf16.msra.mxu0 %v3780
        %3799 = vmatprep.subr.bf16.mxu0 0
        %3800 = vmatpush1.bf16.msra.mxu0 %v3779
        %3801 = vmatprep.subr.bf16.mxu0 0
        %3802 = vmatpush2.bf16.msra.mxu0 0
        %3803 = vmatprep.subr.bf16.mxu0 0
        %3804 = vmatpush2.bf16.msra.mxu0 0
        %3805 = vmatprep.subr.bf16.mxu0 0
        %3806 = vmatpush2.bf16.msra.mxu0 0
        %3807 = vmatprep.subr.bf16.mxu0 0
        %3808 = vmatpush2.bf16.msra.mxu0 0
        %3809 = vmatprep.subr.bf16.mxu0 0
        %3810 = vmatpush2.bf16.msra.mxu0 0
        %3811 = vmatprep.subr.bf16.mxu0 0
        %3812 = vmatpush2.bf16.msra.mxu0 0
        %3813 = vmatprep.subr.bf16.mxu0 0
        %3814 = vmatpush2.bf16.msra.mxu0 0
        %3815 = vmatprep.subr.bf16.mxu0 0
        %3816 = vmatpush2.bf16.msra.mxu0 0
        %3817 = vmatprep.mubr.bf16.mxu0 0
        %3818 = vmatmul.mubr.bf16.gmra.mxu0 %v2334
        %v3819 = vpop.f32.mrf.mxu0
        %v3820 = vadd.f32 %v3766, %v3819
        %v3821 = vpop.f32.mrf.mxu0
        %v3822 = vpop.f32.mrf.mxu0
        %v3823 = vadd.f32 %v3766, %v3822
        %v3824 = vpop.f32.mrf.mxu0
        %3825 = vmatprep.mubr.bf16.mxu0 0
        %3826 = vmatmul.mubr.bf16.gmra.mxu0 %v2337
        %v3827 = vpop.f32.mrf.mxu0
        %v3828 = vadd.f32 %v3766, %v3827
        %v3829 = vpop.f32.mrf.mxu0
        %v3830 = vpop.f32.mrf.mxu0
        %v3831 = vadd.f32 %v3766, %v3830
        %v3832 = vpop.f32.mrf.mxu0
        %3833 = vdwg.mxu0
        %s3834 = scalar_lea.vmem %s696, 48 [#allocation12]
        %v3835 = vld [vmem:[%s3834] sm:$0xf]
        %v3836 = vld [vmem:[%s3834 + $0x4] sm:$0xf]
        %v3837 = vld [vmem:[%s3834 + $0x8] sm:$0xf]
        %v3838 = vld [vmem:[%s3834 + $0xc] sm:$0xf]
        %v3839 = vld [vmem:[%s3834 + $0x10] sm:$0xf]
        %v3840 = vld [vmem:[%s3834 + $0x14] sm:$0xf]
        %v3841 = vlaneseq
        %v3842 = vshrl.u32 %v3841, 7
        %v3843 = vsub.s32 6, %v3842
        %v3844 = vrot.slane %v2298, %v3843
        %v3851 = vunpack.c.l.b16 %v3835
        %v3852 = vunpack.c.l.b16 %v3836
        %v3853 = vunpack.c.l.b16 %v3837
        %v3854 = vunpack.c.l.b16 %v3838
        %v3855 = vunpack.c.l.b16 %v3839
        %v3856 = vunpack.c.l.b16 %v3840
        %v3857 = vpack.c.b16 %v3852, %v3851
        %v3858 = vpack.c.b16 %v3854, %v3853
        %v3859 = vpack.c.b16 %v3856, %v3855
        %3863 = vmatprep.subr.bf16.mxu0 0
        %3864 = vmatpush1.bf16.msra.mxu0 0
        %3865 = vmatprep.subr.bf16.mxu0 0
        %3866 = vmatpush1.bf16.msra.mxu0 0
        %3867 = vmatprep.subr.bf16.mxu0 0
        %3868 = vmatpush1.bf16.msra.mxu0 0
        %3869 = vmatprep.subr.bf16.mxu0 0
        %3870 = vmatpush1.bf16.msra.mxu0 0
        %3871 = vmatprep.subr.bf16.mxu0 0
        %3872 = vmatpush1.bf16.msra.mxu0 0
        %3873 = vmatprep.subr.bf16.mxu0 0
        %3874 = vmatpush1.bf16.msra.mxu0 %v3859
        %3875 = vmatprep.subr.bf16.mxu0 0
        %3876 = vmatpush1.bf16.msra.mxu0 %v3858
        %3877 = vmatprep.subr.bf16.mxu0 0
        %3878 = vmatpush1.bf16.msra.mxu0 %v3857
        %3879 = vmatprep.subr.bf16.mxu0 0
        %3880 = vmatpush2.bf16.msra.mxu0 0
        %3881 = vmatprep.subr.bf16.mxu0 0
        %3882 = vmatpush2.bf16.msra.mxu0 0
        %3883 = vmatprep.subr.bf16.mxu0 0
        %3884 = vmatpush2.bf16.msra.mxu0 0
        %3885 = vmatprep.subr.bf16.mxu0 0
        %3886 = vmatpush2.bf16.msra.mxu0 0
        %3887 = vmatprep.subr.bf16.mxu0 0
        %3888 = vmatpush2.bf16.msra.mxu0 0
        %3889 = vmatprep.subr.bf16.mxu0 0
        %3890 = vmatpush2.bf16.msra.mxu0 0
        %3891 = vmatprep.subr.bf16.mxu0 0
        %3892 = vmatpush2.bf16.msra.mxu0 0
        %3893 = vmatprep.subr.bf16.mxu0 0
        %3894 = vmatpush2.bf16.msra.mxu0 0
        %3895 = vmatprep.mubr.bf16.mxu0 0
        %3896 = vmatmul.mubr.bf16.gmra.mxu0 %v2334
        %v3897 = vpop.f32.mrf.mxu0
        %v3898 = vadd.f32 %v3844, %v3897
        %v3899 = vpop.f32.mrf.mxu0
        %v3900 = vpop.f32.mrf.mxu0
        %v3901 = vadd.f32 %v3844, %v3900
        %v3902 = vpop.f32.mrf.mxu0
        %3903 = vmatprep.mubr.bf16.mxu0 0
        %3904 = vmatmul.mubr.bf16.gmra.mxu0 %v2337
        %v3905 = vpop.f32.mrf.mxu0
        %v3906 = vadd.f32 %v3844, %v3905
        %v3907 = vpop.f32.mrf.mxu0
        %v3908 = vpop.f32.mrf.mxu0
        %v3909 = vadd.f32 %v3844, %v3908
        %v3910 = vpop.f32.mrf.mxu0
        %3911 = vdwg.mxu0
        %v3913 = vsel %vm2542, %v3742, 0
        %v3916 = vsel %vm2542, %v3745, 0
        %v3919 = vsel %vm2542, %v3820, 0
        %v3922 = vsel %vm2542, %v3823, 0
        %3924 = vmatprep.subr.mxu0 0.0
        %3925 = vmatpush1.xpose.msra.mxu0 0.0
        %3926 = vmatprep.subr.mxu0 0.0
        %3927 = vmatpush1.xpose.msra.mxu0 0.0
        %3928 = vmatprep.subr.mxu0 0.0
        %3929 = vmatpush1.xpose.msra.mxu0 0.0
        %3930 = vmatprep.subr.mxu0 0.0
        %3931 = vmatpush1.xpose.msra.mxu0 0.0
        %3932 = vmatprep.subr.mxu0 0.0
        %3933 = vmatpush1.xpose.msra.mxu0 0.0
        %3934 = vmatprep.subr.mxu0 0.0
        %3935 = vmatpush1.xpose.msra.mxu0 0.0
        %3936 = vmatprep.subr.mxu0 0.0
        %3937 = vmatpush1.xpose.msra.mxu0 0.0
        %3938 = vmatprep.subr.mxu0 0.0
        %3939 = vmatpush1.xpose.msra.mxu0 0.0
        %3940 = vmatprep.subr.mxu0 0.0
        %3941 = vmatpush1.xpose.msra.mxu0 0.0
        %3942 = vmatprep.subr.mxu0 0.0
        %3943 = vmatpush1.xpose.msra.mxu0 0.0
        %3944 = vmatprep.subr.mxu0 0.0
        %3945 = vmatpush1.xpose.msra.mxu0 0.0
        %3946 = vmatprep.subr.mxu0 0.0
        %3947 = vmatpush1.xpose.msra.mxu0 0.0
        %3948 = vmatprep.subr.mxu0 0.0
        %3949 = vmatpush1.xpose.msra.mxu0 0.0
        %3950 = vmatprep.subr.mxu0 0.0
        %3951 = vmatpush1.xpose.msra.mxu0 0.0
        %3952 = vmatprep.subr.mxu0 0.0
        %3953 = vmatpush1.xpose.msra.mxu0 %v3922
        %3954 = vmatprep.subr.mxu0 0.0
        %3955 = vmatpush1.xpose.msra.mxu0 %v3919
        %3956 = vmatprep.subr.mxu0 0.0
        %3957 = vmatpush2.xpose.msra.mxu0 0.0
        %3958 = vmatprep.subr.mxu0 0.0
        %3959 = vmatpush2.xpose.msra.mxu0 0.0
        %3960 = vmatprep.subr.mxu0 0.0
        %3961 = vmatpush2.xpose.msra.mxu0 0.0
        %3962 = vmatprep.subr.mxu0 0.0
        %3963 = vmatpush2.xpose.msra.mxu0 0.0
        %3964 = vmatprep.subr.mxu0 0.0
        %3965 = vmatpush2.xpose.msra.mxu0 0.0
        %3966 = vmatprep.subr.mxu0 0.0
        %3967 = vmatpush2.xpose.msra.mxu0 0.0
        %3968 = vmatprep.subr.mxu0 0.0
        %3969 = vmatpush2.xpose.msra.mxu0 0.0
        %3970 = vmatprep.subr.mxu0 0.0
        %3971 = vmatpush2.xpose.msra.mxu0 0.0
        %3972 = vmatprep.subr.mxu0 0.0
        %3973 = vmatpush2.xpose.msra.mxu0 0.0
        %3974 = vmatprep.subr.mxu0 0.0
        %3975 = vmatpush2.xpose.msra.mxu0 0.0
        %3976 = vmatprep.subr.mxu0 0.0
        %3977 = vmatpush2.xpose.msra.mxu0 0.0
        %3978 = vmatprep.subr.mxu0 0.0
        %3979 = vmatpush2.xpose.msra.mxu0 0.0
        %3980 = vmatprep.subr.mxu0 0.0
        %3981 = vmatpush2.xpose.msra.mxu0 0.0
        %3982 = vmatprep.subr.mxu0 0.0
        %3983 = vmatpush2.xpose.msra.mxu0 0.0
        %3984 = vmatprep.subr.mxu0 0.0
        %3985 = vmatpush2.xpose.msra.mxu0 0.0
        %3986 = vmatprep.subr.mxu0 0.0
        %3987 = vmatpush2.xpose.msra.mxu0 0.0
        %3988 = vmatprep.mubr.f32.mxu0 0.0
        %3989 = vmatmul.mubr.f32.gmra.mxu0 %v3913
        %v3990 = vpop.f32.mrf.mxu0
        %v3991 = vadd.f32 0.0, %v3990
        %v3992 = vpop.f32.mrf.mxu0
        %3993 = vmatprep.mubr.f32.mxu0 0.0
        %3994 = vmatmul.mubr.f32.gmra.mxu0 %v3916
        %v3995 = vpop.f32.mrf.mxu0
        %v3996 = vadd.f32 0.0, %v3995
        %v3997 = vpop.f32.mrf.mxu0
        %3998 = vdwg.mxu0
        %v4000 = vsel %vm2542, %v3750, 0
        %v4003 = vsel %vm2542, %v3753, 0
        %v4006 = vsel %vm2542, %v3828, 0
        %v4009 = vsel %vm2542, %v3831, 0
        %4011 = vmatprep.subr.mxu0 0.0
        %4012 = vmatpush1.xpose.msra.mxu0 0.0
        %4013 = vmatprep.subr.mxu0 0.0
        %4014 = vmatpush1.xpose.msra.mxu0 0.0
        %4015 = vmatprep.subr.mxu0 0.0
        %4016 = vmatpush1.xpose.msra.mxu0 0.0
        %4017 = vmatprep.subr.mxu0 0.0
        %4018 = vmatpush1.xpose.msra.mxu0 0.0
        %4019 = vmatprep.subr.mxu0 0.0
        %4020 = vmatpush1.xpose.msra.mxu0 0.0
        %4021 = vmatprep.subr.mxu0 0.0
        %4022 = vmatpush1.xpose.msra.mxu0 0.0
        %4023 = vmatprep.subr.mxu0 0.0
        %4024 = vmatpush1.xpose.msra.mxu0 0.0
        %4025 = vmatprep.subr.mxu0 0.0
        %4026 = vmatpush1.xpose.msra.mxu0 0.0
        %4027 = vmatprep.subr.mxu0 0.0
        %4028 = vmatpush1.xpose.msra.mxu0 0.0
        %4029 = vmatprep.subr.mxu0 0.0
        %4030 = vmatpush1.xpose.msra.mxu0 0.0
        %4031 = vmatprep.subr.mxu0 0.0
        %4032 = vmatpush1.xpose.msra.mxu0 0.0
        %4033 = vmatprep.subr.mxu0 0.0
        %4034 = vmatpush1.xpose.msra.mxu0 0.0
        %4035 = vmatprep.subr.mxu0 0.0
        %4036 = vmatpush1.xpose.msra.mxu0 0.0
        %4037 = vmatprep.subr.mxu0 0.0
        %4038 = vmatpush1.xpose.msra.mxu0 0.0
        %4039 = vmatprep.subr.mxu0 0.0
        %4040 = vmatpush1.xpose.msra.mxu0 %v4009
        %4041 = vmatprep.subr.mxu0 0.0
        %4042 = vmatpush1.xpose.msra.mxu0 %v4006
        %4043 = vmatprep.subr.mxu0 0.0
        %4044 = vmatpush2.xpose.msra.mxu0 0.0
        %4045 = vmatprep.subr.mxu0 0.0
        %4046 = vmatpush2.xpose.msra.mxu0 0.0
        %4047 = vmatprep.subr.mxu0 0.0
        %4048 = vmatpush2.xpose.msra.mxu0 0.0
        %4049 = vmatprep.subr.mxu0 0.0
        %4050 = vmatpush2.xpose.msra.mxu0 0.0
        %4051 = vmatprep.subr.mxu0 0.0
        %4052 = vmatpush2.xpose.msra.mxu0 0.0
        %4053 = vmatprep.subr.mxu0 0.0
        %4054 = vmatpush2.xpose.msra.mxu0 0.0
        %4055 = vmatprep.subr.mxu0 0.0
        %4056 = vmatpush2.xpose.msra.mxu0 0.0
        %4057 = vmatprep.subr.mxu0 0.0
        %4058 = vmatpush2.xpose.msra.mxu0 0.0
        %4059 = vmatprep.subr.mxu0 0.0
        %4060 = vmatpush2.xpose.msra.mxu0 0.0
        %4061 = vmatprep.subr.mxu0 0.0
        %4062 = vmatpush2.xpose.msra.mxu0 0.0
        %4063 = vmatprep.subr.mxu0 0.0
        %4064 = vmatpush2.xpose.msra.mxu0 0.0
        %4065 = vmatprep.subr.mxu0 0.0
        %4066 = vmatpush2.xpose.msra.mxu0 0.0
        %4067 = vmatprep.subr.mxu0 0.0
        %4068 = vmatpush2.xpose.msra.mxu0 0.0
        %4069 = vmatprep.subr.mxu0 0.0
        %4070 = vmatpush2.xpose.msra.mxu0 0.0
        %4071 = vmatprep.subr.mxu0 0.0
        %4072 = vmatpush2.xpose.msra.mxu0 0.0
        %4073 = vmatprep.subr.mxu0 0.0
        %4074 = vmatpush2.xpose.msra.mxu0 0.0
        %4075 = vmatprep.mubr.f32.mxu0 0.0
        %4076 = vmatmul.mubr.f32.gmra.mxu0 %v4000
        %v4077 = vpop.f32.mrf.mxu0
        %v4078 = vadd.f32 0.0, %v4077
        %v4079 = vpop.f32.mrf.mxu0
        %4080 = vmatprep.mubr.f32.mxu0 0.0
        %4081 = vmatmul.mubr.f32.gmra.mxu0 %v4003
        %v4082 = vpop.f32.mrf.mxu0
        %v4083 = vadd.f32 0.0, %v4082
        %v4084 = vpop.f32.mrf.mxu0
        %4085 = vdwg.mxu0
        %v4086 = vmul.f32 %v3991, 0.35355338
        %v4087 = vmul.f32 %v3996, 0.35355338
        %v4088 = vmul.f32 %v4078, 0.35355338
        %v4089 = vmul.f32 %v4083, 0.35355338
        %v4090 = vadd.f32 %v4086, %v2303
        %v4091 = vadd.f32 %v4087, %v2303
        %v4092 = vadd.f32 %v4088, %v2303
        %v4093 = vadd.f32 %v4089, %v2303
        %v4094 = vsel %vm2725, %v4090, -inf
        %4095 = vmax.xlane.f32.xlu0 %v4094
        %v4096 = vpop.xlane.xlu0 %4095
        %v4097 = vsel %vm2725, %v4091, -inf
        %4098 = vmax.xlane.f32.xlu0 %v4097
        %v4099 = vpop.xlane.xlu0 %4098
        %v4100 = vsel %vm2725, %v4092, -inf
        %4101 = vmax.xlane.f32.xlu0 %v4100
        %v4102 = vpop.xlane.xlu0 %4101
        %v4103 = vsel %vm2725, %v4093, -inf
        %4104 = vmax.xlane.f32.xlu0 %v4103
        %v4105 = vpop.xlane.xlu0 %4104
        %v4106 = vsub.f32 %v4090, %v4096
        %v4107 = vsub.f32 %v4091, %v4099
        %v4108 = vsub.f32 %v4092, %v4102
        %v4109 = vsub.f32 %v4093, %v4105
        %v4110 = vmul.f32 %v4106, 1.442695
        %v4111 = vpow.pop %v4110
        %v4112 = vmul.f32 %v4107, 1.442695
        %v4113 = vpow.pop %v4112
        %v4114 = vmul.f32 %v4108, 1.442695
        %v4115 = vpow.pop %v4114
        %v4116 = vmul.f32 %v4109, 1.442695
        %v4117 = vpow.pop %v4116
        %v4118 = vsel %vm2725, %v4111, 0.0
        %4119 = vadd.xlane.f32.xlu0 %v4118
        %v4120 = vpop.xlane.xlu0 %4119
        %v4121 = vsel %vm2725, %v4113, 0.0
        %4122 = vadd.xlane.f32.xlu0 %v4121
        %v4123 = vpop.xlane.xlu0 %4122
        %v4124 = vsel %vm2725, %v4115, 0.0
        %4125 = vadd.xlane.f32.xlu0 %v4124
        %v4126 = vpop.xlane.xlu0 %4125
        %v4127 = vsel %vm2725, %v4117, 0.0
        %4128 = vadd.xlane.f32.xlu0 %v4127
        %v4129 = vpop.xlane.xlu0 %4128
        %v4130 = vrcp.pop %v4120
        %v4131 = vrcp.pop %v4123
        %v4132 = vrcp.pop %v4126
        %v4133 = vrcp.pop %v4129
        %v4134 = vmul.f32 %v4111, %v4130
        %v4135 = vmul.f32 %v4113, %v4131
        %v4136 = vmul.f32 %v4115, %v4132
        %v4137 = vmul.f32 %v4117, %v4133
        %v4139 = vsel %vm2725, %v4134, 0
        %v4142 = vsel %vm2725, %v4135, 0
        %4144 = vmatprep.subr.mxu0 0.0
        %4145 = vmatpush1.msra.mxu0 0.0
        %4146 = vmatprep.subr.mxu0 0.0
        %4147 = vmatpush1.msra.mxu0 0.0
        %4148 = vmatprep.subr.mxu0 0.0
        %4149 = vmatpush1.msra.mxu0 0.0
        %4150 = vmatprep.subr.mxu0 0.0
        %4151 = vmatpush1.msra.mxu0 0.0
        %4152 = vmatprep.subr.mxu0 0.0
        %4153 = vmatpush1.msra.mxu0 0.0
        %4154 = vmatprep.subr.mxu0 0.0
        %4155 = vmatpush1.msra.mxu0 0.0
        %4156 = vmatprep.subr.mxu0 0.0
        %4157 = vmatpush1.msra.mxu0 0.0
        %4158 = vmatprep.subr.mxu0 0.0
        %4159 = vmatpush1.msra.mxu0 0.0
        %4160 = vmatprep.subr.mxu0 0.0
        %4161 = vmatpush1.msra.mxu0 0.0
        %4162 = vmatprep.subr.mxu0 0.0
        %4163 = vmatpush1.msra.mxu0 0.0
        %4164 = vmatprep.subr.mxu0 0.0
        %4165 = vmatpush1.msra.mxu0 0.0
        %4166 = vmatprep.subr.mxu0 0.0
        %4167 = vmatpush1.msra.mxu0 0.0
        %4168 = vmatprep.subr.mxu0 0.0
        %4169 = vmatpush1.msra.mxu0 0.0
        %4170 = vmatprep.subr.mxu0 0.0
        %4171 = vmatpush1.msra.mxu0 0.0
        %4172 = vmatprep.subr.mxu0 0.0
        %4173 = vmatpush1.msra.mxu0 %v3901
        %4174 = vmatprep.subr.mxu0 0.0
        %4175 = vmatpush1.msra.mxu0 %v3898
        %4176 = vmatprep.subr.mxu0 0.0
        %4177 = vmatpush2.msra.mxu0 0.0
        %4178 = vmatprep.subr.mxu0 0.0
        %4179 = vmatpush2.msra.mxu0 0.0
        %4180 = vmatprep.subr.mxu0 0.0
        %4181 = vmatpush2.msra.mxu0 0.0
        %4182 = vmatprep.subr.mxu0 0.0
        %4183 = vmatpush2.msra.mxu0 0.0
        %4184 = vmatprep.subr.mxu0 0.0
        %4185 = vmatpush2.msra.mxu0 0.0
        %4186 = vmatprep.subr.mxu0 0.0
        %4187 = vmatpush2.msra.mxu0 0.0
        %4188 = vmatprep.subr.mxu0 0.0
        %4189 = vmatpush2.msra.mxu0 0.0
        %4190 = vmatprep.subr.mxu0 0.0
        %4191 = vmatpush2.msra.mxu0 0.0
        %4192 = vmatprep.subr.mxu0 0.0
        %4193 = vmatpush2.msra.mxu0 0.0
        %4194 = vmatprep.subr.mxu0 0.0
        %4195 = vmatpush2.msra.mxu0 0.0
        %4196 = vmatprep.subr.mxu0 0.0
        %4197 = vmatpush2.msra.mxu0 0.0
        %4198 = vmatprep.subr.mxu0 0.0
        %4199 = vmatpush2.msra.mxu0 0.0
        %4200 = vmatprep.subr.mxu0 0.0
        %4201 = vmatpush2.msra.mxu0 0.0
        %4202 = vmatprep.subr.mxu0 0.0
        %4203 = vmatpush2.msra.mxu0 0.0
        %4204 = vmatprep.subr.mxu0 0.0
        %4205 = vmatpush2.msra.mxu0 0.0
        %4206 = vmatprep.subr.mxu0 0.0
        %4207 = vmatpush2.msra.mxu0 0.0
        %4208 = vmatprep.mubr.f32.mxu0 0.0
        %4209 = vmatmul.mubr.f32.gmra.mxu0 %v4139
        %v4210 = vpop.f32.mrf.mxu0
        %v4211 = vadd.f32 0.0, %v4210
        %v4212 = vpop.f32.mrf.mxu0
        %4213 = vmatprep.mubr.f32.mxu0 0.0
        %4214 = vmatmul.mubr.f32.gmra.mxu0 %v4142
        %v4215 = vpop.f32.mrf.mxu0
        %v4216 = vadd.f32 0.0, %v4215
        %v4217 = vpop.f32.mrf.mxu0
        %4218 = vdwg.mxu0
        %v4220 = vsel %vm2725, %v4136, 0
        %v4223 = vsel %vm2725, %v4137, 0
        %4225 = vmatprep.subr.mxu0 0.0
        %4226 = vmatpush1.msra.mxu0 0.0
        %4227 = vmatprep.subr.mxu0 0.0
        %4228 = vmatpush1.msra.mxu0 0.0
        %4229 = vmatprep.subr.mxu0 0.0
        %4230 = vmatpush1.msra.mxu0 0.0
        %4231 = vmatprep.subr.mxu0 0.0
        %4232 = vmatpush1.msra.mxu0 0.0
        %4233 = vmatprep.subr.mxu0 0.0
        %4234 = vmatpush1.msra.mxu0 0.0
        %4235 = vmatprep.subr.mxu0 0.0
        %4236 = vmatpush1.msra.mxu0 0.0
        %4237 = vmatprep.subr.mxu0 0.0
        %4238 = vmatpush1.msra.mxu0 0.0
        %4239 = vmatprep.subr.mxu0 0.0
        %4240 = vmatpush1.msra.mxu0 0.0
        %4241 = vmatprep.subr.mxu0 0.0
        %4242 = vmatpush1.msra.mxu0 0.0
        %4243 = vmatprep.subr.mxu0 0.0
        %4244 = vmatpush1.msra.mxu0 0.0
        %4245 = vmatprep.subr.mxu0 0.0
        %4246 = vmatpush1.msra.mxu0 0.0
        %4247 = vmatprep.subr.mxu0 0.0
        %4248 = vmatpush1.msra.mxu0 0.0
        %4249 = vmatprep.subr.mxu0 0.0
        %4250 = vmatpush1.msra.mxu0 0.0
        %4251 = vmatprep.subr.mxu0 0.0
        %4252 = vmatpush1.msra.mxu0 0.0
        %4253 = vmatprep.subr.mxu0 0.0
        %4254 = vmatpush1.msra.mxu0 %v3909
        %4255 = vmatprep.subr.mxu0 0.0
        %4256 = vmatpush1.msra.mxu0 %v3906
        %4257 = vmatprep.subr.mxu0 0.0
        %4258 = vmatpush2.msra.mxu0 0.0
        %4259 = vmatprep.subr.mxu0 0.0
        %4260 = vmatpush2.msra.mxu0 0.0
        %4261 = vmatprep.subr.mxu0 0.0
        %4262 = vmatpush2.msra.mxu0 0.0
        %4263 = vmatprep.subr.mxu0 0.0
        %4264 = vmatpush2.msra.mxu0 0.0
        %4265 = vmatprep.subr.mxu0 0.0
        %4266 = vmatpush2.msra.mxu0 0.0
        %4267 = vmatprep.subr.mxu0 0.0
        %4268 = vmatpush2.msra.mxu0 0.0
        %4269 = vmatprep.subr.mxu0 0.0
        %4270 = vmatpush2.msra.mxu0 0.0
        %4271 = vmatprep.subr.mxu0 0.0
        %4272 = vmatpush2.msra.mxu0 0.0
        %4273 = vmatprep.subr.mxu0 0.0
        %4274 = vmatpush2.msra.mxu0 0.0
        %4275 = vmatprep.subr.mxu0 0.0
        %4276 = vmatpush2.msra.mxu0 0.0
        %4277 = vmatprep.subr.mxu0 0.0
        %4278 = vmatpush2.msra.mxu0 0.0
        %4279 = vmatprep.subr.mxu0 0.0
        %4280 = vmatpush2.msra.mxu0 0.0
        %4281 = vmatprep.subr.mxu0 0.0
        %4282 = vmatpush2.msra.mxu0 0.0
        %4283 = vmatprep.subr.mxu0 0.0
        %4284 = vmatpush2.msra.mxu0 0.0
        %4285 = vmatprep.subr.mxu0 0.0
        %4286 = vmatpush2.msra.mxu0 0.0
        %4287 = vmatprep.subr.mxu0 0.0
        %4288 = vmatpush2.msra.mxu0 0.0
        %4289 = vmatprep.mubr.f32.mxu0 0.0
        %4290 = vmatmul.mubr.f32.gmra.mxu0 %v4220
        %v4291 = vpop.f32.mrf.mxu0
        %v4292 = vadd.f32 0.0, %v4291
        %v4293 = vpop.f32.mrf.mxu0
        %4294 = vmatprep.mubr.f32.mxu0 0.0
        %4295 = vmatmul.mubr.f32.gmra.mxu0 %v4223
        %v4296 = vpop.f32.mrf.mxu0
        %v4297 = vadd.f32 0.0, %v4296
        %v4298 = vpop.f32.mrf.mxu0
        %4299 = vdwg.mxu0
        %v4300 = vpack.c.bf16 %v4216, %v4211
        %v4301 = vpack.c.bf16 %v4297, %v4292
        %s4302 = scalar_lea.vmem %s705, 8 [#allocation13]
        %v4303 = vld [vmem:[%s4302] sm:$0xf]
        %v4305 = vsel %vm2542, %v4300, 0
        %v4308 = vsel %vm2542, %v4301, 0
        %v4311 = vsel %vm3567, %v4303, 0
        %4313 = vmatprep.subr.bf16.mxu0 0
        %4314 = vmatpush1.bf16.msra.mxu0 0
        %4315 = vmatprep.subr.bf16.mxu0 0
        %4316 = vmatpush1.bf16.msra.mxu0 0
        %4317 = vmatprep.subr.bf16.mxu0 0
        %4318 = vmatpush1.bf16.msra.mxu0 0
        %4319 = vmatprep.subr.bf16.mxu0 0
        %4320 = vmatpush1.bf16.msra.mxu0 0
        %4321 = vmatprep.subr.bf16.mxu0 0
        %4322 = vmatpush1.bf16.msra.mxu0 0
        %4323 = vmatprep.subr.bf16.mxu0 0
        %4324 = vmatpush1.bf16.msra.mxu0 0
        %4325 = vmatprep.subr.bf16.mxu0 0
        %4326 = vmatpush1.bf16.msra.mxu0 0
        %4327 = vmatprep.subr.bf16.mxu0 0
        %4328 = vmatpush1.bf16.msra.mxu0 %v4311
        %4329 = vmatprep.subr.bf16.mxu0 0
        %4330 = vmatpush2.bf16.msra.mxu0 0
        %4331 = vmatprep.subr.bf16.mxu0 0
        %4332 = vmatpush2.bf16.msra.mxu0 0
        %4333 = vmatprep.subr.bf16.mxu0 0
        %4334 = vmatpush2.bf16.msra.mxu0 0
        %4335 = vmatprep.subr.bf16.mxu0 0
        %4336 = vmatpush2.bf16.msra.mxu0 0
        %4337 = vmatprep.subr.bf16.mxu0 0
        %4338 = vmatpush2.bf16.msra.mxu0 0
        %4339 = vmatprep.subr.bf16.mxu0 0
        %4340 = vmatpush2.bf16.msra.mxu0 0
        %4341 = vmatprep.subr.bf16.mxu0 0
        %4342 = vmatpush2.bf16.msra.mxu0 0
        %4343 = vmatprep.subr.bf16.mxu0 0
        %4344 = vmatpush2.bf16.msra.mxu0 0
        %4345 = vmatprep.mubr.bf16.mxu0 0
        %4346 = vmatmul.mubr.bf16.gmra.mxu0 %v4305
        %v4347 = vpop.f32.mrf.mxu0
        %v4348 = vadd.f32 0.0, %v4347
        %v4349 = vpop.f32.mrf.mxu0
        %v4350 = vpop.f32.mrf.mxu0
        %v4351 = vadd.f32 0.0, %v4350
        %v4352 = vpop.f32.mrf.mxu0
        %4353 = vmatprep.mubr.bf16.mxu0 0
        %4354 = vmatmul.mubr.bf16.gmra.mxu0 %v4308
        %v4355 = vpop.f32.mrf.mxu0
        %v4356 = vadd.f32 0.0, %v4355
        %v4357 = vpop.f32.mrf.mxu0
        %v4358 = vpop.f32.mrf.mxu0
        %v4359 = vadd.f32 0.0, %v4358
        %v4360 = vpop.f32.mrf.mxu0
        %4361 = vdwg.mxu0
        %v4362 = vadd.f32 %v3664, %v4348
        %v4363 = vadd.f32 %v3667, %v4351
        %v4364 = vadd.f32 %v3672, %v4356
        %v4365 = vadd.f32 %v3675, %v4359
        %s4366 = scalar_lea.vmem %s678, 72 [#allocation10]
        %v4367 = vld [vmem:[%s4366] sm:$0xf]
        %v4368 = vld [vmem:[%s4366 + $0x4] sm:$0xf]
        %v4369 = vld [vmem:[%s4366 + $0x8] sm:$0xf]
        %v4370 = vld [vmem:[%s4366 + $0xc] sm:$0xf]
        %v4371 = vld [vmem:[%s4366 + $0x10] sm:$0xf]
        %v4372 = vld [vmem:[%s4366 + $0x14] sm:$0xf]
        %v4373 = vlaneseq
        %v4374 = vshrl.u32 %v4373, 7
        %v4375 = vsub.s32 3, %v4374
        %v4376 = vrot.slane %v2297, %v4375
        %v4383 = vunpack.c.l.b16 %v4367
        %v4384 = vunpack.c.l.b16 %v4368
        %v4385 = vunpack.c.l.b16 %v4369
        %v4386 = vunpack.c.l.b16 %v4370
        %v4387 = vunpack.c.l.b16 %v4371
        %v4388 = vunpack.c.l.b16 %v4372
        %v4389 = vpack.c.b16 %v4384, %v4383
        %v4390 = vpack.c.b16 %v4386, %v4385
        %v4391 = vpack.c.b16 %v4388, %v4387
        %4395 = vmatprep.subr.bf16.mxu0 0
        %4396 = vmatpush1.bf16.msra.mxu0 0
        %4397 = vmatprep.subr.bf16.mxu0 0
        %4398 = vmatpush1.bf16.msra.mxu0 0
        %4399 = vmatprep.subr.bf16.mxu0 0
        %4400 = vmatpush1.bf16.msra.mxu0 0
        %4401 = vmatprep.subr.bf16.mxu0 0
        %4402 = vmatpush1.bf16.msra.mxu0 0
        %4403 = vmatprep.subr.bf16.mxu0 0
        %4404 = vmatpush1.bf16.msra.mxu0 0
        %4405 = vmatprep.subr.bf16.mxu0 0
        %4406 = vmatpush1.bf16.msra.mxu0 %v4391
        %4407 = vmatprep.subr.bf16.mxu0 0
        %4408 = vmatpush1.bf16.msra.mxu0 %v4390
        %4409 = vmatprep.subr.bf16.mxu0 0
        %4410 = vmatpush1.bf16.msra.mxu0 %v4389
        %4411 = vmatprep.subr.bf16.mxu0 0
        %4412 = vmatpush2.bf16.msra.mxu0 0
        %4413 = vmatprep.subr.bf16.mxu0 0
        %4414 = vmatpush2.bf16.msra.mxu0 0
        %4415 = vmatprep.subr.bf16.mxu0 0
        %4416 = vmatpush2.bf16.msra.mxu0 0
        %4417 = vmatprep.subr.bf16.mxu0 0
        %4418 = vmatpush2.bf16.msra.mxu0 0
        %4419 = vmatprep.subr.bf16.mxu0 0
        %4420 = vmatpush2.bf16.msra.mxu0 0
        %4421 = vmatprep.subr.bf16.mxu0 0
        %4422 = vmatpush2.bf16.msra.mxu0 0
        %4423 = vmatprep.subr.bf16.mxu0 0
        %4424 = vmatpush2.bf16.msra.mxu0 0
        %4425 = vmatprep.subr.bf16.mxu0 0
        %4426 = vmatpush2.bf16.msra.mxu0 0
        %4427 = vmatprep.mubr.bf16.mxu0 0
        %4428 = vmatmul.mubr.bf16.gmra.mxu0 %v2334
        %v4429 = vpop.f32.mrf.mxu0
        %v4430 = vadd.f32 %v4376, %v4429
        %v4431 = vpop.f32.mrf.mxu0
        %v4432 = vpop.f32.mrf.mxu0
        %v4433 = vadd.f32 %v4376, %v4432
        %v4434 = vpop.f32.mrf.mxu0
        %4435 = vmatprep.mubr.bf16.mxu0 0
        %4436 = vmatmul.mubr.bf16.gmra.mxu0 %v2337
        %v4437 = vpop.f32.mrf.mxu0
        %v4438 = vadd.f32 %v4376, %v4437
        %v4439 = vpop.f32.mrf.mxu0
        %v4440 = vpop.f32.mrf.mxu0
        %v4441 = vadd.f32 %v4376, %v4440
        %v4442 = vpop.f32.mrf.mxu0
        %4443 = vdwg.mxu0
        %s4444 = scalar_lea.vmem %s687, 72 [#allocation11]
        %v4445 = vld [vmem:[%s4444] sm:$0xf]
        %v4446 = vld [vmem:[%s4444 + $0x4] sm:$0xf]
        %v4447 = vld [vmem:[%s4444 + $0x8] sm:$0xf]
        %v4448 = vld [vmem:[%s4444 + $0xc] sm:$0xf]
        %v4449 = vld [vmem:[%s4444 + $0x10] sm:$0xf]
        %v4450 = vld [vmem:[%s4444 + $0x14] sm:$0xf]
        %v4451 = vlaneseq
        %v4452 = vshrl.u32 %v4451, 7
        %v4453 = vsub.s32 1, %v4452
        %v4454 = vrot.slane %v2298, %v4453
        %v4461 = vunpack.c.l.b16 %v4445
        %v4462 = vunpack.c.l.b16 %v4446
        %v4463 = vunpack.c.l.b16 %v4447
        %v4464 = vunpack.c.l.b16 %v4448
        %v4465 = vunpack.c.l.b16 %v4449
        %v4466 = vunpack.c.l.b16 %v4450
        %v4467 = vpack.c.b16 %v4462, %v4461
        %v4468 = vpack.c.b16 %v4464, %v4463
        %v4469 = vpack.c.b16 %v4466, %v4465
        %4473 = vmatprep.subr.bf16.mxu0 0
        %4474 = vmatpush1.bf16.msra.mxu0 0
        %4475 = vmatprep.subr.bf16.mxu0 0
        %4476 = vmatpush1.bf16.msra.mxu0 0
        %4477 = vmatprep.subr.bf16.mxu0 0
        %4478 = vmatpush1.bf16.msra.mxu0 0
        %4479 = vmatprep.subr.bf16.mxu0 0
        %4480 = vmatpush1.bf16.msra.mxu0 0
        %4481 = vmatprep.subr.bf16.mxu0 0
        %4482 = vmatpush1.bf16.msra.mxu0 0
        %4483 = vmatprep.subr.bf16.mxu0 0
        %4484 = vmatpush1.bf16.msra.mxu0 %v4469
        %4485 = vmatprep.subr.bf16.mxu0 0
        %4486 = vmatpush1.bf16.msra.mxu0 %v4468
        %4487 = vmatprep.subr.bf16.mxu0 0
        %4488 = vmatpush1.bf16.msra.mxu0 %v4467
        %4489 = vmatprep.subr.bf16.mxu0 0
        %4490 = vmatpush2.bf16.msra.mxu0 0
        %4491 = vmatprep.subr.bf16.mxu0 0
        %4492 = vmatpush2.bf16.msra.mxu0 0
        %4493 = vmatprep.subr.bf16.mxu0 0
        %4494 = vmatpush2.bf16.msra.mxu0 0
        %4495 = vmatprep.subr.bf16.mxu0 0
        %4496 = vmatpush2.bf16.msra.mxu0 0
        %4497 = vmatprep.subr.bf16.mxu0 0
        %4498 = vmatpush2.bf16.msra.mxu0 0
        %4499 = vmatprep.subr.bf16.mxu0 0
        %4500 = vmatpush2.bf16.msra.mxu0 0
        %4501 = vmatprep.subr.bf16.mxu0 0
        %4502 = vmatpush2.bf16.msra.mxu0 0
        %4503 = vmatprep.subr.bf16.mxu0 0
        %4504 = vmatpush2.bf16.msra.mxu0 0
        %4505 = vmatprep.mubr.bf16.mxu0 0
        %4506 = vmatmul.mubr.bf16.gmra.mxu0 %v2334
        %v4507 = vpop.f32.mrf.mxu0
        %v4508 = vadd.f32 %v4454, %v4507
        %v4509 = vpop.f32.mrf.mxu0
        %v4510 = vpop.f32.mrf.mxu0
        %v4511 = vadd.f32 %v4454, %v4510
        %v4512 = vpop.f32.mrf.mxu0
        %4513 = vmatprep.mubr.bf16.mxu0 0
        %4514 = vmatmul.mubr.bf16.gmra.mxu0 %v2337
        %v4515 = vpop.f32.mrf.mxu0
        %v4516 = vadd.f32 %v4454, %v4515
        %v4517 = vpop.f32.mrf.mxu0
        %v4518 = vpop.f32.mrf.mxu0
        %v4519 = vadd.f32 %v4454, %v4518
        %v4520 = vpop.f32.mrf.mxu0
        %4521 = vdwg.mxu0
        %s4522 = scalar_lea.vmem %s696, 72 [#allocation12]
        %v4523 = vld [vmem:[%s4522] sm:$0xf]
        %v4524 = vld [vmem:[%s4522 + $0x4] sm:$0xf]
        %v4525 = vld [vmem:[%s4522 + $0x8] sm:$0xf]
        %v4526 = vld [vmem:[%s4522 + $0xc] sm:$0xf]
        %v4527 = vld [vmem:[%s4522 + $0x10] sm:$0xf]
        %v4528 = vld [vmem:[%s4522 + $0x14] sm:$0xf]
        %v4529 = vlaneseq
        %v4530 = vshrl.u32 %v4529, 7
        %v4531 = vsub.s32 7, %v4530
        %v4532 = vrot.slane %v2298, %v4531
        %v4539 = vunpack.c.l.b16 %v4523
        %v4540 = vunpack.c.l.b16 %v4524
        %v4541 = vunpack.c.l.b16 %v4525
        %v4542 = vunpack.c.l.b16 %v4526
        %v4543 = vunpack.c.l.b16 %v4527
        %v4544 = vunpack.c.l.b16 %v4528
        %v4545 = vpack.c.b16 %v4540, %v4539
        %v4546 = vpack.c.b16 %v4542, %v4541
        %v4547 = vpack.c.b16 %v4544, %v4543
        %4551 = vmatprep.subr.bf16.mxu0 0
        %4552 = vmatpush1.bf16.msra.mxu0 0
        %4553 = vmatprep.subr.bf16.mxu0 0
        %4554 = vmatpush1.bf16.msra.mxu0 0
        %4555 = vmatprep.subr.bf16.mxu0 0
        %4556 = vmatpush1.bf16.msra.mxu0 0
        %4557 = vmatprep.subr.bf16.mxu0 0
        %4558 = vmatpush1.bf16.msra.mxu0 0
        %4559 = vmatprep.subr.bf16.mxu0 0
        %4560 = vmatpush1.bf16.msra.mxu0 0
        %4561 = vmatprep.subr.bf16.mxu0 0
        %4562 = vmatpush1.bf16.msra.mxu0 %v4547
        %4563 = vmatprep.subr.bf16.mxu0 0
        %4564 = vmatpush1.bf16.msra.mxu0 %v4546
        %4565 = vmatprep.subr.bf16.mxu0 0
        %4566 = vmatpush1.bf16.msra.mxu0 %v4545
        %4567 = vmatprep.subr.bf16.mxu0 0
        %4568 = vmatpush2.bf16.msra.mxu0 0
        %4569 = vmatprep.subr.bf16.mxu0 0
        %4570 = vmatpush2.bf16.msra.mxu0 0
        %4571 = vmatprep.subr.bf16.mxu0 0
        %4572 = vmatpush2.bf16.msra.mxu0 0
        %4573 = vmatprep.subr.bf16.mxu0 0
        %4574 = vmatpush2.bf16.msra.mxu0 0
        %4575 = vmatprep.subr.bf16.mxu0 0
        %4576 = vmatpush2.bf16.msra.mxu0 0
        %4577 = vmatprep.subr.bf16.mxu0 0
        %4578 = vmatpush2.bf16.msra.mxu0 0
        %4579 = vmatprep.subr.bf16.mxu0 0
        %4580 = vmatpush2.bf16.msra.mxu0 0
        %4581 = vmatprep.subr.bf16.mxu0 0
        %4582 = vmatpush2.bf16.msra.mxu0 0
        %4583 = vmatprep.mubr.bf16.mxu0 0
        %4584 = vmatmul.mubr.bf16.gmra.mxu0 %v2334
        %v4585 = vpop.f32.mrf.mxu0
        %v4586 = vadd.f32 %v4532, %v4585
        %v4587 = vpop.f32.mrf.mxu0
        %v4588 = vpop.f32.mrf.mxu0
        %v4589 = vadd.f32 %v4532, %v4588
        %v4590 = vpop.f32.mrf.mxu0
        %4591 = vmatprep.mubr.bf16.mxu0 0
        %4592 = vmatmul.mubr.bf16.gmra.mxu0 %v2337
        %v4593 = vpop.f32.mrf.mxu0
        %v4594 = vadd.f32 %v4532, %v4593
        %v4595 = vpop.f32.mrf.mxu0
        %v4596 = vpop.f32.mrf.mxu0
        %v4597 = vadd.f32 %v4532, %v4596
        %v4598 = vpop.f32.mrf.mxu0
        %4599 = vdwg.mxu0
        %v4601 = vsel %vm2542, %v4430, 0
        %v4604 = vsel %vm2542, %v4433, 0
        %v4607 = vsel %vm2542, %v4508, 0
        %v4610 = vsel %vm2542, %v4511, 0
        %4612 = vmatprep.subr.mxu0 0.0
        %4613 = vmatpush1.xpose.msra.mxu0 0.0
        %4614 = vmatprep.subr.mxu0 0.0
        %4615 = vmatpush1.xpose.msra.mxu0 0.0
        %4616 = vmatprep.subr.mxu0 0.0
        %4617 = vmatpush1.xpose.msra.mxu0 0.0
        %4618 = vmatprep.subr.mxu0 0.0
        %4619 = vmatpush1.xpose.msra.mxu0 0.0
        %4620 = vmatprep.subr.mxu0 0.0
        %4621 = vmatpush1.xpose.msra.mxu0 0.0
        %4622 = vmatprep.subr.mxu0 0.0
        %4623 = vmatpush1.xpose.msra.mxu0 0.0
        %4624 = vmatprep.subr.mxu0 0.0
        %4625 = vmatpush1.xpose.msra.mxu0 0.0
        %4626 = vmatprep.subr.mxu0 0.0
        %4627 = vmatpush1.xpose.msra.mxu0 0.0
        %4628 = vmatprep.subr.mxu0 0.0
        %4629 = vmatpush1.xpose.msra.mxu0 0.0
        %4630 = vmatprep.subr.mxu0 0.0
        %4631 = vmatpush1.xpose.msra.mxu0 0.0
        %4632 = vmatprep.subr.mxu0 0.0
        %4633 = vmatpush1.xpose.msra.mxu0 0.0
        %4634 = vmatprep.subr.mxu0 0.0
        %4635 = vmatpush1.xpose.msra.mxu0 0.0
        %4636 = vmatprep.subr.mxu0 0.0
        %4637 = vmatpush1.xpose.msra.mxu0 0.0
        %4638 = vmatprep.subr.mxu0 0.0
        %4639 = vmatpush1.xpose.msra.mxu0 0.0
        %4640 = vmatprep.subr.mxu0 0.0
        %4641 = vmatpush1.xpose.msra.mxu0 %v4610
        %4642 = vmatprep.subr.mxu0 0.0
        %4643 = vmatpush1.xpose.msra.mxu0 %v4607
        %4644 = vmatprep.subr.mxu0 0.0
        %4645 = vmatpush2.xpose.msra.mxu0 0.0
        %4646 = vmatprep.subr.mxu0 0.0
        %4647 = vmatpush2.xpose.msra.mxu0 0.0
        %4648 = vmatprep.subr.mxu0 0.0
        %4649 = vmatpush2.xpose.msra.mxu0 0.0
        %4650 = vmatprep.subr.mxu0 0.0
        %4651 = vmatpush2.xpose.msra.mxu0 0.0
        %4652 = vmatprep.subr.mxu0 0.0
        %4653 = vmatpush2.xpose.msra.mxu0 0.0
        %4654 = vmatprep.subr.mxu0 0.0
        %4655 = vmatpush2.xpose.msra.mxu0 0.0
        %4656 = vmatprep.subr.mxu0 0.0
        %4657 = vmatpush2.xpose.msra.mxu0 0.0
        %4658 = vmatprep.subr.mxu0 0.0
        %4659 = vmatpush2.xpose.msra.mxu0 0.0
        %4660 = vmatprep.subr.mxu0 0.0
        %4661 = vmatpush2.xpose.msra.mxu0 0.0
        %4662 = vmatprep.subr.mxu0 0.0
        %4663 = vmatpush2.xpose.msra.mxu0 0.0
        %4664 = vmatprep.subr.mxu0 0.0
        %4665 = vmatpush2.xpose.msra.mxu0 0.0
        %4666 = vmatprep.subr.mxu0 0.0
        %4667 = vmatpush2.xpose.msra.mxu0 0.0
        %4668 = vmatprep.subr.mxu0 0.0
        %4669 = vmatpush2.xpose.msra.mxu0 0.0
        %4670 = vmatprep.subr.mxu0 0.0
        %4671 = vmatpush2.xpose.msra.mxu0 0.0
        %4672 = vmatprep.subr.mxu0 0.0
        %4673 = vmatpush2.xpose.msra.mxu0 0.0
        %4674 = vmatprep.subr.mxu0 0.0
        %4675 = vmatpush2.xpose.msra.mxu0 0.0
        %4676 = vmatprep.mubr.f32.mxu0 0.0
        %4677 = vmatmul.mubr.f32.gmra.mxu0 %v4601
        %v4678 = vpop.f32.mrf.mxu0
        %v4679 = vadd.f32 0.0, %v4678
        %v4680 = vpop.f32.mrf.mxu0
        %4681 = vmatprep.mubr.f32.mxu0 0.0
        %4682 = vmatmul.mubr.f32.gmra.mxu0 %v4604
        %v4683 = vpop.f32.mrf.mxu0
        %v4684 = vadd.f32 0.0, %v4683
        %v4685 = vpop.f32.mrf.mxu0
        %4686 = vdwg.mxu0
        %v4688 = vsel %vm2542, %v4438, 0
        %v4691 = vsel %vm2542, %v4441, 0
        %v4694 = vsel %vm2542, %v4516, 0
        %v4697 = vsel %vm2542, %v4519, 0
        %4699 = vmatprep.subr.mxu0 0.0
        %4700 = vmatpush1.xpose.msra.mxu0 0.0
        %4701 = vmatprep.subr.mxu0 0.0
        %4702 = vmatpush1.xpose.msra.mxu0 0.0
        %4703 = vmatprep.subr.mxu0 0.0
        %4704 = vmatpush1.xpose.msra.mxu0 0.0
        %4705 = vmatprep.subr.mxu0 0.0
        %4706 = vmatpush1.xpose.msra.mxu0 0.0
        %4707 = vmatprep.subr.mxu0 0.0
        %4708 = vmatpush1.xpose.msra.mxu0 0.0
        %4709 = vmatprep.subr.mxu0 0.0
        %4710 = vmatpush1.xpose.msra.mxu0 0.0
        %4711 = vmatprep.subr.mxu0 0.0
        %4712 = vmatpush1.xpose.msra.mxu0 0.0
        %4713 = vmatprep.subr.mxu0 0.0
        %4714 = vmatpush1.xpose.msra.mxu0 0.0
        %4715 = vmatprep.subr.mxu0 0.0
        %4716 = vmatpush1.xpose.msra.mxu0 0.0
        %4717 = vmatprep.subr.mxu0 0.0
        %4718 = vmatpush1.xpose.msra.mxu0 0.0
        %4719 = vmatprep.subr.mxu0 0.0
        %4720 = vmatpush1.xpose.msra.mxu0 0.0
        %4721 = vmatprep.subr.mxu0 0.0
        %4722 = vmatpush1.xpose.msra.mxu0 0.0
        %4723 = vmatprep.subr.mxu0 0.0
        %4724 = vmatpush1.xpose.msra.mxu0 0.0
        %4725 = vmatprep.subr.mxu0 0.0
        %4726 = vmatpush1.xpose.msra.mxu0 0.0
        %4727 = vmatprep.subr.mxu0 0.0
        %4728 = vmatpush1.xpose.msra.mxu0 %v4697
        %4729 = vmatprep.subr.mxu0 0.0
        %4730 = vmatpush1.xpose.msra.mxu0 %v4694
        %4731 = vmatprep.subr.mxu0 0.0
        %4732 = vmatpush2.xpose.msra.mxu0 0.0
        %4733 = vmatprep.subr.mxu0 0.0
        %4734 = vmatpush2.xpose.msra.mxu0 0.0
        %4735 = vmatprep.subr.mxu0 0.0
        %4736 = vmatpush2.xpose.msra.mxu0 0.0
        %4737 = vmatprep.subr.mxu0 0.0
        %4738 = vmatpush2.xpose.msra.mxu0 0.0
        %4739 = vmatprep.subr.mxu0 0.0
        %4740 = vmatpush2.xpose.msra.mxu0 0.0
        %4741 = vmatprep.subr.mxu0 0.0
        %4742 = vmatpush2.xpose.msra.mxu0 0.0
        %4743 = vmatprep.subr.mxu0 0.0
        %4744 = vmatpush2.xpose.msra.mxu0 0.0
        %4745 = vmatprep.subr.mxu0 0.0
        %4746 = vmatpush2.xpose.msra.mxu0 0.0
        %4747 = vmatprep.subr.mxu0 0.0
        %4748 = vmatpush2.xpose.msra.mxu0 0.0
        %4749 = vmatprep.subr.mxu0 0.0
        %4750 = vmatpush2.xpose.msra.mxu0 0.0
        %4751 = vmatprep.subr.mxu0 0.0
        %4752 = vmatpush2.xpose.msra.mxu0 0.0
        %4753 = vmatprep.subr.mxu0 0.0
        %4754 = vmatpush2.xpose.msra.mxu0 0.0
        %4755 = vmatprep.subr.mxu0 0.0
        %4756 = vmatpush2.xpose.msra.mxu0 0.0
        %4757 = vmatprep.subr.mxu0 0.0
        %4758 = vmatpush2.xpose.msra.mxu0 0.0
        %4759 = vmatprep.subr.mxu0 0.0
        %4760 = vmatpush2.xpose.msra.mxu0 0.0
        %4761 = vmatprep.subr.mxu0 0.0
        %4762 = vmatpush2.xpose.msra.mxu0 0.0
        %4763 = vmatprep.mubr.f32.mxu0 0.0
        %4764 = vmatmul.mubr.f32.gmra.mxu0 %v4688
        %v4765 = vpop.f32.mrf.mxu0
        %v4766 = vadd.f32 0.0, %v4765
        %v4767 = vpop.f32.mrf.mxu0
        %4768 = vmatprep.mubr.f32.mxu0 0.0
        %4769 = vmatmul.mubr.f32.gmra.mxu0 %v4691
        %v4770 = vpop.f32.mrf.mxu0
        %v4771 = vadd.f32 0.0, %v4770
        %v4772 = vpop.f32.mrf.mxu0
        %4773 = vdwg.mxu0
        %v4774 = vmul.f32 %v4679, 0.35355338
        %v4775 = vmul.f32 %v4684, 0.35355338
        %v4776 = vmul.f32 %v4766, 0.35355338
        %v4777 = vmul.f32 %v4771, 0.35355338
        %v4778 = vadd.f32 %v4774, %v2303
        %v4779 = vadd.f32 %v4775, %v2303
        %v4780 = vadd.f32 %v4776, %v2303
        %v4781 = vadd.f32 %v4777, %v2303
        %v4782 = vsel %vm2725, %v4778, -inf
        %4783 = vmax.xlane.f32.xlu0 %v4782
        %v4784 = vpop.xlane.xlu0 %4783
        %v4785 = vsel %vm2725, %v4779, -inf
        %4786 = vmax.xlane.f32.xlu0 %v4785
        %v4787 = vpop.xlane.xlu0 %4786
        %v4788 = vsel %vm2725, %v4780, -inf
        %4789 = vmax.xlane.f32.xlu0 %v4788
        %v4790 = vpop.xlane.xlu0 %4789
        %v4791 = vsel %vm2725, %v4781, -inf
        %4792 = vmax.xlane.f32.xlu0 %v4791
        %v4793 = vpop.xlane.xlu0 %4792
        %v4794 = vsub.f32 %v4778, %v4784
        %v4795 = vsub.f32 %v4779, %v4787
        %v4796 = vsub.f32 %v4780, %v4790
        %v4797 = vsub.f32 %v4781, %v4793
        %v4798 = vmul.f32 %v4794, 1.442695
        %v4799 = vpow.pop %v4798
        %v4800 = vmul.f32 %v4795, 1.442695
        %v4801 = vpow.pop %v4800
        %v4802 = vmul.f32 %v4796, 1.442695
        %v4803 = vpow.pop %v4802
        %v4804 = vmul.f32 %v4797, 1.442695
        %v4805 = vpow.pop %v4804
        %v4806 = vsel %vm2725, %v4799, 0.0
        %4807 = vadd.xlane.f32.xlu0 %v4806
        %v4808 = vpop.xlane.xlu0 %4807
        %v4809 = vsel %vm2725, %v4801, 0.0
        %4810 = vadd.xlane.f32.xlu0 %v4809
        %v4811 = vpop.xlane.xlu0 %4810
        %v4812 = vsel %vm2725, %v4803, 0.0
        %4813 = vadd.xlane.f32.xlu0 %v4812
        %v4814 = vpop.xlane.xlu0 %4813
        %v4815 = vsel %vm2725, %v4805, 0.0
        %4816 = vadd.xlane.f32.xlu0 %v4815
        %v4817 = vpop.xlane.xlu0 %4816
        %v4818 = vrcp.pop %v4808
        %v4819 = vrcp.pop %v4811
        %v4820 = vrcp.pop %v4814
        %v4821 = vrcp.pop %v4817
        %v4822 = vmul.f32 %v4799, %v4818
        %v4823 = vmul.f32 %v4801, %v4819
        %v4824 = vmul.f32 %v4803, %v4820
        %v4825 = vmul.f32 %v4805, %v4821
        %v4827 = vsel %vm2725, %v4822, 0
        %v4830 = vsel %vm2725, %v4823, 0
        %4832 = vmatprep.subr.mxu0 0.0
        %4833 = vmatpush1.msra.mxu0 0.0
        %4834 = vmatprep.subr.mxu0 0.0
        %4835 = vmatpush1.msra.mxu0 0.0
        %4836 = vmatprep.subr.mxu0 0.0
        %4837 = vmatpush1.msra.mxu0 0.0
        %4838 = vmatprep.subr.mxu0 0.0
        %4839 = vmatpush1.msra.mxu0 0.0
        %4840 = vmatprep.subr.mxu0 0.0
        %4841 = vmatpush1.msra.mxu0 0.0
        %4842 = vmatprep.subr.mxu0 0.0
        %4843 = vmatpush1.msra.mxu0 0.0
        %4844 = vmatprep.subr.mxu0 0.0
        %4845 = vmatpush1.msra.mxu0 0.0
        %4846 = vmatprep.subr.mxu0 0.0
        %4847 = vmatpush1.msra.mxu0 0.0
        %4848 = vmatprep.subr.mxu0 0.0
        %4849 = vmatpush1.msra.mxu0 0.0
        %4850 = vmatprep.subr.mxu0 0.0
        %4851 = vmatpush1.msra.mxu0 0.0
        %4852 = vmatprep.subr.mxu0 0.0
        %4853 = vmatpush1.msra.mxu0 0.0
        %4854 = vmatprep.subr.mxu0 0.0
        %4855 = vmatpush1.msra.mxu0 0.0
        %4856 = vmatprep.subr.mxu0 0.0
        %4857 = vmatpush1.msra.mxu0 0.0
        %4858 = vmatprep.subr.mxu0 0.0
        %4859 = vmatpush1.msra.mxu0 0.0
        %4860 = vmatprep.subr.mxu0 0.0
        %4861 = vmatpush1.msra.mxu0 %v4589
        %4862 = vmatprep.subr.mxu0 0.0
        %4863 = vmatpush1.msra.mxu0 %v4586
        %4864 = vmatprep.subr.mxu0 0.0
        %4865 = vmatpush2.msra.mxu0 0.0
        %4866 = vmatprep.subr.mxu0 0.0
        %4867 = vmatpush2.msra.mxu0 0.0
        %4868 = vmatprep.subr.mxu0 0.0
        %4869 = vmatpush2.msra.mxu0 0.0
        %4870 = vmatprep.subr.mxu0 0.0
        %4871 = vmatpush2.msra.mxu0 0.0
        %4872 = vmatprep.subr.mxu0 0.0
        %4873 = vmatpush2.msra.mxu0 0.0
        %4874 = vmatprep.subr.mxu0 0.0
        %4875 = vmatpush2.msra.mxu0 0.0
        %4876 = vmatprep.subr.mxu0 0.0
        %4877 = vmatpush2.msra.mxu0 0.0
        %4878 = vmatprep.subr.mxu0 0.0
        %4879 = vmatpush2.msra.mxu0 0.0
        %4880 = vmatprep.subr.mxu0 0.0
        %4881 = vmatpush2.msra.mxu0 0.0
        %4882 = vmatprep.subr.mxu0 0.0
        %4883 = vmatpush2.msra.mxu0 0.0
        %4884 = vmatprep.subr.mxu0 0.0
        %4885 = vmatpush2.msra.mxu0 0.0
        %4886 = vmatprep.subr.mxu0 0.0
        %4887 = vmatpush2.msra.mxu0 0.0
        %4888 = vmatprep.subr.mxu0 0.0
        %4889 = vmatpush2.msra.mxu0 0.0
        %4890 = vmatprep.subr.mxu0 0.0
        %4891 = vmatpush2.msra.mxu0 0.0
        %4892 = vmatprep.subr.mxu0 0.0
        %4893 = vmatpush2.msra.mxu0 0.0
        %4894 = vmatprep.subr.mxu0 0.0
        %4895 = vmatpush2.msra.mxu0 0.0
        %4896 = vmatprep.mubr.f32.mxu0 0.0
        %4897 = vmatmul.mubr.f32.gmra.mxu0 %v4827
        %v4898 = vpop.f32.mrf.mxu0
        %v4899 = vadd.f32 0.0, %v4898
        %v4900 = vpop.f32.mrf.mxu0
        %4901 = vmatprep.mubr.f32.mxu0 0.0
        %4902 = vmatmul.mubr.f32.gmra.mxu0 %v4830
        %v4903 = vpop.f32.mrf.mxu0
        %v4904 = vadd.f32 0.0, %v4903
        %v4905 = vpop.f32.mrf.mxu0
        %4906 = vdwg.mxu0
        %v4908 = vsel %vm2725, %v4824, 0
        %v4911 = vsel %vm2725, %v4825, 0
        %4913 = vmatprep.subr.mxu0 0.0
        %4914 = vmatpush1.msra.mxu0 0.0
        %4915 = vmatprep.subr.mxu0 0.0
        %4916 = vmatpush1.msra.mxu0 0.0
        %4917 = vmatprep.subr.mxu0 0.0
        %4918 = vmatpush1.msra.mxu0 0.0
        %4919 = vmatprep.subr.mxu0 0.0
        %4920 = vmatpush1.msra.mxu0 0.0
        %4921 = vmatprep.subr.mxu0 0.0
        %4922 = vmatpush1.msra.mxu0 0.0
        %4923 = vmatprep.subr.mxu0 0.0
        %4924 = vmatpush1.msra.mxu0 0.0
        %4925 = vmatprep.subr.mxu0 0.0
        %4926 = vmatpush1.msra.mxu0 0.0
        %4927 = vmatprep.subr.mxu0 0.0
        %4928 = vmatpush1.msra.mxu0 0.0
        %4929 = vmatprep.subr.mxu0 0.0
        %4930 = vmatpush1.msra.mxu0 0.0
        %4931 = vmatprep.subr.mxu0 0.0
        %4932 = vmatpush1.msra.mxu0 0.0
        %4933 = vmatprep.subr.mxu0 0.0
        %4934 = vmatpush1.msra.mxu0 0.0
        %4935 = vmatprep.subr.mxu0 0.0
        %4936 = vmatpush1.msra.mxu0 0.0
        %4937 = vmatprep.subr.mxu0 0.0
        %4938 = vmatpush1.msra.mxu0 0.0
        %4939 = vmatprep.subr.mxu0 0.0
        %4940 = vmatpush1.msra.mxu0 0.0
        %4941 = vmatprep.subr.mxu0 0.0
        %4942 = vmatpush1.msra.mxu0 %v4597
        %4943 = vmatprep.subr.mxu0 0.0
        %4944 = vmatpush1.msra.mxu0 %v4594
        %4945 = vmatprep.subr.mxu0 0.0
        %4946 = vmatpush2.msra.mxu0 0.0
        %4947 = vmatprep.subr.mxu0 0.0
        %4948 = vmatpush2.msra.mxu0 0.0
        %4949 = vmatprep.subr.mxu0 0.0
        %4950 = vmatpush2.msra.mxu0 0.0
        %4951 = vmatprep.subr.mxu0 0.0
        %4952 = vmatpush2.msra.mxu0 0.0
        %4953 = vmatprep.subr.mxu0 0.0
        %4954 = vmatpush2.msra.mxu0 0.0
        %4955 = vmatprep.subr.mxu0 0.0
        %4956 = vmatpush2.msra.mxu0 0.0
        %4957 = vmatprep.subr.mxu0 0.0
        %4958 = vmatpush2.msra.mxu0 0.0
        %4959 = vmatprep.subr.mxu0 0.0
        %4960 = vmatpush2.msra.mxu0 0.0
        %4961 = vmatprep.subr.mxu0 0.0
        %4962 = vmatpush2.msra.mxu0 0.0
        %4963 = vmatprep.subr.mxu0 0.0
        %4964 = vmatpush2.msra.mxu0 0.0
        %4965 = vmatprep.subr.mxu0 0.0
        %4966 = vmatpush2.msra.mxu0 0.0
        %4967 = vmatprep.subr.mxu0 0.0
        %4968 = vmatpush2.msra.mxu0 0.0
        %4969 = vmatprep.subr.mxu0 0.0
        %4970 = vmatpush2.msra.mxu0 0.0
        %4971 = vmatprep.subr.mxu0 0.0
        %4972 = vmatpush2.msra.mxu0 0.0
        %4973 = vmatprep.subr.mxu0 0.0
        %4974 = vmatpush2.msra.mxu0 0.0
        %4975 = vmatprep.subr.mxu0 0.0
        %4976 = vmatpush2.msra.mxu0 0.0
        %4977 = vmatprep.mubr.f32.mxu0 0.0
        %4978 = vmatmul.mubr.f32.gmra.mxu0 %v4908
        %v4979 = vpop.f32.mrf.mxu0
        %v4980 = vadd.f32 0.0, %v4979
        %v4981 = vpop.f32.mrf.mxu0
        %4982 = vmatprep.mubr.f32.mxu0 0.0
        %4983 = vmatmul.mubr.f32.gmra.mxu0 %v4911
        %v4984 = vpop.f32.mrf.mxu0
        %v4985 = vadd.f32 0.0, %v4984
        %v4986 = vpop.f32.mrf.mxu0
        %4987 = vdwg.mxu0
        %v4988 = vpack.c.bf16 %v4904, %v4899
        %v4989 = vpack.c.bf16 %v4985, %v4980
        %s4990 = scalar_lea.vmem %s705, 12 [#allocation13]
        %v4991 = vld [vmem:[%s4990] sm:$0xf]
        %v4993 = vsel %vm2542, %v4988, 0
        %v4996 = vsel %vm2542, %v4989, 0
        %v4999 = vsel %vm3567, %v4991, 0
        %5001 = vmatprep.subr.bf16.mxu0 0
        %5002 = vmatpush1.bf16.msra.mxu0 0
        %5003 = vmatprep.subr.bf16.mxu0 0
        %5004 = vmatpush1.bf16.msra.mxu0 0
        %5005 = vmatprep.subr.bf16.mxu0 0
        %5006 = vmatpush1.bf16.msra.mxu0 0
        %5007 = vmatprep.subr.bf16.mxu0 0
        %5008 = vmatpush1.bf16.msra.mxu0 0
        %5009 = vmatprep.subr.bf16.mxu0 0
        %5010 = vmatpush1.bf16.msra.mxu0 0
        %5011 = vmatprep.subr.bf16.mxu0 0
        %5012 = vmatpush1.bf16.msra.mxu0 0
        %5013 = vmatprep.subr.bf16.mxu0 0
        %5014 = vmatpush1.bf16.msra.mxu0 0
        %5015 = vmatprep.subr.bf16.mxu0 0
        %5016 = vmatpush1.bf16.msra.mxu0 %v4999
        %5017 = vmatprep.subr.bf16.mxu0 0
        %5018 = vmatpush2.bf16.msra.mxu0 0
        %5019 = vmatprep.subr.bf16.mxu0 0
        %5020 = vmatpush2.bf16.msra.mxu0 0
        %5021 = vmatprep.subr.bf16.mxu0 0
        %5022 = vmatpush2.bf16.msra.mxu0 0
        %5023 = vmatprep.subr.bf16.mxu0 0
        %5024 = vmatpush2.bf16.msra.mxu0 0
        %5025 = vmatprep.subr.bf16.mxu0 0
        %5026 = vmatpush2.bf16.msra.mxu0 0
        %5027 = vmatprep.subr.bf16.mxu0 0
        %5028 = vmatpush2.bf16.msra.mxu0 0
        %5029 = vmatprep.subr.bf16.mxu0 0
        %5030 = vmatpush2.bf16.msra.mxu0 0
        %5031 = vmatprep.subr.bf16.mxu0 0
        %5032 = vmatpush2.bf16.msra.mxu0 0
        %5033 = vmatprep.mubr.bf16.mxu0 0
        %5034 = vmatmul.mubr.bf16.gmra.mxu0 %v4993
        %v5035 = vpop.f32.mrf.mxu0
        %v5036 = vadd.f32 0.0, %v5035
        %v5037 = vpop.f32.mrf.mxu0
        %v5038 = vpop.f32.mrf.mxu0
        %v5039 = vadd.f32 0.0, %v5038
        %v5040 = vpop.f32.mrf.mxu0
        %5041 = vmatprep.mubr.bf16.mxu0 0
        %5042 = vmatmul.mubr.bf16.gmra.mxu0 %v4996
        %v5043 = vpop.f32.mrf.mxu0
        %v5044 = vadd.f32 0.0, %v5043
        %v5045 = vpop.f32.mrf.mxu0
        %v5046 = vpop.f32.mrf.mxu0
        %v5047 = vadd.f32 0.0, %v5046
        %v5048 = vpop.f32.mrf.mxu0
        %5049 = vdwg.mxu0
        %v5050 = vadd.f32 %v4362, %v5036
        %v5051 = vadd.f32 %v4363, %v5039
        %v5052 = vadd.f32 %v4364, %v5044
        %v5053 = vadd.f32 %v4365, %v5047
        %s5054 = scalar_lea.vmem %s678, 96 [#allocation10]
        %v5055 = vld [vmem:[%s5054] sm:$0xf]
        %v5056 = vld [vmem:[%s5054 + $0x4] sm:$0xf]
        %v5057 = vld [vmem:[%s5054 + $0x8] sm:$0xf]
        %v5058 = vld [vmem:[%s5054 + $0xc] sm:$0xf]
        %v5059 = vld [vmem:[%s5054 + $0x10] sm:$0xf]
        %v5060 = vld [vmem:[%s5054 + $0x14] sm:$0xf]
        %v5061 = vlaneseq
        %v5062 = vshrl.u32 %v5061, 7
        %v5063 = vsub.s32 4, %v5062
        %v5064 = vrot.slane %v2297, %v5063
        %v5071 = vunpack.c.l.b16 %v5055
        %v5072 = vunpack.c.l.b16 %v5056
        %v5073 = vunpack.c.l.b16 %v5057
        %v5074 = vunpack.c.l.b16 %v5058
        %v5075 = vunpack.c.l.b16 %v5059
        %v5076 = vunpack.c.l.b16 %v5060
        %v5077 = vpack.c.b16 %v5072, %v5071
        %v5078 = vpack.c.b16 %v5074, %v5073
        %v5079 = vpack.c.b16 %v5076, %v5075
        %5083 = vmatprep.subr.bf16.mxu0 0
        %5084 = vmatpush1.bf16.msra.mxu0 0
        %5085 = vmatprep.subr.bf16.mxu0 0
        %5086 = vmatpush1.bf16.msra.mxu0 0
        %5087 = vmatprep.subr.bf16.mxu0 0
        %5088 = vmatpush1.bf16.msra.mxu0 0
        %5089 = vmatprep.subr.bf16.mxu0 0
        %5090 = vmatpush1.bf16.msra.mxu0 0
        %5091 = vmatprep.subr.bf16.mxu0 0
        %5092 = vmatpush1.bf16.msra.mxu0 0
        %5093 = vmatprep.subr.bf16.mxu0 0
        %5094 = vmatpush1.bf16.msra.mxu0 %v5079
        %5095 = vmatprep.subr.bf16.mxu0 0
        %5096 = vmatpush1.bf16.msra.mxu0 %v5078
        %5097 = vmatprep.subr.bf16.mxu0 0
        %5098 = vmatpush1.bf16.msra.mxu0 %v5077
        %5099 = vmatprep.subr.bf16.mxu0 0
        %5100 = vmatpush2.bf16.msra.mxu0 0
        %5101 = vmatprep.subr.bf16.mxu0 0
        %5102 = vmatpush2.bf16.msra.mxu0 0
        %5103 = vmatprep.subr.bf16.mxu0 0
        %5104 = vmatpush2.bf16.msra.mxu0 0
        %5105 = vmatprep.subr.bf16.mxu0 0
        %5106 = vmatpush2.bf16.msra.mxu0 0
        %5107 = vmatprep.subr.bf16.mxu0 0
        %5108 = vmatpush2.bf16.msra.mxu0 0
        %5109 = vmatprep.subr.bf16.mxu0 0
        %5110 = vmatpush2.bf16.msra.mxu0 0
        %5111 = vmatprep.subr.bf16.mxu0 0
        %5112 = vmatpush2.bf16.msra.mxu0 0
        %5113 = vmatprep.subr.bf16.mxu0 0
        %5114 = vmatpush2.bf16.msra.mxu0 0
        %5115 = vmatprep.mubr.bf16.mxu0 0
        %5116 = vmatmul.mubr.bf16.gmra.mxu0 %v2334
        %v5117 = vpop.f32.mrf.mxu0
        %v5118 = vadd.f32 %v5064, %v5117
        %v5119 = vpop.f32.mrf.mxu0
        %v5120 = vpop.f32.mrf.mxu0
        %v5121 = vadd.f32 %v5064, %v5120
        %v5122 = vpop.f32.mrf.mxu0
        %5123 = vmatprep.mubr.bf16.mxu0 0
        %5124 = vmatmul.mubr.bf16.gmra.mxu0 %v2337
        %v5125 = vpop.f32.mrf.mxu0
        %v5126 = vadd.f32 %v5064, %v5125
        %v5127 = vpop.f32.mrf.mxu0
        %v5128 = vpop.f32.mrf.mxu0
        %v5129 = vadd.f32 %v5064, %v5128
        %v5130 = vpop.f32.mrf.mxu0
        %5131 = vdwg.mxu0
        %s5132 = scalar_lea.vmem %s687, 96 [#allocation11]
        %v5133 = vld [vmem:[%s5132] sm:$0xf]
        %v5134 = vld [vmem:[%s5132 + $0x4] sm:$0xf]
        %v5135 = vld [vmem:[%s5132 + $0x8] sm:$0xf]
        %v5136 = vld [vmem:[%s5132 + $0xc] sm:$0xf]
        %v5137 = vld [vmem:[%s5132 + $0x10] sm:$0xf]
        %v5138 = vld [vmem:[%s5132 + $0x14] sm:$0xf]
        %v5139 = vlaneseq
        %v5140 = vshrl.u32 %v5139, 7
        %v5141 = vsub.s32 2, %v5140
        %v5142 = vrot.slane %v2298, %v5141
        %v5149 = vunpack.c.l.b16 %v5133
        %v5150 = vunpack.c.l.b16 %v5134
        %v5151 = vunpack.c.l.b16 %v5135
        %v5152 = vunpack.c.l.b16 %v5136
        %v5153 = vunpack.c.l.b16 %v5137
        %v5154 = vunpack.c.l.b16 %v5138
        %v5155 = vpack.c.b16 %v5150, %v5149
        %v5156 = vpack.c.b16 %v5152, %v5151
        %v5157 = vpack.c.b16 %v5154, %v5153
        %5161 = vmatprep.subr.bf16.mxu0 0
        %5162 = vmatpush1.bf16.msra.mxu0 0
        %5163 = vmatprep.subr.bf16.mxu0 0
        %5164 = vmatpush1.bf16.msra.mxu0 0
        %5165 = vmatprep.subr.bf16.mxu0 0
        %5166 = vmatpush1.bf16.msra.mxu0 0
        %5167 = vmatprep.subr.bf16.mxu0 0
        %5168 = vmatpush1.bf16.msra.mxu0 0
        %5169 = vmatprep.subr.bf16.mxu0 0
        %5170 = vmatpush1.bf16.msra.mxu0 0
        %5171 = vmatprep.subr.bf16.mxu0 0
        %5172 = vmatpush1.bf16.msra.mxu0 %v5157
        %5173 = vmatprep.subr.bf16.mxu0 0
        %5174 = vmatpush1.bf16.msra.mxu0 %v5156
        %5175 = vmatprep.subr.bf16.mxu0 0
        %5176 = vmatpush1.bf16.msra.mxu0 %v5155
        %5177 = vmatprep.subr.bf16.mxu0 0
        %5178 = vmatpush2.bf16.msra.mxu0 0
        %5179 = vmatprep.subr.bf16.mxu0 0
        %5180 = vmatpush2.bf16.msra.mxu0 0
        %5181 = vmatprep.subr.bf16.mxu0 0
        %5182 = vmatpush2.bf16.msra.mxu0 0
        %5183 = vmatprep.subr.bf16.mxu0 0
        %5184 = vmatpush2.bf16.msra.mxu0 0
        %5185 = vmatprep.subr.bf16.mxu0 0
        %5186 = vmatpush2.bf16.msra.mxu0 0
        %5187 = vmatprep.subr.bf16.mxu0 0
        %5188 = vmatpush2.bf16.msra.mxu0 0
        %5189 = vmatprep.subr.bf16.mxu0 0
        %5190 = vmatpush2.bf16.msra.mxu0 0
        %5191 = vmatprep.subr.bf16.mxu0 0
        %5192 = vmatpush2.bf16.msra.mxu0 0
        %5193 = vmatprep.mubr.bf16.mxu0 0
        %5194 = vmatmul.mubr.bf16.gmra.mxu0 %v2334
        %v5195 = vpop.f32.mrf.mxu0
        %v5196 = vadd.f32 %v5142, %v5195
        %v5197 = vpop.f32.mrf.mxu0
        %v5198 = vpop.f32.mrf.mxu0
        %v5199 = vadd.f32 %v5142, %v5198
        %v5200 = vpop.f32.mrf.mxu0
        %5201 = vmatprep.mubr.bf16.mxu0 0
        %5202 = vmatmul.mubr.bf16.gmra.mxu0 %v2337
        %v5203 = vpop.f32.mrf.mxu0
        %v5204 = vadd.f32 %v5142, %v5203
        %v5205 = vpop.f32.mrf.mxu0
        %v5206 = vpop.f32.mrf.mxu0
        %v5207 = vadd.f32 %v5142, %v5206
        %v5208 = vpop.f32.mrf.mxu0
        %5209 = vdwg.mxu0
        %s5210 = scalar_lea.vmem %s696, 96 [#allocation12]
        %v5211 = vld [vmem:[%s5210] sm:$0xf]
        %v5212 = vld [vmem:[%s5210 + $0x4] sm:$0xf]
        %v5213 = vld [vmem:[%s5210 + $0x8] sm:$0xf]
        %v5214 = vld [vmem:[%s5210 + $0xc] sm:$0xf]
        %v5215 = vld [vmem:[%s5210 + $0x10] sm:$0xf]
        %v5216 = vld [vmem:[%s5210 + $0x14] sm:$0xf]
        %v5217 = vlaneseq
        %v5218 = vshrl.u32 %v5217, 7
        %v5219 = vsub.s32 0, %v5218
        %v5220 = vrot.slane %v2299, %v5219
        %v5227 = vunpack.c.l.b16 %v5211
        %v5228 = vunpack.c.l.b16 %v5212
        %v5229 = vunpack.c.l.b16 %v5213
        %v5230 = vunpack.c.l.b16 %v5214
        %v5231 = vunpack.c.l.b16 %v5215
        %v5232 = vunpack.c.l.b16 %v5216
        %v5233 = vpack.c.b16 %v5228, %v5227
        %v5234 = vpack.c.b16 %v5230, %v5229
        %v5235 = vpack.c.b16 %v5232, %v5231
        %5239 = vmatprep.subr.bf16.mxu0 0
        %5240 = vmatpush1.bf16.msra.mxu0 0
        %5241 = vmatprep.subr.bf16.mxu0 0
        %5242 = vmatpush1.bf16.msra.mxu0 0
        %5243 = vmatprep.subr.bf16.mxu0 0
        %5244 = vmatpush1.bf16.msra.mxu0 0
        %5245 = vmatprep.subr.bf16.mxu0 0
        %5246 = vmatpush1.bf16.msra.mxu0 0
        %5247 = vmatprep.subr.bf16.mxu0 0
        %5248 = vmatpush1.bf16.msra.mxu0 0
        %5249 = vmatprep.subr.bf16.mxu0 0
        %5250 = vmatpush1.bf16.msra.mxu0 %v5235
        %5251 = vmatprep.subr.bf16.mxu0 0
        %5252 = vmatpush1.bf16.msra.mxu0 %v5234
        %5253 = vmatprep.subr.bf16.mxu0 0
        %5254 = vmatpush1.bf16.msra.mxu0 %v5233
        %5255 = vmatprep.subr.bf16.mxu0 0
        %5256 = vmatpush2.bf16.msra.mxu0 0
        %5257 = vmatprep.subr.bf16.mxu0 0
        %5258 = vmatpush2.bf16.msra.mxu0 0
        %5259 = vmatprep.subr.bf16.mxu0 0
        %5260 = vmatpush2.bf16.msra.mxu0 0
        %5261 = vmatprep.subr.bf16.mxu0 0
        %5262 = vmatpush2.bf16.msra.mxu0 0
        %5263 = vmatprep.subr.bf16.mxu0 0
        %5264 = vmatpush2.bf16.msra.mxu0 0
        %5265 = vmatprep.subr.bf16.mxu0 0
        %5266 = vmatpush2.bf16.msra.mxu0 0
        %5267 = vmatprep.subr.bf16.mxu0 0
        %5268 = vmatpush2.bf16.msra.mxu0 0
        %5269 = vmatprep.subr.bf16.mxu0 0
        %5270 = vmatpush2.bf16.msra.mxu0 0
        %5271 = vmatprep.mubr.bf16.mxu0 0
        %5272 = vmatmul.mubr.bf16.gmra.mxu0 %v2334
        %v5273 = vpop.f32.mrf.mxu0
        %v5274 = vadd.f32 %v5220, %v5273
        %v5275 = vpop.f32.mrf.mxu0
        %v5276 = vpop.f32.mrf.mxu0
        %v5277 = vadd.f32 %v5220, %v5276
        %v5278 = vpop.f32.mrf.mxu0
        %5279 = vmatprep.mubr.bf16.mxu0 0
        %5280 = vmatmul.mubr.bf16.gmra.mxu0 %v2337
        %v5281 = vpop.f32.mrf.mxu0
        %v5282 = vadd.f32 %v5220, %v5281
        %v5283 = vpop.f32.mrf.mxu0
        %v5284 = vpop.f32.mrf.mxu0
        %v5285 = vadd.f32 %v5220, %v5284
        %v5286 = vpop.f32.mrf.mxu0
        %5287 = vdwg.mxu0
        %v5289 = vsel %vm2542, %v5118, 0
        %v5292 = vsel %vm2542, %v5121, 0
        %v5295 = vsel %vm2542, %v5196, 0
        %v5298 = vsel %vm2542, %v5199, 0
        %5300 = vmatprep.subr.mxu0 0.0
        %5301 = vmatpush1.xpose.msra.mxu0 0.0
        %5302 = vmatprep.subr.mxu0 0.0
        %5303 = vmatpush1.xpose.msra.mxu0 0.0
        %5304 = vmatprep.subr.mxu0 0.0
        %5305 = vmatpush1.xpose.msra.mxu0 0.0
        %5306 = vmatprep.subr.mxu0 0.0
        %5307 = vmatpush1.xpose.msra.mxu0 0.0
        %5308 = vmatprep.subr.mxu0 0.0
        %5309 = vmatpush1.xpose.msra.mxu0 0.0
        %5310 = vmatprep.subr.mxu0 0.0
        %5311 = vmatpush1.xpose.msra.mxu0 0.0
        %5312 = vmatprep.subr.mxu0 0.0
        %5313 = vmatpush1.xpose.msra.mxu0 0.0
        %5314 = vmatprep.subr.mxu0 0.0
        %5315 = vmatpush1.xpose.msra.mxu0 0.0
        %5316 = vmatprep.subr.mxu0 0.0
        %5317 = vmatpush1.xpose.msra.mxu0 0.0
        %5318 = vmatprep.subr.mxu0 0.0
        %5319 = vmatpush1.xpose.msra.mxu0 0.0
        %5320 = vmatprep.subr.mxu0 0.0
        %5321 = vmatpush1.xpose.msra.mxu0 0.0
        %5322 = vmatprep.subr.mxu0 0.0
        %5323 = vmatpush1.xpose.msra.mxu0 0.0
        %5324 = vmatprep.subr.mxu0 0.0
        %5325 = vmatpush1.xpose.msra.mxu0 0.0
        %5326 = vmatprep.subr.mxu0 0.0
        %5327 = vmatpush1.xpose.msra.mxu0 0.0
        %5328 = vmatprep.subr.mxu0 0.0
        %5329 = vmatpush1.xpose.msra.mxu0 %v5298
        %5330 = vmatprep.subr.mxu0 0.0
        %5331 = vmatpush1.xpose.msra.mxu0 %v5295
        %5332 = vmatprep.subr.mxu0 0.0
        %5333 = vmatpush2.xpose.msra.mxu0 0.0
        %5334 = vmatprep.subr.mxu0 0.0
        %5335 = vmatpush2.xpose.msra.mxu0 0.0
        %5336 = vmatprep.subr.mxu0 0.0
        %5337 = vmatpush2.xpose.msra.mxu0 0.0
        %5338 = vmatprep.subr.mxu0 0.0
        %5339 = vmatpush2.xpose.msra.mxu0 0.0
        %5340 = vmatprep.subr.mxu0 0.0
        %5341 = vmatpush2.xpose.msra.mxu0 0.0
        %5342 = vmatprep.subr.mxu0 0.0
        %5343 = vmatpush2.xpose.msra.mxu0 0.0
        %5344 = vmatprep.subr.mxu0 0.0
        %5345 = vmatpush2.xpose.msra.mxu0 0.0
        %5346 = vmatprep.subr.mxu0 0.0
        %5347 = vmatpush2.xpose.msra.mxu0 0.0
        %5348 = vmatprep.subr.mxu0 0.0
        %5349 = vmatpush2.xpose.msra.mxu0 0.0
        %5350 = vmatprep.subr.mxu0 0.0
        %5351 = vmatpush2.xpose.msra.mxu0 0.0
        %5352 = vmatprep.subr.mxu0 0.0
        %5353 = vmatpush2.xpose.msra.mxu0 0.0
        %5354 = vmatprep.subr.mxu0 0.0
        %5355 = vmatpush2.xpose.msra.mxu0 0.0
        %5356 = vmatprep.subr.mxu0 0.0
        %5357 = vmatpush2.xpose.msra.mxu0 0.0
        %5358 = vmatprep.subr.mxu0 0.0
        %5359 = vmatpush2.xpose.msra.mxu0 0.0
        %5360 = vmatprep.subr.mxu0 0.0
        %5361 = vmatpush2.xpose.msra.mxu0 0.0
        %5362 = vmatprep.subr.mxu0 0.0
        %5363 = vmatpush2.xpose.msra.mxu0 0.0
        %5364 = vmatprep.mubr.f32.mxu0 0.0
        %5365 = vmatmul.mubr.f32.gmra.mxu0 %v5289
        %v5366 = vpop.f32.mrf.mxu0
        %v5367 = vadd.f32 0.0, %v5366
        %v5368 = vpop.f32.mrf.mxu0
        %5369 = vmatprep.mubr.f32.mxu0 0.0
        %5370 = vmatmul.mubr.f32.gmra.mxu0 %v5292
        %v5371 = vpop.f32.mrf.mxu0
        %v5372 = vadd.f32 0.0, %v5371
        %v5373 = vpop.f32.mrf.mxu0
        %5374 = vdwg.mxu0
        %v5376 = vsel %vm2542, %v5126, 0
        %v5379 = vsel %vm2542, %v5129, 0
        %v5382 = vsel %vm2542, %v5204, 0
        %v5385 = vsel %vm2542, %v5207, 0
        %5387 = vmatprep.subr.mxu0 0.0
        %5388 = vmatpush1.xpose.msra.mxu0 0.0
        %5389 = vmatprep.subr.mxu0 0.0
        %5390 = vmatpush1.xpose.msra.mxu0 0.0
        %5391 = vmatprep.subr.mxu0 0.0
        %5392 = vmatpush1.xpose.msra.mxu0 0.0
        %5393 = vmatprep.subr.mxu0 0.0
        %5394 = vmatpush1.xpose.msra.mxu0 0.0
        %5395 = vmatprep.subr.mxu0 0.0
        %5396 = vmatpush1.xpose.msra.mxu0 0.0
        %5397 = vmatprep.subr.mxu0 0.0
        %5398 = vmatpush1.xpose.msra.mxu0 0.0
        %5399 = vmatprep.subr.mxu0 0.0
        %5400 = vmatpush1.xpose.msra.mxu0 0.0
        %5401 = vmatprep.subr.mxu0 0.0
        %5402 = vmatpush1.xpose.msra.mxu0 0.0
        %5403 = vmatprep.subr.mxu0 0.0
        %5404 = vmatpush1.xpose.msra.mxu0 0.0
        %5405 = vmatprep.subr.mxu0 0.0
        %5406 = vmatpush1.xpose.msra.mxu0 0.0
        %5407 = vmatprep.subr.mxu0 0.0
        %5408 = vmatpush1.xpose.msra.mxu0 0.0
        %5409 = vmatprep.subr.mxu0 0.0
        %5410 = vmatpush1.xpose.msra.mxu0 0.0
        %5411 = vmatprep.subr.mxu0 0.0
        %5412 = vmatpush1.xpose.msra.mxu0 0.0
        %5413 = vmatprep.subr.mxu0 0.0
        %5414 = vmatpush1.xpose.msra.mxu0 0.0
        %5415 = vmatprep.subr.mxu0 0.0
        %5416 = vmatpush1.xpose.msra.mxu0 %v5385
        %5417 = vmatprep.subr.mxu0 0.0
        %5418 = vmatpush1.xpose.msra.mxu0 %v5382
        %5419 = vmatprep.subr.mxu0 0.0
        %5420 = vmatpush2.xpose.msra.mxu0 0.0
        %5421 = vmatprep.subr.mxu0 0.0
        %5422 = vmatpush2.xpose.msra.mxu0 0.0
        %5423 = vmatprep.subr.mxu0 0.0
        %5424 = vmatpush2.xpose.msra.mxu0 0.0
        %5425 = vmatprep.subr.mxu0 0.0
        %5426 = vmatpush2.xpose.msra.mxu0 0.0
        %5427 = vmatprep.subr.mxu0 0.0
        %5428 = vmatpush2.xpose.msra.mxu0 0.0
        %5429 = vmatprep.subr.mxu0 0.0
        %5430 = vmatpush2.xpose.msra.mxu0 0.0
        %5431 = vmatprep.subr.mxu0 0.0
        %5432 = vmatpush2.xpose.msra.mxu0 0.0
        %5433 = vmatprep.subr.mxu0 0.0
        %5434 = vmatpush2.xpose.msra.mxu0 0.0
        %5435 = vmatprep.subr.mxu0 0.0
        %5436 = vmatpush2.xpose.msra.mxu0 0.0
        %5437 = vmatprep.subr.mxu0 0.0
        %5438 = vmatpush2.xpose.msra.mxu0 0.0
        %5439 = vmatprep.subr.mxu0 0.0
        %5440 = vmatpush2.xpose.msra.mxu0 0.0
        %5441 = vmatprep.subr.mxu0 0.0
        %5442 = vmatpush2.xpose.msra.mxu0 0.0
        %5443 = vmatprep.subr.mxu0 0.0
        %5444 = vmatpush2.xpose.msra.mxu0 0.0
        %5445 = vmatprep.subr.mxu0 0.0
        %5446 = vmatpush2.xpose.msra.mxu0 0.0
        %5447 = vmatprep.subr.mxu0 0.0
        %5448 = vmatpush2.xpose.msra.mxu0 0.0
        %5449 = vmatprep.subr.mxu0 0.0
        %5450 = vmatpush2.xpose.msra.mxu0 0.0
        %5451 = vmatprep.mubr.f32.mxu0 0.0
        %5452 = vmatmul.mubr.f32.gmra.mxu0 %v5376
        %v5453 = vpop.f32.mrf.mxu0
        %v5454 = vadd.f32 0.0, %v5453
        %v5455 = vpop.f32.mrf.mxu0
        %5456 = vmatprep.mubr.f32.mxu0 0.0
        %5457 = vmatmul.mubr.f32.gmra.mxu0 %v5379
        %v5458 = vpop.f32.mrf.mxu0
        %v5459 = vadd.f32 0.0, %v5458
        %v5460 = vpop.f32.mrf.mxu0
        %5461 = vdwg.mxu0
        %v5462 = vmul.f32 %v5367, 0.35355338
        %v5463 = vmul.f32 %v5372, 0.35355338
        %v5464 = vmul.f32 %v5454, 0.35355338
        %v5465 = vmul.f32 %v5459, 0.35355338
        %v5466 = vadd.f32 %v5462, %v2303
        %v5467 = vadd.f32 %v5463, %v2303
        %v5468 = vadd.f32 %v5464, %v2303
        %v5469 = vadd.f32 %v5465, %v2303
        %v5470 = vsel %vm2725, %v5466, -inf
        %5471 = vmax.xlane.f32.xlu0 %v5470
        %v5472 = vpop.xlane.xlu0 %5471
        %v5473 = vsel %vm2725, %v5467, -inf
        %5474 = vmax.xlane.f32.xlu0 %v5473
        %v5475 = vpop.xlane.xlu0 %5474
        %v5476 = vsel %vm2725, %v5468, -inf
        %5477 = vmax.xlane.f32.xlu0 %v5476
        %v5478 = vpop.xlane.xlu0 %5477
        %v5479 = vsel %vm2725, %v5469, -inf
        %5480 = vmax.xlane.f32.xlu0 %v5479
        %v5481 = vpop.xlane.xlu0 %5480
        %v5482 = vsub.f32 %v5466, %v5472
        %v5483 = vsub.f32 %v5467, %v5475
        %v5484 = vsub.f32 %v5468, %v5478
        %v5485 = vsub.f32 %v5469, %v5481
        %v5486 = vmul.f32 %v5482, 1.442695
        %v5487 = vpow.pop %v5486
        %v5488 = vmul.f32 %v5483, 1.442695
        %v5489 = vpow.pop %v5488
        %v5490 = vmul.f32 %v5484, 1.442695
        %v5491 = vpow.pop %v5490
        %v5492 = vmul.f32 %v5485, 1.442695
        %v5493 = vpow.pop %v5492
        %v5494 = vsel %vm2725, %v5487, 0.0
        %5495 = vadd.xlane.f32.xlu0 %v5494
        %v5496 = vpop.xlane.xlu0 %5495
        %v5497 = vsel %vm2725, %v5489, 0.0
        %5498 = vadd.xlane.f32.xlu0 %v5497
        %v5499 = vpop.xlane.xlu0 %5498
        %v5500 = vsel %vm2725, %v5491, 0.0
        %5501 = vadd.xlane.f32.xlu0 %v5500
        %v5502 = vpop.xlane.xlu0 %5501
        %v5503 = vsel %vm2725, %v5493, 0.0
        %5504 = vadd.xlane.f32.xlu0 %v5503
        %v5505 = vpop.xlane.xlu0 %5504
        %v5506 = vrcp.pop %v5496
        %v5507 = vrcp.pop %v5499
        %v5508 = vrcp.pop %v5502
        %v5509 = vrcp.pop %v5505
        %v5510 = vmul.f32 %v5487, %v5506
        %v5511 = vmul.f32 %v5489, %v5507
        %v5512 = vmul.f32 %v5491, %v5508
        %v5513 = vmul.f32 %v5493, %v5509
        %v5515 = vsel %vm2725, %v5510, 0
        %v5518 = vsel %vm2725, %v5511, 0
        %5520 = vmatprep.subr.mxu0 0.0
        %5521 = vmatpush1.msra.mxu0 0.0
        %5522 = vmatprep.subr.mxu0 0.0
        %5523 = vmatpush1.msra.mxu0 0.0
        %5524 = vmatprep.subr.mxu0 0.0
        %5525 = vmatpush1.msra.mxu0 0.0
        %5526 = vmatprep.subr.mxu0 0.0
        %5527 = vmatpush1.msra.mxu0 0.0
        %5528 = vmatprep.subr.mxu0 0.0
        %5529 = vmatpush1.msra.mxu0 0.0
        %5530 = vmatprep.subr.mxu0 0.0
        %5531 = vmatpush1.msra.mxu0 0.0
        %5532 = vmatprep.subr.mxu0 0.0
        %5533 = vmatpush1.msra.mxu0 0.0
        %5534 = vmatprep.subr.mxu0 0.0
        %5535 = vmatpush1.msra.mxu0 0.0
        %5536 = vmatprep.subr.mxu0 0.0
        %5537 = vmatpush1.msra.mxu0 0.0
        %5538 = vmatprep.subr.mxu0 0.0
        %5539 = vmatpush1.msra.mxu0 0.0
        %5540 = vmatprep.subr.mxu0 0.0
        %5541 = vmatpush1.msra.mxu0 0.0
        %5542 = vmatprep.subr.mxu0 0.0
        %5543 = vmatpush1.msra.mxu0 0.0
        %5544 = vmatprep.subr.mxu0 0.0
        %5545 = vmatpush1.msra.mxu0 0.0
        %5546 = vmatprep.subr.mxu0 0.0
        %5547 = vmatpush1.msra.mxu0 0.0
        %5548 = vmatprep.subr.mxu0 0.0
        %5549 = vmatpush1.msra.mxu0 %v5277
        %5550 = vmatprep.subr.mxu0 0.0
        %5551 = vmatpush1.msra.mxu0 %v5274
        %5552 = vmatprep.subr.mxu0 0.0
        %5553 = vmatpush2.msra.mxu0 0.0
        %5554 = vmatprep.subr.mxu0 0.0
        %5555 = vmatpush2.msra.mxu0 0.0
        %5556 = vmatprep.subr.mxu0 0.0
        %5557 = vmatpush2.msra.mxu0 0.0
        %5558 = vmatprep.subr.mxu0 0.0
        %5559 = vmatpush2.msra.mxu0 0.0
        %5560 = vmatprep.subr.mxu0 0.0
        %5561 = vmatpush2.msra.mxu0 0.0
        %5562 = vmatprep.subr.mxu0 0.0
        %5563 = vmatpush2.msra.mxu0 0.0
        %5564 = vmatprep.subr.mxu0 0.0
        %5565 = vmatpush2.msra.mxu0 0.0
        %5566 = vmatprep.subr.mxu0 0.0
        %5567 = vmatpush2.msra.mxu0 0.0
        %5568 = vmatprep.subr.mxu0 0.0
        %5569 = vmatpush2.msra.mxu0 0.0
        %5570 = vmatprep.subr.mxu0 0.0
        %5571 = vmatpush2.msra.mxu0 0.0
        %5572 = vmatprep.subr.mxu0 0.0
        %5573 = vmatpush2.msra.mxu0 0.0
        %5574 = vmatprep.subr.mxu0 0.0
        %5575 = vmatpush2.msra.mxu0 0.0
        %5576 = vmatprep.subr.mxu0 0.0
        %5577 = vmatpush2.msra.mxu0 0.0
        %5578 = vmatprep.subr.mxu0 0.0
        %5579 = vmatpush2.msra.mxu0 0.0
        %5580 = vmatprep.subr.mxu0 0.0
        %5581 = vmatpush2.msra.mxu0 0.0
        %5582 = vmatprep.subr.mxu0 0.0
        %5583 = vmatpush2.msra.mxu0 0.0
        %5584 = vmatprep.mubr.f32.mxu0 0.0
        %5585 = vmatmul.mubr.f32.gmra.mxu0 %v5515
        %v5586 = vpop.f32.mrf.mxu0
        %v5587 = vadd.f32 0.0, %v5586
        %v5588 = vpop.f32.mrf.mxu0
        %5589 = vmatprep.mubr.f32.mxu0 0.0
        %5590 = vmatmul.mubr.f32.gmra.mxu0 %v5518
        %v5591 = vpop.f32.mrf.mxu0
        %v5592 = vadd.f32 0.0, %v5591
        %v5593 = vpop.f32.mrf.mxu0
        %5594 = vdwg.mxu0
        %v5596 = vsel %vm2725, %v5512, 0
        %v5599 = vsel %vm2725, %v5513, 0
        %5601 = vmatprep.subr.mxu0 0.0
        %5602 = vmatpush1.msra.mxu0 0.0
        %5603 = vmatprep.subr.mxu0 0.0
        %5604 = vmatpush1.msra.mxu0 0.0
        %5605 = vmatprep.subr.mxu0 0.0
        %5606 = vmatpush1.msra.mxu0 0.0
        %5607 = vmatprep.subr.mxu0 0.0
        %5608 = vmatpush1.msra.mxu0 0.0
        %5609 = vmatprep.subr.mxu0 0.0
        %5610 = vmatpush1.msra.mxu0 0.0
        %5611 = vmatprep.subr.mxu0 0.0
        %5612 = vmatpush1.msra.mxu0 0.0
        %5613 = vmatprep.subr.mxu0 0.0
        %5614 = vmatpush1.msra.mxu0 0.0
        %5615 = vmatprep.subr.mxu0 0.0
        %5616 = vmatpush1.msra.mxu0 0.0
        %5617 = vmatprep.subr.mxu0 0.0
        %5618 = vmatpush1.msra.mxu0 0.0
        %5619 = vmatprep.subr.mxu0 0.0
        %5620 = vmatpush1.msra.mxu0 0.0
        %5621 = vmatprep.subr.mxu0 0.0
        %5622 = vmatpush1.msra.mxu0 0.0
        %5623 = vmatprep.subr.mxu0 0.0
        %5624 = vmatpush1.msra.mxu0 0.0
        %5625 = vmatprep.subr.mxu0 0.0
        %5626 = vmatpush1.msra.mxu0 0.0
        %5627 = vmatprep.subr.mxu0 0.0
        %5628 = vmatpush1.msra.mxu0 0.0
        %5629 = vmatprep.subr.mxu0 0.0
        %5630 = vmatpush1.msra.mxu0 %v5285
        %5631 = vmatprep.subr.mxu0 0.0
        %5632 = vmatpush1.msra.mxu0 %v5282
        %5633 = vmatprep.subr.mxu0 0.0
        %5634 = vmatpush2.msra.mxu0 0.0
        %5635 = vmatprep.subr.mxu0 0.0
        %5636 = vmatpush2.msra.mxu0 0.0
        %5637 = vmatprep.subr.mxu0 0.0
        %5638 = vmatpush2.msra.mxu0 0.0
        %5639 = vmatprep.subr.mxu0 0.0
        %5640 = vmatpush2.msra.mxu0 0.0
        %5641 = vmatprep.subr.mxu0 0.0
        %5642 = vmatpush2.msra.mxu0 0.0
        %5643 = vmatprep.subr.mxu0 0.0
        %5644 = vmatpush2.msra.mxu0 0.0
        %5645 = vmatprep.subr.mxu0 0.0
        %5646 = vmatpush2.msra.mxu0 0.0
        %5647 = vmatprep.subr.mxu0 0.0
        %5648 = vmatpush2.msra.mxu0 0.0
        %5649 = vmatprep.subr.mxu0 0.0
        %5650 = vmatpush2.msra.mxu0 0.0
        %5651 = vmatprep.subr.mxu0 0.0
        %5652 = vmatpush2.msra.mxu0 0.0
        %5653 = vmatprep.subr.mxu0 0.0
        %5654 = vmatpush2.msra.mxu0 0.0
        %5655 = vmatprep.subr.mxu0 0.0
        %5656 = vmatpush2.msra.mxu0 0.0
        %5657 = vmatprep.subr.mxu0 0.0
        %5658 = vmatpush2.msra.mxu0 0.0
        %5659 = vmatprep.subr.mxu0 0.0
        %5660 = vmatpush2.msra.mxu0 0.0
        %5661 = vmatprep.subr.mxu0 0.0
        %5662 = vmatpush2.msra.mxu0 0.0
        %5663 = vmatprep.subr.mxu0 0.0
        %5664 = vmatpush2.msra.mxu0 0.0
        %5665 = vmatprep.mubr.f32.mxu0 0.0
        %5666 = vmatmul.mubr.f32.gmra.mxu0 %v5596
        %v5667 = vpop.f32.mrf.mxu0
        %v5668 = vadd.f32 0.0, %v5667
        %v5669 = vpop.f32.mrf.mxu0
        %5670 = vmatprep.mubr.f32.mxu0 0.0
        %5671 = vmatmul.mubr.f32.gmra.mxu0 %v5599
        %v5672 = vpop.f32.mrf.mxu0
        %v5673 = vadd.f32 0.0, %v5672
        %v5674 = vpop.f32.mrf.mxu0
        %5675 = vdwg.mxu0
        %v5676 = vpack.c.bf16 %v5592, %v5587
        %v5677 = vpack.c.bf16 %v5673, %v5668
        %s5678 = scalar_lea.vmem %s705, 16 [#allocation13]
        %v5679 = vld [vmem:[%s5678] sm:$0xf]
        %v5681 = vsel %vm2542, %v5676, 0
        %v5684 = vsel %vm2542, %v5677, 0
        %v5687 = vsel %vm3567, %v5679, 0
        %5689 = vmatprep.subr.bf16.mxu0 0
        %5690 = vmatpush1.bf16.msra.mxu0 0
        %5691 = vmatprep.subr.bf16.mxu0 0
        %5692 = vmatpush1.bf16.msra.mxu0 0
        %5693 = vmatprep.subr.bf16.mxu0 0
        %5694 = vmatpush1.bf16.msra.mxu0 0
        %5695 = vmatprep.subr.bf16.mxu0 0
        %5696 = vmatpush1.bf16.msra.mxu0 0
        %5697 = vmatprep.subr.bf16.mxu0 0
        %5698 = vmatpush1.bf16.msra.mxu0 0
        %5699 = vmatprep.subr.bf16.mxu0 0
        %5700 = vmatpush1.bf16.msra.mxu0 0
        %5701 = vmatprep.subr.bf16.mxu0 0
        %5702 = vmatpush1.bf16.msra.mxu0 0
        %5703 = vmatprep.subr.bf16.mxu0 0
        %5704 = vmatpush1.bf16.msra.mxu0 %v5687
        %5705 = vmatprep.subr.bf16.mxu0 0
        %5706 = vmatpush2.bf16.msra.mxu0 0
        %5707 = vmatprep.subr.bf16.mxu0 0
        %5708 = vmatpush2.bf16.msra.mxu0 0
        %5709 = vmatprep.subr.bf16.mxu0 0
        %5710 = vmatpush2.bf16.msra.mxu0 0
        %5711 = vmatprep.subr.bf16.mxu0 0
        %5712 = vmatpush2.bf16.msra.mxu0 0
        %5713 = vmatprep.subr.bf16.mxu0 0
        %5714 = vmatpush2.bf16.msra.mxu0 0
        %5715 = vmatprep.subr.bf16.mxu0 0
        %5716 = vmatpush2.bf16.msra.mxu0 0
        %5717 = vmatprep.subr.bf16.mxu0 0
        %5718 = vmatpush2.bf16.msra.mxu0 0
        %5719 = vmatprep.subr.bf16.mxu0 0
        %5720 = vmatpush2.bf16.msra.mxu0 0
        %5721 = vmatprep.mubr.bf16.mxu0 0
        %5722 = vmatmul.mubr.bf16.gmra.mxu0 %v5681
        %v5723 = vpop.f32.mrf.mxu0
        %v5724 = vadd.f32 0.0, %v5723
        %v5725 = vpop.f32.mrf.mxu0
        %v5726 = vpop.f32.mrf.mxu0
        %v5727 = vadd.f32 0.0, %v5726
        %v5728 = vpop.f32.mrf.mxu0
        %5729 = vmatprep.mubr.bf16.mxu0 0
        %5730 = vmatmul.mubr.bf16.gmra.mxu0 %v5684
        %v5731 = vpop.f32.mrf.mxu0
        %v5732 = vadd.f32 0.0, %v5731
        %v5733 = vpop.f32.mrf.mxu0
        %v5734 = vpop.f32.mrf.mxu0
        %v5735 = vadd.f32 0.0, %v5734
        %v5736 = vpop.f32.mrf.mxu0
        %5737 = vdwg.mxu0
        %v5738 = vadd.f32 %v5050, %v5724
        %v5739 = vadd.f32 %v5051, %v5727
        %v5740 = vadd.f32 %v5052, %v5732
        %v5741 = vadd.f32 %v5053, %v5735
        %s5742 = scalar_lea.vmem %s678, 120 [#allocation10]
        %v5743 = vld [vmem:[%s5742] sm:$0xf]
        %v5744 = vld [vmem:[%s5742 + $0x4] sm:$0xf]
        %v5745 = vld [vmem:[%s5742 + $0x8] sm:$0xf]
        %v5746 = vld [vmem:[%s5742 + $0xc] sm:$0xf]
        %v5747 = vld [vmem:[%s5742 + $0x10] sm:$0xf]
        %v5748 = vld [vmem:[%s5742 + $0x14] sm:$0xf]
        %v5749 = vlaneseq
        %v5750 = vshrl.u32 %v5749, 7
        %v5751 = vsub.s32 5, %v5750
        %v5752 = vrot.slane %v2297, %v5751
        %v5759 = vunpack.c.l.b16 %v5743
        %v5760 = vunpack.c.l.b16 %v5744
        %v5761 = vunpack.c.l.b16 %v5745
        %v5762 = vunpack.c.l.b16 %v5746
        %v5763 = vunpack.c.l.b16 %v5747
        %v5764 = vunpack.c.l.b16 %v5748
        %v5765 = vpack.c.b16 %v5760, %v5759
        %v5766 = vpack.c.b16 %v5762, %v5761
        %v5767 = vpack.c.b16 %v5764, %v5763
        %5771 = vmatprep.subr.bf16.mxu0 0
        %5772 = vmatpush1.bf16.msra.mxu0 0
        %5773 = vmatprep.subr.bf16.mxu0 0
        %5774 = vmatpush1.bf16.msra.mxu0 0
        %5775 = vmatprep.subr.bf16.mxu0 0
        %5776 = vmatpush1.bf16.msra.mxu0 0
        %5777 = vmatprep.subr.bf16.mxu0 0
        %5778 = vmatpush1.bf16.msra.mxu0 0
        %5779 = vmatprep.subr.bf16.mxu0 0
        %5780 = vmatpush1.bf16.msra.mxu0 0
        %5781 = vmatprep.subr.bf16.mxu0 0
        %5782 = vmatpush1.bf16.msra.mxu0 %v5767
        %5783 = vmatprep.subr.bf16.mxu0 0
        %5784 = vmatpush1.bf16.msra.mxu0 %v5766
        %5785 = vmatprep.subr.bf16.mxu0 0
        %5786 = vmatpush1.bf16.msra.mxu0 %v5765
        %5787 = vmatprep.subr.bf16.mxu0 0
        %5788 = vmatpush2.bf16.msra.mxu0 0
        %5789 = vmatprep.subr.bf16.mxu0 0
        %5790 = vmatpush2.bf16.msra.mxu0 0
        %5791 = vmatprep.subr.bf16.mxu0 0
        %5792 = vmatpush2.bf16.msra.mxu0 0
        %5793 = vmatprep.subr.bf16.mxu0 0
        %5794 = vmatpush2.bf16.msra.mxu0 0
        %5795 = vmatprep.subr.bf16.mxu0 0
        %5796 = vmatpush2.bf16.msra.mxu0 0
        %5797 = vmatprep.subr.bf16.mxu0 0
        %5798 = vmatpush2.bf16.msra.mxu0 0
        %5799 = vmatprep.subr.bf16.mxu0 0
        %5800 = vmatpush2.bf16.msra.mxu0 0
        %5801 = vmatprep.subr.bf16.mxu0 0
        %5802 = vmatpush2.bf16.msra.mxu0 0
        %5803 = vmatprep.mubr.bf16.mxu0 0
        %5804 = vmatmul.mubr.bf16.gmra.mxu0 %v2334
        %v5805 = vpop.f32.mrf.mxu0
        %v5806 = vadd.f32 %v5752, %v5805
        %v5807 = vpop.f32.mrf.mxu0
        %v5808 = vpop.f32.mrf.mxu0
        %v5809 = vadd.f32 %v5752, %v5808
        %v5810 = vpop.f32.mrf.mxu0
        %5811 = vmatprep.mubr.bf16.mxu0 0
        %5812 = vmatmul.mubr.bf16.gmra.mxu0 %v2337
        %v5813 = vpop.f32.mrf.mxu0
        %v5814 = vadd.f32 %v5752, %v5813
        %v5815 = vpop.f32.mrf.mxu0
        %v5816 = vpop.f32.mrf.mxu0
        %v5817 = vadd.f32 %v5752, %v5816
        %v5818 = vpop.f32.mrf.mxu0
        %5819 = vdwg.mxu0
        %s5820 = scalar_lea.vmem %s687, 120 [#allocation11]
        %v5821 = vld [vmem:[%s5820] sm:$0xf]
        %v5822 = vld [vmem:[%s5820 + $0x4] sm:$0xf]
        %v5823 = vld [vmem:[%s5820 + $0x8] sm:$0xf]
        %v5824 = vld [vmem:[%s5820 + $0xc] sm:$0xf]
        %v5825 = vld [vmem:[%s5820 + $0x10] sm:$0xf]
        %v5826 = vld [vmem:[%s5820 + $0x14] sm:$0xf]
        %v5827 = vlaneseq
        %v5828 = vshrl.u32 %v5827, 7
        %v5829 = vsub.s32 3, %v5828
        %v5830 = vrot.slane %v2298, %v5829
        %v5837 = vunpack.c.l.b16 %v5821
        %v5838 = vunpack.c.l.b16 %v5822
        %v5839 = vunpack.c.l.b16 %v5823
        %v5840 = vunpack.c.l.b16 %v5824
        %v5841 = vunpack.c.l.b16 %v5825
        %v5842 = vunpack.c.l.b16 %v5826
        %v5843 = vpack.c.b16 %v5838, %v5837
        %v5844 = vpack.c.b16 %v5840, %v5839
        %v5845 = vpack.c.b16 %v5842, %v5841
        %5849 = vmatprep.subr.bf16.mxu0 0
        %5850 = vmatpush1.bf16.msra.mxu0 0
        %5851 = vmatprep.subr.bf16.mxu0 0
        %5852 = vmatpush1.bf16.msra.mxu0 0
        %5853 = vmatprep.subr.bf16.mxu0 0
        %5854 = vmatpush1.bf16.msra.mxu0 0
        %5855 = vmatprep.subr.bf16.mxu0 0
        %5856 = vmatpush1.bf16.msra.mxu0 0
        %5857 = vmatprep.subr.bf16.mxu0 0
        %5858 = vmatpush1.bf16.msra.mxu0 0
        %5859 = vmatprep.subr.bf16.mxu0 0
        %5860 = vmatpush1.bf16.msra.mxu0 %v5845
        %5861 = vmatprep.subr.bf16.mxu0 0
        %5862 = vmatpush1.bf16.msra.mxu0 %v5844
        %5863 = vmatprep.subr.bf16.mxu0 0
        %5864 = vmatpush1.bf16.msra.mxu0 %v5843
        %5865 = vmatprep.subr.bf16.mxu0 0
        %5866 = vmatpush2.bf16.msra.mxu0 0
        %5867 = vmatprep.subr.bf16.mxu0 0
        %5868 = vmatpush2.bf16.msra.mxu0 0
        %5869 = vmatprep.subr.bf16.mxu0 0
        %5870 = vmatpush2.bf16.msra.mxu0 0
        %5871 = vmatprep.subr.bf16.mxu0 0
        %5872 = vmatpush2.bf16.msra.mxu0 0
        %5873 = vmatprep.subr.bf16.mxu0 0
        %5874 = vmatpush2.bf16.msra.mxu0 0
        %5875 = vmatprep.subr.bf16.mxu0 0
        %5876 = vmatpush2.bf16.msra.mxu0 0
        %5877 = vmatprep.subr.bf16.mxu0 0
        %5878 = vmatpush2.bf16.msra.mxu0 0
        %5879 = vmatprep.subr.bf16.mxu0 0
        %5880 = vmatpush2.bf16.msra.mxu0 0
        %5881 = vmatprep.mubr.bf16.mxu0 0
        %5882 = vmatmul.mubr.bf16.gmra.mxu0 %v2334
        %v5883 = vpop.f32.mrf.mxu0
        %v5884 = vadd.f32 %v5830, %v5883
        %v5885 = vpop.f32.mrf.mxu0
        %v5886 = vpop.f32.mrf.mxu0
        %v5887 = vadd.f32 %v5830, %v5886
        %v5888 = vpop.f32.mrf.mxu0
        %5889 = vmatprep.mubr.bf16.mxu0 0
        %5890 = vmatmul.mubr.bf16.gmra.mxu0 %v2337
        %v5891 = vpop.f32.mrf.mxu0
        %v5892 = vadd.f32 %v5830, %v5891
        %v5893 = vpop.f32.mrf.mxu0
        %v5894 = vpop.f32.mrf.mxu0
        %v5895 = vadd.f32 %v5830, %v5894
        %v5896 = vpop.f32.mrf.mxu0
        %5897 = vdwg.mxu0
        %s5898 = scalar_lea.vmem %s696, 120 [#allocation12]
        %v5899 = vld [vmem:[%s5898] sm:$0xf]
        %v5900 = vld [vmem:[%s5898 + $0x4] sm:$0xf]
        %v5901 = vld [vmem:[%s5898 + $0x8] sm:$0xf]
        %v5902 = vld [vmem:[%s5898 + $0xc] sm:$0xf]
        %v5903 = vld [vmem:[%s5898 + $0x10] sm:$0xf]
        %v5904 = vld [vmem:[%s5898 + $0x14] sm:$0xf]
        %v5905 = vlaneseq
        %v5906 = vshrl.u32 %v5905, 7
        %v5907 = vsub.s32 1, %v5906
        %v5908 = vrot.slane %v2299, %v5907
        %v5915 = vunpack.c.l.b16 %v5899
        %v5916 = vunpack.c.l.b16 %v5900
        %v5917 = vunpack.c.l.b16 %v5901
        %v5918 = vunpack.c.l.b16 %v5902
        %v5919 = vunpack.c.l.b16 %v5903
        %v5920 = vunpack.c.l.b16 %v5904
        %v5921 = vpack.c.b16 %v5916, %v5915
        %v5922 = vpack.c.b16 %v5918, %v5917
        %v5923 = vpack.c.b16 %v5920, %v5919
        %5927 = vmatprep.subr.bf16.mxu0 0
        %5928 = vmatpush1.bf16.msra.mxu0 0
        %5929 = vmatprep.subr.bf16.mxu0 0
        %5930 = vmatpush1.bf16.msra.mxu0 0
        %5931 = vmatprep.subr.bf16.mxu0 0
        %5932 = vmatpush1.bf16.msra.mxu0 0
        %5933 = vmatprep.subr.bf16.mxu0 0
        %5934 = vmatpush1.bf16.msra.mxu0 0
        %5935 = vmatprep.subr.bf16.mxu0 0
        %5936 = vmatpush1.bf16.msra.mxu0 0
        %5937 = vmatprep.subr.bf16.mxu0 0
        %5938 = vmatpush1.bf16.msra.mxu0 %v5923
        %5939 = vmatprep.subr.bf16.mxu0 0
        %5940 = vmatpush1.bf16.msra.mxu0 %v5922
        %5941 = vmatprep.subr.bf16.mxu0 0
        %5942 = vmatpush1.bf16.msra.mxu0 %v5921
        %5943 = vmatprep.subr.bf16.mxu0 0
        %5944 = vmatpush2.bf16.msra.mxu0 0
        %5945 = vmatprep.subr.bf16.mxu0 0
        %5946 = vmatpush2.bf16.msra.mxu0 0
        %5947 = vmatprep.subr.bf16.mxu0 0
        %5948 = vmatpush2.bf16.msra.mxu0 0
        %5949 = vmatprep.subr.bf16.mxu0 0
        %5950 = vmatpush2.bf16.msra.mxu0 0
        %5951 = vmatprep.subr.bf16.mxu0 0
        %5952 = vmatpush2.bf16.msra.mxu0 0
        %5953 = vmatprep.subr.bf16.mxu0 0
        %5954 = vmatpush2.bf16.msra.mxu0 0
        %5955 = vmatprep.subr.bf16.mxu0 0
        %5956 = vmatpush2.bf16.msra.mxu0 0
        %5957 = vmatprep.subr.bf16.mxu0 0
        %5958 = vmatpush2.bf16.msra.mxu0 0
        %5959 = vmatprep.mubr.bf16.mxu0 0
        %5960 = vmatmul.mubr.bf16.gmra.mxu0 %v2334
        %v5961 = vpop.f32.mrf.mxu0
        %v5962 = vadd.f32 %v5908, %v5961
        %v5963 = vpop.f32.mrf.mxu0
        %v5964 = vpop.f32.mrf.mxu0
        %v5965 = vadd.f32 %v5908, %v5964
        %v5966 = vpop.f32.mrf.mxu0
        %5967 = vmatprep.mubr.bf16.mxu0 0
        %5968 = vmatmul.mubr.bf16.gmra.mxu0 %v2337
        %v5969 = vpop.f32.mrf.mxu0
        %v5970 = vadd.f32 %v5908, %v5969
        %v5971 = vpop.f32.mrf.mxu0
        %v5972 = vpop.f32.mrf.mxu0
        %v5973 = vadd.f32 %v5908, %v5972
        %v5974 = vpop.f32.mrf.mxu0
        %5975 = vdwg.mxu0
        %v5977 = vsel %vm2542, %v5806, 0
        %v5980 = vsel %vm2542, %v5809, 0
        %v5983 = vsel %vm2542, %v5884, 0
        %v5986 = vsel %vm2542, %v5887, 0
        %5988 = vmatprep.subr.mxu0 0.0
        %5989 = vmatpush1.xpose.msra.mxu0 0.0
        %5990 = vmatprep.subr.mxu0 0.0
        %5991 = vmatpush1.xpose.msra.mxu0 0.0
        %5992 = vmatprep.subr.mxu0 0.0
        %5993 = vmatpush1.xpose.msra.mxu0 0.0
        %5994 = vmatprep.subr.mxu0 0.0
        %5995 = vmatpush1.xpose.msra.mxu0 0.0
        %5996 = vmatprep.subr.mxu0 0.0
        %5997 = vmatpush1.xpose.msra.mxu0 0.0
        %5998 = vmatprep.subr.mxu0 0.0
        %5999 = vmatpush1.xpose.msra.mxu0 0.0
        %6000 = vmatprep.subr.mxu0 0.0
        %6001 = vmatpush1.xpose.msra.mxu0 0.0
        %6002 = vmatprep.subr.mxu0 0.0
        %6003 = vmatpush1.xpose.msra.mxu0 0.0
        %6004 = vmatprep.subr.mxu0 0.0
        %6005 = vmatpush1.xpose.msra.mxu0 0.0
        %6006 = vmatprep.subr.mxu0 0.0
        %6007 = vmatpush1.xpose.msra.mxu0 0.0
        %6008 = vmatprep.subr.mxu0 0.0
        %6009 = vmatpush1.xpose.msra.mxu0 0.0
        %6010 = vmatprep.subr.mxu0 0.0
        %6011 = vmatpush1.xpose.msra.mxu0 0.0
        %6012 = vmatprep.subr.mxu0 0.0
        %6013 = vmatpush1.xpose.msra.mxu0 0.0
        %6014 = vmatprep.subr.mxu0 0.0
        %6015 = vmatpush1.xpose.msra.mxu0 0.0
        %6016 = vmatprep.subr.mxu0 0.0
        %6017 = vmatpush1.xpose.msra.mxu0 %v5986
        %6018 = vmatprep.subr.mxu0 0.0
        %6019 = vmatpush1.xpose.msra.mxu0 %v5983
        %6020 = vmatprep.subr.mxu0 0.0
        %6021 = vmatpush2.xpose.msra.mxu0 0.0
        %6022 = vmatprep.subr.mxu0 0.0
        %6023 = vmatpush2.xpose.msra.mxu0 0.0
        %6024 = vmatprep.subr.mxu0 0.0
        %6025 = vmatpush2.xpose.msra.mxu0 0.0
        %6026 = vmatprep.subr.mxu0 0.0
        %6027 = vmatpush2.xpose.msra.mxu0 0.0
        %6028 = vmatprep.subr.mxu0 0.0
        %6029 = vmatpush2.xpose.msra.mxu0 0.0
        %6030 = vmatprep.subr.mxu0 0.0
        %6031 = vmatpush2.xpose.msra.mxu0 0.0
        %6032 = vmatprep.subr.mxu0 0.0
        %6033 = vmatpush2.xpose.msra.mxu0 0.0
        %6034 = vmatprep.subr.mxu0 0.0
        %6035 = vmatpush2.xpose.msra.mxu0 0.0
        %6036 = vmatprep.subr.mxu0 0.0
        %6037 = vmatpush2.xpose.msra.mxu0 0.0
        %6038 = vmatprep.subr.mxu0 0.0
        %6039 = vmatpush2.xpose.msra.mxu0 0.0
        %6040 = vmatprep.subr.mxu0 0.0
        %6041 = vmatpush2.xpose.msra.mxu0 0.0
        %6042 = vmatprep.subr.mxu0 0.0
        %6043 = vmatpush2.xpose.msra.mxu0 0.0
        %6044 = vmatprep.subr.mxu0 0.0
        %6045 = vmatpush2.xpose.msra.mxu0 0.0
        %6046 = vmatprep.subr.mxu0 0.0
        %6047 = vmatpush2.xpose.msra.mxu0 0.0
        %6048 = vmatprep.subr.mxu0 0.0
        %6049 = vmatpush2.xpose.msra.mxu0 0.0
        %6050 = vmatprep.subr.mxu0 0.0
        %6051 = vmatpush2.xpose.msra.mxu0 0.0
        %6052 = vmatprep.mubr.f32.mxu0 0.0
        %6053 = vmatmul.mubr.f32.gmra.mxu0 %v5977
        %v6054 = vpop.f32.mrf.mxu0
        %v6055 = vadd.f32 0.0, %v6054
        %v6056 = vpop.f32.mrf.mxu0
        %6057 = vmatprep.mubr.f32.mxu0 0.0
        %6058 = vmatmul.mubr.f32.gmra.mxu0 %v5980
        %v6059 = vpop.f32.mrf.mxu0
        %v6060 = vadd.f32 0.0, %v6059
        %v6061 = vpop.f32.mrf.mxu0
        %6062 = vdwg.mxu0
        %v6064 = vsel %vm2542, %v5814, 0
        %v6067 = vsel %vm2542, %v5817, 0
        %v6070 = vsel %vm2542, %v5892, 0
        %v6073 = vsel %vm2542, %v5895, 0
        %6075 = vmatprep.subr.mxu0 0.0
        %6076 = vmatpush1.xpose.msra.mxu0 0.0
        %6077 = vmatprep.subr.mxu0 0.0
        %6078 = vmatpush1.xpose.msra.mxu0 0.0
        %6079 = vmatprep.subr.mxu0 0.0
        %6080 = vmatpush1.xpose.msra.mxu0 0.0
        %6081 = vmatprep.subr.mxu0 0.0
        %6082 = vmatpush1.xpose.msra.mxu0 0.0
        %6083 = vmatprep.subr.mxu0 0.0
        %6084 = vmatpush1.xpose.msra.mxu0 0.0
        %6085 = vmatprep.subr.mxu0 0.0
        %6086 = vmatpush1.xpose.msra.mxu0 0.0
        %6087 = vmatprep.subr.mxu0 0.0
        %6088 = vmatpush1.xpose.msra.mxu0 0.0
        %6089 = vmatprep.subr.mxu0 0.0
        %6090 = vmatpush1.xpose.msra.mxu0 0.0
        %6091 = vmatprep.subr.mxu0 0.0
        %6092 = vmatpush1.xpose.msra.mxu0 0.0
        %6093 = vmatprep.subr.mxu0 0.0
        %6094 = vmatpush1.xpose.msra.mxu0 0.0
        %6095 = vmatprep.subr.mxu0 0.0
        %6096 = vmatpush1.xpose.msra.mxu0 0.0
        %6097 = vmatprep.subr.mxu0 0.0
        %6098 = vmatpush1.xpose.msra.mxu0 0.0
        %6099 = vmatprep.subr.mxu0 0.0
        %6100 = vmatpush1.xpose.msra.mxu0 0.0
        %6101 = vmatprep.subr.mxu0 0.0
        %6102 = vmatpush1.xpose.msra.mxu0 0.0
        %6103 = vmatprep.subr.mxu0 0.0
        %6104 = vmatpush1.xpose.msra.mxu0 %v6073
        %6105 = vmatprep.subr.mxu0 0.0
        %6106 = vmatpush1.xpose.msra.mxu0 %v6070
        %6107 = vmatprep.subr.mxu0 0.0
        %6108 = vmatpush2.xpose.msra.mxu0 0.0
        %6109 = vmatprep.subr.mxu0 0.0
        %6110 = vmatpush2.xpose.msra.mxu0 0.0
        %6111 = vmatprep.subr.mxu0 0.0
        %6112 = vmatpush2.xpose.msra.mxu0 0.0
        %6113 = vmatprep.subr.mxu0 0.0
        %6114 = vmatpush2.xpose.msra.mxu0 0.0
        %6115 = vmatprep.subr.mxu0 0.0
        %6116 = vmatpush2.xpose.msra.mxu0 0.0
        %6117 = vmatprep.subr.mxu0 0.0
        %6118 = vmatpush2.xpose.msra.mxu0 0.0
        %6119 = vmatprep.subr.mxu0 0.0
        %6120 = vmatpush2.xpose.msra.mxu0 0.0
        %6121 = vmatprep.subr.mxu0 0.0
        %6122 = vmatpush2.xpose.msra.mxu0 0.0
        %6123 = vmatprep.subr.mxu0 0.0
        %6124 = vmatpush2.xpose.msra.mxu0 0.0
        %6125 = vmatprep.subr.mxu0 0.0
        %6126 = vmatpush2.xpose.msra.mxu0 0.0
        %6127 = vmatprep.subr.mxu0 0.0
        %6128 = vmatpush2.xpose.msra.mxu0 0.0
        %6129 = vmatprep.subr.mxu0 0.0
        %6130 = vmatpush2.xpose.msra.mxu0 0.0
        %6131 = vmatprep.subr.mxu0 0.0
        %6132 = vmatpush2.xpose.msra.mxu0 0.0
        %6133 = vmatprep.subr.mxu0 0.0
        %6134 = vmatpush2.xpose.msra.mxu0 0.0
        %6135 = vmatprep.subr.mxu0 0.0
        %6136 = vmatpush2.xpose.msra.mxu0 0.0
        %6137 = vmatprep.subr.mxu0 0.0
        %6138 = vmatpush2.xpose.msra.mxu0 0.0
        %6139 = vmatprep.mubr.f32.mxu0 0.0
        %6140 = vmatmul.mubr.f32.gmra.mxu0 %v6064
        %v6141 = vpop.f32.mrf.mxu0
        %v6142 = vadd.f32 0.0, %v6141
        %v6143 = vpop.f32.mrf.mxu0
        %6144 = vmatprep.mubr.f32.mxu0 0.0
        %6145 = vmatmul.mubr.f32.gmra.mxu0 %v6067
        %v6146 = vpop.f32.mrf.mxu0
        %v6147 = vadd.f32 0.0, %v6146
        %v6148 = vpop.f32.mrf.mxu0
        %6149 = vdwg.mxu0
        %v6150 = vmul.f32 %v6055, 0.35355338
        %v6151 = vmul.f32 %v6060, 0.35355338
        %v6152 = vmul.f32 %v6142, 0.35355338
        %v6153 = vmul.f32 %v6147, 0.35355338
        %v6154 = vadd.f32 %v6150, %v2303
        %v6155 = vadd.f32 %v6151, %v2303
        %v6156 = vadd.f32 %v6152, %v2303
        %v6157 = vadd.f32 %v6153, %v2303
        %v6158 = vsel %vm2725, %v6154, -inf
        %6159 = vmax.xlane.f32.xlu0 %v6158
        %v6160 = vpop.xlane.xlu0 %6159
        %v6161 = vsel %vm2725, %v6155, -inf
        %6162 = vmax.xlane.f32.xlu0 %v6161
        %v6163 = vpop.xlane.xlu0 %6162
        %v6164 = vsel %vm2725, %v6156, -inf
        %6165 = vmax.xlane.f32.xlu0 %v6164
        %v6166 = vpop.xlane.xlu0 %6165
        %v6167 = vsel %vm2725, %v6157, -inf
        %6168 = vmax.xlane.f32.xlu0 %v6167
        %v6169 = vpop.xlane.xlu0 %6168
        %v6170 = vsub.f32 %v6154, %v6160
        %v6171 = vsub.f32 %v6155, %v6163
        %v6172 = vsub.f32 %v6156, %v6166
        %v6173 = vsub.f32 %v6157, %v6169
        %v6174 = vmul.f32 %v6170, 1.442695
        %v6175 = vpow.pop %v6174
        %v6176 = vmul.f32 %v6171, 1.442695
        %v6177 = vpow.pop %v6176
        %v6178 = vmul.f32 %v6172, 1.442695
        %v6179 = vpow.pop %v6178
        %v6180 = vmul.f32 %v6173, 1.442695
        %v6181 = vpow.pop %v6180
        %v6182 = vsel %vm2725, %v6175, 0.0
        %6183 = vadd.xlane.f32.xlu0 %v6182
        %v6184 = vpop.xlane.xlu0 %6183
        %v6185 = vsel %vm2725, %v6177, 0.0
        %6186 = vadd.xlane.f32.xlu0 %v6185
        %v6187 = vpop.xlane.xlu0 %6186
        %v6188 = vsel %vm2725, %v6179, 0.0
        %6189 = vadd.xlane.f32.xlu0 %v6188
        %v6190 = vpop.xlane.xlu0 %6189
        %v6191 = vsel %vm2725, %v6181, 0.0
        %6192 = vadd.xlane.f32.xlu0 %v6191
        %v6193 = vpop.xlane.xlu0 %6192
        %v6194 = vrcp.pop %v6184
        %v6195 = vrcp.pop %v6187
        %v6196 = vrcp.pop %v6190
        %v6197 = vrcp.pop %v6193
        %v6198 = vmul.f32 %v6175, %v6194
        %v6199 = vmul.f32 %v6177, %v6195
        %v6200 = vmul.f32 %v6179, %v6196
        %v6201 = vmul.f32 %v6181, %v6197
        %v6203 = vsel %vm2725, %v6198, 0
        %v6206 = vsel %vm2725, %v6199, 0
        %6208 = vmatprep.subr.mxu0 0.0
        %6209 = vmatpush1.msra.mxu0 0.0
        %6210 = vmatprep.subr.mxu0 0.0
        %6211 = vmatpush1.msra.mxu0 0.0
        %6212 = vmatprep.subr.mxu0 0.0
        %6213 = vmatpush1.msra.mxu0 0.0
        %6214 = vmatprep.subr.mxu0 0.0
        %6215 = vmatpush1.msra.mxu0 0.0
        %6216 = vmatprep.subr.mxu0 0.0
        %6217 = vmatpush1.msra.mxu0 0.0
        %6218 = vmatprep.subr.mxu0 0.0
        %6219 = vmatpush1.msra.mxu0 0.0
        %6220 = vmatprep.subr.mxu0 0.0
        %6221 = vmatpush1.msra.mxu0 0.0
        %6222 = vmatprep.subr.mxu0 0.0
        %6223 = vmatpush1.msra.mxu0 0.0
        %6224 = vmatprep.subr.mxu0 0.0
        %6225 = vmatpush1.msra.mxu0 0.0
        %6226 = vmatprep.subr.mxu0 0.0
        %6227 = vmatpush1.msra.mxu0 0.0
        %6228 = vmatprep.subr.mxu0 0.0
        %6229 = vmatpush1.msra.mxu0 0.0
        %6230 = vmatprep.subr.mxu0 0.0
        %6231 = vmatpush1.msra.mxu0 0.0
        %6232 = vmatprep.subr.mxu0 0.0
        %6233 = vmatpush1.msra.mxu0 0.0
        %6234 = vmatprep.subr.mxu0 0.0
        %6235 = vmatpush1.msra.mxu0 0.0
        %6236 = vmatprep.subr.mxu0 0.0
        %6237 = vmatpush1.msra.mxu0 %v5965
        %6238 = vmatprep.subr.mxu0 0.0
        %6239 = vmatpush1.msra.mxu0 %v5962
        %6240 = vmatprep.subr.mxu0 0.0
        %6241 = vmatpush2.msra.mxu0 0.0
        %6242 = vmatprep.subr.mxu0 0.0
        %6243 = vmatpush2.msra.mxu0 0.0
        %6244 = vmatprep.subr.mxu0 0.0
        %6245 = vmatpush2.msra.mxu0 0.0
        %6246 = vmatprep.subr.mxu0 0.0
        %6247 = vmatpush2.msra.mxu0 0.0
        %6248 = vmatprep.subr.mxu0 0.0
        %6249 = vmatpush2.msra.mxu0 0.0
        %6250 = vmatprep.subr.mxu0 0.0
        %6251 = vmatpush2.msra.mxu0 0.0
        %6252 = vmatprep.subr.mxu0 0.0
        %6253 = vmatpush2.msra.mxu0 0.0
        %6254 = vmatprep.subr.mxu0 0.0
        %6255 = vmatpush2.msra.mxu0 0.0
        %6256 = vmatprep.subr.mxu0 0.0
        %6257 = vmatpush2.msra.mxu0 0.0
        %6258 = vmatprep.subr.mxu0 0.0
        %6259 = vmatpush2.msra.mxu0 0.0
        %6260 = vmatprep.subr.mxu0 0.0
        %6261 = vmatpush2.msra.mxu0 0.0
        %6262 = vmatprep.subr.mxu0 0.0
        %6263 = vmatpush2.msra.mxu0 0.0
        %6264 = vmatprep.subr.mxu0 0.0
        %6265 = vmatpush2.msra.mxu0 0.0
        %6266 = vmatprep.subr.mxu0 0.0
        %6267 = vmatpush2.msra.mxu0 0.0
        %6268 = vmatprep.subr.mxu0 0.0
        %6269 = vmatpush2.msra.mxu0 0.0
        %6270 = vmatprep.subr.mxu0 0.0
        %6271 = vmatpush2.msra.mxu0 0.0
        %6272 = vmatprep.mubr.f32.mxu0 0.0
        %6273 = vmatmul.mubr.f32.gmra.mxu0 %v6203
        %v6274 = vpop.f32.mrf.mxu0
        %v6275 = vadd.f32 0.0, %v6274
        %v6276 = vpop.f32.mrf.mxu0
        %6277 = vmatprep.mubr.f32.mxu0 0.0
        %6278 = vmatmul.mubr.f32.gmra.mxu0 %v6206
        %v6279 = vpop.f32.mrf.mxu0
        %v6280 = vadd.f32 0.0, %v6279
        %v6281 = vpop.f32.mrf.mxu0
        %6282 = vdwg.mxu0
        %v6284 = vsel %vm2725, %v6200, 0
        %v6287 = vsel %vm2725, %v6201, 0
        %6289 = vmatprep.subr.mxu0 0.0
        %6290 = vmatpush1.msra.mxu0 0.0
        %6291 = vmatprep.subr.mxu0 0.0
        %6292 = vmatpush1.msra.mxu0 0.0
        %6293 = vmatprep.subr.mxu0 0.0
        %6294 = vmatpush1.msra.mxu0 0.0
        %6295 = vmatprep.subr.mxu0 0.0
        %6296 = vmatpush1.msra.mxu0 0.0
        %6297 = vmatprep.subr.mxu0 0.0
        %6298 = vmatpush1.msra.mxu0 0.0
        %6299 = vmatprep.subr.mxu0 0.0
        %6300 = vmatpush1.msra.mxu0 0.0
        %6301 = vmatprep.subr.mxu0 0.0
        %6302 = vmatpush1.msra.mxu0 0.0
        %6303 = vmatprep.subr.mxu0 0.0
        %6304 = vmatpush1.msra.mxu0 0.0
        %6305 = vmatprep.subr.mxu0 0.0
        %6306 = vmatpush1.msra.mxu0 0.0
        %6307 = vmatprep.subr.mxu0 0.0
        %6308 = vmatpush1.msra.mxu0 0.0
        %6309 = vmatprep.subr.mxu0 0.0
        %6310 = vmatpush1.msra.mxu0 0.0
        %6311 = vmatprep.subr.mxu0 0.0
        %6312 = vmatpush1.msra.mxu0 0.0
        %6313 = vmatprep.subr.mxu0 0.0
        %6314 = vmatpush1.msra.mxu0 0.0
        %6315 = vmatprep.subr.mxu0 0.0
        %6316 = vmatpush1.msra.mxu0 0.0
        %6317 = vmatprep.subr.mxu0 0.0
        %6318 = vmatpush1.msra.mxu0 %v5973
        %6319 = vmatprep.subr.mxu0 0.0
        %6320 = vmatpush1.msra.mxu0 %v5970
        %6321 = vmatprep.subr.mxu0 0.0
        %6322 = vmatpush2.msra.mxu0 0.0
        %6323 = vmatprep.subr.mxu0 0.0
        %6324 = vmatpush2.msra.mxu0 0.0
        %6325 = vmatprep.subr.mxu0 0.0
        %6326 = vmatpush2.msra.mxu0 0.0
        %6327 = vmatprep.subr.mxu0 0.0
        %6328 = vmatpush2.msra.mxu0 0.0
        %6329 = vmatprep.subr.mxu0 0.0
        %6330 = vmatpush2.msra.mxu0 0.0
        %6331 = vmatprep.subr.mxu0 0.0
        %6332 = vmatpush2.msra.mxu0 0.0
        %6333 = vmatprep.subr.mxu0 0.0
        %6334 = vmatpush2.msra.mxu0 0.0
        %6335 = vmatprep.subr.mxu0 0.0
        %6336 = vmatpush2.msra.mxu0 0.0
        %6337 = vmatprep.subr.mxu0 0.0
        %6338 = vmatpush2.msra.mxu0 0.0
        %6339 = vmatprep.subr.mxu0 0.0
        %6340 = vmatpush2.msra.mxu0 0.0
        %6341 = vmatprep.subr.mxu0 0.0
        %6342 = vmatpush2.msra.mxu0 0.0
        %6343 = vmatprep.subr.mxu0 0.0
        %6344 = vmatpush2.msra.mxu0 0.0
        %6345 = vmatprep.subr.mxu0 0.0
        %6346 = vmatpush2.msra.mxu0 0.0
        %6347 = vmatprep.subr.mxu0 0.0
        %6348 = vmatpush2.msra.mxu0 0.0
        %6349 = vmatprep.subr.mxu0 0.0
        %6350 = vmatpush2.msra.mxu0 0.0
        %6351 = vmatprep.subr.mxu0 0.0
        %6352 = vmatpush2.msra.mxu0 0.0
        %6353 = vmatprep.mubr.f32.mxu0 0.0
        %6354 = vmatmul.mubr.f32.gmra.mxu0 %v6284
        %v6355 = vpop.f32.mrf.mxu0
        %v6356 = vadd.f32 0.0, %v6355
        %v6357 = vpop.f32.mrf.mxu0
        %6358 = vmatprep.mubr.f32.mxu0 0.0
        %6359 = vmatmul.mubr.f32.gmra.mxu0 %v6287
        %v6360 = vpop.f32.mrf.mxu0
        %v6361 = vadd.f32 0.0, %v6360
        %v6362 = vpop.f32.mrf.mxu0
        %6363 = vdwg.mxu0
        %v6364 = vpack.c.bf16 %v6280, %v6275
        %v6365 = vpack.c.bf16 %v6361, %v6356
        %s6366 = scalar_lea.vmem %s705, 20 [#allocation13]
        %v6367 = vld [vmem:[%s6366] sm:$0xf]
        %v6369 = vsel %vm2542, %v6364, 0
        %v6372 = vsel %vm2542, %v6365, 0
        %v6375 = vsel %vm3567, %v6367, 0
        %6377 = vmatprep.subr.bf16.mxu0 0
        %6378 = vmatpush1.bf16.msra.mxu0 0
        %6379 = vmatprep.subr.bf16.mxu0 0
        %6380 = vmatpush1.bf16.msra.mxu0 0
        %6381 = vmatprep.subr.bf16.mxu0 0
        %6382 = vmatpush1.bf16.msra.mxu0 0
        %6383 = vmatprep.subr.bf16.mxu0 0
        %6384 = vmatpush1.bf16.msra.mxu0 0
        %6385 = vmatprep.subr.bf16.mxu0 0
        %6386 = vmatpush1.bf16.msra.mxu0 0
        %6387 = vmatprep.subr.bf16.mxu0 0
        %6388 = vmatpush1.bf16.msra.mxu0 0
        %6389 = vmatprep.subr.bf16.mxu0 0
        %6390 = vmatpush1.bf16.msra.mxu0 0
        %6391 = vmatprep.subr.bf16.mxu0 0
        %6392 = vmatpush1.bf16.msra.mxu0 %v6375
        %6393 = vmatprep.subr.bf16.mxu0 0
        %6394 = vmatpush2.bf16.msra.mxu0 0
        %6395 = vmatprep.subr.bf16.mxu0 0
        %6396 = vmatpush2.bf16.msra.mxu0 0
        %6397 = vmatprep.subr.bf16.mxu0 0
        %6398 = vmatpush2.bf16.msra.mxu0 0
        %6399 = vmatprep.subr.bf16.mxu0 0
        %6400 = vmatpush2.bf16.msra.mxu0 0
        %6401 = vmatprep.subr.bf16.mxu0 0
        %6402 = vmatpush2.bf16.msra.mxu0 0
        %6403 = vmatprep.subr.bf16.mxu0 0
        %6404 = vmatpush2.bf16.msra.mxu0 0
        %6405 = vmatprep.subr.bf16.mxu0 0
        %6406 = vmatpush2.bf16.msra.mxu0 0
        %6407 = vmatprep.subr.bf16.mxu0 0
        %6408 = vmatpush2.bf16.msra.mxu0 0
        %6409 = vmatprep.mubr.bf16.mxu0 0
        %6410 = vmatmul.mubr.bf16.gmra.mxu0 %v6369
        %v6411 = vpop.f32.mrf.mxu0
        %v6412 = vadd.f32 0.0, %v6411
        %v6413 = vpop.f32.mrf.mxu0
        %v6414 = vpop.f32.mrf.mxu0
        %v6415 = vadd.f32 0.0, %v6414
        %v6416 = vpop.f32.mrf.mxu0
        %6417 = vmatprep.mubr.bf16.mxu0 0
        %6418 = vmatmul.mubr.bf16.gmra.mxu0 %v6372
        %v6419 = vpop.f32.mrf.mxu0
        %v6420 = vadd.f32 0.0, %v6419
        %v6421 = vpop.f32.mrf.mxu0
        %v6422 = vpop.f32.mrf.mxu0
        %v6423 = vadd.f32 0.0, %v6422
        %v6424 = vpop.f32.mrf.mxu0
        %6425 = vdwg.mxu0
        %v6426 = vadd.f32 %v5738, %v6412
        %v6427 = vadd.f32 %v5739, %v6415
        %v6428 = vadd.f32 %v5740, %v6420
        %v6429 = vadd.f32 %v5741, %v6423
        %v6430 = vlaneseq
        %v6431 = vshrl.u32 %v6430, 7
        %v6432 = vsub.s32 0, %v6431
        %v6433 = vrot.slane %v2296, %v6432
        %v6434 = vadd.f32 %v6426, %v6433
        %v6435 = vadd.f32 %v6427, %v6433
        %v6436 = vadd.f32 %v6428, %v6433
        %v6437 = vadd.f32 %v6429, %v6433
        %v6438 = vadd.f32 %v2290, %v6434
        %v6439 = vadd.f32 %v2291, %v6435
        %v6440 = vadd.f32 %v2292, %v6436
        %v6441 = vadd.f32 %v2293, %v6437
        %v6442 = vsel %vm2332, %v6438, 0.0
        %6443 = vadd.xlane.f32.xlu0 %v6442
        %v6444 = vpop.xlane.xlu0 %6443
        %v6445 = vsel %vm2332, %v6439, 0.0
        %6446 = vadd.xlane.f32.xlu0 %v6445
        %v6447 = vpop.xlane.xlu0 %6446
        %v6448 = vsel %vm2332, %v6440, 0.0
        %6449 = vadd.xlane.f32.xlu0 %v6448
        %v6450 = vpop.xlane.xlu0 %6449
        %v6451 = vsel %vm2332, %v6441, 0.0
        %6452 = vadd.xlane.f32.xlu0 %v6451
        %v6453 = vpop.xlane.xlu0 %6452
        %v6454 = vrcp.pop 48.0
        %v6455 = vmul.f32 %v6444, %v6454
        %v6456 = vmul.f32 %v6447, %v6454
        %v6457 = vmul.f32 %v6450, %v6454
        %v6458 = vmul.f32 %v6453, %v6454
        %v6459 = vsub.f32 %v6438, %v6455
        %v6460 = vsub.f32 %v6439, %v6456
        %v6461 = vsub.f32 %v6440, %v6457
        %v6462 = vsub.f32 %v6441, %v6458
        %v6463 = vmul.f32 %v6459, %v6459
        %v6464 = vmul.f32 %v6460, %v6460
        %v6465 = vmul.f32 %v6461, %v6461
        %v6466 = vmul.f32 %v6462, %v6462
        %v6467 = vsel %vm2332, %v6463, 0.0
        %6468 = vadd.xlane.f32.xlu0 %v6467
        %v6469 = vpop.xlane.xlu0 %6468
        %v6470 = vsel %vm2332, %v6464, 0.0
        %6471 = vadd.xlane.f32.xlu0 %v6470
        %v6472 = vpop.xlane.xlu0 %6471
        %v6473 = vsel %vm2332, %v6465, 0.0
        %6474 = vadd.xlane.f32.xlu0 %v6473
        %v6475 = vpop.xlane.xlu0 %6474
        %v6476 = vsel %vm2332, %v6466, 0.0
        %6477 = vadd.xlane.f32.xlu0 %v6476
        %v6478 = vpop.xlane.xlu0 %6477
        %v6479 = vmul.f32 %v6469, %v6454
        %v6480 = vmul.f32 %v6472, %v6454
        %v6481 = vmul.f32 %v6475, %v6454
        %v6482 = vmul.f32 %v6478, %v6454
        %v6483 = vadd.f32 %v6479, 1e-05
        %v6484 = vadd.f32 %v6480, 1e-05
        %v6485 = vadd.f32 %v6481, 1e-05
        %v6486 = vadd.f32 %v6482, 1e-05
        %v6487 = vrsqrt.pop %v6483
        %v6488 = vrsqrt.pop %v6484
        %v6489 = vrsqrt.pop %v6485
        %v6490 = vrsqrt.pop %v6486
        %v6491 = vmul.f32 %v6459, %v6487
        %v6492 = vmul.f32 %v6460, %v6488
        %v6493 = vmul.f32 %v6461, %v6489
        %v6494 = vmul.f32 %v6462, %v6490
        %v6495 = vlaneseq
        %v6496 = vshrl.u32 %v6495, 7
        %v6497 = vsub.s32 1, %v6496
        %v6498 = vrot.slane %v2296, %v6497
        %v6499 = vmul.f32 %v6491, %v6498
        %v6500 = vmul.f32 %v6492, %v6498
        %v6501 = vmul.f32 %v6493, %v6498
        %v6502 = vmul.f32 %v6494, %v6498
        %v6503 = vlaneseq
        %v6504 = vshrl.u32 %v6503, 7
        %v6505 = vsub.s32 2, %v6504
        %v6506 = vrot.slane %v2296, %v6505
        %v6507 = vadd.f32 %v6499, %v6506
        %v6508 = vadd.f32 %v6500, %v6506
        %v6509 = vadd.f32 %v6501, %v6506
        %v6510 = vadd.f32 %v6502, %v6506
        %v6511 = vpack.c.bf16 %v6508, %v6507
        %v6512 = vpack.c.bf16 %v6510, %v6509
        %v6513 = vld [vmem:[%s714] sm:$0xff]
        %v6514 = vld [vmem:[%s714 + $0x8] sm:$0xff]
        %v6515 = vld [vmem:[%s714 + $0x10] sm:$0xff]
        %v6516 = vld [vmem:[%s714 + $0x18] sm:$0xff]
        %v6517 = vld [vmem:[%s714 + $0x20] sm:$0xff]
        %v6518 = vld [vmem:[%s714 + $0x28] sm:$0xff]
        %v6519 = vld [vmem:[%s714 + $0x30] sm:$0xff]
        %v6520 = vld [vmem:[%s714 + $0x38] sm:$0xff]
        %v6521 = vld [vmem:[%s714 + $0x40] sm:$0xff]
        %v6522 = vld [vmem:[%s714 + $0x48] sm:$0xff]
        %v6523 = vld [vmem:[%s714 + $0x50] sm:$0xff]
        %v6524 = vld [vmem:[%s714 + $0x58] sm:$0xff]
        %v6525 = vld [vmem:[%s714 + $0x60] sm:$0xff]
        %v6526 = vld [vmem:[%s714 + $0x68] sm:$0xff]
        %v6527 = vld [vmem:[%s714 + $0x70] sm:$0xff]
        %v6528 = vld [vmem:[%s714 + $0x78] sm:$0xff]
        %v6529 = vld [vmem:[%s714 + $0x80] sm:$0xff]
        %v6530 = vld [vmem:[%s714 + $0x88] sm:$0xff]
        %v6531 = vld [vmem:[%s714 + $0x90] sm:$0xff]
        %v6532 = vld [vmem:[%s714 + $0x98] sm:$0xff]
        %v6533 = vld [vmem:[%s714 + $0xa0] sm:$0xff]
        %v6534 = vld [vmem:[%s714 + $0xa8] sm:$0xff]
        %v6535 = vld [vmem:[%s714 + $0xb0] sm:$0xff]
        %v6536 = vld [vmem:[%s714 + $0xb8] sm:$0xff]
        %v6537 = vld [vmem:[%s714 + $0xc0] sm:$0xff]
        %v6538 = vld [vmem:[%s714 + $0xc8] sm:$0xff]
        %v6539 = vld [vmem:[%s714 + $0xd0] sm:$0xff]
        %v6540 = vld [vmem:[%s714 + $0xd8] sm:$0xff]
        %v6541 = vld [vmem:[%s714 + $0xe0] sm:$0xff]
        %v6542 = vld [vmem:[%s714 + $0xe8] sm:$0xff]
        %v6543 = vld [vmem:[%s714 + $0xf0] sm:$0xff]
        %v6544 = vld [vmem:[%s714 + $0xf8] sm:$0xff]
        %v6545 = vld [vmem:[%s714 + $0x100] sm:$0xff]
        %v6546 = vld [vmem:[%s714 + $0x108] sm:$0xff]
        %v6547 = vld [vmem:[%s714 + $0x110] sm:$0xff]
        %v6548 = vld [vmem:[%s714 + $0x118] sm:$0xff]
        %v6549 = vld [vmem:[%s714 + $0x120] sm:$0xff]
        %v6550 = vld [vmem:[%s714 + $0x128] sm:$0xff]
        %v6551 = vld [vmem:[%s714 + $0x130] sm:$0xff]
        %v6552 = vld [vmem:[%s714 + $0x138] sm:$0xff]
        %v6553 = vld [vmem:[%s714 + $0x140] sm:$0xff]
        %v6554 = vld [vmem:[%s714 + $0x148] sm:$0xff]
        %v6555 = vld [vmem:[%s714 + $0x150] sm:$0xff]
        %v6556 = vld [vmem:[%s714 + $0x158] sm:$0xff]
        %v6557 = vld [vmem:[%s714 + $0x160] sm:$0xff]
        %v6558 = vld [vmem:[%s714 + $0x168] sm:$0xff]
        %v6559 = vld [vmem:[%s714 + $0x170] sm:$0xff]
        %v6560 = vld [vmem:[%s714 + $0x178] sm:$0xff]
        %v6561 = vld [vmem:[%s825] sm:$0xff]
        %v6562 = vld [vmem:[%s825 + $0x8] sm:$0xff]
        %v6565 = vlaneseq
        %v6566 = vshrl.u32 %v6565, 7
        %v6567 = vsub.s32 0, %v6566
        %v6568 = vrot.slane %v6561, %v6567
        %v6569 = vlaneseq
        %v6570 = vshrl.u32 %v6569, 7
        %v6571 = vsub.s32 1, %v6570
        %v6572 = vrot.slane %v6561, %v6571
        %v6573 = vlaneseq
        %v6574 = vshrl.u32 %v6573, 7
        %v6575 = vsub.s32 2, %v6574
        %v6576 = vrot.slane %v6561, %v6575
        %v6577 = vlaneseq
        %v6578 = vshrl.u32 %v6577, 7
        %v6579 = vsub.s32 3, %v6578
        %v6580 = vrot.slane %v6561, %v6579
        %v6581 = vlaneseq
        %v6582 = vshrl.u32 %v6581, 7
        %v6583 = vsub.s32 4, %v6582
        %v6584 = vrot.slane %v6561, %v6583
        %v6585 = vlaneseq
        %v6586 = vshrl.u32 %v6585, 7
        %v6587 = vsub.s32 5, %v6586
        %v6588 = vrot.slane %v6561, %v6587
        %v6589 = vlaneseq
        %v6590 = vshrl.u32 %v6589, 7
        %v6591 = vsub.s32 6, %v6590
        %v6592 = vrot.slane %v6561, %v6591
        %v6593 = vlaneseq
        %v6594 = vshrl.u32 %v6593, 7
        %v6595 = vsub.s32 7, %v6594
        %v6596 = vrot.slane %v6561, %v6595
        %v6597 = vlaneseq
        %v6598 = vshrl.u32 %v6597, 7
        %v6599 = vsub.s32 0, %v6598
        %v6600 = vrot.slane %v6562, %v6599
        %v6601 = vlaneseq
        %v6602 = vshrl.u32 %v6601, 7
        %v6603 = vsub.s32 1, %v6602
        %v6604 = vrot.slane %v6562, %v6603
        %v6605 = vlaneseq
        %v6606 = vshrl.u32 %v6605, 7
        %v6607 = vsub.s32 2, %v6606
        %v6608 = vrot.slane %v6562, %v6607
        %v6609 = vlaneseq
        %v6610 = vshrl.u32 %v6609, 7
        %v6611 = vsub.s32 3, %v6610
        %v6612 = vrot.slane %v6562, %v6611
        %v6613 = vlaneseq
        %v6614 = vshrl.u32 %v6613, 7
        %v6615 = vsub.s32 4, %v6614
        %v6616 = vrot.slane %v6562, %v6615
        %v6617 = vlaneseq
        %v6618 = vshrl.u32 %v6617, 7
        %v6619 = vsub.s32 5, %v6618
        %v6620 = vrot.slane %v6562, %v6619
        %v6621 = vlaneseq
        %v6622 = vshrl.u32 %v6621, 7
        %v6623 = vsub.s32 6, %v6622
        %v6624 = vrot.slane %v6562, %v6623
        %v6625 = vlaneseq
        %v6626 = vshrl.u32 %v6625, 7
        %v6627 = vsub.s32 7, %v6626
        %v6628 = vrot.slane %v6562, %v6627
        %v6693 = vunpack.c.l.b16 %v6513
        %v6694 = vunpack.c.h.b16 %v6513
        %v6695 = vunpack.c.l.b16 %v6514
        %v6696 = vunpack.c.h.b16 %v6514
        %v6697 = vunpack.c.l.b16 %v6515
        %v6698 = vunpack.c.h.b16 %v6515
        %v6699 = vunpack.c.l.b16 %v6516
        %v6700 = vunpack.c.h.b16 %v6516
        %v6701 = vunpack.c.l.b16 %v6517
        %v6702 = vunpack.c.h.b16 %v6517
        %v6703 = vunpack.c.l.b16 %v6518
        %v6704 = vunpack.c.h.b16 %v6518
        %v6705 = vunpack.c.l.b16 %v6519
        %v6706 = vunpack.c.h.b16 %v6519
        %v6707 = vunpack.c.l.b16 %v6520
        %v6708 = vunpack.c.h.b16 %v6520
        %v6709 = vunpack.c.l.b16 %v6521
        %v6710 = vunpack.c.h.b16 %v6521
        %v6711 = vunpack.c.l.b16 %v6522
        %v6712 = vunpack.c.h.b16 %v6522
        %v6713 = vunpack.c.l.b16 %v6523
        %v6714 = vunpack.c.h.b16 %v6523
        %v6715 = vunpack.c.l.b16 %v6524
        %v6716 = vunpack.c.h.b16 %v6524
        %v6717 = vunpack.c.l.b16 %v6525
        %v6718 = vunpack.c.h.b16 %v6525
        %v6719 = vunpack.c.l.b16 %v6526
        %v6720 = vunpack.c.h.b16 %v6526
        %v6721 = vunpack.c.l.b16 %v6527
        %v6722 = vunpack.c.h.b16 %v6527
        %v6723 = vunpack.c.l.b16 %v6528
        %v6724 = vunpack.c.h.b16 %v6528
        %v6725 = vunpack.c.l.b16 %v6529
        %v6726 = vunpack.c.h.b16 %v6529
        %v6727 = vunpack.c.l.b16 %v6530
        %v6728 = vunpack.c.h.b16 %v6530
        %v6729 = vunpack.c.l.b16 %v6531
        %v6730 = vunpack.c.h.b16 %v6531
        %v6731 = vunpack.c.l.b16 %v6532
        %v6732 = vunpack.c.h.b16 %v6532
        %v6733 = vunpack.c.l.b16 %v6533
        %v6734 = vunpack.c.h.b16 %v6533
        %v6735 = vunpack.c.l.b16 %v6534
        %v6736 = vunpack.c.h.b16 %v6534
        %v6737 = vunpack.c.l.b16 %v6535
        %v6738 = vunpack.c.h.b16 %v6535
        %v6739 = vunpack.c.l.b16 %v6536
        %v6740 = vunpack.c.h.b16 %v6536
        %v6741 = vunpack.c.l.b16 %v6537
        %v6742 = vunpack.c.h.b16 %v6537
        %v6743 = vunpack.c.l.b16 %v6538
        %v6744 = vunpack.c.h.b16 %v6538
        %v6745 = vunpack.c.l.b16 %v6539
        %v6746 = vunpack.c.h.b16 %v6539
        %v6747 = vunpack.c.l.b16 %v6540
        %v6748 = vunpack.c.h.b16 %v6540
        %v6749 = vunpack.c.l.b16 %v6541
        %v6750 = vunpack.c.h.b16 %v6541
        %v6751 = vunpack.c.l.b16 %v6542
        %v6752 = vunpack.c.h.b16 %v6542
        %v6753 = vunpack.c.l.b16 %v6543
        %v6754 = vunpack.c.h.b16 %v6543
        %v6755 = vunpack.c.l.b16 %v6544
        %v6756 = vunpack.c.h.b16 %v6544
        %v6757 = vunpack.c.l.b16 %v6545
        %v6758 = vunpack.c.h.b16 %v6545
        %v6759 = vunpack.c.l.b16 %v6546
        %v6760 = vunpack.c.h.b16 %v6546
        %v6761 = vunpack.c.l.b16 %v6547
        %v6762 = vunpack.c.h.b16 %v6547
        %v6763 = vunpack.c.l.b16 %v6548
        %v6764 = vunpack.c.h.b16 %v6548
        %v6765 = vunpack.c.l.b16 %v6549
        %v6766 = vunpack.c.h.b16 %v6549
        %v6767 = vunpack.c.l.b16 %v6550
        %v6768 = vunpack.c.h.b16 %v6550
        %v6769 = vunpack.c.l.b16 %v6551
        %v6770 = vunpack.c.h.b16 %v6551
        %v6771 = vunpack.c.l.b16 %v6552
        %v6772 = vunpack.c.h.b16 %v6552
        %v6773 = vunpack.c.l.b16 %v6553
        %v6774 = vunpack.c.h.b16 %v6553
        %v6775 = vunpack.c.l.b16 %v6554
        %v6776 = vunpack.c.h.b16 %v6554
        %v6777 = vunpack.c.l.b16 %v6555
        %v6778 = vunpack.c.h.b16 %v6555
        %v6779 = vunpack.c.l.b16 %v6556
        %v6780 = vunpack.c.h.b16 %v6556
        %v6781 = vunpack.c.l.b16 %v6557
        %v6782 = vunpack.c.h.b16 %v6557
        %v6783 = vunpack.c.l.b16 %v6558
        %v6784 = vunpack.c.h.b16 %v6558
        %v6785 = vunpack.c.l.b16 %v6559
        %v6786 = vunpack.c.h.b16 %v6559
        %v6787 = vunpack.c.l.b16 %v6560
        %v6788 = vunpack.c.h.b16 %v6560
        %v6789 = vpack.c.b16 %v6709, %v6693
        %v6790 = vpack.c.b16 %v6710, %v6694
        %v6791 = vpack.c.b16 %v6711, %v6695
        %v6792 = vpack.c.b16 %v6712, %v6696
        %v6793 = vpack.c.b16 %v6713, %v6697
        %v6794 = vpack.c.b16 %v6714, %v6698
        %v6795 = vpack.c.b16 %v6715, %v6699
        %v6796 = vpack.c.b16 %v6716, %v6700
        %v6797 = vpack.c.b16 %v6717, %v6701
        %v6798 = vpack.c.b16 %v6718, %v6702
        %v6799 = vpack.c.b16 %v6719, %v6703
        %v6800 = vpack.c.b16 %v6720, %v6704
        %v6801 = vpack.c.b16 %v6721, %v6705
        %v6802 = vpack.c.b16 %v6722, %v6706
        %v6803 = vpack.c.b16 %v6723, %v6707
        %v6804 = vpack.c.b16 %v6724, %v6708
        %v6805 = vpack.c.b16 %v6741, %v6725
        %v6806 = vpack.c.b16 %v6742, %v6726
        %v6807 = vpack.c.b16 %v6743, %v6727
        %v6808 = vpack.c.b16 %v6744, %v6728
        %v6809 = vpack.c.b16 %v6745, %v6729
        %v6810 = vpack.c.b16 %v6746, %v6730
        %v6811 = vpack.c.b16 %v6747, %v6731
        %v6812 = vpack.c.b16 %v6748, %v6732
        %v6813 = vpack.c.b16 %v6749, %v6733
        %v6814 = vpack.c.b16 %v6750, %v6734
        %v6815 = vpack.c.b16 %v6751, %v6735
        %v6816 = vpack.c.b16 %v6752, %v6736
        %v6817 = vpack.c.b16 %v6753, %v6737
        %v6818 = vpack.c.b16 %v6754, %v6738
        %v6819 = vpack.c.b16 %v6755, %v6739
        %v6820 = vpack.c.b16 %v6756, %v6740
        %v6821 = vpack.c.b16 %v6773, %v6757
        %v6822 = vpack.c.b16 %v6774, %v6758
        %v6823 = vpack.c.b16 %v6775, %v6759
        %v6824 = vpack.c.b16 %v6776, %v6760
        %v6825 = vpack.c.b16 %v6777, %v6761
        %v6826 = vpack.c.b16 %v6778, %v6762
        %v6827 = vpack.c.b16 %v6779, %v6763
        %v6828 = vpack.c.b16 %v6780, %v6764
        %v6829 = vpack.c.b16 %v6781, %v6765
        %v6830 = vpack.c.b16 %v6782, %v6766
        %v6831 = vpack.c.b16 %v6783, %v6767
        %v6832 = vpack.c.b16 %v6784, %v6768
        %v6833 = vpack.c.b16 %v6785, %v6769
        %v6834 = vpack.c.b16 %v6786, %v6770
        %v6835 = vpack.c.b16 %v6787, %v6771
        %v6836 = vpack.c.b16 %v6788, %v6772
        %v6886 = vsel %vm2332, %v6511, 0
        %v6889 = vsel %vm2332, %v6512, 0
        %6891 = vmatprep.subr.bf16.mxu0 0
        %6892 = vmatpush1.bf16.msra.mxu0 0
        %6893 = vmatprep.subr.bf16.mxu0 0
        %6894 = vmatpush1.bf16.msra.mxu0 0
        %6895 = vmatprep.subr.bf16.mxu0 0
        %6896 = vmatpush1.bf16.msra.mxu0 0
        %6897 = vmatprep.subr.bf16.mxu0 0
        %6898 = vmatpush1.bf16.msra.mxu0 0
        %6899 = vmatprep.subr.bf16.mxu0 0
        %6900 = vmatpush1.bf16.msra.mxu0 0
        %6901 = vmatprep.subr.bf16.mxu0 %v6822
        %6902 = vmatpush1.bf16.msra.mxu0 %v6821
        %6903 = vmatprep.subr.bf16.mxu0 %v6806
        %6904 = vmatpush1.bf16.msra.mxu0 %v6805
        %6905 = vmatprep.subr.bf16.mxu0 %v6790
        %6906 = vmatpush1.bf16.msra.mxu0 %v6789
        %6907 = vmatprep.subr.bf16.mxu0 0
        %6908 = vmatpush2.bf16.msra.mxu0 0
        %6909 = vmatprep.subr.bf16.mxu0 0
        %6910 = vmatpush2.bf16.msra.mxu0 0
        %6911 = vmatprep.subr.bf16.mxu0 0
        %6912 = vmatpush2.bf16.msra.mxu0 0
        %6913 = vmatprep.subr.bf16.mxu0 0
        %6914 = vmatpush2.bf16.msra.mxu0 0
        %6915 = vmatprep.subr.bf16.mxu0 0
        %6916 = vmatpush2.bf16.msra.mxu0 0
        %6917 = vmatprep.subr.bf16.mxu0 0
        %6918 = vmatpush2.bf16.msra.mxu0 0
        %6919 = vmatprep.subr.bf16.mxu0 0
        %6920 = vmatpush2.bf16.msra.mxu0 0
        %6921 = vmatprep.subr.bf16.mxu0 0
        %6922 = vmatpush2.bf16.msra.mxu0 0
        %6923 = vmatprep.mubr.bf16.mxu0 0
        %6924 = vmatmul.mubr.bf16.gmra.mxu0 %v6886
        %v6925 = vpop.f32.mrf.mxu0
        %v6926 = vadd.f32 %v6568, %v6925
        %v6927 = vpop.f32.mrf.mxu0
        %v6928 = vadd.f32 %v6572, %v6927
        %v6929 = vpop.f32.mrf.mxu0
        %v6930 = vadd.f32 %v6568, %v6929
        %v6931 = vpop.f32.mrf.mxu0
        %v6932 = vadd.f32 %v6572, %v6931
        %6933 = vmatprep.mubr.bf16.mxu0 0
        %6934 = vmatmul.mubr.bf16.gmra.mxu0 %v6889
        %v6935 = vpop.f32.mrf.mxu0
        %v6936 = vadd.f32 %v6568, %v6935
        %v6937 = vpop.f32.mrf.mxu0
        %v6938 = vadd.f32 %v6572, %v6937
        %v6939 = vpop.f32.mrf.mxu0
        %v6940 = vadd.f32 %v6568, %v6939
        %v6941 = vpop.f32.mrf.mxu0
        %v6942 = vadd.f32 %v6572, %v6941
        %6943 = vdwg.mxu0
        %6944 = vmatprep.subr.bf16.mxu0 0
        %6945 = vmatpush1.bf16.msra.mxu0 0
        %6946 = vmatprep.subr.bf16.mxu0 0
        %6947 = vmatpush1.bf16.msra.mxu0 0
        %6948 = vmatprep.subr.bf16.mxu0 0
        %6949 = vmatpush1.bf16.msra.mxu0 0
        %6950 = vmatprep.subr.bf16.mxu0 0
        %6951 = vmatpush1.bf16.msra.mxu0 0
        %6952 = vmatprep.subr.bf16.mxu0 0
        %6953 = vmatpush1.bf16.msra.mxu0 0
        %6954 = vmatprep.subr.bf16.mxu0 %v6824
        %6955 = vmatpush1.bf16.msra.mxu0 %v6823
        %6956 = vmatprep.subr.bf16.mxu0 %v6808
        %6957 = vmatpush1.bf16.msra.mxu0 %v6807
        %6958 = vmatprep.subr.bf16.mxu0 %v6792
        %6959 = vmatpush1.bf16.msra.mxu0 %v6791
        %6960 = vmatprep.subr.bf16.mxu0 0
        %6961 = vmatpush2.bf16.msra.mxu0 0
        %6962 = vmatprep.subr.bf16.mxu0 0
        %6963 = vmatpush2.bf16.msra.mxu0 0
        %6964 = vmatprep.subr.bf16.mxu0 0
        %6965 = vmatpush2.bf16.msra.mxu0 0
        %6966 = vmatprep.subr.bf16.mxu0 0
        %6967 = vmatpush2.bf16.msra.mxu0 0
        %6968 = vmatprep.subr.bf16.mxu0 0
        %6969 = vmatpush2.bf16.msra.mxu0 0
        %6970 = vmatprep.subr.bf16.mxu0 0
        %6971 = vmatpush2.bf16.msra.mxu0 0
        %6972 = vmatprep.subr.bf16.mxu0 0
        %6973 = vmatpush2.bf16.msra.mxu0 0
        %6974 = vmatprep.subr.bf16.mxu0 0
        %6975 = vmatpush2.bf16.msra.mxu0 0
        %6976 = vmatprep.mubr.bf16.mxu0 0
        %6977 = vmatmul.mubr.bf16.gmra.mxu0 %v6886
        %v6978 = vpop.f32.mrf.mxu0
        %v6979 = vadd.f32 %v6576, %v6978
        %v6980 = vpop.f32.mrf.mxu0
        %v6981 = vadd.f32 %v6580, %v6980
        %v6982 = vpop.f32.mrf.mxu0
        %v6983 = vadd.f32 %v6576, %v6982
        %v6984 = vpop.f32.mrf.mxu0
        %v6985 = vadd.f32 %v6580, %v6984
        %6986 = vmatprep.mubr.bf16.mxu0 0
        %6987 = vmatmul.mubr.bf16.gmra.mxu0 %v6889
        %v6988 = vpop.f32.mrf.mxu0
        %v6989 = vadd.f32 %v6576, %v6988
        %v6990 = vpop.f32.mrf.mxu0
        %v6991 = vadd.f32 %v6580, %v6990
        %v6992 = vpop.f32.mrf.mxu0
        %v6993 = vadd.f32 %v6576, %v6992
        %v6994 = vpop.f32.mrf.mxu0
        %v6995 = vadd.f32 %v6580, %v6994
        %6996 = vdwg.mxu0
        %6997 = vmatprep.subr.bf16.mxu0 0
        %6998 = vmatpush1.bf16.msra.mxu0 0
        %6999 = vmatprep.subr.bf16.mxu0 0
        %7000 = vmatpush1.bf16.msra.mxu0 0
        %7001 = vmatprep.subr.bf16.mxu0 0
        %7002 = vmatpush1.bf16.msra.mxu0 0
        %7003 = vmatprep.subr.bf16.mxu0 0
        %7004 = vmatpush1.bf16.msra.mxu0 0
        %7005 = vmatprep.subr.bf16.mxu0 0
        %7006 = vmatpush1.bf16.msra.mxu0 0
        %7007 = vmatprep.subr.bf16.mxu0 %v6826
        %7008 = vmatpush1.bf16.msra.mxu0 %v6825
        %7009 = vmatprep.subr.bf16.mxu0 %v6810
        %7010 = vmatpush1.bf16.msra.mxu0 %v6809
        %7011 = vmatprep.subr.bf16.mxu0 %v6794
        %7012 = vmatpush1.bf16.msra.mxu0 %v6793
        %7013 = vmatprep.subr.bf16.mxu0 0
        %7014 = vmatpush2.bf16.msra.mxu0 0
        %7015 = vmatprep.subr.bf16.mxu0 0
        %7016 = vmatpush2.bf16.msra.mxu0 0
        %7017 = vmatprep.subr.bf16.mxu0 0
        %7018 = vmatpush2.bf16.msra.mxu0 0
        %7019 = vmatprep.subr.bf16.mxu0 0
        %7020 = vmatpush2.bf16.msra.mxu0 0
        %7021 = vmatprep.subr.bf16.mxu0 0
        %7022 = vmatpush2.bf16.msra.mxu0 0
        %7023 = vmatprep.subr.bf16.mxu0 0
        %7024 = vmatpush2.bf16.msra.mxu0 0
        %7025 = vmatprep.subr.bf16.mxu0 0
        %7026 = vmatpush2.bf16.msra.mxu0 0
        %7027 = vmatprep.subr.bf16.mxu0 0
        %7028 = vmatpush2.bf16.msra.mxu0 0
        %7029 = vmatprep.mubr.bf16.mxu0 0
        %7030 = vmatmul.mubr.bf16.gmra.mxu0 %v6886
        %v7031 = vpop.f32.mrf.mxu0
        %v7032 = vadd.f32 %v6584, %v7031
        %v7033 = vpop.f32.mrf.mxu0
        %v7034 = vadd.f32 %v6588, %v7033
        %v7035 = vpop.f32.mrf.mxu0
        %v7036 = vadd.f32 %v6584, %v7035
        %v7037 = vpop.f32.mrf.mxu0
        %v7038 = vadd.f32 %v6588, %v7037
        %7039 = vmatprep.mubr.bf16.mxu0 0
        %7040 = vmatmul.mubr.bf16.gmra.mxu0 %v6889
        %v7041 = vpop.f32.mrf.mxu0
        %v7042 = vadd.f32 %v6584, %v7041
        %v7043 = vpop.f32.mrf.mxu0
        %v7044 = vadd.f32 %v6588, %v7043
        %v7045 = vpop.f32.mrf.mxu0
        %v7046 = vadd.f32 %v6584, %v7045
        %v7047 = vpop.f32.mrf.mxu0
        %v7048 = vadd.f32 %v6588, %v7047
        %7049 = vdwg.mxu0
        %7050 = vmatprep.subr.bf16.mxu0 0
        %7051 = vmatpush1.bf16.msra.mxu0 0
        %7052 = vmatprep.subr.bf16.mxu0 0
        %7053 = vmatpush1.bf16.msra.mxu0 0
        %7054 = vmatprep.subr.bf16.mxu0 0
        %7055 = vmatpush1.bf16.msra.mxu0 0
        %7056 = vmatprep.subr.bf16.mxu0 0
        %7057 = vmatpush1.bf16.msra.mxu0 0
        %7058 = vmatprep.subr.bf16.mxu0 0
        %7059 = vmatpush1.bf16.msra.mxu0 0
        %7060 = vmatprep.subr.bf16.mxu0 %v6828
        %7061 = vmatpush1.bf16.msra.mxu0 %v6827
        %7062 = vmatprep.subr.bf16.mxu0 %v6812
        %7063 = vmatpush1.bf16.msra.mxu0 %v6811
        %7064 = vmatprep.subr.bf16.mxu0 %v6796
        %7065 = vmatpush1.bf16.msra.mxu0 %v6795
        %7066 = vmatprep.subr.bf16.mxu0 0
        %7067 = vmatpush2.bf16.msra.mxu0 0
        %7068 = vmatprep.subr.bf16.mxu0 0
        %7069 = vmatpush2.bf16.msra.mxu0 0
        %7070 = vmatprep.subr.bf16.mxu0 0
        %7071 = vmatpush2.bf16.msra.mxu0 0
        %7072 = vmatprep.subr.bf16.mxu0 0
        %7073 = vmatpush2.bf16.msra.mxu0 0
        %7074 = vmatprep.subr.bf16.mxu0 0
        %7075 = vmatpush2.bf16.msra.mxu0 0
        %7076 = vmatprep.subr.bf16.mxu0 0
        %7077 = vmatpush2.bf16.msra.mxu0 0
        %7078 = vmatprep.subr.bf16.mxu0 0
        %7079 = vmatpush2.bf16.msra.mxu0 0
        %7080 = vmatprep.subr.bf16.mxu0 0
        %7081 = vmatpush2.bf16.msra.mxu0 0
        %7082 = vmatprep.mubr.bf16.mxu0 0
        %7083 = vmatmul.mubr.bf16.gmra.mxu0 %v6886
        %v7084 = vpop.f32.mrf.mxu0
        %v7085 = vadd.f32 %v6592, %v7084
        %v7086 = vpop.f32.mrf.mxu0
        %v7087 = vadd.f32 %v6596, %v7086
        %v7088 = vpop.f32.mrf.mxu0
        %v7089 = vadd.f32 %v6592, %v7088
        %v7090 = vpop.f32.mrf.mxu0
        %v7091 = vadd.f32 %v6596, %v7090
        %7092 = vmatprep.mubr.bf16.mxu0 0
        %7093 = vmatmul.mubr.bf16.gmra.mxu0 %v6889
        %v7094 = vpop.f32.mrf.mxu0
        %v7095 = vadd.f32 %v6592, %v7094
        %v7096 = vpop.f32.mrf.mxu0
        %v7097 = vadd.f32 %v6596, %v7096
        %v7098 = vpop.f32.mrf.mxu0
        %v7099 = vadd.f32 %v6592, %v7098
        %v7100 = vpop.f32.mrf.mxu0
        %v7101 = vadd.f32 %v6596, %v7100
        %7102 = vdwg.mxu0
        %7103 = vmatprep.subr.bf16.mxu0 0
        %7104 = vmatpush1.bf16.msra.mxu0 0
        %7105 = vmatprep.subr.bf16.mxu0 0
        %7106 = vmatpush1.bf16.msra.mxu0 0
        %7107 = vmatprep.subr.bf16.mxu0 0
        %7108 = vmatpush1.bf16.msra.mxu0 0
        %7109 = vmatprep.subr.bf16.mxu0 0
        %7110 = vmatpush1.bf16.msra.mxu0 0
        %7111 = vmatprep.subr.bf16.mxu0 0
        %7112 = vmatpush1.bf16.msra.mxu0 0
        %7113 = vmatprep.subr.bf16.mxu0 %v6830
        %7114 = vmatpush1.bf16.msra.mxu0 %v6829
        %7115 = vmatprep.subr.bf16.mxu0 %v6814
        %7116 = vmatpush1.bf16.msra.mxu0 %v6813
        %7117 = vmatprep.subr.bf16.mxu0 %v6798
        %7118 = vmatpush1.bf16.msra.mxu0 %v6797
        %7119 = vmatprep.subr.bf16.mxu0 0
        %7120 = vmatpush2.bf16.msra.mxu0 0
        %7121 = vmatprep.subr.bf16.mxu0 0
        %7122 = vmatpush2.bf16.msra.mxu0 0
        %7123 = vmatprep.subr.bf16.mxu0 0
        %7124 = vmatpush2.bf16.msra.mxu0 0
        %7125 = vmatprep.subr.bf16.mxu0 0
        %7126 = vmatpush2.bf16.msra.mxu0 0
        %7127 = vmatprep.subr.bf16.mxu0 0
        %7128 = vmatpush2.bf16.msra.mxu0 0
        %7129 = vmatprep.subr.bf16.mxu0 0
        %7130 = vmatpush2.bf16.msra.mxu0 0
        %7131 = vmatprep.subr.bf16.mxu0 0
        %7132 = vmatpush2.bf16.msra.mxu0 0
        %7133 = vmatprep.subr.bf16.mxu0 0
        %7134 = vmatpush2.bf16.msra.mxu0 0
        %7135 = vmatprep.mubr.bf16.mxu0 0
        %7136 = vmatmul.mubr.bf16.gmra.mxu0 %v6886
        %v7137 = vpop.f32.mrf.mxu0
        %v7138 = vadd.f32 %v6600, %v7137
        %v7139 = vpop.f32.mrf.mxu0
        %v7140 = vadd.f32 %v6604, %v7139
        %v7141 = vpop.f32.mrf.mxu0
        %v7142 = vadd.f32 %v6600, %v7141
        %v7143 = vpop.f32.mrf.mxu0
        %v7144 = vadd.f32 %v6604, %v7143
        %7145 = vmatprep.mubr.bf16.mxu0 0
        %7146 = vmatmul.mubr.bf16.gmra.mxu0 %v6889
        %v7147 = vpop.f32.mrf.mxu0
        %v7148 = vadd.f32 %v6600, %v7147
        %v7149 = vpop.f32.mrf.mxu0
        %v7150 = vadd.f32 %v6604, %v7149
        %v7151 = vpop.f32.mrf.mxu0
        %v7152 = vadd.f32 %v6600, %v7151
        %v7153 = vpop.f32.mrf.mxu0
        %v7154 = vadd.f32 %v6604, %v7153
        %7155 = vdwg.mxu0
        %7156 = vmatprep.subr.bf16.mxu0 0
        %7157 = vmatpush1.bf16.msra.mxu0 0
        %7158 = vmatprep.subr.bf16.mxu0 0
        %7159 = vmatpush1.bf16.msra.mxu0 0
        %7160 = vmatprep.subr.bf16.mxu0 0
        %7161 = vmatpush1.bf16.msra.mxu0 0
        %7162 = vmatprep.subr.bf16.mxu0 0
        %7163 = vmatpush1.bf16.msra.mxu0 0
        %7164 = vmatprep.subr.bf16.mxu0 0
        %7165 = vmatpush1.bf16.msra.mxu0 0
        %7166 = vmatprep.subr.bf16.mxu0 %v6832
        %7167 = vmatpush1.bf16.msra.mxu0 %v6831
        %7168 = vmatprep.subr.bf16.mxu0 %v6816
        %7169 = vmatpush1.bf16.msra.mxu0 %v6815
        %7170 = vmatprep.subr.bf16.mxu0 %v6800
        %7171 = vmatpush1.bf16.msra.mxu0 %v6799
        %7172 = vmatprep.subr.bf16.mxu0 0
        %7173 = vmatpush2.bf16.msra.mxu0 0
        %7174 = vmatprep.subr.bf16.mxu0 0
        %7175 = vmatpush2.bf16.msra.mxu0 0
        %7176 = vmatprep.subr.bf16.mxu0 0
        %7177 = vmatpush2.bf16.msra.mxu0 0
        %7178 = vmatprep.subr.bf16.mxu0 0
        %7179 = vmatpush2.bf16.msra.mxu0 0
        %7180 = vmatprep.subr.bf16.mxu0 0
        %7181 = vmatpush2.bf16.msra.mxu0 0
        %7182 = vmatprep.subr.bf16.mxu0 0
        %7183 = vmatpush2.bf16.msra.mxu0 0
        %7184 = vmatprep.subr.bf16.mxu0 0
        %7185 = vmatpush2.bf16.msra.mxu0 0
        %7186 = vmatprep.subr.bf16.mxu0 0
        %7187 = vmatpush2.bf16.msra.mxu0 0
        %7188 = vmatprep.mubr.bf16.mxu0 0
        %7189 = vmatmul.mubr.bf16.gmra.mxu0 %v6886
        %v7190 = vpop.f32.mrf.mxu0
        %v7191 = vadd.f32 %v6608, %v7190
        %v7192 = vpop.f32.mrf.mxu0
        %v7193 = vadd.f32 %v6612, %v7192
        %v7194 = vpop.f32.mrf.mxu0
        %v7195 = vadd.f32 %v6608, %v7194
        %v7196 = vpop.f32.mrf.mxu0
        %v7197 = vadd.f32 %v6612, %v7196
        %7198 = vmatprep.mubr.bf16.mxu0 0
        %7199 = vmatmul.mubr.bf16.gmra.mxu0 %v6889
        %v7200 = vpop.f32.mrf.mxu0
        %v7201 = vadd.f32 %v6608, %v7200
        %v7202 = vpop.f32.mrf.mxu0
        %v7203 = vadd.f32 %v6612, %v7202
        %v7204 = vpop.f32.mrf.mxu0
        %v7205 = vadd.f32 %v6608, %v7204
        %v7206 = vpop.f32.mrf.mxu0
        %v7207 = vadd.f32 %v6612, %v7206
        %7208 = vdwg.mxu0
        %7209 = vmatprep.subr.bf16.mxu0 0
        %7210 = vmatpush1.bf16.msra.mxu0 0
        %7211 = vmatprep.subr.bf16.mxu0 0
        %7212 = vmatpush1.bf16.msra.mxu0 0
        %7213 = vmatprep.subr.bf16.mxu0 0
        %7214 = vmatpush1.bf16.msra.mxu0 0
        %7215 = vmatprep.subr.bf16.mxu0 0
        %7216 = vmatpush1.bf16.msra.mxu0 0
        %7217 = vmatprep.subr.bf16.mxu0 0
        %7218 = vmatpush1.bf16.msra.mxu0 0
        %7219 = vmatprep.subr.bf16.mxu0 %v6834
        %7220 = vmatpush1.bf16.msra.mxu0 %v6833
        %7221 = vmatprep.subr.bf16.mxu0 %v6818
        %7222 = vmatpush1.bf16.msra.mxu0 %v6817
        %7223 = vmatprep.subr.bf16.mxu0 %v6802
        %7224 = vmatpush1.bf16.msra.mxu0 %v6801
        %7225 = vmatprep.subr.bf16.mxu0 0
        %7226 = vmatpush2.bf16.msra.mxu0 0
        %7227 = vmatprep.subr.bf16.mxu0 0
        %7228 = vmatpush2.bf16.msra.mxu0 0
        %7229 = vmatprep.subr.bf16.mxu0 0
        %7230 = vmatpush2.bf16.msra.mxu0 0
        %7231 = vmatprep.subr.bf16.mxu0 0
        %7232 = vmatpush2.bf16.msra.mxu0 0
        %7233 = vmatprep.subr.bf16.mxu0 0
        %7234 = vmatpush2.bf16.msra.mxu0 0
        %7235 = vmatprep.subr.bf16.mxu0 0
        %7236 = vmatpush2.bf16.msra.mxu0 0
        %7237 = vmatprep.subr.bf16.mxu0 0
        %7238 = vmatpush2.bf16.msra.mxu0 0
        %7239 = vmatprep.subr.bf16.mxu0 0
        %7240 = vmatpush2.bf16.msra.mxu0 0
        %7241 = vmatprep.mubr.bf16.mxu0 0
        %7242 = vmatmul.mubr.bf16.gmra.mxu0 %v6886
        %v7243 = vpop.f32.mrf.mxu0
        %v7244 = vadd.f32 %v6616, %v7243
        %v7245 = vpop.f32.mrf.mxu0
        %v7246 = vadd.f32 %v6620, %v7245
        %v7247 = vpop.f32.mrf.mxu0
        %v7248 = vadd.f32 %v6616, %v7247
        %v7249 = vpop.f32.mrf.mxu0
        %v7250 = vadd.f32 %v6620, %v7249
        %7251 = vmatprep.mubr.bf16.mxu0 0
        %7252 = vmatmul.mubr.bf16.gmra.mxu0 %v6889
        %v7253 = vpop.f32.mrf.mxu0
        %v7254 = vadd.f32 %v6616, %v7253
        %v7255 = vpop.f32.mrf.mxu0
        %v7256 = vadd.f32 %v6620, %v7255
        %v7257 = vpop.f32.mrf.mxu0
        %v7258 = vadd.f32 %v6616, %v7257
        %v7259 = vpop.f32.mrf.mxu0
        %v7260 = vadd.f32 %v6620, %v7259
        %7261 = vdwg.mxu0
        %7262 = vmatprep.subr.bf16.mxu0 0
        %7263 = vmatpush1.bf16.msra.mxu0 0
        %7264 = vmatprep.subr.bf16.mxu0 0
        %7265 = vmatpush1.bf16.msra.mxu0 0
        %7266 = vmatprep.subr.bf16.mxu0 0
        %7267 = vmatpush1.bf16.msra.mxu0 0
        %7268 = vmatprep.subr.bf16.mxu0 0
        %7269 = vmatpush1.bf16.msra.mxu0 0
        %7270 = vmatprep.subr.bf16.mxu0 0
        %7271 = vmatpush1.bf16.msra.mxu0 0
        %7272 = vmatprep.subr.bf16.mxu0 %v6836
        %7273 = vmatpush1.bf16.msra.mxu0 %v6835
        %7274 = vmatprep.subr.bf16.mxu0 %v6820
        %7275 = vmatpush1.bf16.msra.mxu0 %v6819
        %7276 = vmatprep.subr.bf16.mxu0 %v6804
        %7277 = vmatpush1.bf16.msra.mxu0 %v6803
        %7278 = vmatprep.subr.bf16.mxu0 0
        %7279 = vmatpush2.bf16.msra.mxu0 0
        %7280 = vmatprep.subr.bf16.mxu0 0
        %7281 = vmatpush2.bf16.msra.mxu0 0
        %7282 = vmatprep.subr.bf16.mxu0 0
        %7283 = vmatpush2.bf16.msra.mxu0 0
        %7284 = vmatprep.subr.bf16.mxu0 0
        %7285 = vmatpush2.bf16.msra.mxu0 0
        %7286 = vmatprep.subr.bf16.mxu0 0
        %7287 = vmatpush2.bf16.msra.mxu0 0
        %7288 = vmatprep.subr.bf16.mxu0 0
        %7289 = vmatpush2.bf16.msra.mxu0 0
        %7290 = vmatprep.subr.bf16.mxu0 0
        %7291 = vmatpush2.bf16.msra.mxu0 0
        %7292 = vmatprep.subr.bf16.mxu0 0
        %7293 = vmatpush2.bf16.msra.mxu0 0
        %7294 = vmatprep.mubr.bf16.mxu0 0
        %7295 = vmatmul.mubr.bf16.gmra.mxu0 %v6886
        %v7296 = vpop.f32.mrf.mxu0
        %v7297 = vadd.f32 %v6624, %v7296
        %v7298 = vpop.f32.mrf.mxu0
        %v7299 = vadd.f32 %v6628, %v7298
        %v7300 = vpop.f32.mrf.mxu0
        %v7301 = vadd.f32 %v6624, %v7300
        %v7302 = vpop.f32.mrf.mxu0
        %v7303 = vadd.f32 %v6628, %v7302
        %7304 = vmatprep.mubr.bf16.mxu0 0
        %7305 = vmatmul.mubr.bf16.gmra.mxu0 %v6889
        %v7306 = vpop.f32.mrf.mxu0
        %v7307 = vadd.f32 %v6624, %v7306
        %v7308 = vpop.f32.mrf.mxu0
        %v7309 = vadd.f32 %v6628, %v7308
        %v7310 = vpop.f32.mrf.mxu0
        %v7311 = vadd.f32 %v6624, %v7310
        %v7312 = vpop.f32.mrf.mxu0
        %v7313 = vadd.f32 %v6628, %v7312
        %7314 = vdwg.mxu0
        %v7315 = vmax.f32 %v6926, 0.0
        %v7316 = vmax.f32 %v6928, 0.0
        %v7317 = vmax.f32 %v6979, 0.0
        %v7318 = vmax.f32 %v6981, 0.0
        %v7319 = vmax.f32 %v7032, 0.0
        %v7320 = vmax.f32 %v7034, 0.0
        %v7321 = vmax.f32 %v7085, 0.0
        %v7322 = vmax.f32 %v7087, 0.0
        %v7323 = vmax.f32 %v7138, 0.0
        %v7324 = vmax.f32 %v7140, 0.0
        %v7325 = vmax.f32 %v7191, 0.0
        %v7326 = vmax.f32 %v7193, 0.0
        %v7327 = vmax.f32 %v7244, 0.0
        %v7328 = vmax.f32 %v7246, 0.0
        %v7329 = vmax.f32 %v7297, 0.0
        %v7330 = vmax.f32 %v7299, 0.0
        %v7331 = vmax.f32 %v6930, 0.0
        %v7332 = vmax.f32 %v6932, 0.0
        %v7333 = vmax.f32 %v6983, 0.0
        %v7334 = vmax.f32 %v6985, 0.0
        %v7335 = vmax.f32 %v7036, 0.0
        %v7336 = vmax.f32 %v7038, 0.0
        %v7337 = vmax.f32 %v7089, 0.0
        %v7338 = vmax.f32 %v7091, 0.0
        %v7339 = vmax.f32 %v7142, 0.0
        %v7340 = vmax.f32 %v7144, 0.0
        %v7341 = vmax.f32 %v7195, 0.0
        %v7342 = vmax.f32 %v7197, 0.0
        %v7343 = vmax.f32 %v7248, 0.0
        %v7344 = vmax.f32 %v7250, 0.0
        %v7345 = vmax.f32 %v7301, 0.0
        %v7346 = vmax.f32 %v7303, 0.0
        %v7347 = vmax.f32 %v6936, 0.0
        %v7348 = vmax.f32 %v6938, 0.0
        %v7349 = vmax.f32 %v6989, 0.0
        %v7350 = vmax.f32 %v6991, 0.0
        %v7351 = vmax.f32 %v7042, 0.0
        %v7352 = vmax.f32 %v7044, 0.0
        %v7353 = vmax.f32 %v7095, 0.0
        %v7354 = vmax.f32 %v7097, 0.0
        %v7355 = vmax.f32 %v7148, 0.0
        %v7356 = vmax.f32 %v7150, 0.0
        %v7357 = vmax.f32 %v7201, 0.0
        %v7358 = vmax.f32 %v7203, 0.0
        %v7359 = vmax.f32 %v7254, 0.0
        %v7360 = vmax.f32 %v7256, 0.0
        %v7361 = vmax.f32 %v7307, 0.0
        %v7362 = vmax.f32 %v7309, 0.0
        %v7363 = vmax.f32 %v6940, 0.0
        %v7364 = vmax.f32 %v6942, 0.0
        %v7365 = vmax.f32 %v6993, 0.0
        %v7366 = vmax.f32 %v6995, 0.0
        %v7367 = vmax.f32 %v7046, 0.0
        %v7368 = vmax.f32 %v7048, 0.0
        %v7369 = vmax.f32 %v7099, 0.0
        %v7370 = vmax.f32 %v7101, 0.0
        %v7371 = vmax.f32 %v7152, 0.0
        %v7372 = vmax.f32 %v7154, 0.0
        %v7373 = vmax.f32 %v7205, 0.0
        %v7374 = vmax.f32 %v7207, 0.0
        %v7375 = vmax.f32 %v7258, 0.0
        %v7376 = vmax.f32 %v7260, 0.0
        %v7377 = vmax.f32 %v7311, 0.0
        %v7378 = vmax.f32 %v7313, 0.0
        %v7379 = vpack.c.bf16 %v7331, %v7315
        %v7380 = vpack.c.bf16 %v7332, %v7316
        %v7381 = vpack.c.bf16 %v7333, %v7317
        %v7382 = vpack.c.bf16 %v7334, %v7318
        %v7383 = vpack.c.bf16 %v7335, %v7319
        %v7384 = vpack.c.bf16 %v7336, %v7320
        %v7385 = vpack.c.bf16 %v7337, %v7321
        %v7386 = vpack.c.bf16 %v7338, %v7322
        %v7387 = vpack.c.bf16 %v7339, %v7323
        %v7388 = vpack.c.bf16 %v7340, %v7324
        %v7389 = vpack.c.bf16 %v7341, %v7325
        %v7390 = vpack.c.bf16 %v7342, %v7326
        %v7391 = vpack.c.bf16 %v7343, %v7327
        %v7392 = vpack.c.bf16 %v7344, %v7328
        %v7393 = vpack.c.bf16 %v7345, %v7329
        %v7394 = vpack.c.bf16 %v7346, %v7330
        %v7395 = vpack.c.bf16 %v7363, %v7347
        %v7396 = vpack.c.bf16 %v7364, %v7348
        %v7397 = vpack.c.bf16 %v7365, %v7349
        %v7398 = vpack.c.bf16 %v7366, %v7350
        %v7399 = vpack.c.bf16 %v7367, %v7351
        %v7400 = vpack.c.bf16 %v7368, %v7352
        %v7401 = vpack.c.bf16 %v7369, %v7353
        %v7402 = vpack.c.bf16 %v7370, %v7354
        %v7403 = vpack.c.bf16 %v7371, %v7355
        %v7404 = vpack.c.bf16 %v7372, %v7356
        %v7405 = vpack.c.bf16 %v7373, %v7357
        %v7406 = vpack.c.bf16 %v7374, %v7358
        %v7407 = vpack.c.bf16 %v7375, %v7359
        %v7408 = vpack.c.bf16 %v7376, %v7360
        %v7409 = vpack.c.bf16 %v7377, %v7361
        %v7410 = vpack.c.bf16 %v7378, %v7362
        %v7411 = vld [vmem:[%s723] sm:$0xf]
        %v7412 = vld [vmem:[%s723 + $0x4] sm:$0xf]
        %v7413 = vld [vmem:[%s723 + $0x8] sm:$0xf]
        %v7414 = vld [vmem:[%s723 + $0xc] sm:$0xf]
        %v7415 = vld [vmem:[%s723 + $0x10] sm:$0xf]
        %v7416 = vld [vmem:[%s723 + $0x14] sm:$0xf]
        %v7417 = vld [vmem:[%s723 + $0x18] sm:$0xf]
        %v7418 = vld [vmem:[%s723 + $0x1c] sm:$0xf]
        %v7419 = vld [vmem:[%s723 + $0x20] sm:$0xf]
        %v7420 = vld [vmem:[%s723 + $0x24] sm:$0xf]
        %v7421 = vld [vmem:[%s723 + $0x28] sm:$0xf]
        %v7422 = vld [vmem:[%s723 + $0x2c] sm:$0xf]
        %v7423 = vld [vmem:[%s723 + $0x30] sm:$0xf]
        %v7424 = vld [vmem:[%s723 + $0x34] sm:$0xf]
        %v7425 = vld [vmem:[%s723 + $0x38] sm:$0xf]
        %v7426 = vld [vmem:[%s723 + $0x3c] sm:$0xf]
        %v7427 = vld [vmem:[%s723 + $0x40] sm:$0xf]
        %v7428 = vld [vmem:[%s723 + $0x44] sm:$0xf]
        %v7429 = vld [vmem:[%s723 + $0x48] sm:$0xf]
        %v7430 = vld [vmem:[%s723 + $0x4c] sm:$0xf]
        %v7431 = vld [vmem:[%s723 + $0x50] sm:$0xf]
        %v7432 = vld [vmem:[%s723 + $0x54] sm:$0xf]
        %v7433 = vld [vmem:[%s723 + $0x58] sm:$0xf]
        %v7434 = vld [vmem:[%s723 + $0x5c] sm:$0xf]
        %v7435 = vld [vmem:[%s723 + $0x60] sm:$0xf]
        %v7436 = vld [vmem:[%s723 + $0x64] sm:$0xf]
        %v7437 = vld [vmem:[%s723 + $0x68] sm:$0xf]
        %v7438 = vld [vmem:[%s723 + $0x6c] sm:$0xf]
        %v7439 = vld [vmem:[%s723 + $0x70] sm:$0xf]
        %v7440 = vld [vmem:[%s723 + $0x74] sm:$0xf]
        %v7441 = vld [vmem:[%s723 + $0x78] sm:$0xf]
        %v7442 = vld [vmem:[%s723 + $0x7c] sm:$0xf]
        %v7443 = vld [vmem:[%s723 + $0x80] sm:$0xf]
        %v7444 = vld [vmem:[%s723 + $0x84] sm:$0xf]
        %v7445 = vld [vmem:[%s723 + $0x88] sm:$0xf]
        %v7446 = vld [vmem:[%s723 + $0x8c] sm:$0xf]
        %v7447 = vld [vmem:[%s723 + $0x90] sm:$0xf]
        %v7448 = vld [vmem:[%s723 + $0x94] sm:$0xf]
        %v7449 = vld [vmem:[%s723 + $0x98] sm:$0xf]
        %v7450 = vld [vmem:[%s723 + $0x9c] sm:$0xf]
        %v7451 = vld [vmem:[%s723 + $0xa0] sm:$0xf]
        %v7452 = vld [vmem:[%s723 + $0xa4] sm:$0xf]
        %v7453 = vld [vmem:[%s723 + $0xa8] sm:$0xf]
        %v7454 = vld [vmem:[%s723 + $0xac] sm:$0xf]
        %v7455 = vld [vmem:[%s723 + $0xb0] sm:$0xf]
        %v7456 = vld [vmem:[%s723 + $0xb4] sm:$0xf]
        %v7457 = vld [vmem:[%s723 + $0xb8] sm:$0xf]
        %v7458 = vld [vmem:[%s723 + $0xbc] sm:$0xf]
        %v7459 = vld [vmem:[%s723 + $0xc0] sm:$0xf]
        %v7460 = vld [vmem:[%s723 + $0xc4] sm:$0xf]
        %v7461 = vld [vmem:[%s723 + $0xc8] sm:$0xf]
        %v7462 = vld [vmem:[%s723 + $0xcc] sm:$0xf]
        %v7463 = vld [vmem:[%s723 + $0xd0] sm:$0xf]
        %v7464 = vld [vmem:[%s723 + $0xd4] sm:$0xf]
        %v7465 = vld [vmem:[%s723 + $0xd8] sm:$0xf]
        %v7466 = vld [vmem:[%s723 + $0xdc] sm:$0xf]
        %v7467 = vld [vmem:[%s723 + $0xe0] sm:$0xf]
        %v7468 = vld [vmem:[%s723 + $0xe4] sm:$0xf]
        %v7469 = vld [vmem:[%s723 + $0xe8] sm:$0xf]
        %v7470 = vld [vmem:[%s723 + $0xec] sm:$0xf]
        %v7471 = vld [vmem:[%s723 + $0xf0] sm:$0xf]
        %v7472 = vld [vmem:[%s723 + $0xf4] sm:$0xf]
        %v7473 = vld [vmem:[%s723 + $0xf8] sm:$0xf]
        %v7474 = vld [vmem:[%s723 + $0xfc] sm:$0xf]
        %v7475 = vld [vmem:[%s723 + $0x100] sm:$0xf]
        %v7476 = vld [vmem:[%s723 + $0x104] sm:$0xf]
        %v7477 = vld [vmem:[%s723 + $0x108] sm:$0xf]
        %v7478 = vld [vmem:[%s723 + $0x10c] sm:$0xf]
        %v7479 = vld [vmem:[%s723 + $0x110] sm:$0xf]
        %v7480 = vld [vmem:[%s723 + $0x114] sm:$0xf]
        %v7481 = vld [vmem:[%s723 + $0x118] sm:$0xf]
        %v7482 = vld [vmem:[%s723 + $0x11c] sm:$0xf]
        %v7483 = vld [vmem:[%s723 + $0x120] sm:$0xf]
        %v7484 = vld [vmem:[%s723 + $0x124] sm:$0xf]
        %v7485 = vld [vmem:[%s723 + $0x128] sm:$0xf]
        %v7486 = vld [vmem:[%s723 + $0x12c] sm:$0xf]
        %v7487 = vld [vmem:[%s723 + $0x130] sm:$0xf]
        %v7488 = vld [vmem:[%s723 + $0x134] sm:$0xf]
        %v7489 = vld [vmem:[%s723 + $0x138] sm:$0xf]
        %v7490 = vld [vmem:[%s723 + $0x13c] sm:$0xf]
        %v7491 = vld [vmem:[%s723 + $0x140] sm:$0xf]
        %v7492 = vld [vmem:[%s723 + $0x144] sm:$0xf]
        %v7493 = vld [vmem:[%s723 + $0x148] sm:$0xf]
        %v7494 = vld [vmem:[%s723 + $0x14c] sm:$0xf]
        %v7495 = vld [vmem:[%s723 + $0x150] sm:$0xf]
        %v7496 = vld [vmem:[%s723 + $0x154] sm:$0xf]
        %v7497 = vld [vmem:[%s723 + $0x158] sm:$0xf]
        %v7498 = vld [vmem:[%s723 + $0x15c] sm:$0xf]
        %v7499 = vld [vmem:[%s723 + $0x160] sm:$0xf]
        %v7500 = vld [vmem:[%s723 + $0x164] sm:$0xf]
        %v7501 = vld [vmem:[%s723 + $0x168] sm:$0xf]
        %v7502 = vld [vmem:[%s723 + $0x16c] sm:$0xf]
        %v7503 = vld [vmem:[%s723 + $0x170] sm:$0xf]
        %v7504 = vld [vmem:[%s723 + $0x174] sm:$0xf]
        %v7505 = vld [vmem:[%s723 + $0x178] sm:$0xf]
        %v7506 = vld [vmem:[%s723 + $0x17c] sm:$0xf]
        %v7507 = vld [vmem:[%s723 + $0x180] sm:$0xf]
        %v7508 = vld [vmem:[%s723 + $0x184] sm:$0xf]
        %v7509 = vld [vmem:[%s723 + $0x188] sm:$0xf]
        %v7510 = vld [vmem:[%s723 + $0x18c] sm:$0xf]
        %v7511 = vld [vmem:[%s723 + $0x190] sm:$0xf]
        %v7512 = vld [vmem:[%s723 + $0x194] sm:$0xf]
        %v7513 = vld [vmem:[%s723 + $0x198] sm:$0xf]
        %v7514 = vld [vmem:[%s723 + $0x19c] sm:$0xf]
        %v7515 = vld [vmem:[%s723 + $0x1a0] sm:$0xf]
        %v7516 = vld [vmem:[%s723 + $0x1a4] sm:$0xf]
        %v7517 = vld [vmem:[%s723 + $0x1a8] sm:$0xf]
        %v7518 = vld [vmem:[%s723 + $0x1ac] sm:$0xf]
        %v7519 = vld [vmem:[%s723 + $0x1b0] sm:$0xf]
        %v7520 = vld [vmem:[%s723 + $0x1b4] sm:$0xf]
        %v7521 = vld [vmem:[%s723 + $0x1b8] sm:$0xf]
        %v7522 = vld [vmem:[%s723 + $0x1bc] sm:$0xf]
        %v7523 = vld [vmem:[%s723 + $0x1c0] sm:$0xf]
        %v7524 = vld [vmem:[%s723 + $0x1c4] sm:$0xf]
        %v7525 = vld [vmem:[%s723 + $0x1c8] sm:$0xf]
        %v7526 = vld [vmem:[%s723 + $0x1cc] sm:$0xf]
        %v7527 = vld [vmem:[%s723 + $0x1d0] sm:$0xf]
        %v7528 = vld [vmem:[%s723 + $0x1d4] sm:$0xf]
        %v7529 = vld [vmem:[%s723 + $0x1d8] sm:$0xf]
        %v7530 = vld [vmem:[%s723 + $0x1dc] sm:$0xf]
        %v7531 = vld [vmem:[%s723 + $0x1e0] sm:$0xf]
        %v7532 = vld [vmem:[%s723 + $0x1e4] sm:$0xf]
        %v7533 = vld [vmem:[%s723 + $0x1e8] sm:$0xf]
        %v7534 = vld [vmem:[%s723 + $0x1ec] sm:$0xf]
        %v7535 = vld [vmem:[%s723 + $0x1f0] sm:$0xf]
        %v7536 = vld [vmem:[%s723 + $0x1f4] sm:$0xf]
        %v7537 = vld [vmem:[%s723 + $0x1f8] sm:$0xf]
        %v7538 = vld [vmem:[%s723 + $0x1fc] sm:$0xf]
        %v7539 = vld [vmem:[%s723 + $0x200] sm:$0xf]
        %v7540 = vld [vmem:[%s723 + $0x204] sm:$0xf]
        %v7541 = vld [vmem:[%s723 + $0x208] sm:$0xf]
        %v7542 = vld [vmem:[%s723 + $0x20c] sm:$0xf]
        %v7543 = vld [vmem:[%s723 + $0x210] sm:$0xf]
        %v7544 = vld [vmem:[%s723 + $0x214] sm:$0xf]
        %v7545 = vld [vmem:[%s723 + $0x218] sm:$0xf]
        %v7546 = vld [vmem:[%s723 + $0x21c] sm:$0xf]
        %v7547 = vld [vmem:[%s723 + $0x220] sm:$0xf]
        %v7548 = vld [vmem:[%s723 + $0x224] sm:$0xf]
        %v7549 = vld [vmem:[%s723 + $0x228] sm:$0xf]
        %v7550 = vld [vmem:[%s723 + $0x22c] sm:$0xf]
        %v7551 = vld [vmem:[%s723 + $0x230] sm:$0xf]
        %v7552 = vld [vmem:[%s723 + $0x234] sm:$0xf]
        %v7553 = vld [vmem:[%s723 + $0x238] sm:$0xf]
        %v7554 = vld [vmem:[%s723 + $0x23c] sm:$0xf]
        %v7555 = vld [vmem:[%s723 + $0x240] sm:$0xf]
        %v7556 = vld [vmem:[%s723 + $0x244] sm:$0xf]
        %v7557 = vld [vmem:[%s723 + $0x248] sm:$0xf]
        %v7558 = vld [vmem:[%s723 + $0x24c] sm:$0xf]
        %v7559 = vld [vmem:[%s723 + $0x250] sm:$0xf]
        %v7560 = vld [vmem:[%s723 + $0x254] sm:$0xf]
        %v7561 = vld [vmem:[%s723 + $0x258] sm:$0xf]
        %v7562 = vld [vmem:[%s723 + $0x25c] sm:$0xf]
        %v7563 = vld [vmem:[%s723 + $0x260] sm:$0xf]
        %v7564 = vld [vmem:[%s723 + $0x264] sm:$0xf]
        %v7565 = vld [vmem:[%s723 + $0x268] sm:$0xf]
        %v7566 = vld [vmem:[%s723 + $0x26c] sm:$0xf]
        %v7567 = vld [vmem:[%s723 + $0x270] sm:$0xf]
        %v7568 = vld [vmem:[%s723 + $0x274] sm:$0xf]
        %v7569 = vld [vmem:[%s723 + $0x278] sm:$0xf]
        %v7570 = vld [vmem:[%s723 + $0x27c] sm:$0xf]
        %v7571 = vld [vmem:[%s723 + $0x280] sm:$0xf]
        %v7572 = vld [vmem:[%s723 + $0x284] sm:$0xf]
        %v7573 = vld [vmem:[%s723 + $0x288] sm:$0xf]
        %v7574 = vld [vmem:[%s723 + $0x28c] sm:$0xf]
        %v7575 = vld [vmem:[%s723 + $0x290] sm:$0xf]
        %v7576 = vld [vmem:[%s723 + $0x294] sm:$0xf]
        %v7577 = vld [vmem:[%s723 + $0x298] sm:$0xf]
        %v7578 = vld [vmem:[%s723 + $0x29c] sm:$0xf]
        %v7579 = vld [vmem:[%s723 + $0x2a0] sm:$0xf]
        %v7580 = vld [vmem:[%s723 + $0x2a4] sm:$0xf]
        %v7581 = vld [vmem:[%s723 + $0x2a8] sm:$0xf]
        %v7582 = vld [vmem:[%s723 + $0x2ac] sm:$0xf]
        %v7583 = vld [vmem:[%s723 + $0x2b0] sm:$0xf]
        %v7584 = vld [vmem:[%s723 + $0x2b4] sm:$0xf]
        %v7585 = vld [vmem:[%s723 + $0x2b8] sm:$0xf]
        %v7586 = vld [vmem:[%s723 + $0x2bc] sm:$0xf]
        %v7587 = vld [vmem:[%s723 + $0x2c0] sm:$0xf]
        %v7588 = vld [vmem:[%s723 + $0x2c4] sm:$0xf]
        %v7589 = vld [vmem:[%s723 + $0x2c8] sm:$0xf]
        %v7590 = vld [vmem:[%s723 + $0x2cc] sm:$0xf]
        %v7591 = vld [vmem:[%s723 + $0x2d0] sm:$0xf]
        %v7592 = vld [vmem:[%s723 + $0x2d4] sm:$0xf]
        %v7593 = vld [vmem:[%s723 + $0x2d8] sm:$0xf]
        %v7594 = vld [vmem:[%s723 + $0x2dc] sm:$0xf]
        %v7595 = vld [vmem:[%s723 + $0x2e0] sm:$0xf]
        %v7596 = vld [vmem:[%s723 + $0x2e4] sm:$0xf]
        %v7597 = vld [vmem:[%s723 + $0x2e8] sm:$0xf]
        %v7598 = vld [vmem:[%s723 + $0x2ec] sm:$0xf]
        %v7599 = vld [vmem:[%s723 + $0x2f0] sm:$0xf]
        %v7600 = vld [vmem:[%s723 + $0x2f4] sm:$0xf]
        %v7601 = vld [vmem:[%s723 + $0x2f8] sm:$0xf]
        %v7602 = vld [vmem:[%s723 + $0x2fc] sm:$0xf]
        %v7603 = vld [vmem:[%s723 + $0x300] sm:$0xf]
        %v7604 = vld [vmem:[%s723 + $0x304] sm:$0xf]
        %v7605 = vld [vmem:[%s723 + $0x308] sm:$0xf]
        %v7606 = vld [vmem:[%s723 + $0x30c] sm:$0xf]
        %v7607 = vld [vmem:[%s723 + $0x310] sm:$0xf]
        %v7608 = vld [vmem:[%s723 + $0x314] sm:$0xf]
        %v7609 = vld [vmem:[%s723 + $0x318] sm:$0xf]
        %v7610 = vld [vmem:[%s723 + $0x31c] sm:$0xf]
        %v7611 = vld [vmem:[%s723 + $0x320] sm:$0xf]
        %v7612 = vld [vmem:[%s723 + $0x324] sm:$0xf]
        %v7613 = vld [vmem:[%s723 + $0x328] sm:$0xf]
        %v7614 = vld [vmem:[%s723 + $0x32c] sm:$0xf]
        %v7615 = vld [vmem:[%s723 + $0x330] sm:$0xf]
        %v7616 = vld [vmem:[%s723 + $0x334] sm:$0xf]
        %v7617 = vld [vmem:[%s723 + $0x338] sm:$0xf]
        %v7618 = vld [vmem:[%s723 + $0x33c] sm:$0xf]
        %v7619 = vld [vmem:[%s723 + $0x340] sm:$0xf]
        %v7620 = vld [vmem:[%s723 + $0x344] sm:$0xf]
        %v7621 = vld [vmem:[%s723 + $0x348] sm:$0xf]
        %v7622 = vld [vmem:[%s723 + $0x34c] sm:$0xf]
        %v7623 = vld [vmem:[%s723 + $0x350] sm:$0xf]
        %v7624 = vld [vmem:[%s723 + $0x354] sm:$0xf]
        %v7625 = vld [vmem:[%s723 + $0x358] sm:$0xf]
        %v7626 = vld [vmem:[%s723 + $0x35c] sm:$0xf]
        %v7627 = vld [vmem:[%s723 + $0x360] sm:$0xf]
        %v7628 = vld [vmem:[%s723 + $0x364] sm:$0xf]
        %v7629 = vld [vmem:[%s723 + $0x368] sm:$0xf]
        %v7630 = vld [vmem:[%s723 + $0x36c] sm:$0xf]
        %v7631 = vld [vmem:[%s723 + $0x370] sm:$0xf]
        %v7632 = vld [vmem:[%s723 + $0x374] sm:$0xf]
        %v7633 = vld [vmem:[%s723 + $0x378] sm:$0xf]
        %v7634 = vld [vmem:[%s723 + $0x37c] sm:$0xf]
        %v7635 = vld [vmem:[%s723 + $0x380] sm:$0xf]
        %v7636 = vld [vmem:[%s723 + $0x384] sm:$0xf]
        %v7637 = vld [vmem:[%s723 + $0x388] sm:$0xf]
        %v7638 = vld [vmem:[%s723 + $0x38c] sm:$0xf]
        %v7639 = vld [vmem:[%s723 + $0x390] sm:$0xf]
        %v7640 = vld [vmem:[%s723 + $0x394] sm:$0xf]
        %v7641 = vld [vmem:[%s723 + $0x398] sm:$0xf]
        %v7642 = vld [vmem:[%s723 + $0x39c] sm:$0xf]
        %v7643 = vld [vmem:[%s723 + $0x3a0] sm:$0xf]
        %v7644 = vld [vmem:[%s723 + $0x3a4] sm:$0xf]
        %v7645 = vld [vmem:[%s723 + $0x3a8] sm:$0xf]
        %v7646 = vld [vmem:[%s723 + $0x3ac] sm:$0xf]
        %v7647 = vld [vmem:[%s723 + $0x3b0] sm:$0xf]
        %v7648 = vld [vmem:[%s723 + $0x3b4] sm:$0xf]
        %v7649 = vld [vmem:[%s723 + $0x3b8] sm:$0xf]
        %v7650 = vld [vmem:[%s723 + $0x3bc] sm:$0xf]
        %v7651 = vld [vmem:[%s723 + $0x3c0] sm:$0xf]
        %v7652 = vld [vmem:[%s723 + $0x3c4] sm:$0xf]
        %v7653 = vld [vmem:[%s723 + $0x3c8] sm:$0xf]
        %v7654 = vld [vmem:[%s723 + $0x3cc] sm:$0xf]
        %v7655 = vld [vmem:[%s723 + $0x3d0] sm:$0xf]
        %v7656 = vld [vmem:[%s723 + $0x3d4] sm:$0xf]
        %v7657 = vld [vmem:[%s723 + $0x3d8] sm:$0xf]
        %v7658 = vld [vmem:[%s723 + $0x3dc] sm:$0xf]
        %v7659 = vld [vmem:[%s723 + $0x3e0] sm:$0xf]
        %v7660 = vld [vmem:[%s723 + $0x3e4] sm:$0xf]
        %v7661 = vld [vmem:[%s723 + $0x3e8] sm:$0xf]
        %v7662 = vld [vmem:[%s723 + $0x3ec] sm:$0xf]
        %v7663 = vld [vmem:[%s723 + $0x3f0] sm:$0xf]
        %v7664 = vld [vmem:[%s723 + $0x3f4] sm:$0xf]
        %v7665 = vld [vmem:[%s723 + $0x3f8] sm:$0xf]
        %v7666 = vld [vmem:[%s723 + $0x3fc] sm:$0xf]
        %v7667 = vlaneseq
        %v7668 = vshrl.u32 %v7667, 7
        %v7669 = vsub.s32 3, %v7668
        %v7670 = vrot.slane %v2296, %v7669
        %v7927 = vunpack.c.l.b16 %v7411
        %v7928 = vunpack.c.l.b16 %v7412
        %v7929 = vunpack.c.l.b16 %v7413
        %v7930 = vunpack.c.l.b16 %v7414
        %v7931 = vunpack.c.l.b16 %v7415
        %v7932 = vunpack.c.l.b16 %v7416
        %v7933 = vunpack.c.l.b16 %v7417
        %v7934 = vunpack.c.l.b16 %v7418
        %v7935 = vunpack.c.l.b16 %v7419
        %v7936 = vunpack.c.l.b16 %v7420
        %v7937 = vunpack.c.l.b16 %v7421
        %v7938 = vunpack.c.l.b16 %v7422
        %v7939 = vunpack.c.l.b16 %v7423
        %v7940 = vunpack.c.l.b16 %v7424
        %v7941 = vunpack.c.l.b16 %v7425
        %v7942 = vunpack.c.l.b16 %v7426
        %v7943 = vunpack.c.l.b16 %v7427
        %v7944 = vunpack.c.l.b16 %v7428
        %v7945 = vunpack.c.l.b16 %v7429
        %v7946 = vunpack.c.l.b16 %v7430
        %v7947 = vunpack.c.l.b16 %v7431
        %v7948 = vunpack.c.l.b16 %v7432
        %v7949 = vunpack.c.l.b16 %v7433
        %v7950 = vunpack.c.l.b16 %v7434
        %v7951 = vunpack.c.l.b16 %v7435
        %v7952 = vunpack.c.l.b16 %v7436
        %v7953 = vunpack.c.l.b16 %v7437
        %v7954 = vunpack.c.l.b16 %v7438
        %v7955 = vunpack.c.l.b16 %v7439
        %v7956 = vunpack.c.l.b16 %v7440
        %v7957 = vunpack.c.l.b16 %v7441
        %v7958 = vunpack.c.l.b16 %v7442
        %v7959 = vunpack.c.l.b16 %v7443
        %v7960 = vunpack.c.l.b16 %v7444
        %v7961 = vunpack.c.l.b16 %v7445
        %v7962 = vunpack.c.l.b16 %v7446
        %v7963 = vunpack.c.l.b16 %v7447
        %v7964 = vunpack.c.l.b16 %v7448
        %v7965 = vunpack.c.l.b16 %v7449
        %v7966 = vunpack.c.l.b16 %v7450
        %v7967 = vunpack.c.l.b16 %v7451
        %v7968 = vunpack.c.l.b16 %v7452
        %v7969 = vunpack.c.l.b16 %v7453
        %v7970 = vunpack.c.l.b16 %v7454
        %v7971 = vunpack.c.l.b16 %v7455
        %v7972 = vunpack.c.l.b16 %v7456
        %v7973 = vunpack.c.l.b16 %v7457
        %v7974 = vunpack.c.l.b16 %v7458
        %v7975 = vunpack.c.l.b16 %v7459
        %v7976 = vunpack.c.l.b16 %v7460
        %v7977 = vunpack.c.l.b16 %v7461
        %v7978 = vunpack.c.l.b16 %v7462
        %v7979 = vunpack.c.l.b16 %v7463
        %v7980 = vunpack.c.l.b16 %v7464
        %v7981 = vunpack.c.l.b16 %v7465
        %v7982 = vunpack.c.l.b16 %v7466
        %v7983 = vunpack.c.l.b16 %v7467
        %v7984 = vunpack.c.l.b16 %v7468
        %v7985 = vunpack.c.l.b16 %v7469
        %v7986 = vunpack.c.l.b16 %v7470
        %v7987 = vunpack.c.l.b16 %v7471
        %v7988 = vunpack.c.l.b16 %v7472
        %v7989 = vunpack.c.l.b16 %v7473
        %v7990 = vunpack.c.l.b16 %v7474
        %v7991 = vunpack.c.l.b16 %v7475
        %v7992 = vunpack.c.l.b16 %v7476
        %v7993 = vunpack.c.l.b16 %v7477
        %v7994 = vunpack.c.l.b16 %v7478
        %v7995 = vunpack.c.l.b16 %v7479
        %v7996 = vunpack.c.l.b16 %v7480
        %v7997 = vunpack.c.l.b16 %v7481
        %v7998 = vunpack.c.l.b16 %v7482
        %v7999 = vunpack.c.l.b16 %v7483
        %v8000 = vunpack.c.l.b16 %v7484
        %v8001 = vunpack.c.l.b16 %v7485
        %v8002 = vunpack.c.l.b16 %v7486
        %v8003 = vunpack.c.l.b16 %v7487
        %v8004 = vunpack.c.l.b16 %v7488
        %v8005 = vunpack.c.l.b16 %v7489
        %v8006 = vunpack.c.l.b16 %v7490
        %v8007 = vunpack.c.l.b16 %v7491
        %v8008 = vunpack.c.l.b16 %v7492
        %v8009 = vunpack.c.l.b16 %v7493
        %v8010 = vunpack.c.l.b16 %v7494
        %v8011 = vunpack.c.l.b16 %v7495
        %v8012 = vunpack.c.l.b16 %v7496
        %v8013 = vunpack.c.l.b16 %v7497
        %v8014 = vunpack.c.l.b16 %v7498
        %v8015 = vunpack.c.l.b16 %v7499
        %v8016 = vunpack.c.l.b16 %v7500
        %v8017 = vunpack.c.l.b16 %v7501
        %v8018 = vunpack.c.l.b16 %v7502
        %v8019 = vunpack.c.l.b16 %v7503
        %v8020 = vunpack.c.l.b16 %v7504
        %v8021 = vunpack.c.l.b16 %v7505
        %v8022 = vunpack.c.l.b16 %v7506
        %v8023 = vunpack.c.l.b16 %v7507
        %v8024 = vunpack.c.l.b16 %v7508
        %v8025 = vunpack.c.l.b16 %v7509
        %v8026 = vunpack.c.l.b16 %v7510
        %v8027 = vunpack.c.l.b16 %v7511
        %v8028 = vunpack.c.l.b16 %v7512
        %v8029 = vunpack.c.l.b16 %v7513
        %v8030 = vunpack.c.l.b16 %v7514
        %v8031 = vunpack.c.l.b16 %v7515
        %v8032 = vunpack.c.l.b16 %v7516
        %v8033 = vunpack.c.l.b16 %v7517
        %v8034 = vunpack.c.l.b16 %v7518
        %v8035 = vunpack.c.l.b16 %v7519
        %v8036 = vunpack.c.l.b16 %v7520
        %v8037 = vunpack.c.l.b16 %v7521
        %v8038 = vunpack.c.l.b16 %v7522
        %v8039 = vunpack.c.l.b16 %v7523
        %v8040 = vunpack.c.l.b16 %v7524
        %v8041 = vunpack.c.l.b16 %v7525
        %v8042 = vunpack.c.l.b16 %v7526
        %v8043 = vunpack.c.l.b16 %v7527
        %v8044 = vunpack.c.l.b16 %v7528
        %v8045 = vunpack.c.l.b16 %v7529
        %v8046 = vunpack.c.l.b16 %v7530
        %v8047 = vunpack.c.l.b16 %v7531
        %v8048 = vunpack.c.l.b16 %v7532
        %v8049 = vunpack.c.l.b16 %v7533
        %v8050 = vunpack.c.l.b16 %v7534
        %v8051 = vunpack.c.l.b16 %v7535
        %v8052 = vunpack.c.l.b16 %v7536
        %v8053 = vunpack.c.l.b16 %v7537
        %v8054 = vunpack.c.l.b16 %v7538
        %v8055 = vunpack.c.l.b16 %v7539
        %v8056 = vunpack.c.l.b16 %v7540
        %v8057 = vunpack.c.l.b16 %v7541
        %v8058 = vunpack.c.l.b16 %v7542
        %v8059 = vunpack.c.l.b16 %v7543
        %v8060 = vunpack.c.l.b16 %v7544
        %v8061 = vunpack.c.l.b16 %v7545
        %v8062 = vunpack.c.l.b16 %v7546
        %v8063 = vunpack.c.l.b16 %v7547
        %v8064 = vunpack.c.l.b16 %v7548
        %v8065 = vunpack.c.l.b16 %v7549
        %v8066 = vunpack.c.l.b16 %v7550
        %v8067 = vunpack.c.l.b16 %v7551
        %v8068 = vunpack.c.l.b16 %v7552
        %v8069 = vunpack.c.l.b16 %v7553
        %v8070 = vunpack.c.l.b16 %v7554
        %v8071 = vunpack.c.l.b16 %v7555
        %v8072 = vunpack.c.l.b16 %v7556
        %v8073 = vunpack.c.l.b16 %v7557
        %v8074 = vunpack.c.l.b16 %v7558
        %v8075 = vunpack.c.l.b16 %v7559
        %v8076 = vunpack.c.l.b16 %v7560
        %v8077 = vunpack.c.l.b16 %v7561
        %v8078 = vunpack.c.l.b16 %v7562
        %v8079 = vunpack.c.l.b16 %v7563
        %v8080 = vunpack.c.l.b16 %v7564
        %v8081 = vunpack.c.l.b16 %v7565
        %v8082 = vunpack.c.l.b16 %v7566
        %v8083 = vunpack.c.l.b16 %v7567
        %v8084 = vunpack.c.l.b16 %v7568
        %v8085 = vunpack.c.l.b16 %v7569
        %v8086 = vunpack.c.l.b16 %v7570
        %v8087 = vunpack.c.l.b16 %v7571
        %v8088 = vunpack.c.l.b16 %v7572
        %v8089 = vunpack.c.l.b16 %v7573
        %v8090 = vunpack.c.l.b16 %v7574
        %v8091 = vunpack.c.l.b16 %v7575
        %v8092 = vunpack.c.l.b16 %v7576
        %v8093 = vunpack.c.l.b16 %v7577
        %v8094 = vunpack.c.l.b16 %v7578
        %v8095 = vunpack.c.l.b16 %v7579
        %v8096 = vunpack.c.l.b16 %v7580
        %v8097 = vunpack.c.l.b16 %v7581
        %v8098 = vunpack.c.l.b16 %v7582
        %v8099 = vunpack.c.l.b16 %v7583
        %v8100 = vunpack.c.l.b16 %v7584
        %v8101 = vunpack.c.l.b16 %v7585
        %v8102 = vunpack.c.l.b16 %v7586
        %v8103 = vunpack.c.l.b16 %v7587
        %v8104 = vunpack.c.l.b16 %v7588
        %v8105 = vunpack.c.l.b16 %v7589
        %v8106 = vunpack.c.l.b16 %v7590
        %v8107 = vunpack.c.l.b16 %v7591
        %v8108 = vunpack.c.l.b16 %v7592
        %v8109 = vunpack.c.l.b16 %v7593
        %v8110 = vunpack.c.l.b16 %v7594
        %v8111 = vunpack.c.l.b16 %v7595
        %v8112 = vunpack.c.l.b16 %v7596
        %v8113 = vunpack.c.l.b16 %v7597
        %v8114 = vunpack.c.l.b16 %v7598
        %v8115 = vunpack.c.l.b16 %v7599
        %v8116 = vunpack.c.l.b16 %v7600
        %v8117 = vunpack.c.l.b16 %v7601
        %v8118 = vunpack.c.l.b16 %v7602
        %v8119 = vunpack.c.l.b16 %v7603
        %v8120 = vunpack.c.l.b16 %v7604
        %v8121 = vunpack.c.l.b16 %v7605
        %v8122 = vunpack.c.l.b16 %v7606
        %v8123 = vunpack.c.l.b16 %v7607
        %v8124 = vunpack.c.l.b16 %v7608
        %v8125 = vunpack.c.l.b16 %v7609
        %v8126 = vunpack.c.l.b16 %v7610
        %v8127 = vunpack.c.l.b16 %v7611
        %v8128 = vunpack.c.l.b16 %v7612
        %v8129 = vunpack.c.l.b16 %v7613
        %v8130 = vunpack.c.l.b16 %v7614
        %v8131 = vunpack.c.l.b16 %v7615
        %v8132 = vunpack.c.l.b16 %v7616
        %v8133 = vunpack.c.l.b16 %v7617
        %v8134 = vunpack.c.l.b16 %v7618
        %v8135 = vunpack.c.l.b16 %v7619
        %v8136 = vunpack.c.l.b16 %v7620
        %v8137 = vunpack.c.l.b16 %v7621
        %v8138 = vunpack.c.l.b16 %v7622
        %v8139 = vunpack.c.l.b16 %v7623
        %v8140 = vunpack.c.l.b16 %v7624
        %v8141 = vunpack.c.l.b16 %v7625
        %v8142 = vunpack.c.l.b16 %v7626
        %v8143 = vunpack.c.l.b16 %v7627
        %v8144 = vunpack.c.l.b16 %v7628
        %v8145 = vunpack.c.l.b16 %v7629
        %v8146 = vunpack.c.l.b16 %v7630
        %v8147 = vunpack.c.l.b16 %v7631
        %v8148 = vunpack.c.l.b16 %v7632
        %v8149 = vunpack.c.l.b16 %v7633
        %v8150 = vunpack.c.l.b16 %v7634
        %v8151 = vunpack.c.l.b16 %v7635
        %v8152 = vunpack.c.l.b16 %v7636
        %v8153 = vunpack.c.l.b16 %v7637
        %v8154 = vunpack.c.l.b16 %v7638
        %v8155 = vunpack.c.l.b16 %v7639
        %v8156 = vunpack.c.l.b16 %v7640
        %v8157 = vunpack.c.l.b16 %v7641
        %v8158 = vunpack.c.l.b16 %v7642
        %v8159 = vunpack.c.l.b16 %v7643
        %v8160 = vunpack.c.l.b16 %v7644
        %v8161 = vunpack.c.l.b16 %v7645
        %v8162 = vunpack.c.l.b16 %v7646
        %v8163 = vunpack.c.l.b16 %v7647
        %v8164 = vunpack.c.l.b16 %v7648
        %v8165 = vunpack.c.l.b16 %v7649
        %v8166 = vunpack.c.l.b16 %v7650
        %v8167 = vunpack.c.l.b16 %v7651
        %v8168 = vunpack.c.l.b16 %v7652
        %v8169 = vunpack.c.l.b16 %v7653
        %v8170 = vunpack.c.l.b16 %v7654
        %v8171 = vunpack.c.l.b16 %v7655
        %v8172 = vunpack.c.l.b16 %v7656
        %v8173 = vunpack.c.l.b16 %v7657
        %v8174 = vunpack.c.l.b16 %v7658
        %v8175 = vunpack.c.l.b16 %v7659
        %v8176 = vunpack.c.l.b16 %v7660
        %v8177 = vunpack.c.l.b16 %v7661
        %v8178 = vunpack.c.l.b16 %v7662
        %v8179 = vunpack.c.l.b16 %v7663
        %v8180 = vunpack.c.l.b16 %v7664
        %v8181 = vunpack.c.l.b16 %v7665
        %v8182 = vunpack.c.l.b16 %v7666
        %v8183 = vpack.c.b16 %v7928, %v7927
        %v8184 = vpack.c.b16 %v7930, %v7929
        %v8185 = vpack.c.b16 %v7932, %v7931
        %v8186 = vpack.c.b16 %v7934, %v7933
        %v8187 = vpack.c.b16 %v7936, %v7935
        %v8188 = vpack.c.b16 %v7938, %v7937
        %v8189 = vpack.c.b16 %v7940, %v7939
        %v8190 = vpack.c.b16 %v7942, %v7941
        %v8191 = vpack.c.b16 %v7944, %v7943
        %v8192 = vpack.c.b16 %v7946, %v7945
        %v8193 = vpack.c.b16 %v7948, %v7947
        %v8194 = vpack.c.b16 %v7950, %v7949
        %v8195 = vpack.c.b16 %v7952, %v7951
        %v8196 = vpack.c.b16 %v7954, %v7953
        %v8197 = vpack.c.b16 %v7956, %v7955
        %v8198 = vpack.c.b16 %v7958, %v7957
        %v8199 = vpack.c.b16 %v7960, %v7959
        %v8200 = vpack.c.b16 %v7962, %v7961
        %v8201 = vpack.c.b16 %v7964, %v7963
        %v8202 = vpack.c.b16 %v7966, %v7965
        %v8203 = vpack.c.b16 %v7968, %v7967
        %v8204 = vpack.c.b16 %v7970, %v7969
        %v8205 = vpack.c.b16 %v7972, %v7971
        %v8206 = vpack.c.b16 %v7974, %v7973
        %v8207 = vpack.c.b16 %v7976, %v7975
        %v8208 = vpack.c.b16 %v7978, %v7977
        %v8209 = vpack.c.b16 %v7980, %v7979
        %v8210 = vpack.c.b16 %v7982, %v7981
        %v8211 = vpack.c.b16 %v7984, %v7983
        %v8212 = vpack.c.b16 %v7986, %v7985
        %v8213 = vpack.c.b16 %v7988, %v7987
        %v8214 = vpack.c.b16 %v7990, %v7989
        %v8215 = vpack.c.b16 %v7992, %v7991
        %v8216 = vpack.c.b16 %v7994, %v7993
        %v8217 = vpack.c.b16 %v7996, %v7995
        %v8218 = vpack.c.b16 %v7998, %v7997
        %v8219 = vpack.c.b16 %v8000, %v7999
        %v8220 = vpack.c.b16 %v8002, %v8001
        %v8221 = vpack.c.b16 %v8004, %v8003
        %v8222 = vpack.c.b16 %v8006, %v8005
        %v8223 = vpack.c.b16 %v8008, %v8007
        %v8224 = vpack.c.b16 %v8010, %v8009
        %v8225 = vpack.c.b16 %v8012, %v8011
        %v8226 = vpack.c.b16 %v8014, %v8013
        %v8227 = vpack.c.b16 %v8016, %v8015
        %v8228 = vpack.c.b16 %v8018, %v8017
        %v8229 = vpack.c.b16 %v8020, %v8019
        %v8230 = vpack.c.b16 %v8022, %v8021
        %v8231 = vpack.c.b16 %v8024, %v8023
        %v8232 = vpack.c.b16 %v8026, %v8025
        %v8233 = vpack.c.b16 %v8028, %v8027
        %v8234 = vpack.c.b16 %v8030, %v8029
        %v8235 = vpack.c.b16 %v8032, %v8031
        %v8236 = vpack.c.b16 %v8034, %v8033
        %v8237 = vpack.c.b16 %v8036, %v8035
        %v8238 = vpack.c.b16 %v8038, %v8037
        %v8239 = vpack.c.b16 %v8040, %v8039
        %v8240 = vpack.c.b16 %v8042, %v8041
        %v8241 = vpack.c.b16 %v8044, %v8043
        %v8242 = vpack.c.b16 %v8046, %v8045
        %v8243 = vpack.c.b16 %v8048, %v8047
        %v8244 = vpack.c.b16 %v8050, %v8049
        %v8245 = vpack.c.b16 %v8052, %v8051
        %v8246 = vpack.c.b16 %v8054, %v8053
        %v8247 = vpack.c.b16 %v8056, %v8055
        %v8248 = vpack.c.b16 %v8058, %v8057
        %v8249 = vpack.c.b16 %v8060, %v8059
        %v8250 = vpack.c.b16 %v8062, %v8061
        %v8251 = vpack.c.b16 %v8064, %v8063
        %v8252 = vpack.c.b16 %v8066, %v8065
        %v8253 = vpack.c.b16 %v8068, %v8067
        %v8254 = vpack.c.b16 %v8070, %v8069
        %v8255 = vpack.c.b16 %v8072, %v8071
        %v8256 = vpack.c.b16 %v8074, %v8073
        %v8257 = vpack.c.b16 %v8076, %v8075
        %v8258 = vpack.c.b16 %v8078, %v8077
        %v8259 = vpack.c.b16 %v8080, %v8079
        %v8260 = vpack.c.b16 %v8082, %v8081
        %v8261 = vpack.c.b16 %v8084, %v8083
        %v8262 = vpack.c.b16 %v8086, %v8085
        %v8263 = vpack.c.b16 %v8088, %v8087
        %v8264 = vpack.c.b16 %v8090, %v8089
        %v8265 = vpack.c.b16 %v8092, %v8091
        %v8266 = vpack.c.b16 %v8094, %v8093
        %v8267 = vpack.c.b16 %v8096, %v8095
        %v8268 = vpack.c.b16 %v8098, %v8097
        %v8269 = vpack.c.b16 %v8100, %v8099
        %v8270 = vpack.c.b16 %v8102, %v8101
        %v8271 = vpack.c.b16 %v8104, %v8103
        %v8272 = vpack.c.b16 %v8106, %v8105
        %v8273 = vpack.c.b16 %v8108, %v8107
        %v8274 = vpack.c.b16 %v8110, %v8109
        %v8275 = vpack.c.b16 %v8112, %v8111
        %v8276 = vpack.c.b16 %v8114, %v8113
        %v8277 = vpack.c.b16 %v8116, %v8115
        %v8278 = vpack.c.b16 %v8118, %v8117
        %v8279 = vpack.c.b16 %v8120, %v8119
        %v8280 = vpack.c.b16 %v8122, %v8121
        %v8281 = vpack.c.b16 %v8124, %v8123
        %v8282 = vpack.c.b16 %v8126, %v8125
        %v8283 = vpack.c.b16 %v8128, %v8127
        %v8284 = vpack.c.b16 %v8130, %v8129
        %v8285 = vpack.c.b16 %v8132, %v8131
        %v8286 = vpack.c.b16 %v8134, %v8133
        %v8287 = vpack.c.b16 %v8136, %v8135
        %v8288 = vpack.c.b16 %v8138, %v8137
        %v8289 = vpack.c.b16 %v8140, %v8139
        %v8290 = vpack.c.b16 %v8142, %v8141
        %v8291 = vpack.c.b16 %v8144, %v8143
        %v8292 = vpack.c.b16 %v8146, %v8145
        %v8293 = vpack.c.b16 %v8148, %v8147
        %v8294 = vpack.c.b16 %v8150, %v8149
        %v8295 = vpack.c.b16 %v8152, %v8151
        %v8296 = vpack.c.b16 %v8154, %v8153
        %v8297 = vpack.c.b16 %v8156, %v8155
        %v8298 = vpack.c.b16 %v8158, %v8157
        %v8299 = vpack.c.b16 %v8160, %v8159
        %v8300 = vpack.c.b16 %v8162, %v8161
        %v8301 = vpack.c.b16 %v8164, %v8163
        %v8302 = vpack.c.b16 %v8166, %v8165
        %v8303 = vpack.c.b16 %v8168, %v8167
        %v8304 = vpack.c.b16 %v8170, %v8169
        %v8305 = vpack.c.b16 %v8172, %v8171
        %v8306 = vpack.c.b16 %v8174, %v8173
        %v8307 = vpack.c.b16 %v8176, %v8175
        %v8308 = vpack.c.b16 %v8178, %v8177
        %v8309 = vpack.c.b16 %v8180, %v8179
        %v8310 = vpack.c.b16 %v8182, %v8181
        %8439 = vmatprep.subr.bf16.mxu0 0
        %8440 = vmatpush1.bf16.msra.mxu0 %v8190
        %8441 = vmatprep.subr.bf16.mxu0 0
        %8442 = vmatpush1.bf16.msra.mxu0 %v8189
        %8443 = vmatprep.subr.bf16.mxu0 0
        %8444 = vmatpush1.bf16.msra.mxu0 %v8188
        %8445 = vmatprep.subr.bf16.mxu0 0
        %8446 = vmatpush1.bf16.msra.mxu0 %v8187
        %8447 = vmatprep.subr.bf16.mxu0 0
        %8448 = vmatpush1.bf16.msra.mxu0 %v8186
        %8449 = vmatprep.subr.bf16.mxu0 0
        %8450 = vmatpush1.bf16.msra.mxu0 %v8185
        %8451 = vmatprep.subr.bf16.mxu0 0
        %8452 = vmatpush1.bf16.msra.mxu0 %v8184
        %8453 = vmatprep.subr.bf16.mxu0 0
        %8454 = vmatpush1.bf16.msra.mxu0 %v8183
        %8455 = vmatprep.subr.bf16.mxu0 0
        %8456 = vmatpush2.bf16.msra.mxu0 %v8198
        %8457 = vmatprep.subr.bf16.mxu0 0
        %8458 = vmatpush2.bf16.msra.mxu0 %v8197
        %8459 = vmatprep.subr.bf16.mxu0 0
        %8460 = vmatpush2.bf16.msra.mxu0 %v8196
        %8461 = vmatprep.subr.bf16.mxu0 0
        %8462 = vmatpush2.bf16.msra.mxu0 %v8195
        %8463 = vmatprep.subr.bf16.mxu0 0
        %8464 = vmatpush2.bf16.msra.mxu0 %v8194
        %8465 = vmatprep.subr.bf16.mxu0 0
        %8466 = vmatpush2.bf16.msra.mxu0 %v8193
        %8467 = vmatprep.subr.bf16.mxu0 0
        %8468 = vmatpush2.bf16.msra.mxu0 %v8192
        %8469 = vmatprep.subr.bf16.mxu0 0
        %8470 = vmatpush2.bf16.msra.mxu0 %v8191
        %8471 = vmatprep.mubr.bf16.mxu0 %v7380
        %8472 = vmatmul.mubr.bf16.gmra.mxu0 %v7379
        %v8473 = vpop.f32.mrf.mxu0
        %v8474 = vadd.f32 %v7670, %v8473
        %v8475 = vpop.f32.mrf.mxu0
        %v8476 = vpop.f32.mrf.mxu0
        %v8477 = vadd.f32 %v7670, %v8476
        %v8478 = vpop.f32.mrf.mxu0
        %8479 = vmatprep.mubr.bf16.mxu0 %v7396
        %8480 = vmatmul.mubr.bf16.gmra.mxu0 %v7395
        %v8481 = vpop.f32.mrf.mxu0
        %v8482 = vadd.f32 %v7670, %v8481
        %v8483 = vpop.f32.mrf.mxu0
        %v8484 = vpop.f32.mrf.mxu0
        %v8485 = vadd.f32 %v7670, %v8484
        %v8486 = vpop.f32.mrf.mxu0
        %8487 = vdwg.mxu0
        %8488 = vmatprep.subr.bf16.mxu0 0
        %8489 = vmatpush1.bf16.msra.mxu0 %v8206
        %8490 = vmatprep.subr.bf16.mxu0 0
        %8491 = vmatpush1.bf16.msra.mxu0 %v8205
        %8492 = vmatprep.subr.bf16.mxu0 0
        %8493 = vmatpush1.bf16.msra.mxu0 %v8204
        %8494 = vmatprep.subr.bf16.mxu0 0
        %8495 = vmatpush1.bf16.msra.mxu0 %v8203
        %8496 = vmatprep.subr.bf16.mxu0 0
        %8497 = vmatpush1.bf16.msra.mxu0 %v8202
        %8498 = vmatprep.subr.bf16.mxu0 0
        %8499 = vmatpush1.bf16.msra.mxu0 %v8201
        %8500 = vmatprep.subr.bf16.mxu0 0
        %8501 = vmatpush1.bf16.msra.mxu0 %v8200
        %8502 = vmatprep.subr.bf16.mxu0 0
        %8503 = vmatpush1.bf16.msra.mxu0 %v8199
        %8504 = vmatprep.subr.bf16.mxu0 0
        %8505 = vmatpush2.bf16.msra.mxu0 %v8214
        %8506 = vmatprep.subr.bf16.mxu0 0
        %8507 = vmatpush2.bf16.msra.mxu0 %v8213
        %8508 = vmatprep.subr.bf16.mxu0 0
        %8509 = vmatpush2.bf16.msra.mxu0 %v8212
        %8510 = vmatprep.subr.bf16.mxu0 0
        %8511 = vmatpush2.bf16.msra.mxu0 %v8211
        %8512 = vmatprep.subr.bf16.mxu0 0
        %8513 = vmatpush2.bf16.msra.mxu0 %v8210
        %8514 = vmatprep.subr.bf16.mxu0 0
        %8515 = vmatpush2.bf16.msra.mxu0 %v8209
        %8516 = vmatprep.subr.bf16.mxu0 0
        %8517 = vmatpush2.bf16.msra.mxu0 %v8208
        %8518 = vmatprep.subr.bf16.mxu0 0
        %8519 = vmatpush2.bf16.msra.mxu0 %v8207
        %8520 = vmatprep.mubr.bf16.mxu0 %v7382
        %8521 = vmatmul.mubr.bf16.gmra.mxu0 %v7381
        %v8522 = vpop.f32.mrf.mxu0
        %v8523 = vadd.f32 %v8474, %v8522
        %v8524 = vpop.f32.mrf.mxu0
        %v8525 = vpop.f32.mrf.mxu0
        %v8526 = vadd.f32 %v8477, %v8525
        %v8527 = vpop.f32.mrf.mxu0
        %8528 = vmatprep.mubr.bf16.mxu0 %v7398
        %8529 = vmatmul.mubr.bf16.gmra.mxu0 %v7397
        %v8530 = vpop.f32.mrf.mxu0
        %v8531 = vadd.f32 %v8482, %v8530
        %v8532 = vpop.f32.mrf.mxu0
        %v8533 = vpop.f32.mrf.mxu0
        %v8534 = vadd.f32 %v8485, %v8533
        %v8535 = vpop.f32.mrf.mxu0
        %8536 = vdwg.mxu0
        %8537 = vmatprep.subr.bf16.mxu0 0
        %8538 = vmatpush1.bf16.msra.mxu0 %v8222
        %8539 = vmatprep.subr.bf16.mxu0 0
        %8540 = vmatpush1.bf16.msra.mxu0 %v8221
        %8541 = vmatprep.subr.bf16.mxu0 0
        %8542 = vmatpush1.bf16.msra.mxu0 %v8220
        %8543 = vmatprep.subr.bf16.mxu0 0
        %8544 = vmatpush1.bf16.msra.mxu0 %v8219
        %8545 = vmatprep.subr.bf16.mxu0 0
        %8546 = vmatpush1.bf16.msra.mxu0 %v8218
        %8547 = vmatprep.subr.bf16.mxu0 0
        %8548 = vmatpush1.bf16.msra.mxu0 %v8217
        %8549 = vmatprep.subr.bf16.mxu0 0
        %8550 = vmatpush1.bf16.msra.mxu0 %v8216
        %8551 = vmatprep.subr.bf16.mxu0 0
        %8552 = vmatpush1.bf16.msra.mxu0 %v8215
        %8553 = vmatprep.subr.bf16.mxu0 0
        %8554 = vmatpush2.bf16.msra.mxu0 %v8230
        %8555 = vmatprep.subr.bf16.mxu0 0
        %8556 = vmatpush2.bf16.msra.mxu0 %v8229
        %8557 = vmatprep.subr.bf16.mxu0 0
        %8558 = vmatpush2.bf16.msra.mxu0 %v8228
        %8559 = vmatprep.subr.bf16.mxu0 0
        %8560 = vmatpush2.bf16.msra.mxu0 %v8227
        %8561 = vmatprep.subr.bf16.mxu0 0
        %8562 = vmatpush2.bf16.msra.mxu0 %v8226
        %8563 = vmatprep.subr.bf16.mxu0 0
        %8564 = vmatpush2.bf16.msra.mxu0 %v8225
        %8565 = vmatprep.subr.bf16.mxu0 0
        %8566 = vmatpush2.bf16.msra.mxu0 %v8224
        %8567 = vmatprep.subr.bf16.mxu0 0
        %8568 = vmatpush2.bf16.msra.mxu0 %v8223
        %8569 = vmatprep.mubr.bf16.mxu0 %v7384
        %8570 = vmatmul.mubr.bf16.gmra.mxu0 %v7383
        %v8571 = vpop.f32.mrf.mxu0
        %v8572 = vadd.f32 %v8523, %v8571
        %v8573 = vpop.f32.mrf.mxu0
        %v8574 = vpop.f32.mrf.mxu0
        %v8575 = vadd.f32 %v8526, %v8574
        %v8576 = vpop.f32.mrf.mxu0
        %8577 = vmatprep.mubr.bf16.mxu0 %v7400
        %8578 = vmatmul.mubr.bf16.gmra.mxu0 %v7399
        %v8579 = vpop.f32.mrf.mxu0
        %v8580 = vadd.f32 %v8531, %v8579
        %v8581 = vpop.f32.mrf.mxu0
        %v8582 = vpop.f32.mrf.mxu0
        %v8583 = vadd.f32 %v8534, %v8582
        %v8584 = vpop.f32.mrf.mxu0
        %8585 = vdwg.mxu0
        %8586 = vmatprep.subr.bf16.mxu0 0
        %8587 = vmatpush1.bf16.msra.mxu0 %v8238
        %8588 = vmatprep.subr.bf16.mxu0 0
        %8589 = vmatpush1.bf16.msra.mxu0 %v8237
        %8590 = vmatprep.subr.bf16.mxu0 0
        %8591 = vmatpush1.bf16.msra.mxu0 %v8236
        %8592 = vmatprep.subr.bf16.mxu0 0
        %8593 = vmatpush1.bf16.msra.mxu0 %v8235
        %8594 = vmatprep.subr.bf16.mxu0 0
        %8595 = vmatpush1.bf16.msra.mxu0 %v8234
        %8596 = vmatprep.subr.bf16.mxu0 0
        %8597 = vmatpush1.bf16.msra.mxu0 %v8233
        %8598 = vmatprep.subr.bf16.mxu0 0
        %8599 = vmatpush1.bf16.msra.mxu0 %v8232
        %8600 = vmatprep.subr.bf16.mxu0 0
        %8601 = vmatpush1.bf16.msra.mxu0 %v8231
        %8602 = vmatprep.subr.bf16.mxu0 0
        %8603 = vmatpush2.bf16.msra.mxu0 %v8246
        %8604 = vmatprep.subr.bf16.mxu0 0
        %8605 = vmatpush2.bf16.msra.mxu0 %v8245
        %8606 = vmatprep.subr.bf16.mxu0 0
        %8607 = vmatpush2.bf16.msra.mxu0 %v8244
        %8608 = vmatprep.subr.bf16.mxu0 0
        %8609 = vmatpush2.bf16.msra.mxu0 %v8243
        %8610 = vmatprep.subr.bf16.mxu0 0
        %8611 = vmatpush2.bf16.msra.mxu0 %v8242
        %8612 = vmatprep.subr.bf16.mxu0 0
        %8613 = vmatpush2.bf16.msra.mxu0 %v8241
        %8614 = vmatprep.subr.bf16.mxu0 0
        %8615 = vmatpush2.bf16.msra.mxu0 %v8240
        %8616 = vmatprep.subr.bf16.mxu0 0
        %8617 = vmatpush2.bf16.msra.mxu0 %v8239
        %8618 = vmatprep.mubr.bf16.mxu0 %v7386
        %8619 = vmatmul.mubr.bf16.gmra.mxu0 %v7385
        %v8620 = vpop.f32.mrf.mxu0
        %v8621 = vadd.f32 %v8572, %v8620
        %v8622 = vpop.f32.mrf.mxu0
        %v8623 = vpop.f32.mrf.mxu0
        %v8624 = vadd.f32 %v8575, %v8623
        %v8625 = vpop.f32.mrf.mxu0
        %8626 = vmatprep.mubr.bf16.mxu0 %v7402
        %8627 = vmatmul.mubr.bf16.gmra.mxu0 %v7401
        %v8628 = vpop.f32.mrf.mxu0
        %v8629 = vadd.f32 %v8580, %v8628
        %v8630 = vpop.f32.mrf.mxu0
        %v8631 = vpop.f32.mrf.mxu0
        %v8632 = vadd.f32 %v8583, %v8631
        %v8633 = vpop.f32.mrf.mxu0
        %8634 = vdwg.mxu0
        %8635 = vmatprep.subr.bf16.mxu0 0
        %8636 = vmatpush1.bf16.msra.mxu0 %v8254
        %8637 = vmatprep.subr.bf16.mxu0 0
        %8638 = vmatpush1.bf16.msra.mxu0 %v8253
        %8639 = vmatprep.subr.bf16.mxu0 0
        %8640 = vmatpush1.bf16.msra.mxu0 %v8252
        %8641 = vmatprep.subr.bf16.mxu0 0
        %8642 = vmatpush1.bf16.msra.mxu0 %v8251
        %8643 = vmatprep.subr.bf16.mxu0 0
        %8644 = vmatpush1.bf16.msra.mxu0 %v8250
        %8645 = vmatprep.subr.bf16.mxu0 0
        %8646 = vmatpush1.bf16.msra.mxu0 %v8249
        %8647 = vmatprep.subr.bf16.mxu0 0
        %8648 = vmatpush1.bf16.msra.mxu0 %v8248
        %8649 = vmatprep.subr.bf16.mxu0 0
        %8650 = vmatpush1.bf16.msra.mxu0 %v8247
        %8651 = vmatprep.subr.bf16.mxu0 0
        %8652 = vmatpush2.bf16.msra.mxu0 %v8262
        %8653 = vmatprep.subr.bf16.mxu0 0
        %8654 = vmatpush2.bf16.msra.mxu0 %v8261
        %8655 = vmatprep.subr.bf16.mxu0 0
        %8656 = vmatpush2.bf16.msra.mxu0 %v8260
        %8657 = vmatprep.subr.bf16.mxu0 0
        %8658 = vmatpush2.bf16.msra.mxu0 %v8259
        %8659 = vmatprep.subr.bf16.mxu0 0
        %8660 = vmatpush2.bf16.msra.mxu0 %v8258
        %8661 = vmatprep.subr.bf16.mxu0 0
        %8662 = vmatpush2.bf16.msra.mxu0 %v8257
        %8663 = vmatprep.subr.bf16.mxu0 0
        %8664 = vmatpush2.bf16.msra.mxu0 %v8256
        %8665 = vmatprep.subr.bf16.mxu0 0
        %8666 = vmatpush2.bf16.msra.mxu0 %v8255
        %8667 = vmatprep.mubr.bf16.mxu0 %v7388
        %8668 = vmatmul.mubr.bf16.gmra.mxu0 %v7387
        %v8669 = vpop.f32.mrf.mxu0
        %v8670 = vadd.f32 %v8621, %v8669
        %v8671 = vpop.f32.mrf.mxu0
        %v8672 = vpop.f32.mrf.mxu0
        %v8673 = vadd.f32 %v8624, %v8672
        %v8674 = vpop.f32.mrf.mxu0
        %8675 = vmatprep.mubr.bf16.mxu0 %v7404
        %8676 = vmatmul.mubr.bf16.gmra.mxu0 %v7403
        %v8677 = vpop.f32.mrf.mxu0
        %v8678 = vadd.f32 %v8629, %v8677
        %v8679 = vpop.f32.mrf.mxu0
        %v8680 = vpop.f32.mrf.mxu0
        %v8681 = vadd.f32 %v8632, %v8680
        %v8682 = vpop.f32.mrf.mxu0
        %8683 = vdwg.mxu0
        %8684 = vmatprep.subr.bf16.mxu0 0
        %8685 = vmatpush1.bf16.msra.mxu0 %v8270
        %8686 = vmatprep.subr.bf16.mxu0 0
        %8687 = vmatpush1.bf16.msra.mxu0 %v8269
        %8688 = vmatprep.subr.bf16.mxu0 0
        %8689 = vmatpush1.bf16.msra.mxu0 %v8268
        %8690 = vmatprep.subr.bf16.mxu0 0
        %8691 = vmatpush1.bf16.msra.mxu0 %v8267
        %8692 = vmatprep.subr.bf16.mxu0 0
        %8693 = vmatpush1.bf16.msra.mxu0 %v8266
        %8694 = vmatprep.subr.bf16.mxu0 0
        %8695 = vmatpush1.bf16.msra.mxu0 %v8265
        %8696 = vmatprep.subr.bf16.mxu0 0
        %8697 = vmatpush1.bf16.msra.mxu0 %v8264
        %8698 = vmatprep.subr.bf16.mxu0 0
        %8699 = vmatpush1.bf16.msra.mxu0 %v8263
        %8700 = vmatprep.subr.bf16.mxu0 0
        %8701 = vmatpush2.bf16.msra.mxu0 %v8278
        %8702 = vmatprep.subr.bf16.mxu0 0
        %8703 = vmatpush2.bf16.msra.mxu0 %v8277
        %8704 = vmatprep.subr.bf16.mxu0 0
        %8705 = vmatpush2.bf16.msra.mxu0 %v8276
        %8706 = vmatprep.subr.bf16.mxu0 0
        %8707 = vmatpush2.bf16.msra.mxu0 %v8275
        %8708 = vmatprep.subr.bf16.mxu0 0
        %8709 = vmatpush2.bf16.msra.mxu0 %v8274
        %8710 = vmatprep.subr.bf16.mxu0 0
        %8711 = vmatpush2.bf16.msra.mxu0 %v8273
        %8712 = vmatprep.subr.bf16.mxu0 0
        %8713 = vmatpush2.bf16.msra.mxu0 %v8272
        %8714 = vmatprep.subr.bf16.mxu0 0
        %8715 = vmatpush2.bf16.msra.mxu0 %v8271
        %8716 = vmatprep.mubr.bf16.mxu0 %v7390
        %8717 = vmatmul.mubr.bf16.gmra.mxu0 %v7389
        %v8718 = vpop.f32.mrf.mxu0
        %v8719 = vadd.f32 %v8670, %v8718
        %v8720 = vpop.f32.mrf.mxu0
        %v8721 = vpop.f32.mrf.mxu0
        %v8722 = vadd.f32 %v8673, %v8721
        %v8723 = vpop.f32.mrf.mxu0
        %8724 = vmatprep.mubr.bf16.mxu0 %v7406
        %8725 = vmatmul.mubr.bf16.gmra.mxu0 %v7405
        %v8726 = vpop.f32.mrf.mxu0
        %v8727 = vadd.f32 %v8678, %v8726
        %v8728 = vpop.f32.mrf.mxu0
        %v8729 = vpop.f32.mrf.mxu0
        %v8730 = vadd.f32 %v8681, %v8729
        %v8731 = vpop.f32.mrf.mxu0
        %8732 = vdwg.mxu0
        %8733 = vmatprep.subr.bf16.mxu0 0
        %8734 = vmatpush1.bf16.msra.mxu0 %v8286
        %8735 = vmatprep.subr.bf16.mxu0 0
        %8736 = vmatpush1.bf16.msra.mxu0 %v8285
        %8737 = vmatprep.subr.bf16.mxu0 0
        %8738 = vmatpush1.bf16.msra.mxu0 %v8284
        %8739 = vmatprep.subr.bf16.mxu0 0
        %8740 = vmatpush1.bf16.msra.mxu0 %v8283
        %8741 = vmatprep.subr.bf16.mxu0 0
        %8742 = vmatpush1.bf16.msra.mxu0 %v8282
        %8743 = vmatprep.subr.bf16.mxu0 0
        %8744 = vmatpush1.bf16.msra.mxu0 %v8281
        %8745 = vmatprep.subr.bf16.mxu0 0
        %8746 = vmatpush1.bf16.msra.mxu0 %v8280
        %8747 = vmatprep.subr.bf16.mxu0 0
        %8748 = vmatpush1.bf16.msra.mxu0 %v8279
        %8749 = vmatprep.subr.bf16.mxu0 0
        %8750 = vmatpush2.bf16.msra.mxu0 %v8294
        %8751 = vmatprep.subr.bf16.mxu0 0
        %8752 = vmatpush2.bf16.msra.mxu0 %v8293
        %8753 = vmatprep.subr.bf16.mxu0 0
        %8754 = vmatpush2.bf16.msra.mxu0 %v8292
        %8755 = vmatprep.subr.bf16.mxu0 0
        %8756 = vmatpush2.bf16.msra.mxu0 %v8291
        %8757 = vmatprep.subr.bf16.mxu0 0
        %8758 = vmatpush2.bf16.msra.mxu0 %v8290
        %8759 = vmatprep.subr.bf16.mxu0 0
        %8760 = vmatpush2.bf16.msra.mxu0 %v8289
        %8761 = vmatprep.subr.bf16.mxu0 0
        %8762 = vmatpush2.bf16.msra.mxu0 %v8288
        %8763 = vmatprep.subr.bf16.mxu0 0
        %8764 = vmatpush2.bf16.msra.mxu0 %v8287
        %8765 = vmatprep.mubr.bf16.mxu0 %v7392
        %8766 = vmatmul.mubr.bf16.gmra.mxu0 %v7391
        %v8767 = vpop.f32.mrf.mxu0
        %v8768 = vadd.f32 %v8719, %v8767
        %v8769 = vpop.f32.mrf.mxu0
        %v8770 = vpop.f32.mrf.mxu0
        %v8771 = vadd.f32 %v8722, %v8770
        %v8772 = vpop.f32.mrf.mxu0
        %8773 = vmatprep.mubr.bf16.mxu0 %v7408
        %8774 = vmatmul.mubr.bf16.gmra.mxu0 %v7407
        %v8775 = vpop.f32.mrf.mxu0
        %v8776 = vadd.f32 %v8727, %v8775
        %v8777 = vpop.f32.mrf.mxu0
        %v8778 = vpop.f32.mrf.mxu0
        %v8779 = vadd.f32 %v8730, %v8778
        %v8780 = vpop.f32.mrf.mxu0
        %8781 = vdwg.mxu0
        %8782 = vmatprep.subr.bf16.mxu0 0
        %8783 = vmatpush1.bf16.msra.mxu0 %v8302
        %8784 = vmatprep.subr.bf16.mxu0 0
        %8785 = vmatpush1.bf16.msra.mxu0 %v8301
        %8786 = vmatprep.subr.bf16.mxu0 0
        %8787 = vmatpush1.bf16.msra.mxu0 %v8300
        %8788 = vmatprep.subr.bf16.mxu0 0
        %8789 = vmatpush1.bf16.msra.mxu0 %v8299
        %8790 = vmatprep.subr.bf16.mxu0 0
        %8791 = vmatpush1.bf16.msra.mxu0 %v8298
        %8792 = vmatprep.subr.bf16.mxu0 0
        %8793 = vmatpush1.bf16.msra.mxu0 %v8297
        %8794 = vmatprep.subr.bf16.mxu0 0
        %8795 = vmatpush1.bf16.msra.mxu0 %v8296
        %8796 = vmatprep.subr.bf16.mxu0 0
        %8797 = vmatpush1.bf16.msra.mxu0 %v8295
        %8798 = vmatprep.subr.bf16.mxu0 0
        %8799 = vmatpush2.bf16.msra.mxu0 %v8310
        %8800 = vmatprep.subr.bf16.mxu0 0
        %8801 = vmatpush2.bf16.msra.mxu0 %v8309
        %8802 = vmatprep.subr.bf16.mxu0 0
        %8803 = vmatpush2.bf16.msra.mxu0 %v8308
        %8804 = vmatprep.subr.bf16.mxu0 0
        %8805 = vmatpush2.bf16.msra.mxu0 %v8307
        %8806 = vmatprep.subr.bf16.mxu0 0
        %8807 = vmatpush2.bf16.msra.mxu0 %v8306
        %8808 = vmatprep.subr.bf16.mxu0 0
        %8809 = vmatpush2.bf16.msra.mxu0 %v8305
        %8810 = vmatprep.subr.bf16.mxu0 0
        %8811 = vmatpush2.bf16.msra.mxu0 %v8304
        %8812 = vmatprep.subr.bf16.mxu0 0
        %8813 = vmatpush2.bf16.msra.mxu0 %v8303
        %8814 = vmatprep.mubr.bf16.mxu0 %v7394
        %8815 = vmatmul.mubr.bf16.gmra.mxu0 %v7393
        %v8816 = vpop.f32.mrf.mxu0
        %v8817 = vadd.f32 %v8768, %v8816
        %v8818 = vpop.f32.mrf.mxu0
        %v8819 = vpop.f32.mrf.mxu0
        %v8820 = vadd.f32 %v8771, %v8819
        %v8821 = vpop.f32.mrf.mxu0
        %8822 = vmatprep.mubr.bf16.mxu0 %v7410
        %8823 = vmatmul.mubr.bf16.gmra.mxu0 %v7409
        %v8824 = vpop.f32.mrf.mxu0
        %v8825 = vadd.f32 %v8776, %v8824
        %v8826 = vpop.f32.mrf.mxu0
        %v8827 = vpop.f32.mrf.mxu0
        %v8828 = vadd.f32 %v8779, %v8827
        %v8829 = vpop.f32.mrf.mxu0
        %8830 = vdwg.mxu0
        %v8831 = vadd.f32 %v6507, %v8817
        %v8832 = vadd.f32 %v6508, %v8820
        %v8833 = vadd.f32 %v6509, %v8825
        %v8834 = vadd.f32 %v6510, %v8828
        %v8835 = vsel %vm2332, %v8831, 0.0
        %8836 = vadd.xlane.f32.xlu0 %v8835
        %v8837 = vpop.xlane.xlu0 %8836
        %v8838 = vsel %vm2332, %v8832, 0.0
        %8839 = vadd.xlane.f32.xlu0 %v8838
        %v8840 = vpop.xlane.xlu0 %8839
        %v8841 = vsel %vm2332, %v8833, 0.0
        %8842 = vadd.xlane.f32.xlu0 %v8841
        %v8843 = vpop.xlane.xlu0 %8842
        %v8844 = vsel %vm2332, %v8834, 0.0
        %8845 = vadd.xlane.f32.xlu0 %v8844
        %v8846 = vpop.xlane.xlu0 %8845
        %v8847 = vmul.f32 %v8837, %v6454
        %v8848 = vmul.f32 %v8840, %v6454
        %v8849 = vmul.f32 %v8843, %v6454
        %v8850 = vmul.f32 %v8846, %v6454
        %v8851 = vsub.f32 %v8831, %v8847
        %v8852 = vsub.f32 %v8832, %v8848
        %v8853 = vsub.f32 %v8833, %v8849
        %v8854 = vsub.f32 %v8834, %v8850
        %v8855 = vmul.f32 %v8851, %v8851
        %v8856 = vmul.f32 %v8852, %v8852
        %v8857 = vmul.f32 %v8853, %v8853
        %v8858 = vmul.f32 %v8854, %v8854
        %v8859 = vsel %vm2332, %v8855, 0.0
        %8860 = vadd.xlane.f32.xlu0 %v8859
        %v8861 = vpop.xlane.xlu0 %8860
        %v8862 = vsel %vm2332, %v8856, 0.0
        %8863 = vadd.xlane.f32.xlu0 %v8862
        %v8864 = vpop.xlane.xlu0 %8863
        %v8865 = vsel %vm2332, %v8857, 0.0
        %8866 = vadd.xlane.f32.xlu0 %v8865
        %v8867 = vpop.xlane.xlu0 %8866
        %v8868 = vsel %vm2332, %v8858, 0.0
        %8869 = vadd.xlane.f32.xlu0 %v8868
        %v8870 = vpop.xlane.xlu0 %8869
        %v8871 = vmul.f32 %v8861, %v6454
        %v8872 = vmul.f32 %v8864, %v6454
        %v8873 = vmul.f32 %v8867, %v6454
        %v8874 = vmul.f32 %v8870, %v6454
        %v8875 = vadd.f32 %v8871, 1e-05
        %v8876 = vadd.f32 %v8872, 1e-05
        %v8877 = vadd.f32 %v8873, 1e-05
        %v8878 = vadd.f32 %v8874, 1e-05
        %v8879 = vrsqrt.pop %v8875
        %v8880 = vrsqrt.pop %v8876
        %v8881 = vrsqrt.pop %v8877
        %v8882 = vrsqrt.pop %v8878
        %v8883 = vmul.f32 %v8851, %v8879
        %v8884 = vmul.f32 %v8852, %v8880
        %v8885 = vmul.f32 %v8853, %v8881
        %v8886 = vmul.f32 %v8854, %v8882
        %v8887 = vlaneseq
        %v8888 = vshrl.u32 %v8887, 7
        %v8889 = vsub.s32 4, %v8888
        %v8890 = vrot.slane %v2296, %v8889
        %v8891 = vmul.f32 %v8883, %v8890
        %v8892 = vmul.f32 %v8884, %v8890
        %v8893 = vmul.f32 %v8885, %v8890
        %v8894 = vmul.f32 %v8886, %v8890
        %v8895 = vlaneseq
        %v8896 = vshrl.u32 %v8895, 7
        %v8897 = vsub.s32 5, %v8896
        %v8898 = vrot.slane %v2296, %v8897
        %v8899 = vadd.f32 %v8891, %v8898
        %v8900 = vadd.f32 %v8892, %v8898
        %v8901 = vadd.f32 %v8893, %v8898
        %v8902 = vadd.f32 %v8894, %v8898
        %8903 = vst.msk [vmem:[#allocation2] sm:$0xff] %vm2332, %v8899
        %8904 = vst.msk [vmem:[#allocation2 + $0x8] sm:$0xff] %vm2332, %v8900
        %8905 = vst.msk [vmem:[#allocation2 + $0x10] sm:$0xff] %vm2332, %v8901
        %8906 = vst.msk [vmem:[#allocation2 + $0x18] sm:$0xff] %vm2332, %v8902
        %p8907 = scmp.eq.s32.totalorder %s29, 5
        // Predicated region
        $region133: #{postfinder_forward.1} parent=79 // pred_check
          %p8908 = pneg %p8907
        $region134: #{postfinder_forward.1} parent=79 // pred_check_branch
          %8910 = sbr.rel (%p8908) target = $region136
        $region135: #{postfinder_forward.1} parent=79 // pred_region
          %v8911 = vpack.c.bf16 %v8900, %v8899
          %v8912 = vpack.c.bf16 %v8902, %v8901
          %v8913 = vld [vmem:[#allocation17] sm:$0xf]
          %v8914 = vld [vmem:[#allocation17 + $0x4] sm:$0xf]
          %v8915 = vld [vmem:[#allocation17 + $0x8] sm:$0xf]
          %v8916 = vld [vmem:[#allocation17 + $0xc] sm:$0xf]
          %v8917 = vld [vmem:[#allocation17 + $0x10] sm:$0xf]
          %v8918 = vld [vmem:[#allocation17 + $0x14] sm:$0xf]
          %v8919 = vld [vmem:[%s14] sm:$0x1]
          %v8921 = vlaneseq
          %v8922 = vshrl.u32 %v8921, 7
          %v8923 = vsub.s32 0, %v8922
          %v8924 = vrot.slane %v8919, %v8923
          %v8932 = vunpack.c.l.b16 %v8913
          %v8933 = vunpack.c.l.b16 %v8914
          %v8934 = vunpack.c.l.b16 %v8915
          %v8935 = vunpack.c.l.b16 %v8916
          %v8936 = vunpack.c.l.b16 %v8917
          %v8937 = vunpack.c.l.b16 %v8918
          %v8938 = vpack.c.b16 %v8933, %v8932
          %v8939 = vpack.c.b16 %v8935, %v8934
          %v8940 = vpack.c.b16 %v8937, %v8936
          %v8945 = vsel %vm2332, %v8911, 0
          %v8948 = vsel %vm2332, %v8912, 0
          %8950 = vmatprep.subr.bf16.mxu0 0
          %8951 = vmatpush1.bf16.msra.mxu0 0
          %8952 = vmatprep.subr.bf16.mxu0 0
          %8953 = vmatpush1.bf16.msra.mxu0 0
          %8954 = vmatprep.subr.bf16.mxu0 0
          %8955 = vmatpush1.bf16.msra.mxu0 0
          %8956 = vmatprep.subr.bf16.mxu0 0
          %8957 = vmatpush1.bf16.msra.mxu0 0
          %8958 = vmatprep.subr.bf16.mxu0 0
          %8959 = vmatpush1.bf16.msra.mxu0 0
          %8960 = vmatprep.subr.bf16.mxu0 0
          %8961 = vmatpush1.bf16.msra.mxu0 %v8940
          %8962 = vmatprep.subr.bf16.mxu0 0
          %8963 = vmatpush1.bf16.msra.mxu0 %v8939
          %8964 = vmatprep.subr.bf16.mxu0 0
          %8965 = vmatpush1.bf16.msra.mxu0 %v8938
          %8966 = vmatprep.subr.bf16.mxu0 0
          %8967 = vmatpush2.bf16.msra.mxu0 0
          %8968 = vmatprep.subr.bf16.mxu0 0
          %8969 = vmatpush2.bf16.msra.mxu0 0
          %8970 = vmatprep.subr.bf16.mxu0 0
          %8971 = vmatpush2.bf16.msra.mxu0 0
          %8972 = vmatprep.subr.bf16.mxu0 0
          %8973 = vmatpush2.bf16.msra.mxu0 0
          %8974 = vmatprep.subr.bf16.mxu0 0
          %8975 = vmatpush2.bf16.msra.mxu0 0
          %8976 = vmatprep.subr.bf16.mxu0 0
          %8977 = vmatpush2.bf16.msra.mxu0 0
          %8978 = vmatprep.subr.bf16.mxu0 0
          %8979 = vmatpush2.bf16.msra.mxu0 0
          %8980 = vmatprep.subr.bf16.mxu0 0
          %8981 = vmatpush2.bf16.msra.mxu0 0
          %8982 = vmatprep.mubr.bf16.mxu0 0
          %8983 = vmatmul.mubr.bf16.gmra.mxu0 %v8945
          %v8984 = vpop.f32.mrf.mxu0
          %v8985 = vadd.f32 %v8924, %v8984
          %v8986 = vpop.f32.mrf.mxu0
          %v8987 = vpop.f32.mrf.mxu0
          %v8988 = vadd.f32 %v8924, %v8987
          %v8989 = vpop.f32.mrf.mxu0
          %8990 = vmatprep.mubr.bf16.mxu0 0
          %8991 = vmatmul.mubr.bf16.gmra.mxu0 %v8948
          %v8992 = vpop.f32.mrf.mxu0
          %v8993 = vadd.f32 %v8924, %v8992
          %v8994 = vpop.f32.mrf.mxu0
          %v8995 = vpop.f32.mrf.mxu0
          %v8996 = vadd.f32 %v8924, %v8995
          %v8997 = vpop.f32.mrf.mxu0
          %8998 = vdwg.mxu0
          %vm8999 = vcmask 31744
          %9000 = vst.msk [vmem:[%s15] sm:$0xff] %vm8999, %v8985
          %vm9001 = vcmask 24576
          %9002 = vst.msk [vmem:[%s15 + $0x8] sm:$0x1] %vm9001, %v8988
          %s9003 = scalar_lea.vmem %s15, 16
          %9004 = vst.msk [vmem:[%s9003] sm:$0xff] %vm8999, %v8993
          %9005 = vst.msk [vmem:[%s9003 + $0x8] sm:$0x1] %vm9001, %v8996
        $region136: #{postfinder_forward.1} parent=79 // pred_fallthru
          _
        // Predicated region
        $region137: #{postfinder_forward.1} parent=79 // pred_check
          %p9006 = pneg %p402
        $region138: #{postfinder_forward.1} parent=79 // pred_check_branch
          %9008 = sbr.rel (%p9006) target = $region140
        $region139: #{postfinder_forward.1} parent=79 // pred_region
          _
        $region140: #{postfinder_forward.1} parent=79 // pred_fallthru
          _
        // Predicated region
        $region141: #{postfinder_forward.1} parent=79 // pred_check
          %p9009 = pneg %p402
        $region142: #{postfinder_forward.1} parent=79 // pred_check_branch
          %9011 = sbr.rel (%p9009) target = $region144
        $region143: #{postfinder_forward.1} parent=79 // pred_region
          _
        $region144: #{postfinder_forward.1} parent=79 // pred_fallthru
          _
      $region80: #{postfinder_forward.1} parent=5 // pred_fallthru
        _
      %p9012 = scmp.le.s32.totalorder 2, %s24
      // Predicated region
      $region145: #{postfinder_forward.1} parent=5 // pred_check
        %p9013 = pneg %p9012
      $region146: #{postfinder_forward.1} parent=5 // pred_check_branch
        %9015 = sbr.rel (%p9013) target = $region148
      $region147: #{postfinder_forward.1} parent=5 // pred_region
        %s9016 = ssub.s32 %s24, 2
      $region148: #{postfinder_forward.1} parent=5 // pred_fallthru
        _
    $region6: #{postfinder_forward.1} parent=1 // loop_footer
      %s28 = sadd.s32 1, %s24
    $region7: #{postfinder_forward.1} parent=1 // loop_footer_branch
      %23 = sbr.rel target = $region3
    $region8: #{postfinder_forward.1} parent=1 // loop_exit
      _
    %9017 = vsyncpa [#allocation4], 1
    %s9018 = scalar_lea.sflag [#allocation4], 1
    %9019 = vsyncpa %s9018, 1
    %9020 = vsyncpa [#allocation6], 1
    %9021 = vsyncpa [#allocation9], 1

</llo_original>
